<compile_context>
chip_gen: v6e
topology: v6e:2x2x1
jax: 0.10.0
libtpu: 0.0.40
codegen_flags: <defaults>
</compile_context>

<pallas_src>
import jax
import jax.numpy as jnp
from jax.experimental import pallas as pl
from jax.experimental.pallas import tpu as pltpu

F_IN = 16 * 7 * 7 * 6   # 4704
H = 2048
TN = 512                # hidden-dim tile: bf16 W1 tile ~4.6 MiB, x2 buffers fits every gen
NP = 2                  # hidden-dim halves -> leading "parallel" axis (2 TCs on v7x)


def _mlp_kernel(x_ref, w1_ref, b1_ref, w2_ref, o_ref, xr_ref, acc_ref):
    j = pl.program_id(1)

    @pl.when(j == 0)
    def _():
        # Hoisted input ReLU (+ bf16 cast for the MXU): computed once per
        # reduction sweep, reused across all hidden tiles of this half.
        xr_ref[...] = jnp.maximum(x_ref[...], 0.0).astype(jnp.bfloat16)
        acc_ref[...] = jnp.zeros_like(acc_ref)

    # Linear(F -> TN) for this hidden tile: bf16 MXU matmul, f32 accumulation.
    h = jnp.dot(xr_ref[...], w1_ref[0], preferred_element_type=jnp.float32)
    h = jnp.maximum(h + b1_ref[...], 0.0)

    # Dropout: identity (eval mode)

    # Partial contribution of Linear(H -> 1).  An N=1 MXU matmul wastes 255/256
    # of the output columns, so use VPU multiply + XLU row-reduce instead.
    acc_ref[...] += jnp.sum(h * w2_ref[...], axis=-1, keepdims=True)

    @pl.when(j == pl.num_programs(1) - 1)
    def _():
        o_ref[0] = acc_ref[...]


def multi_stream_near_collision_forward(x, w1, b1, w2, b2):
    """x: (B, F_IN) f32, w1: (F_IN, H), b1: (H,), w2: (H, 1), b2: (1,) -> (B, 1) f32."""
    B, F = x.shape
    assert F == F_IN
    assert H % (NP * TN) == 0
    n_tiles = H // TN
    tiles_per_half = n_tiles // NP

    # Weight packing (would be done once, offline, in a real deployment):
    #   W1 -> bf16, contiguous per-tile layout (n_tiles, F_IN, TN).
    w1_packed = (
        w1.astype(jnp.bfloat16).reshape(F_IN, n_tiles, TN).transpose(1, 0, 2)
    )
    b1_row = b1.reshape(1, H).astype(jnp.float32)
    w2_row = w2.reshape(1, H).astype(jnp.float32)   # tiny; keep f32 for accuracy

    partials = pl.pallas_call(
        _mlp_kernel,
        out_shape=jax.ShapeDtypeStruct((NP, B, 1), jnp.float32),
        grid_spec=pltpu.PrefetchScalarGridSpec(
            num_scalar_prefetch=0,
            grid=(NP, tiles_per_half),
            in_specs=[
                # x: resident across the whole grid (constant block index)
                pl.BlockSpec((B, F_IN), lambda p, j: (0, 0)),
                # W1 tile: contiguous (F_IN, TN) slab per hidden tile
                pl.BlockSpec((1, F_IN, TN),
                             lambda p, j: (p * tiles_per_half + j, 0, 0)),
                # b1 tile
                pl.BlockSpec((1, TN),
                             lambda p, j: (0, p * tiles_per_half + j)),
                # w2 tile (as a row vector)
                pl.BlockSpec((1, TN),
                             lambda p, j: (0, p * tiles_per_half + j)),
            ],
            out_specs=pl.BlockSpec((1, B, 1), lambda p, j: (p, 0, 0)),
            scratch_shapes=[
                pltpu.VMEM((B, F_IN), jnp.bfloat16),   # relu(x), cast once
                pltpu.VMEM((B, 1), jnp.float32),       # per-half accumulator
            ],
        ),
        compiler_params=pltpu.CompilerParams(
            dimension_semantics=("parallel", "arbitrary"),
            vmem_limit_bytes=32 * 1024 * 1024,
        ),
    )(x, w1_packed, b1_row, w2_row)

    # Combine the two hidden-dim halves and add the final bias exactly once.
    return jnp.sum(partials, axis=0) + b2.reshape(1, 1)


def _reference(x, w1, b1, w2, b2):
    # Mirrors the kernel's numerics: bf16 weights/activations into the first
    # matmul with f32 accumulation; everything else in f32.
    xr = jnp.maximum(x, 0.0)
    h = jnp.dot(xr.astype(jnp.bfloat16), w1.astype(jnp.bfloat16),
                preferred_element_type=jnp.float32)
    h = jnp.maximum(h + b1.reshape(1, -1), 0.0)
    out = jnp.sum(h * w2.reshape(1, -1), axis=-1, keepdims=True)
    return out + b2.reshape(1, 1)


if __name__ == "__main__":
    key = jax.random.PRNGKey(0)
    k_x, k_w1, k_b1, k_w2, k_b2 = jax.random.split(key, 5)

    B = 2
    # deterministic synthetic weights (no checkpoint load)
    x = jax.random.normal(k_x, (B, F_IN), dtype=jnp.float32)
    w1 = jax.random.normal(k_w1, (F_IN, H), dtype=jnp.float32) * 0.01
    b1 = jax.random.normal(k_b1, (H,), dtype=jnp.float32) * 0.01
    w2 = jax.random.normal(k_w2, (H, 1), dtype=jnp.float32) * 0.01
    b2 = jax.random.normal(k_b2, (1,), dtype=jnp.float32) * 0.01

    out = multi_stream_near_collision_forward(x, w1, b1, w2, b2)
    out = jax.block_until_ready(out)

    ref = _reference(x, w1, b1, w2, b2)
    assert out.shape == (B, 1)
    assert jnp.allclose(out, ref, rtol=1e-3, atol=1e-3), (out, ref)

    print("KERNEL_OK")
</pallas_src>

<mosaic_0001>
module attributes {stable_mosaic.version = 11 : i64} {
  func.func @_mlp_kernel(%arg0: i32, %arg1: i32, %arg2: memref<2x4704xf32, #tpu.memory_space<vmem>>, %arg3: memref<1x4704x512xbf16, #tpu.memory_space<vmem>>, %arg4: memref<1x512xf32, #tpu.memory_space<vmem>>, %arg5: memref<1x512xf32, #tpu.memory_space<vmem>>, %arg6: memref<1x2x1xf32, #tpu.memory_space<vmem>>, %arg7: memref<2x4704xbf16, #tpu.memory_space<vmem>>, %arg8: memref<2x1xf32, #tpu.memory_space<vmem>>) attributes {dimension_semantics = [#tpu.dimension_semantics<parallel>, #tpu.dimension_semantics<arbitrary>], iteration_bounds = array<i64: 2, 2>, scalar_prefetch = 0 : i64, scratch_operands = 2 : i64, tpu.core_type = #tpu.core_type<tc>, window_params = [{pipeline_mode = #tpu.pipeline_mode<synchronous>, transform_indices = @transform_0, window_bounds = array<i64: 2, 4704>}, {transform_indices = @transform_1, window_bounds = array<i64: 1, 4704, 512>}, {transform_indices = @transform_2, window_bounds = array<i64: 1, 512>}, {transform_indices = @transform_3, window_bounds = array<i64: 1, 512>}, {transform_indices = @transform_4, window_bounds = array<i64: 1, 2, 1>}]} {
    %c0_i32 = arith.constant 0 : i32
    %0 = arith.cmpi eq, %arg1, %c0_i32 : i32
    %1 = arith.extui %0 : i1 to i32
    %c0_i32_0 = arith.constant 0 : i32
    %2 = arith.cmpi ne, %1, %c0_i32_0 : i32
    scf.if %2 {
      %c0_16 = arith.constant 0 : index
      %c0_17 = arith.constant 0 : index
      %23 = vector.load %arg2[%c0_16, %c0_17] : memref<2x4704xf32, #tpu.memory_space<vmem>>, vector<2x4704xf32>
      %cst_18 = arith.constant 0.000000e+00 : f32
      %24 = vector.broadcast %cst_18 : f32 to vector<2x4704xf32>
      %25 = arith.maximumf %23, %24 : vector<2x4704xf32>
      %26 = arith.truncf %25 : vector<2x4704xf32> to vector<2x4704xbf16>
      %c0_19 = arith.constant 0 : index
      %c0_20 = arith.constant 0 : index
      %27 = vector.load %arg7[%c0_19, %c0_20] : memref<2x4704xbf16, #tpu.memory_space<vmem>>, vector<2x4704xbf16>
      tpu.vector_store %arg7[%c0_19, %c0_20], %26 {strides = array<i32>} : memref<2x4704xbf16, #tpu.memory_space<vmem>>, vector<2x4704xbf16>,
      %cst_21 = arith.constant 0.000000e+00 : f32
      %28 = vector.broadcast %cst_21 : f32 to vector<2x1xf32>
      %c0_22 = arith.constant 0 : index
      %c0_23 = arith.constant 0 : index
      %29 = vector.load %arg8[%c0_22, %c0_23] : memref<2x1xf32, #tpu.memory_space<vmem>>, vector<2x1xf32>
      tpu.vector_store %arg8[%c0_22, %c0_23], %28 {strides = array<i32>} : memref<2x1xf32, #tpu.memory_space<vmem>>, vector<2x1xf32>,
    } else {
    }
    %c0 = arith.constant 0 : index
    %c0_1 = arith.constant 0 : index
    %3 = vector.load %arg7[%c0, %c0_1] : memref<2x4704xbf16, #tpu.memory_space<vmem>>, vector<2x4704xbf16>
    %c0_2 = arith.constant 0 : index
    %c0_3 = arith.constant 0 : index
    %c0_4 = arith.constant 0 : index
    %4 = vector.load %arg3[%c0_2, %c0_3, %c0_4] : memref<1x4704x512xbf16, #tpu.memory_space<vmem>>, vector<1x4704x512xbf16>
    %5 = vector.shape_cast %4 : vector<1x4704x512xbf16> to vector<4704x512xbf16>
    %cst = arith.constant dense<0.000000e+00> : vector<2x512xf32>
    %6 = tpu.matmul %3, %5, %cst {dimension_numbers = #tpu.dot_dimension_numbers<[1], [0], [0], [1], [0, 0, 1, 1], [], []>} : vector<2x4704xbf16>, vector<4704x512xbf16>, vector<2x512xf32> -> vector<2x512xf32>
    %c0_5 = arith.constant 0 : index
    %c0_6 = arith.constant 0 : index
    %7 = vector.load %arg4[%c0_5, %c0_6] : memref<1x512xf32, #tpu.memory_space<vmem>>, vector<1x512xf32>
    %8 = vector.broadcast %7 : vector<1x512xf32> to vector<2x512xf32>
    %9 = arith.addf %6, %8 : vector<2x512xf32>
    %cst_7 = arith.constant 0.000000e+00 : f32
    %10 = vector.broadcast %cst_7 : f32 to vector<2x512xf32>
    %11 = arith.maximumf %9, %10 : vector<2x512xf32>
    %c0_8 = arith.constant 0 : index
    %c0_9 = arith.constant 0 : index
    %12 = vector.load %arg8[%c0_8, %c0_9] : memref<2x1xf32, #tpu.memory_space<vmem>>, vector<2x1xf32>
    %c0_10 = arith.constant 0 : index
    %c0_11 = arith.constant 0 : index
    %13 = vector.load %arg5[%c0_10, %c0_11] : memref<1x512xf32, #tpu.memory_space<vmem>>, vector<1x512xf32>
    %14 = vector.broadcast %13 : vector<1x512xf32> to vector<2x512xf32>
    %15 = arith.mulf %11, %14 : vector<2x512xf32>
    %cst_12 = arith.constant dense<0.000000e+00> : vector<2xf32>
    %16 = vector.multi_reduction <add>, %15, %cst_12 [1] : vector<2x512xf32> to vector<2xf32>
    %17 = vector.shape_cast %16 : vector<2xf32> to vector<2x1xf32>
    %18 = arith.addf %12, %17 : vector<2x1xf32>
    %c0_13 = arith.constant 0 : index
    %c0_14 = arith.constant 0 : index
    %19 = vector.load %arg8[%c0_13, %c0_14] : memref<2x1xf32, #tpu.memory_space<vmem>>, vector<2x1xf32>
    tpu.vector_store %arg8[%c0_13, %c0_14], %18 {strides = array<i32>} : memref<2x1xf32, #tpu.memory_space<vmem>>, vector<2x1xf32>,
    %c1_i32 = arith.constant 1 : i32
    %20 = arith.cmpi eq, %arg1, %c1_i32 : i32
    %21 = arith.extui %20 : i1 to i32
    %c0_i32_15 = arith.constant 0 : i32
    %22 = arith.cmpi ne, %21, %c0_i32_15 : i32
    scf.if %22 {
      %c0_16 = arith.constant 0 : index
      %c0_17 = arith.constant 0 : index
      %23 = vector.load %arg8[%c0_16, %c0_17] : memref<2x1xf32, #tpu.memory_space<vmem>>, vector<2x1xf32>
      %c0_18 = arith.constant 0 : index
      %c0_19 = arith.constant 0 : index
      %c0_20 = arith.constant 0 : index
      %24 = vector.load %arg6[%c0_18, %c0_19, %c0_20] : memref<1x2x1xf32, #tpu.memory_space<vmem>>, vector<1x2x1xf32>
      %25 = vector.shape_cast %24 : vector<1x2x1xf32> to vector<2x1xf32>
      %26 = vector.shape_cast %23 : vector<2x1xf32> to vector<1x2x1xf32>
      tpu.vector_store %arg6[%c0_18, %c0_19, %c0_20], %26 {strides = array<i32>} : memref<1x2x1xf32, #tpu.memory_space<vmem>>, vector<1x2x1xf32>,
    } else {
    }
    return
  }
  func.func @transform_0(%arg0: i32, %arg1: i32) -> (i32, i32) {
    %c0_i32 = arith.constant 0 : i32
    %c0_i32_0 = arith.constant 0 : i32
    %c0_i32_1 = arith.constant 0 : i32
    return %c0_i32, %c0_i32_0 : i32, i32
  }
  func.func @transform_1(%arg0: i32, %arg1: i32) -> (i32, i32, i32) {
    %c2_i32 = arith.constant 2 : i32
    %0 = arith.muli %arg0, %c2_i32 : i32
    %1 = arith.addi %0, %arg1 : i32
    %c0_i32 = arith.constant 0 : i32
    %c0_i32_0 = arith.constant 0 : i32
    %c0_i32_1 = arith.constant 0 : i32
    return %1, %c0_i32, %c0_i32_0 : i32, i32, i32
  }
  func.func @transform_2(%arg0: i32, %arg1: i32) -> (i32, i32) {
    %c2_i32 = arith.constant 2 : i32
    %0 = arith.muli %arg0, %c2_i32 : i32
    %1 = arith.addi %0, %arg1 : i32
    %c0_i32 = arith.constant 0 : i32
    %c0_i32_0 = arith.constant 0 : i32
    return %c0_i32, %1 : i32, i32
  }
  func.func @transform_3(%arg0: i32, %arg1: i32) -> (i32, i32) {
    %c2_i32 = arith.constant 2 : i32
    %0 = arith.muli %arg0, %c2_i32 : i32
    %1 = arith.addi %0, %arg1 : i32
    %c0_i32 = arith.constant 0 : i32
    %c0_i32_0 = arith.constant 0 : i32
    return %c0_i32, %1 : i32, i32
  }
  func.func @transform_4(%arg0: i32, %arg1: i32) -> (i32, i32, i32) {
    %c0_i32 = arith.constant 0 : i32
    %c0_i32_0 = arith.constant 0 : i32
    %c0_i32_1 = arith.constant 0 : i32
    return %arg0, %c0_i32, %c0_i32_0 : i32, i32, i32
  }
}

</mosaic_0001>

<llo_original>
// kernel: tpu_custom_call.1
$region0: #{tpu_custom_call.1}
  #allocation0 [shape = 'u32[]', space=smem, size = 0x4, offset = 0x4, fixed_abs, tag = 'smem constant byte address 0x4 - core index']
  #allocation1 [shape = 'u32[144,128]{1,0:T(1,128)}', space=vmem, size = 0x12000, scoped, tag = 'internal scratch']
  #allocation2 [shape = 'bf16[2,4704]{1,0:T(2,128)(2,1)}', space=vmem, size = 0x4a00, scoped, tag = 'scratch operand']
  #allocation3 [shape = 'f32[2,1]{1,0:T(2,128)}', space=vmem, size = 0x400, scoped, tag = 'scratch operand']
  %s0 = inlined_call_operand.hbm [shape: f32[2,4704], index: 0, kind: input, shape index: {}]
  %s1 = inlined_call_operand.hbm [shape: bf16[4,4704,512], index: 1, kind: input, shape index: {}]
  %s2 = inlined_call_operand.hbm [shape: f32[1,2048], index: 2, kind: input, shape index: {}]
  %s3 = inlined_call_operand.hbm [shape: f32[1,2048], index: 3, kind: input, shape index: {}]
  %s4 = inlined_call_operand.vmem [shape: f32[2,2,1], index: 4, kind: output, shape index: {}]
  %s5 = sld [smem:[#allocation0]]
  $region73: #{tpu_custom_call.1} parent=0
    _
  %s7 = ssub.s32 1, %s5
  %s8 = scalar_select 0, %s7, %s5
  $region1: #{tpu_custom_call.1} parent=0
    #allocation4 [shape = 'u8[37888]{0}', space=vmem, size = 0x9400, scoped, tag = 'input window, operand 0, single buffered']
    #allocation5 [shape = 's32[2]{0}', space=sflag, size = 0x8, scoped, tag = 'scoped memory for tpu_custom_call.1']
    #allocation6 [shape = 'u8[9633792]{0}', space=vmem, size = 0x930000, scoped, tag = 'input window, operand 1']
    #allocation7 [shape = 's32[2]{0}', space=sflag, size = 0x8, scoped, tag = 'scoped memory for tpu_custom_call.1']
    #allocation8 [shape = 'u8[4096]{0}', space=vmem, size = 0x1000, scoped, tag = 'input window, operand 2']
    #allocation9 [shape = 'u8[4096]{0}', space=vmem, size = 0x1000, scoped, tag = 'input window, operand 3']
    #allocation10 [shape = 's32[2]{0}', space=sflag, size = 0x8, scoped, tag = 'scoped memory for tpu_custom_call.1']
    %9 = vsyncpa [#allocation5], 0
    %10 = vsyncpa [#allocation7], 0
    %s11 = scalar_lea.sflag [#allocation7], 1
    %12 = vsyncpa %s11, 0
    %13 = vsyncpa [#allocation10], 0
    %s14 = scalar_lea.sflag [#allocation10], 1
    %15 = vsyncpa %s14, 0
    loop: start=0, step=1, limit=6
    $region2: #{tpu_custom_call.1} parent=1 // loop_pre_header
      _
    $region3: #{tpu_custom_call.1} parent=1 // loop_header
      %s17 = sphi 0, %s21
      %p18 = scmp.ge.s32.totalorder %s17, 6
      %s24 = sphi 0, %s36
      %s25 = sphi 0, %s32
      %s26 = sphi 0, %s24
      %s27 = sphi 0, %s25
      %s28 = sphi 0, %s26
      %s29 = sphi 0, %s27
      %s37 = sphi 0, %s37
      %s39 = sphi 0, %s37
      %s40 = sphi 0, %s39
      %s54 = sphi 0, %s40
      %s64 = sphi 0, %s66
      %s67 = sphi 0, %s64
      %s68 = sphi 0, %s67
      %s84 = sphi 0, %s68
      %s94 = sphi 0, %s96
      %s97 = sphi 0, %s94
      %s98 = sphi 0, %s97
      %s114 = sphi 0, %s98
      %s124 = sphi 0, %s126
      %s127 = sphi 0, %s124
      %s128 = sphi 0, %s127
      %s144 = sphi 0, %s128
      %s150 = sphi 0, %s152
      %s153 = sphi 0, %s150
      %s154 = sphi 0, %s153
      %s170 = sphi 0, %s154
    $region4: #{tpu_custom_call.1} parent=1 // loop_header_branch
      %20 = sbr.rel (%p18) target = $region8
    $region5: #{tpu_custom_call.1} parent=1 // loop_body
      %s22 = ssub.s32 %s17, 1
      %s23 = ssub.s32 %s17, 2
      %s30 = sadd.s32 1, %s25
      %p31 = scmp.ge.s32.totalorder %s30, 2
      %s32 = scalar_select %p31, 0, %s30
      %s33 = sadd.s32 1, %s24
      %s34 = scalar_select %p31, %s33, %s24
      %p35 = scmp.ge.s32.totalorder %s34, 2
      %s36 = scalar_select %p35, 0, %s34
      %s38 = sadd.s32 %s37, 1
      %p41 = scmp.eq.s32.totalorder %s17, 3
      %p42 = scmp.ne.s32.totalorder %s37, %s39
      %p43 = scmp.eq.s32.totalorder %s17, 0
      %p44 = por %p42, %p43
      %p45 = scmp.ne.s32.totalorder %s37, %s39
      %p46 = scmp.eq.s32.totalorder %s22, 3
      %p47 = por %p45, %p46
      %p48 = scmp.ne.s32.totalorder %s39, %s40
      %p49 = scmp.eq.s32.totalorder %s22, 0
      %p50 = por %p48, %p49
      %p51 = scmp.ne.s32.totalorder %s39, %s40
      %p52 = scmp.eq.s32.totalorder %s23, 3
      %p53 = por %p51, %p52
      %p55 = scmp.ne.s32.totalorder %s40, %s54
      %p56 = scmp.eq.s32.totalorder %s23, 0
      %p57 = por %p55, %p56
      %s58 = smul.u32 %s24, 2
      %s59 = sadd.s32 %s58, %s25
      %s60 = smul.u32 %s36, 2
      %s61 = sadd.s32 %s60, %s32
      %s62 = ssub.s32 %s59, %s61
      %p63 = scmp.eq.s32.totalorder %s62, 0
      %s65 = sadd.s32 %s64, 1
      %s66 = scalar_select %p63, %s64, %s65
      %p69 = pneg %p63
      %p70 = scmp.eq.s32.totalorder %s17, 3
      %p71 = por %p69, %p70
      %p72 = scmp.ne.s32.totalorder %s64, %s67
      %p73 = scmp.eq.s32.totalorder %s17, 0
      %p74 = por %p72, %p73
      %p75 = scmp.ne.s32.totalorder %s64, %s67
      %p76 = scmp.eq.s32.totalorder %s22, 3
      %p77 = por %p75, %p76
      %p78 = scmp.ne.s32.totalorder %s67, %s68
      %p79 = scmp.eq.s32.totalorder %s22, 0
      %p80 = por %p78, %p79
      %p81 = scmp.ne.s32.totalorder %s67, %s68
      %p82 = scmp.eq.s32.totalorder %s23, 3
      %p83 = por %p81, %p82
      %p85 = scmp.ne.s32.totalorder %s68, %s84
      %p86 = scmp.eq.s32.totalorder %s23, 0
      %p87 = por %p85, %p86
      %s88 = smul.u32 %s24, 2
      %s89 = sadd.s32 %s88, %s25
      %s90 = smul.u32 %s36, 2
      %s91 = sadd.s32 %s90, %s32
      %s92 = ssub.s32 %s89, %s91
      %p93 = scmp.eq.s32.totalorder %s92, 0
      %s95 = sadd.s32 %s94, 1
      %s96 = scalar_select %p93, %s94, %s95
      %p99 = pneg %p93
      %p100 = scmp.eq.s32.totalorder %s17, 3
      %p101 = por %p99, %p100
      %p102 = scmp.ne.s32.totalorder %s94, %s97
      %p103 = scmp.eq.s32.totalorder %s17, 0
      %p104 = por %p102, %p103
      %p105 = scmp.ne.s32.totalorder %s94, %s97
      %p106 = scmp.eq.s32.totalorder %s22, 3
      %p107 = por %p105, %p106
      %p108 = scmp.ne.s32.totalorder %s97, %s98
      %p109 = scmp.eq.s32.totalorder %s22, 0
      %p110 = por %p108, %p109
      %p111 = scmp.ne.s32.totalorder %s97, %s98
      %p112 = scmp.eq.s32.totalorder %s23, 3
      %p113 = por %p111, %p112
      %p115 = scmp.ne.s32.totalorder %s98, %s114
      %p116 = scmp.eq.s32.totalorder %s23, 0
      %p117 = por %p115, %p116
      %s118 = smul.u32 %s24, 2
      %s119 = sadd.s32 %s118, %s25
      %s120 = smul.u32 %s36, 2
      %s121 = sadd.s32 %s120, %s32
      %s122 = ssub.s32 %s119, %s121
      %p123 = scmp.eq.s32.totalorder %s122, 0
      %s125 = sadd.s32 %s124, 1
      %s126 = scalar_select %p123, %s124, %s125
      %p129 = pneg %p123
      %p130 = scmp.eq.s32.totalorder %s17, 3
      %p131 = por %p129, %p130
      %p132 = scmp.ne.s32.totalorder %s124, %s127
      %p133 = scmp.eq.s32.totalorder %s17, 0
      %p134 = por %p132, %p133
      %p135 = scmp.ne.s32.totalorder %s124, %s127
      %p136 = scmp.eq.s32.totalorder %s22, 3
      %p137 = por %p135, %p136
      %p138 = scmp.ne.s32.totalorder %s127, %s128
      %p139 = scmp.eq.s32.totalorder %s22, 0
      %p140 = por %p138, %p139
      %p141 = scmp.ne.s32.totalorder %s127, %s128
      %p142 = scmp.eq.s32.totalorder %s23, 3
      %p143 = por %p141, %p142
      %p145 = scmp.ne.s32.totalorder %s128, %s144
      %p146 = scmp.eq.s32.totalorder %s23, 0
      %p147 = por %p145, %p146
      %s148 = ssub.s32 %s24, %s36
      %p149 = scmp.eq.s32.totalorder %s148, 0
      %s151 = sadd.s32 %s150, 1
      %s152 = scalar_select %p149, %s150, %s151
      %p155 = pneg %p149
      %p156 = scmp.eq.s32.totalorder %s17, 3
      %p157 = por %p155, %p156
      %p158 = scmp.ne.s32.totalorder %s150, %s153
      %p159 = scmp.eq.s32.totalorder %s17, 0
      %p160 = por %p158, %p159
      %p161 = scmp.ne.s32.totalorder %s150, %s153
      %p162 = scmp.eq.s32.totalorder %s22, 3
      %p163 = por %p161, %p162
      %p164 = scmp.ne.s32.totalorder %s153, %s154
      %p165 = scmp.eq.s32.totalorder %s22, 0
      %p166 = por %p164, %p165
      %p167 = scmp.ne.s32.totalorder %s153, %s154
      %p168 = scmp.eq.s32.totalorder %s23, 3
      %p169 = por %p167, %p168
      %p171 = scmp.ne.s32.totalorder %s154, %s170
      %p172 = scmp.eq.s32.totalorder %s23, 0
      %p173 = por %p171, %p172
      %p174 = scmp.le.s32.totalorder 1, %s17
      %p175 = scmp.lt.s32.totalorder %s17, 5
      %p176 = pnand %p174, %p175
      %p177 = pneg %p176
      // Predicated region
      $region9: #{tpu_custom_call.1} parent=5 // pred_check
        _
      $region10: #{tpu_custom_call.1} parent=5 // pred_check_branch
        %179 = sbr.rel (%p176) target = $region12
      $region11: #{tpu_custom_call.1} parent=5 // pred_region
        %s180 = ssub.s32 %s17, 1
        // Predicated region
        $region13: #{tpu_custom_call.1} parent=11 // pred_check
          %p181 = pneg %p50
        $region14: #{tpu_custom_call.1} parent=11 // pred_check_branch
          %183 = sbr.rel (%p181) target = $region16
        $region15: #{tpu_custom_call.1} parent=11 // pred_region
          %s185 = ssub.s32 1184, 1184
          %186 = vsyncadd [#allocation5], %s185
          %s188 = sshll.u32 [#allocation4], 4
          %s189 = int_to_ptr.vmem [resolvable:$true] %s188
          %191 = dma.hbm_to_vmem [thread:$0]  %s0, 1184, %s189, [#allocation5]
        $region16: #{tpu_custom_call.1} parent=11 // pred_fallthru
          _
      $region12: #{tpu_custom_call.1} parent=5 // pred_fallthru
        _
      %p192 = scmp.lt.s32.totalorder %s17, 4
      // Predicated region
      $region17: #{tpu_custom_call.1} parent=5 // pred_check
        %p193 = pneg %p192
      $region18: #{tpu_custom_call.1} parent=5 // pred_check_branch
        %195 = sbr.rel (%p193) target = $region20
      $region19: #{tpu_custom_call.1} parent=5 // pred_region
        // Predicated region
        $region21: #{tpu_custom_call.1} parent=19 // pred_check
          %p196 = pneg %p74
        $region22: #{tpu_custom_call.1} parent=19 // pred_check_branch
          %198 = sbr.rel (%p196) target = $region24
        $region23: #{tpu_custom_call.1} parent=19 // pred_region
          %s199 = sand.u32 %s17, 1
          %s200 = scalar_lea.sflag [#allocation7], %s199
          %s201 = sand.u32 %s64, 1
          %s202 = smul.addr %s201, 9408
          %s203 = scalar_lea.vmem [#allocation6], %s202
          %s204 = smul.u32 %s24, 2
          %s205 = sadd.s32 %s204, %s25
          %s207 = ssub.s32 150528, 150528
          %208 = vsyncadd %s200, %s207
          %s209 = smul.addr %s205, 2352
          %s210 = smul.addr %s209, 64
          %s211 = scalar_lea.hbm %s1, %s210
          %s212 = sshll.u32 %s203, 4
          %s213 = int_to_ptr.vmem [resolvable:$true] %s212
          %218 = dma.hbm_to_vmem [thread:$0]  %s211, 150528, %s213, %s200, 256, 256, 16
        $region24: #{tpu_custom_call.1} parent=19 // pred_fallthru
          _
        // Predicated region
        $region25: #{tpu_custom_call.1} parent=19 // pred_check
          %p219 = pneg %p104
        $region26: #{tpu_custom_call.1} parent=19 // pred_check_branch
          %221 = sbr.rel (%p219) target = $region28
        $region27: #{tpu_custom_call.1} parent=19 // pred_region
          %s222 = sand.u32 %s17, 1
          %s223 = scalar_lea.sflag [#allocation7], %s222
          %s224 = sand.u32 %s94, 1
          %s225 = smul.addr %s224, 4
          %s226 = scalar_lea.vmem [#allocation8], %s225
          %s227 = smul.u32 %s24, 2
          %s228 = sadd.s32 %s227, %s25
          %s229 = smul.u32 4, %s228
          %s231 = ssub.s32 64, 64
          %232 = vsyncadd %s223, %s231
          %s233 = smul.addr %s229, 16
          %s234 = scalar_lea.hbm %s2, %s233
          %s236 = sshll.u32 %s226, 4
          %s237 = int_to_ptr.vmem [resolvable:$true] %s236
          %239 = dma.hbm_to_vmem [thread:$0]  %s234, 64, %s237, %s223
        $region28: #{tpu_custom_call.1} parent=19 // pred_fallthru
          _
        // Predicated region
        $region29: #{tpu_custom_call.1} parent=19 // pred_check
          %p240 = pneg %p134
        $region30: #{tpu_custom_call.1} parent=19 // pred_check_branch
          %242 = sbr.rel (%p240) target = $region32
        $region31: #{tpu_custom_call.1} parent=19 // pred_region
          %s243 = sand.u32 %s124, 1
          %s244 = scalar_lea.sflag [#allocation10], %s243
          %s245 = sand.u32 %s124, 1
          %s246 = smul.addr %s245, 4
          %s247 = scalar_lea.vmem [#allocation9], %s246
          %s248 = smul.u32 %s24, 2
          %s249 = sadd.s32 %s248, %s25
          %s250 = smul.u32 4, %s249
          %s252 = ssub.s32 64, 64
          %253 = vsyncadd %s244, %s252
          %s254 = smul.addr %s250, 16
          %s255 = scalar_lea.hbm %s3, %s254
          %s257 = sshll.u32 %s247, 4
          %s258 = int_to_ptr.vmem [resolvable:$true] %s257
          %260 = dma.hbm_to_vmem [thread:$0]  %s255, 64, %s258, %s244
        $region32: #{tpu_custom_call.1} parent=19 // pred_fallthru
          _
      $region20: #{tpu_custom_call.1} parent=5 // pred_fallthru
        _
      %p261 = scmp.le.s32.totalorder 1, %s17
      %p262 = scmp.lt.s32.totalorder %s17, 5
      %p263 = pnand %p261, %p262
      %p264 = pneg %p263
      // Predicated region
      $region33: #{tpu_custom_call.1} parent=5 // pred_check
        _
      $region34: #{tpu_custom_call.1} parent=5 // pred_check_branch
        %266 = sbr.rel (%p263) target = $region36
      $region35: #{tpu_custom_call.1} parent=5 // pred_region
        %s267 = ssub.s32 %s17, 1
        // Predicated region
        $region37: #{tpu_custom_call.1} parent=35 // pred_check
          %p268 = pneg %p50
        $region38: #{tpu_custom_call.1} parent=35 // pred_check_branch
          %270 = sbr.rel (%p268) target = $region40
        $region39: #{tpu_custom_call.1} parent=35 // pred_region
          %271 = dma.done [#allocation5], 1184
        $region40: #{tpu_custom_call.1} parent=35 // pred_fallthru
          _
        %s272 = sand.u32 %s22, 1
        %s273 = scalar_lea.sflag [#allocation7], %s272
        %s274 = sand.u32 %s67, 1
        %s275 = smul.addr %s274, 9408
        %s276 = scalar_lea.vmem [#allocation6], %s275
        // Predicated region
        $region41: #{tpu_custom_call.1} parent=35 // pred_check
          %p277 = pneg %p80
        $region42: #{tpu_custom_call.1} parent=35 // pred_check_branch
          %279 = sbr.rel (%p277) target = $region44
        $region43: #{tpu_custom_call.1} parent=35 // pred_region
          %280 = dma.done %s273, 150528
        $region44: #{tpu_custom_call.1} parent=35 // pred_fallthru
          _
        %s281 = sand.u32 %s22, 1
        %s282 = scalar_lea.sflag [#allocation7], %s281
        %s283 = sand.u32 %s97, 1
        %s284 = smul.addr %s283, 4
        %s285 = scalar_lea.vmem [#allocation8], %s284
        // Predicated region
        $region45: #{tpu_custom_call.1} parent=35 // pred_check
          %p286 = pneg %p110
        $region46: #{tpu_custom_call.1} parent=35 // pred_check_branch
          %288 = sbr.rel (%p286) target = $region48
        $region47: #{tpu_custom_call.1} parent=35 // pred_region
          %289 = dma.done %s282, 64
        $region48: #{tpu_custom_call.1} parent=35 // pred_fallthru
          _
        %s290 = sand.u32 %s127, 1
        %s291 = scalar_lea.sflag [#allocation10], %s290
        %s292 = sand.u32 %s127, 1
        %s293 = smul.addr %s292, 4
        %s294 = scalar_lea.vmem [#allocation9], %s293
        // Predicated region
        $region49: #{tpu_custom_call.1} parent=35 // pred_check
          %p295 = pneg %p140
        $region50: #{tpu_custom_call.1} parent=35 // pred_check_branch
          %297 = sbr.rel (%p295) target = $region52
        $region51: #{tpu_custom_call.1} parent=35 // pred_region
          %298 = dma.done %s291, 64
        $region52: #{tpu_custom_call.1} parent=35 // pred_fallthru
          _
        %p299 = pneg %p50
        %p300 = pneg %p47
        %s301 = sand.u32 %s22, 1
        %s302 = scalar_lea.sflag [#allocation7], %s301
        %s303 = sand.u32 %s67, 1
        %s304 = smul.addr %s303, 9408
        %s305 = scalar_lea.vmem [#allocation6], %s304
        %p306 = pneg %p80
        %p307 = pneg %p77
        %s308 = sand.u32 %s22, 1
        %s309 = scalar_lea.sflag [#allocation7], %s308
        %s310 = sand.u32 %s97, 1
        %s311 = smul.addr %s310, 4
        %s312 = scalar_lea.vmem [#allocation8], %s311
        %p313 = pneg %p110
        %p314 = pneg %p107
        %s315 = sand.u32 %s127, 1
        %s316 = scalar_lea.sflag [#allocation10], %s315
        %s317 = sand.u32 %s127, 1
        %s318 = smul.addr %s317, 4
        %s319 = scalar_lea.vmem [#allocation9], %s318
        %p320 = pneg %p140
        %p321 = pneg %p137
        %p322 = pneg %p166
        %p323 = pneg %p163
        %p324 = scmp.lt.s32.totalorder %s26, 1
        %s325 = scalar_select %p324, %s26, 1
        %s326 = smul.addr %s325, 2
        %s327 = scalar_lea.vmem %s4, %s326
        %s328 = smul.u32 %s26, 2
        %s329 = sadd.s32 %s328, %s27
        %s330 = smul.u32 %s26, 2
        %s331 = sadd.s32 %s330, %s27
        %s332 = smul.u32 4, %s331
        %s333 = smul.u32 %s26, 2
        %s334 = sadd.s32 %s333, %s27
        %s335 = smul.u32 4, %s334
        %p336 = scmp.lt.s32.totalorder %s26, 1
        %s337 = scalar_select %p336, %s26, 1
        %s338 = smul.addr %s337, 2
        %s339 = scalar_lea.vmem %s4, %s338
        %p341 = scmp.eq.s32.totalorder %s27, 0
        // Predicated region
        $region53: #{tpu_custom_call.1} parent=35 // pred_check
          %p342 = pneg %p341
        $region54: #{tpu_custom_call.1} parent=35 // pred_check_branch
          %344 = sbr.rel (%p342) target = $region56
        $region55: #{tpu_custom_call.1} parent=35 // pred_region
          %v345 = vld [vmem:[#allocation4] sm:$0xff]
          %v346 = vld [vmem:[#allocation4 + $0x8] sm:$0xff]
          %v347 = vld [vmem:[#allocation4 + $0x10] sm:$0xff]
          %v348 = vld [vmem:[#allocation4 + $0x18] sm:$0xff]
          %v349 = vld [vmem:[#allocation4 + $0x20] sm:$0xff]
          %v350 = vld [vmem:[#allocation4 + $0x28] sm:$0xff]
          %v351 = vld [vmem:[#allocation4 + $0x30] sm:$0xff]
          %v352 = vld [vmem:[#allocation4 + $0x38] sm:$0xff]
          %v353 = vld [vmem:[#allocation4 + $0x40] sm:$0xff]
          %v354 = vld [vmem:[#allocation4 + $0x48] sm:$0x3]
          %v355 = vmax.f32 %v345, 0.0
          %v356 = vmax.f32 %v346, 0.0
          %v357 = vmax.f32 %v347, 0.0
          %v358 = vmax.f32 %v348, 0.0
          %v359 = vmax.f32 %v349, 0.0
          %v360 = vmax.f32 %v350, 0.0
          %v361 = vmax.f32 %v351, 0.0
          %v362 = vmax.f32 %v352, 0.0
          %v363 = vmax.f32 %v353, 0.0
          %v364 = vmax.f32 %v354, 0.0
          %v375 = vcombine.high %v355, %v355
          %v377 = vunpack.c.l.s4 1983009808
          %v378 = vunpack.c.0.s8 %v377
          %v379 = vlaneseq
          %v380 = vshrl.u32 %v379, 7
          %v381 = vsub.s32 %v378, %v380
          %v382 = vrot.slane %v355, %v381
          %v384 = vunpack.c.l.s4 1983009808
          %v385 = vunpack.c.0.s8 %v384
          %v386 = vlaneseq
          %v387 = vshrl.u32 %v386, 7
          %v388 = vsub.s32 %v385, %v387
          %v389 = vrot.slane %v375, %v388
          %v390 = vcombine.high %v382, %v382
          %v391 = vcombine.high %v389, %v389
          %v392 = vcombine.high %v356, %v356
          %v394 = vunpack.c.l.s4 1983009808
          %v395 = vunpack.c.0.s8 %v394
          %v396 = vlaneseq
          %v397 = vshrl.u32 %v396, 7
          %v398 = vsub.s32 %v395, %v397
          %v399 = vrot.slane %v356, %v398
          %v401 = vunpack.c.l.s4 1983009808
          %v402 = vunpack.c.0.s8 %v401
          %v403 = vlaneseq
          %v404 = vshrl.u32 %v403, 7
          %v405 = vsub.s32 %v402, %v404
          %v406 = vrot.slane %v392, %v405
          %v407 = vcombine.high %v399, %v399
          %v408 = vcombine.high %v406, %v406
          %v409 = vcombine.high %v357, %v357
          %v411 = vunpack.c.l.s4 1983009808
          %v412 = vunpack.c.0.s8 %v411
          %v413 = vlaneseq
          %v414 = vshrl.u32 %v413, 7
          %v415 = vsub.s32 %v412, %v414
          %v416 = vrot.slane %v357, %v415
          %v418 = vunpack.c.l.s4 1983009808
          %v419 = vunpack.c.0.s8 %v418
          %v420 = vlaneseq
          %v421 = vshrl.u32 %v420, 7
          %v422 = vsub.s32 %v419, %v421
          %v423 = vrot.slane %v409, %v422
          %v424 = vcombine.high %v416, %v416
          %v425 = vcombine.high %v423, %v423
          %v426 = vcombine.high %v358, %v358
          %v428 = vunpack.c.l.s4 1983009808
          %v429 = vunpack.c.0.s8 %v428
          %v430 = vlaneseq
          %v431 = vshrl.u32 %v430, 7
          %v432 = vsub.s32 %v429, %v431
          %v433 = vrot.slane %v358, %v432
          %v435 = vunpack.c.l.s4 1983009808
          %v436 = vunpack.c.0.s8 %v435
          %v437 = vlaneseq
          %v438 = vshrl.u32 %v437, 7
          %v439 = vsub.s32 %v436, %v438
          %v440 = vrot.slane %v426, %v439
          %v441 = vcombine.high %v433, %v433
          %v442 = vcombine.high %v440, %v440
          %v443 = vcombine.high %v359, %v359
          %v445 = vunpack.c.l.s4 1983009808
          %v446 = vunpack.c.0.s8 %v445
          %v447 = vlaneseq
          %v448 = vshrl.u32 %v447, 7
          %v449 = vsub.s32 %v446, %v448
          %v450 = vrot.slane %v359, %v449
          %v452 = vunpack.c.l.s4 1983009808
          %v453 = vunpack.c.0.s8 %v452
          %v454 = vlaneseq
          %v455 = vshrl.u32 %v454, 7
          %v456 = vsub.s32 %v453, %v455
          %v457 = vrot.slane %v443, %v456
          %v458 = vcombine.high %v450, %v450
          %v459 = vcombine.high %v457, %v457
          %v460 = vcombine.high %v360, %v360
          %v462 = vunpack.c.l.s4 1983009808
          %v463 = vunpack.c.0.s8 %v462
          %v464 = vlaneseq
          %v465 = vshrl.u32 %v464, 7
          %v466 = vsub.s32 %v463, %v465
          %v467 = vrot.slane %v360, %v466
          %v469 = vunpack.c.l.s4 1983009808
          %v470 = vunpack.c.0.s8 %v469
          %v471 = vlaneseq
          %v472 = vshrl.u32 %v471, 7
          %v473 = vsub.s32 %v470, %v472
          %v474 = vrot.slane %v460, %v473
          %v475 = vcombine.high %v467, %v467
          %v476 = vcombine.high %v474, %v474
          %v477 = vcombine.high %v361, %v361
          %v479 = vunpack.c.l.s4 1983009808
          %v480 = vunpack.c.0.s8 %v479
          %v481 = vlaneseq
          %v482 = vshrl.u32 %v481, 7
          %v483 = vsub.s32 %v480, %v482
          %v484 = vrot.slane %v361, %v483
          %v486 = vunpack.c.l.s4 1983009808
          %v487 = vunpack.c.0.s8 %v486
          %v488 = vlaneseq
          %v489 = vshrl.u32 %v488, 7
          %v490 = vsub.s32 %v487, %v489
          %v491 = vrot.slane %v477, %v490
          %v492 = vcombine.high %v484, %v484
          %v493 = vcombine.high %v491, %v491
          %v494 = vcombine.high %v362, %v362
          %v496 = vunpack.c.l.s4 1983009808
          %v497 = vunpack.c.0.s8 %v496
          %v498 = vlaneseq
          %v499 = vshrl.u32 %v498, 7
          %v500 = vsub.s32 %v497, %v499
          %v501 = vrot.slane %v362, %v500
          %v503 = vunpack.c.l.s4 1983009808
          %v504 = vunpack.c.0.s8 %v503
          %v505 = vlaneseq
          %v506 = vshrl.u32 %v505, 7
          %v507 = vsub.s32 %v504, %v506
          %v508 = vrot.slane %v494, %v507
          %v509 = vcombine.high %v501, %v501
          %v510 = vcombine.high %v508, %v508
          %v511 = vcombine.high %v363, %v363
          %v513 = vunpack.c.l.s4 1983009808
          %v514 = vunpack.c.0.s8 %v513
          %v515 = vlaneseq
          %v516 = vshrl.u32 %v515, 7
          %v517 = vsub.s32 %v514, %v516
          %v518 = vrot.slane %v363, %v517
          %v520 = vunpack.c.l.s4 1983009808
          %v521 = vunpack.c.0.s8 %v520
          %v522 = vlaneseq
          %v523 = vshrl.u32 %v522, 7
          %v524 = vsub.s32 %v521, %v523
          %v525 = vrot.slane %v511, %v524
          %v526 = vcombine.high %v518, %v518
          %v527 = vcombine.high %v525, %v525
          %v529 = vunpack.c.l.s4 1983009808
          %v530 = vunpack.c.0.s8 %v529
          %v531 = vlaneseq
          %v532 = vshrl.u32 %v531, 7
          %v533 = vsub.s32 %v530, %v532
          %v534 = vrot.slane %v364, %v533
          %v572 = vpack.c.bf16 %v382, %v382
          %v573 = vpack.c.bf16 %v390, %v390
          %v574 = vpack.c.bf16 %v389, %v389
          %v575 = vpack.c.bf16 %v391, %v391
          %v576 = vpack.c.bf16 %v399, %v399
          %v577 = vpack.c.bf16 %v407, %v407
          %v578 = vpack.c.bf16 %v406, %v406
          %v579 = vpack.c.bf16 %v408, %v408
          %v580 = vpack.c.bf16 %v416, %v416
          %v581 = vpack.c.bf16 %v424, %v424
          %v582 = vpack.c.bf16 %v423, %v423
          %v583 = vpack.c.bf16 %v425, %v425
          %v584 = vpack.c.bf16 %v433, %v433
          %v585 = vpack.c.bf16 %v441, %v441
          %v586 = vpack.c.bf16 %v440, %v440
          %v587 = vpack.c.bf16 %v442, %v442
          %v588 = vpack.c.bf16 %v450, %v450
          %v589 = vpack.c.bf16 %v458, %v458
          %v590 = vpack.c.bf16 %v457, %v457
          %v591 = vpack.c.bf16 %v459, %v459
          %v592 = vpack.c.bf16 %v467, %v467
          %v593 = vpack.c.bf16 %v475, %v475
          %v594 = vpack.c.bf16 %v474, %v474
          %v595 = vpack.c.bf16 %v476, %v476
          %v596 = vpack.c.bf16 %v484, %v484
          %v597 = vpack.c.bf16 %v492, %v492
          %v598 = vpack.c.bf16 %v491, %v491
          %v599 = vpack.c.bf16 %v493, %v493
          %v600 = vpack.c.bf16 %v501, %v501
          %v601 = vpack.c.bf16 %v509, %v509
          %v602 = vpack.c.bf16 %v508, %v508
          %v603 = vpack.c.bf16 %v510, %v510
          %v604 = vpack.c.bf16 %v518, %v518
          %v605 = vpack.c.bf16 %v526, %v526
          %v606 = vpack.c.bf16 %v525, %v525
          %v607 = vpack.c.bf16 %v527, %v527
          %v608 = vpack.c.bf16 %v534, %v534
          %v646 = vcombine.low %v572, %v573
          %v647 = vcombine.low %v574, %v575
          %v648 = vcombine.low %v576, %v577
          %v649 = vcombine.low %v578, %v579
          %v651 = vunpack.c.l.s4 1966171168
          %v652 = vunpack.c.0.s8 %v651
          %v653 = vlaneseq
          %v654 = vshrl.u32 %v653, 7
          %v655 = vsub.s32 %v652, %v654
          %v656 = vrot.slane %v646, %v655
          %v658 = vunpack.c.l.s4 1966171168
          %v659 = vunpack.c.0.s8 %v658
          %v660 = vlaneseq
          %v661 = vshrl.u32 %v660, 7
          %v662 = vsub.s32 %v659, %v661
          %v663 = vrot.slane %v647, %v662
          %v665 = vunpack.c.l.s4 1966171168
          %v666 = vunpack.c.0.s8 %v665
          %v667 = vlaneseq
          %v668 = vshrl.u32 %v667, 7
          %v669 = vsub.s32 %v666, %v668
          %v670 = vrot.slane %v648, %v669
          %v672 = vunpack.c.l.s4 1966171168
          %v673 = vunpack.c.0.s8 %v672
          %v674 = vlaneseq
          %v675 = vshrl.u32 %v674, 7
          %v676 = vsub.s32 %v673, %v675
          %v677 = vrot.slane %v649, %v676
          %v678 = vcombine.low %v656, %v663
          %v679 = vcombine.low %v670, %v677
          %v681 = vunpack.c.l.s4 1966171168
          %v682 = vunpack.c.0.s8 %v681
          %v683 = vlaneseq
          %v684 = vshrl.u32 %v683, 7
          %v685 = vsub.s32 %v682, %v684
          %v686 = vrot.slane %v678, %v685
          %v688 = vunpack.c.l.s4 1966171168
          %v689 = vunpack.c.0.s8 %v688
          %v690 = vlaneseq
          %v691 = vshrl.u32 %v690, 7
          %v692 = vsub.s32 %v689, %v691
          %v693 = vrot.slane %v679, %v692
          %v694 = vcombine.low %v686, %v693
          %v695 = vcombine.low %v580, %v581
          %v696 = vcombine.low %v582, %v583
          %v697 = vcombine.low %v584, %v585
          %v698 = vcombine.low %v586, %v587
          %v700 = vunpack.c.l.s4 1966171168
          %v701 = vunpack.c.0.s8 %v700
          %v702 = vlaneseq
          %v703 = vshrl.u32 %v702, 7
          %v704 = vsub.s32 %v701, %v703
          %v705 = vrot.slane %v695, %v704
          %v707 = vunpack.c.l.s4 1966171168
          %v708 = vunpack.c.0.s8 %v707
          %v709 = vlaneseq
          %v710 = vshrl.u32 %v709, 7
          %v711 = vsub.s32 %v708, %v710
          %v712 = vrot.slane %v696, %v711
          %v714 = vunpack.c.l.s4 1966171168
          %v715 = vunpack.c.0.s8 %v714
          %v716 = vlaneseq
          %v717 = vshrl.u32 %v716, 7
          %v718 = vsub.s32 %v715, %v717
          %v719 = vrot.slane %v697, %v718
          %v721 = vunpack.c.l.s4 1966171168
          %v722 = vunpack.c.0.s8 %v721
          %v723 = vlaneseq
          %v724 = vshrl.u32 %v723, 7
          %v725 = vsub.s32 %v722, %v724
          %v726 = vrot.slane %v698, %v725
          %v727 = vcombine.low %v705, %v712
          %v728 = vcombine.low %v719, %v726
          %v730 = vunpack.c.l.s4 1966171168
          %v731 = vunpack.c.0.s8 %v730
          %v732 = vlaneseq
          %v733 = vshrl.u32 %v732, 7
          %v734 = vsub.s32 %v731, %v733
          %v735 = vrot.slane %v727, %v734
          %v737 = vunpack.c.l.s4 1966171168
          %v738 = vunpack.c.0.s8 %v737
          %v739 = vlaneseq
          %v740 = vshrl.u32 %v739, 7
          %v741 = vsub.s32 %v738, %v740
          %v742 = vrot.slane %v728, %v741
          %v743 = vcombine.low %v735, %v742
          %v744 = vcombine.low %v588, %v589
          %v745 = vcombine.low %v590, %v591
          %v746 = vcombine.low %v592, %v593
          %v747 = vcombine.low %v594, %v595
          %v749 = vunpack.c.l.s4 1966171168
          %v750 = vunpack.c.0.s8 %v749
          %v751 = vlaneseq
          %v752 = vshrl.u32 %v751, 7
          %v753 = vsub.s32 %v750, %v752
          %v754 = vrot.slane %v744, %v753
          %v756 = vunpack.c.l.s4 1966171168
          %v757 = vunpack.c.0.s8 %v756
          %v758 = vlaneseq
          %v759 = vshrl.u32 %v758, 7
          %v760 = vsub.s32 %v757, %v759
          %v761 = vrot.slane %v745, %v760
          %v763 = vunpack.c.l.s4 1966171168
          %v764 = vunpack.c.0.s8 %v763
          %v765 = vlaneseq
          %v766 = vshrl.u32 %v765, 7
          %v767 = vsub.s32 %v764, %v766
          %v768 = vrot.slane %v746, %v767
          %v770 = vunpack.c.l.s4 1966171168
          %v771 = vunpack.c.0.s8 %v770
          %v772 = vlaneseq
          %v773 = vshrl.u32 %v772, 7
          %v774 = vsub.s32 %v771, %v773
          %v775 = vrot.slane %v747, %v774
          %v776 = vcombine.low %v754, %v761
          %v777 = vcombine.low %v768, %v775
          %v779 = vunpack.c.l.s4 1966171168
          %v780 = vunpack.c.0.s8 %v779
          %v781 = vlaneseq
          %v782 = vshrl.u32 %v781, 7
          %v783 = vsub.s32 %v780, %v782
          %v784 = vrot.slane %v776, %v783
          %v786 = vunpack.c.l.s4 1966171168
          %v787 = vunpack.c.0.s8 %v786
          %v788 = vlaneseq
          %v789 = vshrl.u32 %v788, 7
          %v790 = vsub.s32 %v787, %v789
          %v791 = vrot.slane %v777, %v790
          %v792 = vcombine.low %v784, %v791
          %v793 = vcombine.low %v596, %v597
          %v794 = vcombine.low %v598, %v599
          %v795 = vcombine.low %v600, %v601
          %v796 = vcombine.low %v602, %v603
          %v798 = vunpack.c.l.s4 1966171168
          %v799 = vunpack.c.0.s8 %v798
          %v800 = vlaneseq
          %v801 = vshrl.u32 %v800, 7
          %v802 = vsub.s32 %v799, %v801
          %v803 = vrot.slane %v793, %v802
          %v805 = vunpack.c.l.s4 1966171168
          %v806 = vunpack.c.0.s8 %v805
          %v807 = vlaneseq
          %v808 = vshrl.u32 %v807, 7
          %v809 = vsub.s32 %v806, %v808
          %v810 = vrot.slane %v794, %v809
          %v812 = vunpack.c.l.s4 1966171168
          %v813 = vunpack.c.0.s8 %v812
          %v814 = vlaneseq
          %v815 = vshrl.u32 %v814, 7
          %v816 = vsub.s32 %v813, %v815
          %v817 = vrot.slane %v795, %v816
          %v819 = vunpack.c.l.s4 1966171168
          %v820 = vunpack.c.0.s8 %v819
          %v821 = vlaneseq
          %v822 = vshrl.u32 %v821, 7
          %v823 = vsub.s32 %v820, %v822
          %v824 = vrot.slane %v796, %v823
          %v825 = vcombine.low %v803, %v810
          %v826 = vcombine.low %v817, %v824
          %v828 = vunpack.c.l.s4 1966171168
          %v829 = vunpack.c.0.s8 %v828
          %v830 = vlaneseq
          %v831 = vshrl.u32 %v830, 7
          %v832 = vsub.s32 %v829, %v831
          %v833 = vrot.slane %v825, %v832
          %v835 = vunpack.c.l.s4 1966171168
          %v836 = vunpack.c.0.s8 %v835
          %v837 = vlaneseq
          %v838 = vshrl.u32 %v837, 7
          %v839 = vsub.s32 %v836, %v838
          %v840 = vrot.slane %v826, %v839
          %v841 = vcombine.low %v833, %v840
          %v842 = vcombine.low %v604, %v605
          %v843 = vcombine.low %v606, %v607
          %v845 = vunpack.c.l.s4 1966171168
          %v846 = vunpack.c.0.s8 %v845
          %v847 = vlaneseq
          %v848 = vshrl.u32 %v847, 7
          %v849 = vsub.s32 %v846, %v848
          %v850 = vrot.slane %v842, %v849
          %v852 = vunpack.c.l.s4 1966171168
          %v853 = vunpack.c.0.s8 %v852
          %v854 = vlaneseq
          %v855 = vshrl.u32 %v854, 7
          %v856 = vsub.s32 %v853, %v855
          %v857 = vrot.slane %v843, %v856
          %v859 = vunpack.c.l.s4 1966171168
          %v860 = vunpack.c.0.s8 %v859
          %v861 = vlaneseq
          %v862 = vshrl.u32 %v861, 7
          %v863 = vsub.s32 %v860, %v862
          %v864 = vrot.slane %v608, %v863
          %v865 = vcombine.low %v850, %v857
          %v867 = vunpack.c.l.s4 1966171168
          %v868 = vunpack.c.0.s8 %v867
          %v869 = vlaneseq
          %v870 = vshrl.u32 %v869, 7
          %v871 = vsub.s32 %v868, %v870
          %v872 = vrot.slane %v865, %v871
          %v874 = vunpack.c.l.s4 1966171168
          %v875 = vunpack.c.0.s8 %v874
          %v876 = vlaneseq
          %v877 = vshrl.u32 %v876, 7
          %v878 = vsub.s32 %v875, %v877
          %v879 = vrot.slane %v864, %v878
          %v880 = vcombine.low %v872, %v879
          %886 = vst [vmem:[#allocation2] sm:$0xff] %v694
          %887 = vst [vmem:[#allocation2 + $0x8] sm:$0xff] %v743
          %888 = vst [vmem:[#allocation2 + $0x10] sm:$0xff] %v792
          %889 = vst [vmem:[#allocation2 + $0x18] sm:$0xff] %v841
          %vm890 = vcmask 1040384
          %vm891 = vcmask 1041409
          %vm892 = vmor %vm891, %vm890
          %vm893 = vcmask 1042434
          %vm894 = vmor %vm893, %vm892
          %vm895 = vcmask 1043459
          %vm896 = vmor %vm895, %vm894
          %vm897 = vcmask 782340
          %vm898 = vmor %vm897, %vm896
          %899 = vst.msk [vmem:[#allocation2 + $0x20] sm:$0x1f] %vm898, %v880
          %vm900 = vcmask 1024
          %901 = vst.msk [vmem:[#allocation3] sm:$0x3] %vm900, 0.0
        $region56: #{tpu_custom_call.1} parent=35 // pred_fallthru
          _
        %v902 = vld [vmem:[#allocation2] sm:$0xff]
        %v903 = vld [vmem:[#allocation2 + $0x8] sm:$0xff]
        %v904 = vld [vmem:[#allocation2 + $0x10] sm:$0xff]
        %v905 = vld [vmem:[#allocation2 + $0x18] sm:$0xff]
        %v906 = vld [vmem:[#allocation2 + $0x20] sm:$0x1f]
        %v907 = vld [vmem:[%s276] sm:$0xff]
        %v908 = vld [vmem:[%s276 + $0x8] sm:$0xff]
        %v909 = vld [vmem:[%s276 + $0x10] sm:$0xff]
        %v910 = vld [vmem:[%s276 + $0x18] sm:$0xff]
        %v911 = vld [vmem:[%s276 + $0x20] sm:$0xff]
        %v912 = vld [vmem:[%s276 + $0x28] sm:$0xff]
        %v913 = vld [vmem:[%s276 + $0x30] sm:$0xff]
        %v914 = vld [vmem:[%s276 + $0x38] sm:$0xff]
        %v915 = vld [vmem:[%s276 + $0x40] sm:$0xff]
        %v916 = vld [vmem:[%s276 + $0x48] sm:$0xff]
        %v917 = vld [vmem:[%s276 + $0x50] sm:$0xff]
        %v918 = vld [vmem:[%s276 + $0x58] sm:$0xff]
        %v919 = vld [vmem:[%s276 + $0x60] sm:$0xff]
        %v920 = vld [vmem:[%s276 + $0x68] sm:$0xff]
        %v921 = vld [vmem:[%s276 + $0x70] sm:$0xff]
        %v922 = vld [vmem:[%s276 + $0x78] sm:$0xff]
        %v923 = vld [vmem:[%s276 + $0x80] sm:$0xff]
        %v924 = vld [vmem:[%s276 + $0x88] sm:$0xff]
        %v925 = vld [vmem:[%s276 + $0x90] sm:$0xff]
        %v926 = vld [vmem:[%s276 + $0x98] sm:$0xff]
        %v927 = vld [vmem:[%s276 + $0xa0] sm:$0xff]
        %v928 = vld [vmem:[%s276 + $0xa8] sm:$0xff]
        %v929 = vld [vmem:[%s276 + $0xb0] sm:$0xff]
        %v930 = vld [vmem:[%s276 + $0xb8] sm:$0xff]
        %v931 = vld [vmem:[%s276 + $0xc0] sm:$0xff]
        %v932 = vld [vmem:[%s276 + $0xc8] sm:$0xff]
        %v933 = vld [vmem:[%s276 + $0xd0] sm:$0xff]
        %v934 = vld [vmem:[%s276 + $0xd8] sm:$0xff]
        %v935 = vld [vmem:[%s276 + $0xe0] sm:$0xff]
        %v936 = vld [vmem:[%s276 + $0xe8] sm:$0xff]
        %v937 = vld [vmem:[%s276 + $0xf0] sm:$0xff]
        %v938 = vld [vmem:[%s276 + $0xf8] sm:$0xff]
        %v939 = vld [vmem:[%s276 + $0x100] sm:$0xff]
        %v940 = vld [vmem:[%s276 + $0x108] sm:$0xff]
        %v941 = vld [vmem:[%s276 + $0x110] sm:$0xff]
        %v942 = vld [vmem:[%s276 + $0x118] sm:$0xff]
        %v943 = vld [vmem:[%s276 + $0x120] sm:$0xff]
        %v944 = vld [vmem:[%s276 + $0x128] sm:$0xff]
        %v945 = vld [vmem:[%s276 + $0x130] sm:$0xff]
        %v946 = vld [vmem:[%s276 + $0x138] sm:$0xff]
        %v947 = vld [vmem:[%s276 + $0x140] sm:$0xff]
        %v948 = vld [vmem:[%s276 + $0x148] sm:$0xff]
        %v949 = vld [vmem:[%s276 + $0x150] sm:$0xff]
        %v950 = vld [vmem:[%s276 + $0x158] sm:$0xff]
        %v951 = vld [vmem:[%s276 + $0x160] sm:$0xff]
        %v952 = vld [vmem:[%s276 + $0x168] sm:$0xff]
        %v953 = vld [vmem:[%s276 + $0x170] sm:$0xff]
        %v954 = vld [vmem:[%s276 + $0x178] sm:$0xff]
        %v955 = vld [vmem:[%s276 + $0x180] sm:$0xff]
        %v956 = vld [vmem:[%s276 + $0x188] sm:$0xff]
        %v957 = vld [vmem:[%s276 + $0x190] sm:$0xff]
        %v958 = vld [vmem:[%s276 + $0x198] sm:$0xff]
        %v959 = vld [vmem:[%s276 + $0x1a0] sm:$0xff]
        %v960 = vld [vmem:[%s276 + $0x1a8] sm:$0xff]
        %v961 = vld [vmem:[%s276 + $0x1b0] sm:$0xff]
        %v962 = vld [vmem:[%s276 + $0x1b8] sm:$0xff]
        %v963 = vld [vmem:[%s276 + $0x1c0] sm:$0xff]
        %v964 = vld [vmem:[%s276 + $0x1c8] sm:$0xff]
        %v965 = vld [vmem:[%s276 + $0x1d0] sm:$0xff]
        %v966 = vld [vmem:[%s276 + $0x1d8] sm:$0xff]
        %v967 = vld [vmem:[%s276 + $0x1e0] sm:$0xff]
        %v968 = vld [vmem:[%s276 + $0x1e8] sm:$0xff]
        %v969 = vld [vmem:[%s276 + $0x1f0] sm:$0xff]
        %v970 = vld [vmem:[%s276 + $0x1f8] sm:$0xff]
        %v971 = vld [vmem:[%s276 + $0x200] sm:$0xff]
        %v972 = vld [vmem:[%s276 + $0x208] sm:$0xff]
        %v973 = vld [vmem:[%s276 + $0x210] sm:$0xff]
        %v974 = vld [vmem:[%s276 + $0x218] sm:$0xff]
        %v975 = vld [vmem:[%s276 + $0x220] sm:$0xff]
        %v976 = vld [vmem:[%s276 + $0x228] sm:$0xff]
        %v977 = vld [vmem:[%s276 + $0x230] sm:$0xff]
        %v978 = vld [vmem:[%s276 + $0x238] sm:$0xff]
        %v979 = vld [vmem:[%s276 + $0x240] sm:$0xff]
        %v980 = vld [vmem:[%s276 + $0x248] sm:$0xff]
        %v981 = vld [vmem:[%s276 + $0x250] sm:$0xff]
        %v982 = vld [vmem:[%s276 + $0x258] sm:$0xff]
        %v983 = vld [vmem:[%s276 + $0x260] sm:$0xff]
        %v984 = vld [vmem:[%s276 + $0x268] sm:$0xff]
        %v985 = vld [vmem:[%s276 + $0x270] sm:$0xff]
        %v986 = vld [vmem:[%s276 + $0x278] sm:$0xff]
        %v987 = vld [vmem:[%s276 + $0x280] sm:$0xff]
        %v988 = vld [vmem:[%s276 + $0x288] sm:$0xff]
        %v989 = vld [vmem:[%s276 + $0x290] sm:$0xff]
        %v990 = vld [vmem:[%s276 + $0x298] sm:$0xff]
        %v991 = vld [vmem:[%s276 + $0x2a0] sm:$0xff]
        %v992 = vld [vmem:[%s276 + $0x2a8] sm:$0xff]
        %v993 = vld [vmem:[%s276 + $0x2b0] sm:$0xff]
        %v994 = vld [vmem:[%s276 + $0x2b8] sm:$0xff]
        %v995 = vld [vmem:[%s276 + $0x2c0] sm:$0xff]
        %v996 = vld [vmem:[%s276 + $0x2c8] sm:$0xff]
        %v997 = vld [vmem:[%s276 + $0x2d0] sm:$0xff]
        %v998 = vld [vmem:[%s276 + $0x2d8] sm:$0xff]
        %v999 = vld [vmem:[%s276 + $0x2e0] sm:$0xff]
        %v1000 = vld [vmem:[%s276 + $0x2e8] sm:$0xff]
        %v1001 = vld [vmem:[%s276 + $0x2f0] sm:$0xff]
        %v1002 = vld [vmem:[%s276 + $0x2f8] sm:$0xff]
        %v1003 = vld [vmem:[%s276 + $0x300] sm:$0xff]
        %v1004 = vld [vmem:[%s276 + $0x308] sm:$0xff]
        %v1005 = vld [vmem:[%s276 + $0x310] sm:$0xff]
        %v1006 = vld [vmem:[%s276 + $0x318] sm:$0xff]
        %v1007 = vld [vmem:[%s276 + $0x320] sm:$0xff]
        %v1008 = vld [vmem:[%s276 + $0x328] sm:$0xff]
        %v1009 = vld [vmem:[%s276 + $0x330] sm:$0xff]
        %v1010 = vld [vmem:[%s276 + $0x338] sm:$0xff]
        %v1011 = vld [vmem:[%s276 + $0x340] sm:$0xff]
        %v1012 = vld [vmem:[%s276 + $0x348] sm:$0xff]
        %v1013 = vld [vmem:[%s276 + $0x350] sm:$0xff]
        %v1014 = vld [vmem:[%s276 + $0x358] sm:$0xff]
        %v1015 = vld [vmem:[%s276 + $0x360] sm:$0xff]
        %v1016 = vld [vmem:[%s276 + $0x368] sm:$0xff]
        %v1017 = vld [vmem:[%s276 + $0x370] sm:$0xff]
        %v1018 = vld [vmem:[%s276 + $0x378] sm:$0xff]
        %v1019 = vld [vmem:[%s276 + $0x380] sm:$0xff]
        %v1020 = vld [vmem:[%s276 + $0x388] sm:$0xff]
        %v1021 = vld [vmem:[%s276 + $0x390] sm:$0xff]
        %v1022 = vld [vmem:[%s276 + $0x398] sm:$0xff]
        %v1023 = vld [vmem:[%s276 + $0x3a0] sm:$0xff]
        %v1024 = vld [vmem:[%s276 + $0x3a8] sm:$0xff]
        %v1025 = vld [vmem:[%s276 + $0x3b0] sm:$0xff]
        %v1026 = vld [vmem:[%s276 + $0x3b8] sm:$0xff]
        %v1027 = vld [vmem:[%s276 + $0x3c0] sm:$0xff]
        %v1028 = vld [vmem:[%s276 + $0x3c8] sm:$0xff]
        %v1029 = vld [vmem:[%s276 + $0x3d0] sm:$0xff]
        %v1030 = vld [vmem:[%s276 + $0x3d8] sm:$0xff]
        %v1031 = vld [vmem:[%s276 + $0x3e0] sm:$0xff]
        %v1032 = vld [vmem:[%s276 + $0x3e8] sm:$0xff]
        %v1033 = vld [vmem:[%s276 + $0x3f0] sm:$0xff]
        %v1034 = vld [vmem:[%s276 + $0x3f8] sm:$0xff]
        %v1035 = vld [vmem:[%s276 + $0x400] sm:$0xff]
        %v1036 = vld [vmem:[%s276 + $0x408] sm:$0xff]
        %v1037 = vld [vmem:[%s276 + $0x410] sm:$0xff]
        %v1038 = vld [vmem:[%s276 + $0x418] sm:$0xff]
        %v1039 = vld [vmem:[%s276 + $0x420] sm:$0xff]
        %v1040 = vld [vmem:[%s276 + $0x428] sm:$0xff]
        %v1041 = vld [vmem:[%s276 + $0x430] sm:$0xff]
        %v1042 = vld [vmem:[%s276 + $0x438] sm:$0xff]
        %v1043 = vld [vmem:[%s276 + $0x440] sm:$0xff]
        %v1044 = vld [vmem:[%s276 + $0x448] sm:$0xff]
        %v1045 = vld [vmem:[%s276 + $0x450] sm:$0xff]
        %v1046 = vld [vmem:[%s276 + $0x458] sm:$0xff]
        %v1047 = vld [vmem:[%s276 + $0x460] sm:$0xff]
        %v1048 = vld [vmem:[%s276 + $0x468] sm:$0xff]
        %v1049 = vld [vmem:[%s276 + $0x470] sm:$0xff]
        %v1050 = vld [vmem:[%s276 + $0x478] sm:$0xff]
        %v1051 = vld [vmem:[%s276 + $0x480] sm:$0xff]
        %v1052 = vld [vmem:[%s276 + $0x488] sm:$0xff]
        %v1053 = vld [vmem:[%s276 + $0x490] sm:$0xff]
        %v1054 = vld [vmem:[%s276 + $0x498] sm:$0xff]
        %v1055 = vld [vmem:[%s276 + $0x4a0] sm:$0xff]
        %v1056 = vld [vmem:[%s276 + $0x4a8] sm:$0xff]
        %v1057 = vld [vmem:[%s276 + $0x4b0] sm:$0xff]
        %v1058 = vld [vmem:[%s276 + $0x4b8] sm:$0xff]
        %v1059 = vld [vmem:[%s276 + $0x4c0] sm:$0xff]
        %v1060 = vld [vmem:[%s276 + $0x4c8] sm:$0xff]
        %v1061 = vld [vmem:[%s276 + $0x4d0] sm:$0xff]
        %v1062 = vld [vmem:[%s276 + $0x4d8] sm:$0xff]
        %v1063 = vld [vmem:[%s276 + $0x4e0] sm:$0xff]
        %v1064 = vld [vmem:[%s276 + $0x4e8] sm:$0xff]
        %v1065 = vld [vmem:[%s276 + $0x4f0] sm:$0xff]
        %v1066 = vld [vmem:[%s276 + $0x4f8] sm:$0xff]
        %v1067 = vld [vmem:[%s276 + $0x500] sm:$0xff]
        %v1068 = vld [vmem:[%s276 + $0x508] sm:$0xff]
        %v1069 = vld [vmem:[%s276 + $0x510] sm:$0xff]
        %v1070 = vld [vmem:[%s276 + $0x518] sm:$0xff]
        %v1071 = vld [vmem:[%s276 + $0x520] sm:$0xff]
        %v1072 = vld [vmem:[%s276 + $0x528] sm:$0xff]
        %v1073 = vld [vmem:[%s276 + $0x530] sm:$0xff]
        %v1074 = vld [vmem:[%s276 + $0x538] sm:$0xff]
        %v1075 = vld [vmem:[%s276 + $0x540] sm:$0xff]
        %v1076 = vld [vmem:[%s276 + $0x548] sm:$0xff]
        %v1077 = vld [vmem:[%s276 + $0x550] sm:$0xff]
        %v1078 = vld [vmem:[%s276 + $0x558] sm:$0xff]
        %v1079 = vld [vmem:[%s276 + $0x560] sm:$0xff]
        %v1080 = vld [vmem:[%s276 + $0x568] sm:$0xff]
        %v1081 = vld [vmem:[%s276 + $0x570] sm:$0xff]
        %v1082 = vld [vmem:[%s276 + $0x578] sm:$0xff]
        %v1083 = vld [vmem:[%s276 + $0x580] sm:$0xff]
        %v1084 = vld [vmem:[%s276 + $0x588] sm:$0xff]
        %v1085 = vld [vmem:[%s276 + $0x590] sm:$0xff]
        %v1086 = vld [vmem:[%s276 + $0x598] sm:$0xff]
        %v1087 = vld [vmem:[%s276 + $0x5a0] sm:$0xff]
        %v1088 = vld [vmem:[%s276 + $0x5a8] sm:$0xff]
        %v1089 = vld [vmem:[%s276 + $0x5b0] sm:$0xff]
        %v1090 = vld [vmem:[%s276 + $0x5b8] sm:$0xff]
        %v1091 = vld [vmem:[%s276 + $0x5c0] sm:$0xff]
        %v1092 = vld [vmem:[%s276 + $0x5c8] sm:$0xff]
        %v1093 = vld [vmem:[%s276 + $0x5d0] sm:$0xff]
        %v1094 = vld [vmem:[%s276 + $0x5d8] sm:$0xff]
        %v1095 = vld [vmem:[%s276 + $0x5e0] sm:$0xff]
        %v1096 = vld [vmem:[%s276 + $0x5e8] sm:$0xff]
        %v1097 = vld [vmem:[%s276 + $0x5f0] sm:$0xff]
        %v1098 = vld [vmem:[%s276 + $0x5f8] sm:$0xff]
        %v1099 = vld [vmem:[%s276 + $0x600] sm:$0xff]
        %v1100 = vld [vmem:[%s276 + $0x608] sm:$0xff]
        %v1101 = vld [vmem:[%s276 + $0x610] sm:$0xff]
        %v1102 = vld [vmem:[%s276 + $0x618] sm:$0xff]
        %v1103 = vld [vmem:[%s276 + $0x620] sm:$0xff]
        %v1104 = vld [vmem:[%s276 + $0x628] sm:$0xff]
        %v1105 = vld [vmem:[%s276 + $0x630] sm:$0xff]
        %v1106 = vld [vmem:[%s276 + $0x638] sm:$0xff]
        %v1107 = vld [vmem:[%s276 + $0x640] sm:$0xff]
        %v1108 = vld [vmem:[%s276 + $0x648] sm:$0xff]
        %v1109 = vld [vmem:[%s276 + $0x650] sm:$0xff]
        %v1110 = vld [vmem:[%s276 + $0x658] sm:$0xff]
        %v1111 = vld [vmem:[%s276 + $0x660] sm:$0xff]
        %v1112 = vld [vmem:[%s276 + $0x668] sm:$0xff]
        %v1113 = vld [vmem:[%s276 + $0x670] sm:$0xff]
        %v1114 = vld [vmem:[%s276 + $0x678] sm:$0xff]
        %v1115 = vld [vmem:[%s276 + $0x680] sm:$0xff]
        %v1116 = vld [vmem:[%s276 + $0x688] sm:$0xff]
        %v1117 = vld [vmem:[%s276 + $0x690] sm:$0xff]
        %v1118 = vld [vmem:[%s276 + $0x698] sm:$0xff]
        %v1119 = vld [vmem:[%s276 + $0x6a0] sm:$0xff]
        %v1120 = vld [vmem:[%s276 + $0x6a8] sm:$0xff]
        %v1121 = vld [vmem:[%s276 + $0x6b0] sm:$0xff]
        %v1122 = vld [vmem:[%s276 + $0x6b8] sm:$0xff]
        %v1123 = vld [vmem:[%s276 + $0x6c0] sm:$0xff]
        %v1124 = vld [vmem:[%s276 + $0x6c8] sm:$0xff]
        %v1125 = vld [vmem:[%s276 + $0x6d0] sm:$0xff]
        %v1126 = vld [vmem:[%s276 + $0x6d8] sm:$0xff]
        %v1127 = vld [vmem:[%s276 + $0x6e0] sm:$0xff]
        %v1128 = vld [vmem:[%s276 + $0x6e8] sm:$0xff]
        %v1129 = vld [vmem:[%s276 + $0x6f0] sm:$0xff]
        %v1130 = vld [vmem:[%s276 + $0x6f8] sm:$0xff]
        %v1131 = vld [vmem:[%s276 + $0x700] sm:$0xff]
        %v1132 = vld [vmem:[%s276 + $0x708] sm:$0xff]
        %v1133 = vld [vmem:[%s276 + $0x710] sm:$0xff]
        %v1134 = vld [vmem:[%s276 + $0x718] sm:$0xff]
        %v1135 = vld [vmem:[%s276 + $0x720] sm:$0xff]
        %v1136 = vld [vmem:[%s276 + $0x728] sm:$0xff]
        %v1137 = vld [vmem:[%s276 + $0x730] sm:$0xff]
        %v1138 = vld [vmem:[%s276 + $0x738] sm:$0xff]
        %v1139 = vld [vmem:[%s276 + $0x740] sm:$0xff]
        %v1140 = vld [vmem:[%s276 + $0x748] sm:$0xff]
        %v1141 = vld [vmem:[%s276 + $0x750] sm:$0xff]
        %v1142 = vld [vmem:[%s276 + $0x758] sm:$0xff]
        %v1143 = vld [vmem:[%s276 + $0x760] sm:$0xff]
        %v1144 = vld [vmem:[%s276 + $0x768] sm:$0xff]
        %v1145 = vld [vmem:[%s276 + $0x770] sm:$0xff]
        %v1146 = vld [vmem:[%s276 + $0x778] sm:$0xff]
        %v1147 = vld [vmem:[%s276 + $0x780] sm:$0xff]
        %v1148 = vld [vmem:[%s276 + $0x788] sm:$0xff]
        %v1149 = vld [vmem:[%s276 + $0x790] sm:$0xff]
        %v1150 = vld [vmem:[%s276 + $0x798] sm:$0xff]
        %v1151 = vld [vmem:[%s276 + $0x7a0] sm:$0xff]
        %v1152 = vld [vmem:[%s276 + $0x7a8] sm:$0xff]
        %v1153 = vld [vmem:[%s276 + $0x7b0] sm:$0xff]
        %v1154 = vld [vmem:[%s276 + $0x7b8] sm:$0xff]
        %v1155 = vld [vmem:[%s276 + $0x7c0] sm:$0xff]
        %v1156 = vld [vmem:[%s276 + $0x7c8] sm:$0xff]
        %v1157 = vld [vmem:[%s276 + $0x7d0] sm:$0xff]
        %v1158 = vld [vmem:[%s276 + $0x7d8] sm:$0xff]
        %v1159 = vld [vmem:[%s276 + $0x7e0] sm:$0xff]
        %v1160 = vld [vmem:[%s276 + $0x7e8] sm:$0xff]
        %v1161 = vld [vmem:[%s276 + $0x7f0] sm:$0xff]
        %v1162 = vld [vmem:[%s276 + $0x7f8] sm:$0xff]
        %v1163 = vld [vmem:[%s276 + $0x800] sm:$0xff]
        %v1164 = vld [vmem:[%s276 + $0x808] sm:$0xff]
        %v1165 = vld [vmem:[%s276 + $0x810] sm:$0xff]
        %v1166 = vld [vmem:[%s276 + $0x818] sm:$0xff]
        %v1167 = vld [vmem:[%s276 + $0x820] sm:$0xff]
        %v1168 = vld [vmem:[%s276 + $0x828] sm:$0xff]
        %v1169 = vld [vmem:[%s276 + $0x830] sm:$0xff]
        %v1170 = vld [vmem:[%s276 + $0x838] sm:$0xff]
        %v1171 = vld [vmem:[%s276 + $0x840] sm:$0xff]
        %v1172 = vld [vmem:[%s276 + $0x848] sm:$0xff]
        %v1173 = vld [vmem:[%s276 + $0x850] sm:$0xff]
        %v1174 = vld [vmem:[%s276 + $0x858] sm:$0xff]
        %v1175 = vld [vmem:[%s276 + $0x860] sm:$0xff]
        %v1176 = vld [vmem:[%s276 + $0x868] sm:$0xff]
        %v1177 = vld [vmem:[%s276 + $0x870] sm:$0xff]
        %v1178 = vld [vmem:[%s276 + $0x878] sm:$0xff]
        %v1179 = vld [vmem:[%s276 + $0x880] sm:$0xff]
        %v1180 = vld [vmem:[%s276 + $0x888] sm:$0xff]
        %v1181 = vld [vmem:[%s276 + $0x890] sm:$0xff]
        %v1182 = vld [vmem:[%s276 + $0x898] sm:$0xff]
        %v1183 = vld [vmem:[%s276 + $0x8a0] sm:$0xff]
        %v1184 = vld [vmem:[%s276 + $0x8a8] sm:$0xff]
        %v1185 = vld [vmem:[%s276 + $0x8b0] sm:$0xff]
        %v1186 = vld [vmem:[%s276 + $0x8b8] sm:$0xff]
        %v1187 = vld [vmem:[%s276 + $0x8c0] sm:$0xff]
        %v1188 = vld [vmem:[%s276 + $0x8c8] sm:$0xff]
        %v1189 = vld [vmem:[%s276 + $0x8d0] sm:$0xff]
        %v1190 = vld [vmem:[%s276 + $0x8d8] sm:$0xff]
        %v1191 = vld [vmem:[%s276 + $0x8e0] sm:$0xff]
        %v1192 = vld [vmem:[%s276 + $0x8e8] sm:$0xff]
        %v1193 = vld [vmem:[%s276 + $0x8f0] sm:$0xff]
        %v1194 = vld [vmem:[%s276 + $0x8f8] sm:$0xff]
        %v1195 = vld [vmem:[%s276 + $0x900] sm:$0xff]
        %v1196 = vld [vmem:[%s276 + $0x908] sm:$0xff]
        %v1197 = vld [vmem:[%s276 + $0x910] sm:$0xff]
        %v1198 = vld [vmem:[%s276 + $0x918] sm:$0xff]
        %v1199 = vld [vmem:[%s276 + $0x920] sm:$0xff]
        %v1200 = vld [vmem:[%s276 + $0x928] sm:$0xff]
        %v1201 = vld [vmem:[%s276 + $0x930] sm:$0xff]
        %v1202 = vld [vmem:[%s276 + $0x938] sm:$0xff]
        %v1203 = vld [vmem:[%s276 + $0x940] sm:$0xff]
        %v1204 = vld [vmem:[%s276 + $0x948] sm:$0xff]
        %v1205 = vld [vmem:[%s276 + $0x950] sm:$0xff]
        %v1206 = vld [vmem:[%s276 + $0x958] sm:$0xff]
        %v1207 = vld [vmem:[%s276 + $0x960] sm:$0xff]
        %v1208 = vld [vmem:[%s276 + $0x968] sm:$0xff]
        %v1209 = vld [vmem:[%s276 + $0x970] sm:$0xff]
        %v1210 = vld [vmem:[%s276 + $0x978] sm:$0xff]
        %v1211 = vld [vmem:[%s276 + $0x980] sm:$0xff]
        %v1212 = vld [vmem:[%s276 + $0x988] sm:$0xff]
        %v1213 = vld [vmem:[%s276 + $0x990] sm:$0xff]
        %v1214 = vld [vmem:[%s276 + $0x998] sm:$0xff]
        %v1215 = vld [vmem:[%s276 + $0x9a0] sm:$0xff]
        %v1216 = vld [vmem:[%s276 + $0x9a8] sm:$0xff]
        %v1217 = vld [vmem:[%s276 + $0x9b0] sm:$0xff]
        %v1218 = vld [vmem:[%s276 + $0x9b8] sm:$0xff]
        %v1219 = vld [vmem:[%s276 + $0x9c0] sm:$0xff]
        %v1220 = vld [vmem:[%s276 + $0x9c8] sm:$0xff]
        %v1221 = vld [vmem:[%s276 + $0x9d0] sm:$0xff]
        %v1222 = vld [vmem:[%s276 + $0x9d8] sm:$0xff]
        %v1223 = vld [vmem:[%s276 + $0x9e0] sm:$0xff]
        %v1224 = vld [vmem:[%s276 + $0x9e8] sm:$0xff]
        %v1225 = vld [vmem:[%s276 + $0x9f0] sm:$0xff]
        %v1226 = vld [vmem:[%s276 + $0x9f8] sm:$0xff]
        %v1227 = vld [vmem:[%s276 + $0xa00] sm:$0xff]
        %v1228 = vld [vmem:[%s276 + $0xa08] sm:$0xff]
        %v1229 = vld [vmem:[%s276 + $0xa10] sm:$0xff]
        %v1230 = vld [vmem:[%s276 + $0xa18] sm:$0xff]
        %v1231 = vld [vmem:[%s276 + $0xa20] sm:$0xff]
        %v1232 = vld [vmem:[%s276 + $0xa28] sm:$0xff]
        %v1233 = vld [vmem:[%s276 + $0xa30] sm:$0xff]
        %v1234 = vld [vmem:[%s276 + $0xa38] sm:$0xff]
        %v1235 = vld [vmem:[%s276 + $0xa40] sm:$0xff]
        %v1236 = vld [vmem:[%s276 + $0xa48] sm:$0xff]
        %v1237 = vld [vmem:[%s276 + $0xa50] sm:$0xff]
        %v1238 = vld [vmem:[%s276 + $0xa58] sm:$0xff]
        %v1239 = vld [vmem:[%s276 + $0xa60] sm:$0xff]
        %v1240 = vld [vmem:[%s276 + $0xa68] sm:$0xff]
        %v1241 = vld [vmem:[%s276 + $0xa70] sm:$0xff]
        %v1242 = vld [vmem:[%s276 + $0xa78] sm:$0xff]
        %v1243 = vld [vmem:[%s276 + $0xa80] sm:$0xff]
        %v1244 = vld [vmem:[%s276 + $0xa88] sm:$0xff]
        %v1245 = vld [vmem:[%s276 + $0xa90] sm:$0xff]
        %v1246 = vld [vmem:[%s276 + $0xa98] sm:$0xff]
        %v1247 = vld [vmem:[%s276 + $0xaa0] sm:$0xff]
        %v1248 = vld [vmem:[%s276 + $0xaa8] sm:$0xff]
        %v1249 = vld [vmem:[%s276 + $0xab0] sm:$0xff]
        %v1250 = vld [vmem:[%s276 + $0xab8] sm:$0xff]
        %v1251 = vld [vmem:[%s276 + $0xac0] sm:$0xff]
        %v1252 = vld [vmem:[%s276 + $0xac8] sm:$0xff]
        %v1253 = vld [vmem:[%s276 + $0xad0] sm:$0xff]
        %v1254 = vld [vmem:[%s276 + $0xad8] sm:$0xff]
        %v1255 = vld [vmem:[%s276 + $0xae0] sm:$0xff]
        %v1256 = vld [vmem:[%s276 + $0xae8] sm:$0xff]
        %v1257 = vld [vmem:[%s276 + $0xaf0] sm:$0xff]
        %v1258 = vld [vmem:[%s276 + $0xaf8] sm:$0xff]
        %v1259 = vld [vmem:[%s276 + $0xb00] sm:$0xff]
        %v1260 = vld [vmem:[%s276 + $0xb08] sm:$0xff]
        %v1261 = vld [vmem:[%s276 + $0xb10] sm:$0xff]
        %v1262 = vld [vmem:[%s276 + $0xb18] sm:$0xff]
        %v1263 = vld [vmem:[%s276 + $0xb20] sm:$0xff]
        %v1264 = vld [vmem:[%s276 + $0xb28] sm:$0xff]
        %v1265 = vld [vmem:[%s276 + $0xb30] sm:$0xff]
        %v1266 = vld [vmem:[%s276 + $0xb38] sm:$0xff]
        %v1267 = vld [vmem:[%s276 + $0xb40] sm:$0xff]
        %v1268 = vld [vmem:[%s276 + $0xb48] sm:$0xff]
        %v1269 = vld [vmem:[%s276 + $0xb50] sm:$0xff]
        %v1270 = vld [vmem:[%s276 + $0xb58] sm:$0xff]
        %v1271 = vld [vmem:[%s276 + $0xb60] sm:$0xff]
        %v1272 = vld [vmem:[%s276 + $0xb68] sm:$0xff]
        %v1273 = vld [vmem:[%s276 + $0xb70] sm:$0xff]
        %v1274 = vld [vmem:[%s276 + $0xb78] sm:$0xff]
        %v1275 = vld [vmem:[%s276 + $0xb80] sm:$0xff]
        %v1276 = vld [vmem:[%s276 + $0xb88] sm:$0xff]
        %v1277 = vld [vmem:[%s276 + $0xb90] sm:$0xff]
        %v1278 = vld [vmem:[%s276 + $0xb98] sm:$0xff]
        %v1279 = vld [vmem:[%s276 + $0xba0] sm:$0xff]
        %v1280 = vld [vmem:[%s276 + $0xba8] sm:$0xff]
        %v1281 = vld [vmem:[%s276 + $0xbb0] sm:$0xff]
        %v1282 = vld [vmem:[%s276 + $0xbb8] sm:$0xff]
        %v1283 = vld [vmem:[%s276 + $0xbc0] sm:$0xff]
        %v1284 = vld [vmem:[%s276 + $0xbc8] sm:$0xff]
        %v1285 = vld [vmem:[%s276 + $0xbd0] sm:$0xff]
        %v1286 = vld [vmem:[%s276 + $0xbd8] sm:$0xff]
        %v1287 = vld [vmem:[%s276 + $0xbe0] sm:$0xff]
        %v1288 = vld [vmem:[%s276 + $0xbe8] sm:$0xff]
        %v1289 = vld [vmem:[%s276 + $0xbf0] sm:$0xff]
        %v1290 = vld [vmem:[%s276 + $0xbf8] sm:$0xff]
        %v1291 = vld [vmem:[%s276 + $0xc00] sm:$0xff]
        %v1292 = vld [vmem:[%s276 + $0xc08] sm:$0xff]
        %v1293 = vld [vmem:[%s276 + $0xc10] sm:$0xff]
        %v1294 = vld [vmem:[%s276 + $0xc18] sm:$0xff]
        %v1295 = vld [vmem:[%s276 + $0xc20] sm:$0xff]
        %v1296 = vld [vmem:[%s276 + $0xc28] sm:$0xff]
        %v1297 = vld [vmem:[%s276 + $0xc30] sm:$0xff]
        %v1298 = vld [vmem:[%s276 + $0xc38] sm:$0xff]
        %v1299 = vld [vmem:[%s276 + $0xc40] sm:$0xff]
        %v1300 = vld [vmem:[%s276 + $0xc48] sm:$0xff]
        %v1301 = vld [vmem:[%s276 + $0xc50] sm:$0xff]
        %v1302 = vld [vmem:[%s276 + $0xc58] sm:$0xff]
        %v1303 = vld [vmem:[%s276 + $0xc60] sm:$0xff]
        %v1304 = vld [vmem:[%s276 + $0xc68] sm:$0xff]
        %v1305 = vld [vmem:[%s276 + $0xc70] sm:$0xff]
        %v1306 = vld [vmem:[%s276 + $0xc78] sm:$0xff]
        %v1307 = vld [vmem:[%s276 + $0xc80] sm:$0xff]
        %v1308 = vld [vmem:[%s276 + $0xc88] sm:$0xff]
        %v1309 = vld [vmem:[%s276 + $0xc90] sm:$0xff]
        %v1310 = vld [vmem:[%s276 + $0xc98] sm:$0xff]
        %v1311 = vld [vmem:[%s276 + $0xca0] sm:$0xff]
        %v1312 = vld [vmem:[%s276 + $0xca8] sm:$0xff]
        %v1313 = vld [vmem:[%s276 + $0xcb0] sm:$0xff]
        %v1314 = vld [vmem:[%s276 + $0xcb8] sm:$0xff]
        %v1315 = vld [vmem:[%s276 + $0xcc0] sm:$0xff]
        %v1316 = vld [vmem:[%s276 + $0xcc8] sm:$0xff]
        %v1317 = vld [vmem:[%s276 + $0xcd0] sm:$0xff]
        %v1318 = vld [vmem:[%s276 + $0xcd8] sm:$0xff]
        %v1319 = vld [vmem:[%s276 + $0xce0] sm:$0xff]
        %v1320 = vld [vmem:[%s276 + $0xce8] sm:$0xff]
        %v1321 = vld [vmem:[%s276 + $0xcf0] sm:$0xff]
        %v1322 = vld [vmem:[%s276 + $0xcf8] sm:$0xff]
        %v1323 = vld [vmem:[%s276 + $0xd00] sm:$0xff]
        %v1324 = vld [vmem:[%s276 + $0xd08] sm:$0xff]
        %v1325 = vld [vmem:[%s276 + $0xd10] sm:$0xff]
        %v1326 = vld [vmem:[%s276 + $0xd18] sm:$0xff]
        %v1327 = vld [vmem:[%s276 + $0xd20] sm:$0xff]
        %v1328 = vld [vmem:[%s276 + $0xd28] sm:$0xff]
        %v1329 = vld [vmem:[%s276 + $0xd30] sm:$0xff]
        %v1330 = vld [vmem:[%s276 + $0xd38] sm:$0xff]
        %v1331 = vld [vmem:[%s276 + $0xd40] sm:$0xff]
        %v1332 = vld [vmem:[%s276 + $0xd48] sm:$0xff]
        %v1333 = vld [vmem:[%s276 + $0xd50] sm:$0xff]
        %v1334 = vld [vmem:[%s276 + $0xd58] sm:$0xff]
        %v1335 = vld [vmem:[%s276 + $0xd60] sm:$0xff]
        %v1336 = vld [vmem:[%s276 + $0xd68] sm:$0xff]
        %v1337 = vld [vmem:[%s276 + $0xd70] sm:$0xff]
        %v1338 = vld [vmem:[%s276 + $0xd78] sm:$0xff]
        %v1339 = vld [vmem:[%s276 + $0xd80] sm:$0xff]
        %v1340 = vld [vmem:[%s276 + $0xd88] sm:$0xff]
        %v1341 = vld [vmem:[%s276 + $0xd90] sm:$0xff]
        %v1342 = vld [vmem:[%s276 + $0xd98] sm:$0xff]
        %v1343 = vld [vmem:[%s276 + $0xda0] sm:$0xff]
        %v1344 = vld [vmem:[%s276 + $0xda8] sm:$0xff]
        %v1345 = vld [vmem:[%s276 + $0xdb0] sm:$0xff]
        %v1346 = vld [vmem:[%s276 + $0xdb8] sm:$0xff]
        %v1347 = vld [vmem:[%s276 + $0xdc0] sm:$0xff]
        %v1348 = vld [vmem:[%s276 + $0xdc8] sm:$0xff]
        %v1349 = vld [vmem:[%s276 + $0xdd0] sm:$0xff]
        %v1350 = vld [vmem:[%s276 + $0xdd8] sm:$0xff]
        %v1351 = vld [vmem:[%s276 + $0xde0] sm:$0xff]
        %v1352 = vld [vmem:[%s276 + $0xde8] sm:$0xff]
        %v1353 = vld [vmem:[%s276 + $0xdf0] sm:$0xff]
        %v1354 = vld [vmem:[%s276 + $0xdf8] sm:$0xff]
        %v1355 = vld [vmem:[%s276 + $0xe00] sm:$0xff]
        %v1356 = vld [vmem:[%s276 + $0xe08] sm:$0xff]
        %v1357 = vld [vmem:[%s276 + $0xe10] sm:$0xff]
        %v1358 = vld [vmem:[%s276 + $0xe18] sm:$0xff]
        %v1359 = vld [vmem:[%s276 + $0xe20] sm:$0xff]
        %v1360 = vld [vmem:[%s276 + $0xe28] sm:$0xff]
        %v1361 = vld [vmem:[%s276 + $0xe30] sm:$0xff]
        %v1362 = vld [vmem:[%s276 + $0xe38] sm:$0xff]
        %v1363 = vld [vmem:[%s276 + $0xe40] sm:$0xff]
        %v1364 = vld [vmem:[%s276 + $0xe48] sm:$0xff]
        %v1365 = vld [vmem:[%s276 + $0xe50] sm:$0xff]
        %v1366 = vld [vmem:[%s276 + $0xe58] sm:$0xff]
        %v1367 = vld [vmem:[%s276 + $0xe60] sm:$0xff]
        %v1368 = vld [vmem:[%s276 + $0xe68] sm:$0xff]
        %v1369 = vld [vmem:[%s276 + $0xe70] sm:$0xff]
        %v1370 = vld [vmem:[%s276 + $0xe78] sm:$0xff]
        %v1371 = vld [vmem:[%s276 + $0xe80] sm:$0xff]
        %v1372 = vld [vmem:[%s276 + $0xe88] sm:$0xff]
        %v1373 = vld [vmem:[%s276 + $0xe90] sm:$0xff]
        %v1374 = vld [vmem:[%s276 + $0xe98] sm:$0xff]
        %v1375 = vld [vmem:[%s276 + $0xea0] sm:$0xff]
        %v1376 = vld [vmem:[%s276 + $0xea8] sm:$0xff]
        %v1377 = vld [vmem:[%s276 + $0xeb0] sm:$0xff]
        %v1378 = vld [vmem:[%s276 + $0xeb8] sm:$0xff]
        %v1379 = vld [vmem:[%s276 + $0xec0] sm:$0xff]
        %v1380 = vld [vmem:[%s276 + $0xec8] sm:$0xff]
        %v1381 = vld [vmem:[%s276 + $0xed0] sm:$0xff]
        %v1382 = vld [vmem:[%s276 + $0xed8] sm:$0xff]
        %v1383 = vld [vmem:[%s276 + $0xee0] sm:$0xff]
        %v1384 = vld [vmem:[%s276 + $0xee8] sm:$0xff]
        %v1385 = vld [vmem:[%s276 + $0xef0] sm:$0xff]
        %v1386 = vld [vmem:[%s276 + $0xef8] sm:$0xff]
        %v1387 = vld [vmem:[%s276 + $0xf00] sm:$0xff]
        %v1388 = vld [vmem:[%s276 + $0xf08] sm:$0xff]
        %v1389 = vld [vmem:[%s276 + $0xf10] sm:$0xff]
        %v1390 = vld [vmem:[%s276 + $0xf18] sm:$0xff]
        %v1391 = vld [vmem:[%s276 + $0xf20] sm:$0xff]
        %v1392 = vld [vmem:[%s276 + $0xf28] sm:$0xff]
        %v1393 = vld [vmem:[%s276 + $0xf30] sm:$0xff]
        %v1394 = vld [vmem:[%s276 + $0xf38] sm:$0xff]
        %v1395 = vld [vmem:[%s276 + $0xf40] sm:$0xff]
        %v1396 = vld [vmem:[%s276 + $0xf48] sm:$0xff]
        %v1397 = vld [vmem:[%s276 + $0xf50] sm:$0xff]
        %v1398 = vld [vmem:[%s276 + $0xf58] sm:$0xff]
        %v1399 = vld [vmem:[%s276 + $0xf60] sm:$0xff]
        %v1400 = vld [vmem:[%s276 + $0xf68] sm:$0xff]
        %v1401 = vld [vmem:[%s276 + $0xf70] sm:$0xff]
        %v1402 = vld [vmem:[%s276 + $0xf78] sm:$0xff]
        %v1403 = vld [vmem:[%s276 + $0xf80] sm:$0xff]
        %v1404 = vld [vmem:[%s276 + $0xf88] sm:$0xff]
        %v1405 = vld [vmem:[%s276 + $0xf90] sm:$0xff]
        %v1406 = vld [vmem:[%s276 + $0xf98] sm:$0xff]
        %v1407 = vld [vmem:[%s276 + $0xfa0] sm:$0xff]
        %v1408 = vld [vmem:[%s276 + $0xfa8] sm:$0xff]
        %v1409 = vld [vmem:[%s276 + $0xfb0] sm:$0xff]
        %v1410 = vld [vmem:[%s276 + $0xfb8] sm:$0xff]
        %v1411 = vld [vmem:[%s276 + $0xfc0] sm:$0xff]
        %v1412 = vld [vmem:[%s276 + $0xfc8] sm:$0xff]
        %v1413 = vld [vmem:[%s276 + $0xfd0] sm:$0xff]
        %v1414 = vld [vmem:[%s276 + $0xfd8] sm:$0xff]
        %v1415 = vld [vmem:[%s276 + $0xfe0] sm:$0xff]
        %v1416 = vld [vmem:[%s276 + $0xfe8] sm:$0xff]
        %v1417 = vld [vmem:[%s276 + $0xff0] sm:$0xff]
        %v1418 = vld [vmem:[%s276 + $0xff8] sm:$0xff]
        %v1419 = vld [vmem:[%s276 + $0x1000] sm:$0xff]
        %v1420 = vld [vmem:[%s276 + $0x1008] sm:$0xff]
        %v1421 = vld [vmem:[%s276 + $0x1010] sm:$0xff]
        %v1422 = vld [vmem:[%s276 + $0x1018] sm:$0xff]
        %v1423 = vld [vmem:[%s276 + $0x1020] sm:$0xff]
        %v1424 = vld [vmem:[%s276 + $0x1028] sm:$0xff]
        %v1425 = vld [vmem:[%s276 + $0x1030] sm:$0xff]
        %v1426 = vld [vmem:[%s276 + $0x1038] sm:$0xff]
        %v1427 = vld [vmem:[%s276 + $0x1040] sm:$0xff]
        %v1428 = vld [vmem:[%s276 + $0x1048] sm:$0xff]
        %v1429 = vld [vmem:[%s276 + $0x1050] sm:$0xff]
        %v1430 = vld [vmem:[%s276 + $0x1058] sm:$0xff]
        %v1431 = vld [vmem:[%s276 + $0x1060] sm:$0xff]
        %v1432 = vld [vmem:[%s276 + $0x1068] sm:$0xff]
        %v1433 = vld [vmem:[%s276 + $0x1070] sm:$0xff]
        %v1434 = vld [vmem:[%s276 + $0x1078] sm:$0xff]
        %v1435 = vld [vmem:[%s276 + $0x1080] sm:$0xff]
        %v1436 = vld [vmem:[%s276 + $0x1088] sm:$0xff]
        %v1437 = vld [vmem:[%s276 + $0x1090] sm:$0xff]
        %v1438 = vld [vmem:[%s276 + $0x1098] sm:$0xff]
        %v1439 = vld [vmem:[%s276 + $0x10a0] sm:$0xff]
        %v1440 = vld [vmem:[%s276 + $0x10a8] sm:$0xff]
        %v1441 = vld [vmem:[%s276 + $0x10b0] sm:$0xff]
        %v1442 = vld [vmem:[%s276 + $0x10b8] sm:$0xff]
        %v1443 = vld [vmem:[%s276 + $0x10c0] sm:$0xff]
        %v1444 = vld [vmem:[%s276 + $0x10c8] sm:$0xff]
        %v1445 = vld [vmem:[%s276 + $0x10d0] sm:$0xff]
        %v1446 = vld [vmem:[%s276 + $0x10d8] sm:$0xff]
        %v1447 = vld [vmem:[%s276 + $0x10e0] sm:$0xff]
        %v1448 = vld [vmem:[%s276 + $0x10e8] sm:$0xff]
        %v1449 = vld [vmem:[%s276 + $0x10f0] sm:$0xff]
        %v1450 = vld [vmem:[%s276 + $0x10f8] sm:$0xff]
        %v1451 = vld [vmem:[%s276 + $0x1100] sm:$0xff]
        %v1452 = vld [vmem:[%s276 + $0x1108] sm:$0xff]
        %v1453 = vld [vmem:[%s276 + $0x1110] sm:$0xff]
        %v1454 = vld [vmem:[%s276 + $0x1118] sm:$0xff]
        %v1455 = vld [vmem:[%s276 + $0x1120] sm:$0xff]
        %v1456 = vld [vmem:[%s276 + $0x1128] sm:$0xff]
        %v1457 = vld [vmem:[%s276 + $0x1130] sm:$0xff]
        %v1458 = vld [vmem:[%s276 + $0x1138] sm:$0xff]
        %v1459 = vld [vmem:[%s276 + $0x1140] sm:$0xff]
        %v1460 = vld [vmem:[%s276 + $0x1148] sm:$0xff]
        %v1461 = vld [vmem:[%s276 + $0x1150] sm:$0xff]
        %v1462 = vld [vmem:[%s276 + $0x1158] sm:$0xff]
        %v1463 = vld [vmem:[%s276 + $0x1160] sm:$0xff]
        %v1464 = vld [vmem:[%s276 + $0x1168] sm:$0xff]
        %v1465 = vld [vmem:[%s276 + $0x1170] sm:$0xff]
        %v1466 = vld [vmem:[%s276 + $0x1178] sm:$0xff]
        %v1467 = vld [vmem:[%s276 + $0x1180] sm:$0xff]
        %v1468 = vld [vmem:[%s276 + $0x1188] sm:$0xff]
        %v1469 = vld [vmem:[%s276 + $0x1190] sm:$0xff]
        %v1470 = vld [vmem:[%s276 + $0x1198] sm:$0xff]
        %v1471 = vld [vmem:[%s276 + $0x11a0] sm:$0xff]
        %v1472 = vld [vmem:[%s276 + $0x11a8] sm:$0xff]
        %v1473 = vld [vmem:[%s276 + $0x11b0] sm:$0xff]
        %v1474 = vld [vmem:[%s276 + $0x11b8] sm:$0xff]
        %v1475 = vld [vmem:[%s276 + $0x11c0] sm:$0xff]
        %v1476 = vld [vmem:[%s276 + $0x11c8] sm:$0xff]
        %v1477 = vld [vmem:[%s276 + $0x11d0] sm:$0xff]
        %v1478 = vld [vmem:[%s276 + $0x11d8] sm:$0xff]
        %v1479 = vld [vmem:[%s276 + $0x11e0] sm:$0xff]
        %v1480 = vld [vmem:[%s276 + $0x11e8] sm:$0xff]
        %v1481 = vld [vmem:[%s276 + $0x11f0] sm:$0xff]
        %v1482 = vld [vmem:[%s276 + $0x11f8] sm:$0xff]
        %v1483 = vld [vmem:[%s276 + $0x1200] sm:$0xff]
        %v1484 = vld [vmem:[%s276 + $0x1208] sm:$0xff]
        %v1485 = vld [vmem:[%s276 + $0x1210] sm:$0xff]
        %v1486 = vld [vmem:[%s276 + $0x1218] sm:$0xff]
        %v1487 = vld [vmem:[%s276 + $0x1220] sm:$0xff]
        %v1488 = vld [vmem:[%s276 + $0x1228] sm:$0xff]
        %v1489 = vld [vmem:[%s276 + $0x1230] sm:$0xff]
        %v1490 = vld [vmem:[%s276 + $0x1238] sm:$0xff]
        %v1491 = vld [vmem:[%s276 + $0x1240] sm:$0xff]
        %v1492 = vld [vmem:[%s276 + $0x1248] sm:$0xff]
        %v1493 = vld [vmem:[%s276 + $0x1250] sm:$0xff]
        %v1494 = vld [vmem:[%s276 + $0x1258] sm:$0xff]
        %v1495 = vld [vmem:[%s276 + $0x1260] sm:$0xff]
        %v1496 = vld [vmem:[%s276 + $0x1268] sm:$0xff]
        %v1497 = vld [vmem:[%s276 + $0x1270] sm:$0xff]
        %v1498 = vld [vmem:[%s276 + $0x1278] sm:$0xff]
        %v1499 = vld [vmem:[%s276 + $0x1280] sm:$0xff]
        %v1500 = vld [vmem:[%s276 + $0x1288] sm:$0xff]
        %v1501 = vld [vmem:[%s276 + $0x1290] sm:$0xff]
        %v1502 = vld [vmem:[%s276 + $0x1298] sm:$0xff]
        %v1503 = vld [vmem:[%s276 + $0x12a0] sm:$0xff]
        %v1504 = vld [vmem:[%s276 + $0x12a8] sm:$0xff]
        %v1505 = vld [vmem:[%s276 + $0x12b0] sm:$0xff]
        %v1506 = vld [vmem:[%s276 + $0x12b8] sm:$0xff]
        %v1507 = vld [vmem:[%s276 + $0x12c0] sm:$0xff]
        %v1508 = vld [vmem:[%s276 + $0x12c8] sm:$0xff]
        %v1509 = vld [vmem:[%s276 + $0x12d0] sm:$0xff]
        %v1510 = vld [vmem:[%s276 + $0x12d8] sm:$0xff]
        %v1511 = vld [vmem:[%s276 + $0x12e0] sm:$0xff]
        %v1512 = vld [vmem:[%s276 + $0x12e8] sm:$0xff]
        %v1513 = vld [vmem:[%s276 + $0x12f0] sm:$0xff]
        %v1514 = vld [vmem:[%s276 + $0x12f8] sm:$0xff]
        %v1515 = vld [vmem:[%s276 + $0x1300] sm:$0xff]
        %v1516 = vld [vmem:[%s276 + $0x1308] sm:$0xff]
        %v1517 = vld [vmem:[%s276 + $0x1310] sm:$0xff]
        %v1518 = vld [vmem:[%s276 + $0x1318] sm:$0xff]
        %v1519 = vld [vmem:[%s276 + $0x1320] sm:$0xff]
        %v1520 = vld [vmem:[%s276 + $0x1328] sm:$0xff]
        %v1521 = vld [vmem:[%s276 + $0x1330] sm:$0xff]
        %v1522 = vld [vmem:[%s276 + $0x1338] sm:$0xff]
        %v1523 = vld [vmem:[%s276 + $0x1340] sm:$0xff]
        %v1524 = vld [vmem:[%s276 + $0x1348] sm:$0xff]
        %v1525 = vld [vmem:[%s276 + $0x1350] sm:$0xff]
        %v1526 = vld [vmem:[%s276 + $0x1358] sm:$0xff]
        %v1527 = vld [vmem:[%s276 + $0x1360] sm:$0xff]
        %v1528 = vld [vmem:[%s276 + $0x1368] sm:$0xff]
        %v1529 = vld [vmem:[%s276 + $0x1370] sm:$0xff]
        %v1530 = vld [vmem:[%s276 + $0x1378] sm:$0xff]
        %v1531 = vld [vmem:[%s276 + $0x1380] sm:$0xff]
        %v1532 = vld [vmem:[%s276 + $0x1388] sm:$0xff]
        %v1533 = vld [vmem:[%s276 + $0x1390] sm:$0xff]
        %v1534 = vld [vmem:[%s276 + $0x1398] sm:$0xff]
        %v1535 = vld [vmem:[%s276 + $0x13a0] sm:$0xff]
        %v1536 = vld [vmem:[%s276 + $0x13a8] sm:$0xff]
        %v1537 = vld [vmem:[%s276 + $0x13b0] sm:$0xff]
        %v1538 = vld [vmem:[%s276 + $0x13b8] sm:$0xff]
        %v1539 = vld [vmem:[%s276 + $0x13c0] sm:$0xff]
        %v1540 = vld [vmem:[%s276 + $0x13c8] sm:$0xff]
        %v1541 = vld [vmem:[%s276 + $0x13d0] sm:$0xff]
        %v1542 = vld [vmem:[%s276 + $0x13d8] sm:$0xff]
        %v1543 = vld [vmem:[%s276 + $0x13e0] sm:$0xff]
        %v1544 = vld [vmem:[%s276 + $0x13e8] sm:$0xff]
        %v1545 = vld [vmem:[%s276 + $0x13f0] sm:$0xff]
        %v1546 = vld [vmem:[%s276 + $0x13f8] sm:$0xff]
        %v1547 = vld [vmem:[%s276 + $0x1400] sm:$0xff]
        %v1548 = vld [vmem:[%s276 + $0x1408] sm:$0xff]
        %v1549 = vld [vmem:[%s276 + $0x1410] sm:$0xff]
        %v1550 = vld [vmem:[%s276 + $0x1418] sm:$0xff]
        %v1551 = vld [vmem:[%s276 + $0x1420] sm:$0xff]
        %v1552 = vld [vmem:[%s276 + $0x1428] sm:$0xff]
        %v1553 = vld [vmem:[%s276 + $0x1430] sm:$0xff]
        %v1554 = vld [vmem:[%s276 + $0x1438] sm:$0xff]
        %v1555 = vld [vmem:[%s276 + $0x1440] sm:$0xff]
        %v1556 = vld [vmem:[%s276 + $0x1448] sm:$0xff]
        %v1557 = vld [vmem:[%s276 + $0x1450] sm:$0xff]
        %v1558 = vld [vmem:[%s276 + $0x1458] sm:$0xff]
        %v1559 = vld [vmem:[%s276 + $0x1460] sm:$0xff]
        %v1560 = vld [vmem:[%s276 + $0x1468] sm:$0xff]
        %v1561 = vld [vmem:[%s276 + $0x1470] sm:$0xff]
        %v1562 = vld [vmem:[%s276 + $0x1478] sm:$0xff]
        %v1563 = vld [vmem:[%s276 + $0x1480] sm:$0xff]
        %v1564 = vld [vmem:[%s276 + $0x1488] sm:$0xff]
        %v1565 = vld [vmem:[%s276 + $0x1490] sm:$0xff]
        %v1566 = vld [vmem:[%s276 + $0x1498] sm:$0xff]
        %v1567 = vld [vmem:[%s276 + $0x14a0] sm:$0xff]
        %v1568 = vld [vmem:[%s276 + $0x14a8] sm:$0xff]
        %v1569 = vld [vmem:[%s276 + $0x14b0] sm:$0xff]
        %v1570 = vld [vmem:[%s276 + $0x14b8] sm:$0xff]
        %v1571 = vld [vmem:[%s276 + $0x14c0] sm:$0xff]
        %v1572 = vld [vmem:[%s276 + $0x14c8] sm:$0xff]
        %v1573 = vld [vmem:[%s276 + $0x14d0] sm:$0xff]
        %v1574 = vld [vmem:[%s276 + $0x14d8] sm:$0xff]
        %v1575 = vld [vmem:[%s276 + $0x14e0] sm:$0xff]
        %v1576 = vld [vmem:[%s276 + $0x14e8] sm:$0xff]
        %v1577 = vld [vmem:[%s276 + $0x14f0] sm:$0xff]
        %v1578 = vld [vmem:[%s276 + $0x14f8] sm:$0xff]
        %v1579 = vld [vmem:[%s276 + $0x1500] sm:$0xff]
        %v1580 = vld [vmem:[%s276 + $0x1508] sm:$0xff]
        %v1581 = vld [vmem:[%s276 + $0x1510] sm:$0xff]
        %v1582 = vld [vmem:[%s276 + $0x1518] sm:$0xff]
        %v1583 = vld [vmem:[%s276 + $0x1520] sm:$0xff]
        %v1584 = vld [vmem:[%s276 + $0x1528] sm:$0xff]
        %v1585 = vld [vmem:[%s276 + $0x1530] sm:$0xff]
        %v1586 = vld [vmem:[%s276 + $0x1538] sm:$0xff]
        %v1587 = vld [vmem:[%s276 + $0x1540] sm:$0xff]
        %v1588 = vld [vmem:[%s276 + $0x1548] sm:$0xff]
        %v1589 = vld [vmem:[%s276 + $0x1550] sm:$0xff]
        %v1590 = vld [vmem:[%s276 + $0x1558] sm:$0xff]
        %v1591 = vld [vmem:[%s276 + $0x1560] sm:$0xff]
        %v1592 = vld [vmem:[%s276 + $0x1568] sm:$0xff]
        %v1593 = vld [vmem:[%s276 + $0x1570] sm:$0xff]
        %v1594 = vld [vmem:[%s276 + $0x1578] sm:$0xff]
        %v1595 = vld [vmem:[%s276 + $0x1580] sm:$0xff]
        %v1596 = vld [vmem:[%s276 + $0x1588] sm:$0xff]
        %v1597 = vld [vmem:[%s276 + $0x1590] sm:$0xff]
        %v1598 = vld [vmem:[%s276 + $0x1598] sm:$0xff]
        %v1599 = vld [vmem:[%s276 + $0x15a0] sm:$0xff]
        %v1600 = vld [vmem:[%s276 + $0x15a8] sm:$0xff]
        %v1601 = vld [vmem:[%s276 + $0x15b0] sm:$0xff]
        %v1602 = vld [vmem:[%s276 + $0x15b8] sm:$0xff]
        %v1603 = vld [vmem:[%s276 + $0x15c0] sm:$0xff]
        %v1604 = vld [vmem:[%s276 + $0x15c8] sm:$0xff]
        %v1605 = vld [vmem:[%s276 + $0x15d0] sm:$0xff]
        %v1606 = vld [vmem:[%s276 + $0x15d8] sm:$0xff]
        %v1607 = vld [vmem:[%s276 + $0x15e0] sm:$0xff]
        %v1608 = vld [vmem:[%s276 + $0x15e8] sm:$0xff]
        %v1609 = vld [vmem:[%s276 + $0x15f0] sm:$0xff]
        %v1610 = vld [vmem:[%s276 + $0x15f8] sm:$0xff]
        %v1611 = vld [vmem:[%s276 + $0x1600] sm:$0xff]
        %v1612 = vld [vmem:[%s276 + $0x1608] sm:$0xff]
        %v1613 = vld [vmem:[%s276 + $0x1610] sm:$0xff]
        %v1614 = vld [vmem:[%s276 + $0x1618] sm:$0xff]
        %v1615 = vld [vmem:[%s276 + $0x1620] sm:$0xff]
        %v1616 = vld [vmem:[%s276 + $0x1628] sm:$0xff]
        %v1617 = vld [vmem:[%s276 + $0x1630] sm:$0xff]
        %v1618 = vld [vmem:[%s276 + $0x1638] sm:$0xff]
        %v1619 = vld [vmem:[%s276 + $0x1640] sm:$0xff]
        %v1620 = vld [vmem:[%s276 + $0x1648] sm:$0xff]
        %v1621 = vld [vmem:[%s276 + $0x1650] sm:$0xff]
        %v1622 = vld [vmem:[%s276 + $0x1658] sm:$0xff]
        %v1623 = vld [vmem:[%s276 + $0x1660] sm:$0xff]
        %v1624 = vld [vmem:[%s276 + $0x1668] sm:$0xff]
        %v1625 = vld [vmem:[%s276 + $0x1670] sm:$0xff]
        %v1626 = vld [vmem:[%s276 + $0x1678] sm:$0xff]
        %v1627 = vld [vmem:[%s276 + $0x1680] sm:$0xff]
        %v1628 = vld [vmem:[%s276 + $0x1688] sm:$0xff]
        %v1629 = vld [vmem:[%s276 + $0x1690] sm:$0xff]
        %v1630 = vld [vmem:[%s276 + $0x1698] sm:$0xff]
        %v1631 = vld [vmem:[%s276 + $0x16a0] sm:$0xff]
        %v1632 = vld [vmem:[%s276 + $0x16a8] sm:$0xff]
        %v1633 = vld [vmem:[%s276 + $0x16b0] sm:$0xff]
        %v1634 = vld [vmem:[%s276 + $0x16b8] sm:$0xff]
        %v1635 = vld [vmem:[%s276 + $0x16c0] sm:$0xff]
        %v1636 = vld [vmem:[%s276 + $0x16c8] sm:$0xff]
        %v1637 = vld [vmem:[%s276 + $0x16d0] sm:$0xff]
        %v1638 = vld [vmem:[%s276 + $0x16d8] sm:$0xff]
        %v1639 = vld [vmem:[%s276 + $0x16e0] sm:$0xff]
        %v1640 = vld [vmem:[%s276 + $0x16e8] sm:$0xff]
        %v1641 = vld [vmem:[%s276 + $0x16f0] sm:$0xff]
        %v1642 = vld [vmem:[%s276 + $0x16f8] sm:$0xff]
        %v1643 = vld [vmem:[%s276 + $0x1700] sm:$0xff]
        %v1644 = vld [vmem:[%s276 + $0x1708] sm:$0xff]
        %v1645 = vld [vmem:[%s276 + $0x1710] sm:$0xff]
        %v1646 = vld [vmem:[%s276 + $0x1718] sm:$0xff]
        %v1647 = vld [vmem:[%s276 + $0x1720] sm:$0xff]
        %v1648 = vld [vmem:[%s276 + $0x1728] sm:$0xff]
        %v1649 = vld [vmem:[%s276 + $0x1730] sm:$0xff]
        %v1650 = vld [vmem:[%s276 + $0x1738] sm:$0xff]
        %v1651 = vld [vmem:[%s276 + $0x1740] sm:$0xff]
        %v1652 = vld [vmem:[%s276 + $0x1748] sm:$0xff]
        %v1653 = vld [vmem:[%s276 + $0x1750] sm:$0xff]
        %v1654 = vld [vmem:[%s276 + $0x1758] sm:$0xff]
        %v1655 = vld [vmem:[%s276 + $0x1760] sm:$0xff]
        %v1656 = vld [vmem:[%s276 + $0x1768] sm:$0xff]
        %v1657 = vld [vmem:[%s276 + $0x1770] sm:$0xff]
        %v1658 = vld [vmem:[%s276 + $0x1778] sm:$0xff]
        %v1659 = vld [vmem:[%s276 + $0x1780] sm:$0xff]
        %v1660 = vld [vmem:[%s276 + $0x1788] sm:$0xff]
        %v1661 = vld [vmem:[%s276 + $0x1790] sm:$0xff]
        %v1662 = vld [vmem:[%s276 + $0x1798] sm:$0xff]
        %v1663 = vld [vmem:[%s276 + $0x17a0] sm:$0xff]
        %v1664 = vld [vmem:[%s276 + $0x17a8] sm:$0xff]
        %v1665 = vld [vmem:[%s276 + $0x17b0] sm:$0xff]
        %v1666 = vld [vmem:[%s276 + $0x17b8] sm:$0xff]
        %v1667 = vld [vmem:[%s276 + $0x17c0] sm:$0xff]
        %v1668 = vld [vmem:[%s276 + $0x17c8] sm:$0xff]
        %v1669 = vld [vmem:[%s276 + $0x17d0] sm:$0xff]
        %v1670 = vld [vmem:[%s276 + $0x17d8] sm:$0xff]
        %v1671 = vld [vmem:[%s276 + $0x17e0] sm:$0xff]
        %v1672 = vld [vmem:[%s276 + $0x17e8] sm:$0xff]
        %v1673 = vld [vmem:[%s276 + $0x17f0] sm:$0xff]
        %v1674 = vld [vmem:[%s276 + $0x17f8] sm:$0xff]
        %v1675 = vld [vmem:[%s276 + $0x1800] sm:$0xff]
        %v1676 = vld [vmem:[%s276 + $0x1808] sm:$0xff]
        %v1677 = vld [vmem:[%s276 + $0x1810] sm:$0xff]
        %v1678 = vld [vmem:[%s276 + $0x1818] sm:$0xff]
        %v1679 = vld [vmem:[%s276 + $0x1820] sm:$0xff]
        %v1680 = vld [vmem:[%s276 + $0x1828] sm:$0xff]
        %v1681 = vld [vmem:[%s276 + $0x1830] sm:$0xff]
        %v1682 = vld [vmem:[%s276 + $0x1838] sm:$0xff]
        %v1683 = vld [vmem:[%s276 + $0x1840] sm:$0xff]
        %v1684 = vld [vmem:[%s276 + $0x1848] sm:$0xff]
        %v1685 = vld [vmem:[%s276 + $0x1850] sm:$0xff]
        %v1686 = vld [vmem:[%s276 + $0x1858] sm:$0xff]
        %v1687 = vld [vmem:[%s276 + $0x1860] sm:$0xff]
        %v1688 = vld [vmem:[%s276 + $0x1868] sm:$0xff]
        %v1689 = vld [vmem:[%s276 + $0x1870] sm:$0xff]
        %v1690 = vld [vmem:[%s276 + $0x1878] sm:$0xff]
        %v1691 = vld [vmem:[%s276 + $0x1880] sm:$0xff]
        %v1692 = vld [vmem:[%s276 + $0x1888] sm:$0xff]
        %v1693 = vld [vmem:[%s276 + $0x1890] sm:$0xff]
        %v1694 = vld [vmem:[%s276 + $0x1898] sm:$0xff]
        %v1695 = vld [vmem:[%s276 + $0x18a0] sm:$0xff]
        %v1696 = vld [vmem:[%s276 + $0x18a8] sm:$0xff]
        %v1697 = vld [vmem:[%s276 + $0x18b0] sm:$0xff]
        %v1698 = vld [vmem:[%s276 + $0x18b8] sm:$0xff]
        %v1699 = vld [vmem:[%s276 + $0x18c0] sm:$0xff]
        %v1700 = vld [vmem:[%s276 + $0x18c8] sm:$0xff]
        %v1701 = vld [vmem:[%s276 + $0x18d0] sm:$0xff]
        %v1702 = vld [vmem:[%s276 + $0x18d8] sm:$0xff]
        %v1703 = vld [vmem:[%s276 + $0x18e0] sm:$0xff]
        %v1704 = vld [vmem:[%s276 + $0x18e8] sm:$0xff]
        %v1705 = vld [vmem:[%s276 + $0x18f0] sm:$0xff]
        %v1706 = vld [vmem:[%s276 + $0x18f8] sm:$0xff]
        %v1707 = vld [vmem:[%s276 + $0x1900] sm:$0xff]
        %v1708 = vld [vmem:[%s276 + $0x1908] sm:$0xff]
        %v1709 = vld [vmem:[%s276 + $0x1910] sm:$0xff]
        %v1710 = vld [vmem:[%s276 + $0x1918] sm:$0xff]
        %v1711 = vld [vmem:[%s276 + $0x1920] sm:$0xff]
        %v1712 = vld [vmem:[%s276 + $0x1928] sm:$0xff]
        %v1713 = vld [vmem:[%s276 + $0x1930] sm:$0xff]
        %v1714 = vld [vmem:[%s276 + $0x1938] sm:$0xff]
        %v1715 = vld [vmem:[%s276 + $0x1940] sm:$0xff]
        %v1716 = vld [vmem:[%s276 + $0x1948] sm:$0xff]
        %v1717 = vld [vmem:[%s276 + $0x1950] sm:$0xff]
        %v1718 = vld [vmem:[%s276 + $0x1958] sm:$0xff]
        %v1719 = vld [vmem:[%s276 + $0x1960] sm:$0xff]
        %v1720 = vld [vmem:[%s276 + $0x1968] sm:$0xff]
        %v1721 = vld [vmem:[%s276 + $0x1970] sm:$0xff]
        %v1722 = vld [vmem:[%s276 + $0x1978] sm:$0xff]
        %v1723 = vld [vmem:[%s276 + $0x1980] sm:$0xff]
        %v1724 = vld [vmem:[%s276 + $0x1988] sm:$0xff]
        %v1725 = vld [vmem:[%s276 + $0x1990] sm:$0xff]
        %v1726 = vld [vmem:[%s276 + $0x1998] sm:$0xff]
        %v1727 = vld [vmem:[%s276 + $0x19a0] sm:$0xff]
        %v1728 = vld [vmem:[%s276 + $0x19a8] sm:$0xff]
        %v1729 = vld [vmem:[%s276 + $0x19b0] sm:$0xff]
        %v1730 = vld [vmem:[%s276 + $0x19b8] sm:$0xff]
        %v1731 = vld [vmem:[%s276 + $0x19c0] sm:$0xff]
        %v1732 = vld [vmem:[%s276 + $0x19c8] sm:$0xff]
        %v1733 = vld [vmem:[%s276 + $0x19d0] sm:$0xff]
        %v1734 = vld [vmem:[%s276 + $0x19d8] sm:$0xff]
        %v1735 = vld [vmem:[%s276 + $0x19e0] sm:$0xff]
        %v1736 = vld [vmem:[%s276 + $0x19e8] sm:$0xff]
        %v1737 = vld [vmem:[%s276 + $0x19f0] sm:$0xff]
        %v1738 = vld [vmem:[%s276 + $0x19f8] sm:$0xff]
        %v1739 = vld [vmem:[%s276 + $0x1a00] sm:$0xff]
        %v1740 = vld [vmem:[%s276 + $0x1a08] sm:$0xff]
        %v1741 = vld [vmem:[%s276 + $0x1a10] sm:$0xff]
        %v1742 = vld [vmem:[%s276 + $0x1a18] sm:$0xff]
        %v1743 = vld [vmem:[%s276 + $0x1a20] sm:$0xff]
        %v1744 = vld [vmem:[%s276 + $0x1a28] sm:$0xff]
        %v1745 = vld [vmem:[%s276 + $0x1a30] sm:$0xff]
        %v1746 = vld [vmem:[%s276 + $0x1a38] sm:$0xff]
        %v1747 = vld [vmem:[%s276 + $0x1a40] sm:$0xff]
        %v1748 = vld [vmem:[%s276 + $0x1a48] sm:$0xff]
        %v1749 = vld [vmem:[%s276 + $0x1a50] sm:$0xff]
        %v1750 = vld [vmem:[%s276 + $0x1a58] sm:$0xff]
        %v1751 = vld [vmem:[%s276 + $0x1a60] sm:$0xff]
        %v1752 = vld [vmem:[%s276 + $0x1a68] sm:$0xff]
        %v1753 = vld [vmem:[%s276 + $0x1a70] sm:$0xff]
        %v1754 = vld [vmem:[%s276 + $0x1a78] sm:$0xff]
        %v1755 = vld [vmem:[%s276 + $0x1a80] sm:$0xff]
        %v1756 = vld [vmem:[%s276 + $0x1a88] sm:$0xff]
        %v1757 = vld [vmem:[%s276 + $0x1a90] sm:$0xff]
        %v1758 = vld [vmem:[%s276 + $0x1a98] sm:$0xff]
        %v1759 = vld [vmem:[%s276 + $0x1aa0] sm:$0xff]
        %v1760 = vld [vmem:[%s276 + $0x1aa8] sm:$0xff]
        %v1761 = vld [vmem:[%s276 + $0x1ab0] sm:$0xff]
        %v1762 = vld [vmem:[%s276 + $0x1ab8] sm:$0xff]
        %v1763 = vld [vmem:[%s276 + $0x1ac0] sm:$0xff]
        %v1764 = vld [vmem:[%s276 + $0x1ac8] sm:$0xff]
        %v1765 = vld [vmem:[%s276 + $0x1ad0] sm:$0xff]
        %v1766 = vld [vmem:[%s276 + $0x1ad8] sm:$0xff]
        %v1767 = vld [vmem:[%s276 + $0x1ae0] sm:$0xff]
        %v1768 = vld [vmem:[%s276 + $0x1ae8] sm:$0xff]
        %v1769 = vld [vmem:[%s276 + $0x1af0] sm:$0xff]
        %v1770 = vld [vmem:[%s276 + $0x1af8] sm:$0xff]
        %v1771 = vld [vmem:[%s276 + $0x1b00] sm:$0xff]
        %v1772 = vld [vmem:[%s276 + $0x1b08] sm:$0xff]
        %v1773 = vld [vmem:[%s276 + $0x1b10] sm:$0xff]
        %v1774 = vld [vmem:[%s276 + $0x1b18] sm:$0xff]
        %v1775 = vld [vmem:[%s276 + $0x1b20] sm:$0xff]
        %v1776 = vld [vmem:[%s276 + $0x1b28] sm:$0xff]
        %v1777 = vld [vmem:[%s276 + $0x1b30] sm:$0xff]
        %v1778 = vld [vmem:[%s276 + $0x1b38] sm:$0xff]
        %v1779 = vld [vmem:[%s276 + $0x1b40] sm:$0xff]
        %v1780 = vld [vmem:[%s276 + $0x1b48] sm:$0xff]
        %v1781 = vld [vmem:[%s276 + $0x1b50] sm:$0xff]
        %v1782 = vld [vmem:[%s276 + $0x1b58] sm:$0xff]
        %v1783 = vld [vmem:[%s276 + $0x1b60] sm:$0xff]
        %v1784 = vld [vmem:[%s276 + $0x1b68] sm:$0xff]
        %v1785 = vld [vmem:[%s276 + $0x1b70] sm:$0xff]
        %v1786 = vld [vmem:[%s276 + $0x1b78] sm:$0xff]
        %v1787 = vld [vmem:[%s276 + $0x1b80] sm:$0xff]
        %v1788 = vld [vmem:[%s276 + $0x1b88] sm:$0xff]
        %v1789 = vld [vmem:[%s276 + $0x1b90] sm:$0xff]
        %v1790 = vld [vmem:[%s276 + $0x1b98] sm:$0xff]
        %v1791 = vld [vmem:[%s276 + $0x1ba0] sm:$0xff]
        %v1792 = vld [vmem:[%s276 + $0x1ba8] sm:$0xff]
        %v1793 = vld [vmem:[%s276 + $0x1bb0] sm:$0xff]
        %v1794 = vld [vmem:[%s276 + $0x1bb8] sm:$0xff]
        %v1795 = vld [vmem:[%s276 + $0x1bc0] sm:$0xff]
        %v1796 = vld [vmem:[%s276 + $0x1bc8] sm:$0xff]
        %v1797 = vld [vmem:[%s276 + $0x1bd0] sm:$0xff]
        %v1798 = vld [vmem:[%s276 + $0x1bd8] sm:$0xff]
        %v1799 = vld [vmem:[%s276 + $0x1be0] sm:$0xff]
        %v1800 = vld [vmem:[%s276 + $0x1be8] sm:$0xff]
        %v1801 = vld [vmem:[%s276 + $0x1bf0] sm:$0xff]
        %v1802 = vld [vmem:[%s276 + $0x1bf8] sm:$0xff]
        %v1803 = vld [vmem:[%s276 + $0x1c00] sm:$0xff]
        %v1804 = vld [vmem:[%s276 + $0x1c08] sm:$0xff]
        %v1805 = vld [vmem:[%s276 + $0x1c10] sm:$0xff]
        %v1806 = vld [vmem:[%s276 + $0x1c18] sm:$0xff]
        %v1807 = vld [vmem:[%s276 + $0x1c20] sm:$0xff]
        %v1808 = vld [vmem:[%s276 + $0x1c28] sm:$0xff]
        %v1809 = vld [vmem:[%s276 + $0x1c30] sm:$0xff]
        %v1810 = vld [vmem:[%s276 + $0x1c38] sm:$0xff]
        %v1811 = vld [vmem:[%s276 + $0x1c40] sm:$0xff]
        %v1812 = vld [vmem:[%s276 + $0x1c48] sm:$0xff]
        %v1813 = vld [vmem:[%s276 + $0x1c50] sm:$0xff]
        %v1814 = vld [vmem:[%s276 + $0x1c58] sm:$0xff]
        %v1815 = vld [vmem:[%s276 + $0x1c60] sm:$0xff]
        %v1816 = vld [vmem:[%s276 + $0x1c68] sm:$0xff]
        %v1817 = vld [vmem:[%s276 + $0x1c70] sm:$0xff]
        %v1818 = vld [vmem:[%s276 + $0x1c78] sm:$0xff]
        %v1819 = vld [vmem:[%s276 + $0x1c80] sm:$0xff]
        %v1820 = vld [vmem:[%s276 + $0x1c88] sm:$0xff]
        %v1821 = vld [vmem:[%s276 + $0x1c90] sm:$0xff]
        %v1822 = vld [vmem:[%s276 + $0x1c98] sm:$0xff]
        %v1823 = vld [vmem:[%s276 + $0x1ca0] sm:$0xff]
        %v1824 = vld [vmem:[%s276 + $0x1ca8] sm:$0xff]
        %v1825 = vld [vmem:[%s276 + $0x1cb0] sm:$0xff]
        %v1826 = vld [vmem:[%s276 + $0x1cb8] sm:$0xff]
        %v1827 = vld [vmem:[%s276 + $0x1cc0] sm:$0xff]
        %v1828 = vld [vmem:[%s276 + $0x1cc8] sm:$0xff]
        %v1829 = vld [vmem:[%s276 + $0x1cd0] sm:$0xff]
        %v1830 = vld [vmem:[%s276 + $0x1cd8] sm:$0xff]
        %v1831 = vld [vmem:[%s276 + $0x1ce0] sm:$0xff]
        %v1832 = vld [vmem:[%s276 + $0x1ce8] sm:$0xff]
        %v1833 = vld [vmem:[%s276 + $0x1cf0] sm:$0xff]
        %v1834 = vld [vmem:[%s276 + $0x1cf8] sm:$0xff]
        %v1835 = vld [vmem:[%s276 + $0x1d00] sm:$0xff]
        %v1836 = vld [vmem:[%s276 + $0x1d08] sm:$0xff]
        %v1837 = vld [vmem:[%s276 + $0x1d10] sm:$0xff]
        %v1838 = vld [vmem:[%s276 + $0x1d18] sm:$0xff]
        %v1839 = vld [vmem:[%s276 + $0x1d20] sm:$0xff]
        %v1840 = vld [vmem:[%s276 + $0x1d28] sm:$0xff]
        %v1841 = vld [vmem:[%s276 + $0x1d30] sm:$0xff]
        %v1842 = vld [vmem:[%s276 + $0x1d38] sm:$0xff]
        %v1843 = vld [vmem:[%s276 + $0x1d40] sm:$0xff]
        %v1844 = vld [vmem:[%s276 + $0x1d48] sm:$0xff]
        %v1845 = vld [vmem:[%s276 + $0x1d50] sm:$0xff]
        %v1846 = vld [vmem:[%s276 + $0x1d58] sm:$0xff]
        %v1847 = vld [vmem:[%s276 + $0x1d60] sm:$0xff]
        %v1848 = vld [vmem:[%s276 + $0x1d68] sm:$0xff]
        %v1849 = vld [vmem:[%s276 + $0x1d70] sm:$0xff]
        %v1850 = vld [vmem:[%s276 + $0x1d78] sm:$0xff]
        %v1851 = vld [vmem:[%s276 + $0x1d80] sm:$0xff]
        %v1852 = vld [vmem:[%s276 + $0x1d88] sm:$0xff]
        %v1853 = vld [vmem:[%s276 + $0x1d90] sm:$0xff]
        %v1854 = vld [vmem:[%s276 + $0x1d98] sm:$0xff]
        %v1855 = vld [vmem:[%s276 + $0x1da0] sm:$0xff]
        %v1856 = vld [vmem:[%s276 + $0x1da8] sm:$0xff]
        %v1857 = vld [vmem:[%s276 + $0x1db0] sm:$0xff]
        %v1858 = vld [vmem:[%s276 + $0x1db8] sm:$0xff]
        %v1859 = vld [vmem:[%s276 + $0x1dc0] sm:$0xff]
        %v1860 = vld [vmem:[%s276 + $0x1dc8] sm:$0xff]
        %v1861 = vld [vmem:[%s276 + $0x1dd0] sm:$0xff]
        %v1862 = vld [vmem:[%s276 + $0x1dd8] sm:$0xff]
        %v1863 = vld [vmem:[%s276 + $0x1de0] sm:$0xff]
        %v1864 = vld [vmem:[%s276 + $0x1de8] sm:$0xff]
        %v1865 = vld [vmem:[%s276 + $0x1df0] sm:$0xff]
        %v1866 = vld [vmem:[%s276 + $0x1df8] sm:$0xff]
        %v1867 = vld [vmem:[%s276 + $0x1e00] sm:$0xff]
        %v1868 = vld [vmem:[%s276 + $0x1e08] sm:$0xff]
        %v1869 = vld [vmem:[%s276 + $0x1e10] sm:$0xff]
        %v1870 = vld [vmem:[%s276 + $0x1e18] sm:$0xff]
        %v1871 = vld [vmem:[%s276 + $0x1e20] sm:$0xff]
        %v1872 = vld [vmem:[%s276 + $0x1e28] sm:$0xff]
        %v1873 = vld [vmem:[%s276 + $0x1e30] sm:$0xff]
        %v1874 = vld [vmem:[%s276 + $0x1e38] sm:$0xff]
        %v1875 = vld [vmem:[%s276 + $0x1e40] sm:$0xff]
        %v1876 = vld [vmem:[%s276 + $0x1e48] sm:$0xff]
        %v1877 = vld [vmem:[%s276 + $0x1e50] sm:$0xff]
        %v1878 = vld [vmem:[%s276 + $0x1e58] sm:$0xff]
        %v1879 = vld [vmem:[%s276 + $0x1e60] sm:$0xff]
        %v1880 = vld [vmem:[%s276 + $0x1e68] sm:$0xff]
        %v1881 = vld [vmem:[%s276 + $0x1e70] sm:$0xff]
        %v1882 = vld [vmem:[%s276 + $0x1e78] sm:$0xff]
        %v1883 = vld [vmem:[%s276 + $0x1e80] sm:$0xff]
        %v1884 = vld [vmem:[%s276 + $0x1e88] sm:$0xff]
        %v1885 = vld [vmem:[%s276 + $0x1e90] sm:$0xff]
        %v1886 = vld [vmem:[%s276 + $0x1e98] sm:$0xff]
        %v1887 = vld [vmem:[%s276 + $0x1ea0] sm:$0xff]
        %v1888 = vld [vmem:[%s276 + $0x1ea8] sm:$0xff]
        %v1889 = vld [vmem:[%s276 + $0x1eb0] sm:$0xff]
        %v1890 = vld [vmem:[%s276 + $0x1eb8] sm:$0xff]
        %v1891 = vld [vmem:[%s276 + $0x1ec0] sm:$0xff]
        %v1892 = vld [vmem:[%s276 + $0x1ec8] sm:$0xff]
        %v1893 = vld [vmem:[%s276 + $0x1ed0] sm:$0xff]
        %v1894 = vld [vmem:[%s276 + $0x1ed8] sm:$0xff]
        %v1895 = vld [vmem:[%s276 + $0x1ee0] sm:$0xff]
        %v1896 = vld [vmem:[%s276 + $0x1ee8] sm:$0xff]
        %v1897 = vld [vmem:[%s276 + $0x1ef0] sm:$0xff]
        %v1898 = vld [vmem:[%s276 + $0x1ef8] sm:$0xff]
        %v1899 = vld [vmem:[%s276 + $0x1f00] sm:$0xff]
        %v1900 = vld [vmem:[%s276 + $0x1f08] sm:$0xff]
        %v1901 = vld [vmem:[%s276 + $0x1f10] sm:$0xff]
        %v1902 = vld [vmem:[%s276 + $0x1f18] sm:$0xff]
        %v1903 = vld [vmem:[%s276 + $0x1f20] sm:$0xff]
        %v1904 = vld [vmem:[%s276 + $0x1f28] sm:$0xff]
        %v1905 = vld [vmem:[%s276 + $0x1f30] sm:$0xff]
        %v1906 = vld [vmem:[%s276 + $0x1f38] sm:$0xff]
        %v1907 = vld [vmem:[%s276 + $0x1f40] sm:$0xff]
        %v1908 = vld [vmem:[%s276 + $0x1f48] sm:$0xff]
        %v1909 = vld [vmem:[%s276 + $0x1f50] sm:$0xff]
        %v1910 = vld [vmem:[%s276 + $0x1f58] sm:$0xff]
        %v1911 = vld [vmem:[%s276 + $0x1f60] sm:$0xff]
        %v1912 = vld [vmem:[%s276 + $0x1f68] sm:$0xff]
        %v1913 = vld [vmem:[%s276 + $0x1f70] sm:$0xff]
        %v1914 = vld [vmem:[%s276 + $0x1f78] sm:$0xff]
        %v1915 = vld [vmem:[%s276 + $0x1f80] sm:$0xff]
        %v1916 = vld [vmem:[%s276 + $0x1f88] sm:$0xff]
        %v1917 = vld [vmem:[%s276 + $0x1f90] sm:$0xff]
        %v1918 = vld [vmem:[%s276 + $0x1f98] sm:$0xff]
        %v1919 = vld [vmem:[%s276 + $0x1fa0] sm:$0xff]
        %v1920 = vld [vmem:[%s276 + $0x1fa8] sm:$0xff]
        %v1921 = vld [vmem:[%s276 + $0x1fb0] sm:$0xff]
        %v1922 = vld [vmem:[%s276 + $0x1fb8] sm:$0xff]
        %v1923 = vld [vmem:[%s276 + $0x1fc0] sm:$0xff]
        %v1924 = vld [vmem:[%s276 + $0x1fc8] sm:$0xff]
        %v1925 = vld [vmem:[%s276 + $0x1fd0] sm:$0xff]
        %v1926 = vld [vmem:[%s276 + $0x1fd8] sm:$0xff]
        %v1927 = vld [vmem:[%s276 + $0x1fe0] sm:$0xff]
        %v1928 = vld [vmem:[%s276 + $0x1fe8] sm:$0xff]
        %v1929 = vld [vmem:[%s276 + $0x1ff0] sm:$0xff]
        %v1930 = vld [vmem:[%s276 + $0x1ff8] sm:$0xff]
        %v1931 = vld [vmem:[%s276 + $0x2000] sm:$0xff]
        %v1932 = vld [vmem:[%s276 + $0x2008] sm:$0xff]
        %v1933 = vld [vmem:[%s276 + $0x2010] sm:$0xff]
        %v1934 = vld [vmem:[%s276 + $0x2018] sm:$0xff]
        %v1935 = vld [vmem:[%s276 + $0x2020] sm:$0xff]
        %v1936 = vld [vmem:[%s276 + $0x2028] sm:$0xff]
        %v1937 = vld [vmem:[%s276 + $0x2030] sm:$0xff]
        %v1938 = vld [vmem:[%s276 + $0x2038] sm:$0xff]
        %v1939 = vld [vmem:[%s276 + $0x2040] sm:$0xff]
        %v1940 = vld [vmem:[%s276 + $0x2048] sm:$0xff]
        %v1941 = vld [vmem:[%s276 + $0x2050] sm:$0xff]
        %v1942 = vld [vmem:[%s276 + $0x2058] sm:$0xff]
        %v1943 = vld [vmem:[%s276 + $0x2060] sm:$0xff]
        %v1944 = vld [vmem:[%s276 + $0x2068] sm:$0xff]
        %v1945 = vld [vmem:[%s276 + $0x2070] sm:$0xff]
        %v1946 = vld [vmem:[%s276 + $0x2078] sm:$0xff]
        %v1947 = vld [vmem:[%s276 + $0x2080] sm:$0xff]
        %v1948 = vld [vmem:[%s276 + $0x2088] sm:$0xff]
        %v1949 = vld [vmem:[%s276 + $0x2090] sm:$0xff]
        %v1950 = vld [vmem:[%s276 + $0x2098] sm:$0xff]
        %v1951 = vld [vmem:[%s276 + $0x20a0] sm:$0xff]
        %v1952 = vld [vmem:[%s276 + $0x20a8] sm:$0xff]
        %v1953 = vld [vmem:[%s276 + $0x20b0] sm:$0xff]
        %v1954 = vld [vmem:[%s276 + $0x20b8] sm:$0xff]
        %v1955 = vld [vmem:[%s276 + $0x20c0] sm:$0xff]
        %v1956 = vld [vmem:[%s276 + $0x20c8] sm:$0xff]
        %v1957 = vld [vmem:[%s276 + $0x20d0] sm:$0xff]
        %v1958 = vld [vmem:[%s276 + $0x20d8] sm:$0xff]
        %v1959 = vld [vmem:[%s276 + $0x20e0] sm:$0xff]
        %v1960 = vld [vmem:[%s276 + $0x20e8] sm:$0xff]
        %v1961 = vld [vmem:[%s276 + $0x20f0] sm:$0xff]
        %v1962 = vld [vmem:[%s276 + $0x20f8] sm:$0xff]
        %v1963 = vld [vmem:[%s276 + $0x2100] sm:$0xff]
        %v1964 = vld [vmem:[%s276 + $0x2108] sm:$0xff]
        %v1965 = vld [vmem:[%s276 + $0x2110] sm:$0xff]
        %v1966 = vld [vmem:[%s276 + $0x2118] sm:$0xff]
        %v1967 = vld [vmem:[%s276 + $0x2120] sm:$0xff]
        %v1968 = vld [vmem:[%s276 + $0x2128] sm:$0xff]
        %v1969 = vld [vmem:[%s276 + $0x2130] sm:$0xff]
        %v1970 = vld [vmem:[%s276 + $0x2138] sm:$0xff]
        %v1971 = vld [vmem:[%s276 + $0x2140] sm:$0xff]
        %v1972 = vld [vmem:[%s276 + $0x2148] sm:$0xff]
        %v1973 = vld [vmem:[%s276 + $0x2150] sm:$0xff]
        %v1974 = vld [vmem:[%s276 + $0x2158] sm:$0xff]
        %v1975 = vld [vmem:[%s276 + $0x2160] sm:$0xff]
        %v1976 = vld [vmem:[%s276 + $0x2168] sm:$0xff]
        %v1977 = vld [vmem:[%s276 + $0x2170] sm:$0xff]
        %v1978 = vld [vmem:[%s276 + $0x2178] sm:$0xff]
        %v1979 = vld [vmem:[%s276 + $0x2180] sm:$0xff]
        %v1980 = vld [vmem:[%s276 + $0x2188] sm:$0xff]
        %v1981 = vld [vmem:[%s276 + $0x2190] sm:$0xff]
        %v1982 = vld [vmem:[%s276 + $0x2198] sm:$0xff]
        %v1983 = vld [vmem:[%s276 + $0x21a0] sm:$0xff]
        %v1984 = vld [vmem:[%s276 + $0x21a8] sm:$0xff]
        %v1985 = vld [vmem:[%s276 + $0x21b0] sm:$0xff]
        %v1986 = vld [vmem:[%s276 + $0x21b8] sm:$0xff]
        %v1987 = vld [vmem:[%s276 + $0x21c0] sm:$0xff]
        %v1988 = vld [vmem:[%s276 + $0x21c8] sm:$0xff]
        %v1989 = vld [vmem:[%s276 + $0x21d0] sm:$0xff]
        %v1990 = vld [vmem:[%s276 + $0x21d8] sm:$0xff]
        %v1991 = vld [vmem:[%s276 + $0x21e0] sm:$0xff]
        %v1992 = vld [vmem:[%s276 + $0x21e8] sm:$0xff]
        %v1993 = vld [vmem:[%s276 + $0x21f0] sm:$0xff]
        %v1994 = vld [vmem:[%s276 + $0x21f8] sm:$0xff]
        %v1995 = vld [vmem:[%s276 + $0x2200] sm:$0xff]
        %v1996 = vld [vmem:[%s276 + $0x2208] sm:$0xff]
        %v1997 = vld [vmem:[%s276 + $0x2210] sm:$0xff]
        %v1998 = vld [vmem:[%s276 + $0x2218] sm:$0xff]
        %v1999 = vld [vmem:[%s276 + $0x2220] sm:$0xff]
        %v2000 = vld [vmem:[%s276 + $0x2228] sm:$0xff]
        %v2001 = vld [vmem:[%s276 + $0x2230] sm:$0xff]
        %v2002 = vld [vmem:[%s276 + $0x2238] sm:$0xff]
        %v2003 = vld [vmem:[%s276 + $0x2240] sm:$0xff]
        %v2004 = vld [vmem:[%s276 + $0x2248] sm:$0xff]
        %v2005 = vld [vmem:[%s276 + $0x2250] sm:$0xff]
        %v2006 = vld [vmem:[%s276 + $0x2258] sm:$0xff]
        %v2007 = vld [vmem:[%s276 + $0x2260] sm:$0xff]
        %v2008 = vld [vmem:[%s276 + $0x2268] sm:$0xff]
        %v2009 = vld [vmem:[%s276 + $0x2270] sm:$0xff]
        %v2010 = vld [vmem:[%s276 + $0x2278] sm:$0xff]
        %v2011 = vld [vmem:[%s276 + $0x2280] sm:$0xff]
        %v2012 = vld [vmem:[%s276 + $0x2288] sm:$0xff]
        %v2013 = vld [vmem:[%s276 + $0x2290] sm:$0xff]
        %v2014 = vld [vmem:[%s276 + $0x2298] sm:$0xff]
        %v2015 = vld [vmem:[%s276 + $0x22a0] sm:$0xff]
        %v2016 = vld [vmem:[%s276 + $0x22a8] sm:$0xff]
        %v2017 = vld [vmem:[%s276 + $0x22b0] sm:$0xff]
        %v2018 = vld [vmem:[%s276 + $0x22b8] sm:$0xff]
        %v2019 = vld [vmem:[%s276 + $0x22c0] sm:$0xff]
        %v2020 = vld [vmem:[%s276 + $0x22c8] sm:$0xff]
        %v2021 = vld [vmem:[%s276 + $0x22d0] sm:$0xff]
        %v2022 = vld [vmem:[%s276 + $0x22d8] sm:$0xff]
        %v2023 = vld [vmem:[%s276 + $0x22e0] sm:$0xff]
        %v2024 = vld [vmem:[%s276 + $0x22e8] sm:$0xff]
        %v2025 = vld [vmem:[%s276 + $0x22f0] sm:$0xff]
        %v2026 = vld [vmem:[%s276 + $0x22f8] sm:$0xff]
        %v2027 = vld [vmem:[%s276 + $0x2300] sm:$0xff]
        %v2028 = vld [vmem:[%s276 + $0x2308] sm:$0xff]
        %v2029 = vld [vmem:[%s276 + $0x2310] sm:$0xff]
        %v2030 = vld [vmem:[%s276 + $0x2318] sm:$0xff]
        %v2031 = vld [vmem:[%s276 + $0x2320] sm:$0xff]
        %v2032 = vld [vmem:[%s276 + $0x2328] sm:$0xff]
        %v2033 = vld [vmem:[%s276 + $0x2330] sm:$0xff]
        %v2034 = vld [vmem:[%s276 + $0x2338] sm:$0xff]
        %v2035 = vld [vmem:[%s276 + $0x2340] sm:$0xff]
        %v2036 = vld [vmem:[%s276 + $0x2348] sm:$0xff]
        %v2037 = vld [vmem:[%s276 + $0x2350] sm:$0xff]
        %v2038 = vld [vmem:[%s276 + $0x2358] sm:$0xff]
        %v2039 = vld [vmem:[%s276 + $0x2360] sm:$0xff]
        %v2040 = vld [vmem:[%s276 + $0x2368] sm:$0xff]
        %v2041 = vld [vmem:[%s276 + $0x2370] sm:$0xff]
        %v2042 = vld [vmem:[%s276 + $0x2378] sm:$0xff]
        %v2043 = vld [vmem:[%s276 + $0x2380] sm:$0xff]
        %v2044 = vld [vmem:[%s276 + $0x2388] sm:$0xff]
        %v2045 = vld [vmem:[%s276 + $0x2390] sm:$0xff]
        %v2046 = vld [vmem:[%s276 + $0x2398] sm:$0xff]
        %v2047 = vld [vmem:[%s276 + $0x23a0] sm:$0xff]
        %v2048 = vld [vmem:[%s276 + $0x23a8] sm:$0xff]
        %v2049 = vld [vmem:[%s276 + $0x23b0] sm:$0xff]
        %v2050 = vld [vmem:[%s276 + $0x23b8] sm:$0xff]
        %v2051 = vld [vmem:[%s276 + $0x23c0] sm:$0xff]
        %v2052 = vld [vmem:[%s276 + $0x23c8] sm:$0xff]
        %v2053 = vld [vmem:[%s276 + $0x23d0] sm:$0xff]
        %v2054 = vld [vmem:[%s276 + $0x23d8] sm:$0xff]
        %v2055 = vld [vmem:[%s276 + $0x23e0] sm:$0xff]
        %v2056 = vld [vmem:[%s276 + $0x23e8] sm:$0xff]
        %v2057 = vld [vmem:[%s276 + $0x23f0] sm:$0xff]
        %v2058 = vld [vmem:[%s276 + $0x23f8] sm:$0xff]
        %v2059 = vld [vmem:[%s276 + $0x2400] sm:$0xff]
        %v2060 = vld [vmem:[%s276 + $0x2408] sm:$0xff]
        %v2061 = vld [vmem:[%s276 + $0x2410] sm:$0xff]
        %v2062 = vld [vmem:[%s276 + $0x2418] sm:$0xff]
        %v2063 = vld [vmem:[%s276 + $0x2420] sm:$0xff]
        %v2064 = vld [vmem:[%s276 + $0x2428] sm:$0xff]
        %v2065 = vld [vmem:[%s276 + $0x2430] sm:$0xff]
        %v2066 = vld [vmem:[%s276 + $0x2438] sm:$0xff]
        %v2067 = vld [vmem:[%s276 + $0x2440] sm:$0xff]
        %v2068 = vld [vmem:[%s276 + $0x2448] sm:$0xff]
        %v2069 = vld [vmem:[%s276 + $0x2450] sm:$0xff]
        %v2070 = vld [vmem:[%s276 + $0x2458] sm:$0xff]
        %v2071 = vld [vmem:[%s276 + $0x2460] sm:$0xff]
        %v2072 = vld [vmem:[%s276 + $0x2468] sm:$0xff]
        %v2073 = vld [vmem:[%s276 + $0x2470] sm:$0xff]
        %v2074 = vld [vmem:[%s276 + $0x2478] sm:$0xff]
        %v2075 = vld [vmem:[%s276 + $0x2480] sm:$0xff]
        %v2076 = vld [vmem:[%s276 + $0x2488] sm:$0xff]
        %v2077 = vld [vmem:[%s276 + $0x2490] sm:$0xff]
        %v2078 = vld [vmem:[%s276 + $0x2498] sm:$0xff]
        %v2079 = vld [vmem:[%s276 + $0x24a0] sm:$0xff]
        %v2080 = vld [vmem:[%s276 + $0x24a8] sm:$0xff]
        %v2081 = vld [vmem:[%s276 + $0x24b0] sm:$0xff]
        %v2082 = vld [vmem:[%s276 + $0x24b8] sm:$0xff]
        %v2083 = vld [vmem:[%s285] sm:$0xf]
        %v2085 = vlaneseq
        %v2086 = vshrl.u32 %v2085, 7
        %v2087 = vsub.s32 0, %v2086
        %v2088 = vrot.slane %v2083, %v2087
        %v2089 = vlaneseq
        %v2090 = vshrl.u32 %v2089, 7
        %v2091 = vsub.s32 1, %v2090
        %v2092 = vrot.slane %v2083, %v2091
        %v2093 = vlaneseq
        %v2094 = vshrl.u32 %v2093, 7
        %v2095 = vsub.s32 2, %v2094
        %v2096 = vrot.slane %v2083, %v2095
        %v2097 = vlaneseq
        %v2098 = vshrl.u32 %v2097, 7
        %v2099 = vsub.s32 3, %v2098
        %v2100 = vrot.slane %v2083, %v2099
        %v2110 = vcombine.high %v902, %v902
        %v2112 = vunpack.c.l.s4 1966171168
        %v2113 = vunpack.c.0.s8 %v2112
        %v2114 = vlaneseq
        %v2115 = vshrl.u32 %v2114, 7
        %v2116 = vsub.s32 %v2113, %v2115
        %v2117 = vrot.slane %v902, %v2116
        %v2119 = vunpack.c.l.s4 1966171168
        %v2120 = vunpack.c.0.s8 %v2119
        %v2121 = vlaneseq
        %v2122 = vshrl.u32 %v2121, 7
        %v2123 = vsub.s32 %v2120, %v2122
        %v2124 = vrot.slane %v2110, %v2123
        %v2125 = vcombine.high %v2117, %v2117
        %v2126 = vcombine.high %v2124, %v2124
        %v2128 = vunpack.c.l.s4 1966171168
        %v2129 = vunpack.c.0.s8 %v2128
        %v2130 = vlaneseq
        %v2131 = vshrl.u32 %v2130, 7
        %v2132 = vsub.s32 %v2129, %v2131
        %v2133 = vrot.slane %v2117, %v2132
        %v2135 = vunpack.c.l.s4 1966171168
        %v2136 = vunpack.c.0.s8 %v2135
        %v2137 = vlaneseq
        %v2138 = vshrl.u32 %v2137, 7
        %v2139 = vsub.s32 %v2136, %v2138
        %v2140 = vrot.slane %v2124, %v2139
        %v2142 = vunpack.c.l.s4 1966171168
        %v2143 = vunpack.c.0.s8 %v2142
        %v2144 = vlaneseq
        %v2145 = vshrl.u32 %v2144, 7
        %v2146 = vsub.s32 %v2143, %v2145
        %v2147 = vrot.slane %v2125, %v2146
        %v2149 = vunpack.c.l.s4 1966171168
        %v2150 = vunpack.c.0.s8 %v2149
        %v2151 = vlaneseq
        %v2152 = vshrl.u32 %v2151, 7
        %v2153 = vsub.s32 %v2150, %v2152
        %v2154 = vrot.slane %v2126, %v2153
        %v2155 = vcombine.high %v2133, %v2133
        %v2156 = vcombine.high %v2140, %v2140
        %v2157 = vcombine.high %v2147, %v2147
        %v2158 = vcombine.high %v2154, %v2154
        %v2159 = vcombine.high %v903, %v903
        %v2161 = vunpack.c.l.s4 1966171168
        %v2162 = vunpack.c.0.s8 %v2161
        %v2163 = vlaneseq
        %v2164 = vshrl.u32 %v2163, 7
        %v2165 = vsub.s32 %v2162, %v2164
        %v2166 = vrot.slane %v903, %v2165
        %v2168 = vunpack.c.l.s4 1966171168
        %v2169 = vunpack.c.0.s8 %v2168
        %v2170 = vlaneseq
        %v2171 = vshrl.u32 %v2170, 7
        %v2172 = vsub.s32 %v2169, %v2171
        %v2173 = vrot.slane %v2159, %v2172
        %v2174 = vcombine.high %v2166, %v2166
        %v2175 = vcombine.high %v2173, %v2173
        %v2177 = vunpack.c.l.s4 1966171168
        %v2178 = vunpack.c.0.s8 %v2177
        %v2179 = vlaneseq
        %v2180 = vshrl.u32 %v2179, 7
        %v2181 = vsub.s32 %v2178, %v2180
        %v2182 = vrot.slane %v2166, %v2181
        %v2184 = vunpack.c.l.s4 1966171168
        %v2185 = vunpack.c.0.s8 %v2184
        %v2186 = vlaneseq
        %v2187 = vshrl.u32 %v2186, 7
        %v2188 = vsub.s32 %v2185, %v2187
        %v2189 = vrot.slane %v2173, %v2188
        %v2191 = vunpack.c.l.s4 1966171168
        %v2192 = vunpack.c.0.s8 %v2191
        %v2193 = vlaneseq
        %v2194 = vshrl.u32 %v2193, 7
        %v2195 = vsub.s32 %v2192, %v2194
        %v2196 = vrot.slane %v2174, %v2195
        %v2198 = vunpack.c.l.s4 1966171168
        %v2199 = vunpack.c.0.s8 %v2198
        %v2200 = vlaneseq
        %v2201 = vshrl.u32 %v2200, 7
        %v2202 = vsub.s32 %v2199, %v2201
        %v2203 = vrot.slane %v2175, %v2202
        %v2204 = vcombine.high %v2182, %v2182
        %v2205 = vcombine.high %v2189, %v2189
        %v2206 = vcombine.high %v2196, %v2196
        %v2207 = vcombine.high %v2203, %v2203
        %v2208 = vcombine.high %v904, %v904
        %v2210 = vunpack.c.l.s4 1966171168
        %v2211 = vunpack.c.0.s8 %v2210
        %v2212 = vlaneseq
        %v2213 = vshrl.u32 %v2212, 7
        %v2214 = vsub.s32 %v2211, %v2213
        %v2215 = vrot.slane %v904, %v2214
        %v2217 = vunpack.c.l.s4 1966171168
        %v2218 = vunpack.c.0.s8 %v2217
        %v2219 = vlaneseq
        %v2220 = vshrl.u32 %v2219, 7
        %v2221 = vsub.s32 %v2218, %v2220
        %v2222 = vrot.slane %v2208, %v2221
        %v2223 = vcombine.high %v2215, %v2215
        %v2224 = vcombine.high %v2222, %v2222
        %v2226 = vunpack.c.l.s4 1966171168
        %v2227 = vunpack.c.0.s8 %v2226
        %v2228 = vlaneseq
        %v2229 = vshrl.u32 %v2228, 7
        %v2230 = vsub.s32 %v2227, %v2229
        %v2231 = vrot.slane %v2215, %v2230
        %v2233 = vunpack.c.l.s4 1966171168
        %v2234 = vunpack.c.0.s8 %v2233
        %v2235 = vlaneseq
        %v2236 = vshrl.u32 %v2235, 7
        %v2237 = vsub.s32 %v2234, %v2236
        %v2238 = vrot.slane %v2222, %v2237
        %v2240 = vunpack.c.l.s4 1966171168
        %v2241 = vunpack.c.0.s8 %v2240
        %v2242 = vlaneseq
        %v2243 = vshrl.u32 %v2242, 7
        %v2244 = vsub.s32 %v2241, %v2243
        %v2245 = vrot.slane %v2223, %v2244
        %v2247 = vunpack.c.l.s4 1966171168
        %v2248 = vunpack.c.0.s8 %v2247
        %v2249 = vlaneseq
        %v2250 = vshrl.u32 %v2249, 7
        %v2251 = vsub.s32 %v2248, %v2250
        %v2252 = vrot.slane %v2224, %v2251
        %v2253 = vcombine.high %v2231, %v2231
        %v2254 = vcombine.high %v2238, %v2238
        %v2255 = vcombine.high %v2245, %v2245
        %v2256 = vcombine.high %v2252, %v2252
        %v2257 = vcombine.high %v905, %v905
        %v2259 = vunpack.c.l.s4 1966171168
        %v2260 = vunpack.c.0.s8 %v2259
        %v2261 = vlaneseq
        %v2262 = vshrl.u32 %v2261, 7
        %v2263 = vsub.s32 %v2260, %v2262
        %v2264 = vrot.slane %v905, %v2263
        %v2266 = vunpack.c.l.s4 1966171168
        %v2267 = vunpack.c.0.s8 %v2266
        %v2268 = vlaneseq
        %v2269 = vshrl.u32 %v2268, 7
        %v2270 = vsub.s32 %v2267, %v2269
        %v2271 = vrot.slane %v2257, %v2270
        %v2272 = vcombine.high %v2264, %v2264
        %v2273 = vcombine.high %v2271, %v2271
        %v2275 = vunpack.c.l.s4 1966171168
        %v2276 = vunpack.c.0.s8 %v2275
        %v2277 = vlaneseq
        %v2278 = vshrl.u32 %v2277, 7
        %v2279 = vsub.s32 %v2276, %v2278
        %v2280 = vrot.slane %v2264, %v2279
        %v2282 = vunpack.c.l.s4 1966171168
        %v2283 = vunpack.c.0.s8 %v2282
        %v2284 = vlaneseq
        %v2285 = vshrl.u32 %v2284, 7
        %v2286 = vsub.s32 %v2283, %v2285
        %v2287 = vrot.slane %v2271, %v2286
        %v2289 = vunpack.c.l.s4 1966171168
        %v2290 = vunpack.c.0.s8 %v2289
        %v2291 = vlaneseq
        %v2292 = vshrl.u32 %v2291, 7
        %v2293 = vsub.s32 %v2290, %v2292
        %v2294 = vrot.slane %v2272, %v2293
        %v2296 = vunpack.c.l.s4 1966171168
        %v2297 = vunpack.c.0.s8 %v2296
        %v2298 = vlaneseq
        %v2299 = vshrl.u32 %v2298, 7
        %v2300 = vsub.s32 %v2297, %v2299
        %v2301 = vrot.slane %v2273, %v2300
        %v2302 = vcombine.high %v2280, %v2280
        %v2303 = vcombine.high %v2287, %v2287
        %v2304 = vcombine.high %v2294, %v2294
        %v2305 = vcombine.high %v2301, %v2301
        %v2306 = vcombine.high %v906, %v906
        %v2308 = vunpack.c.l.s4 1966171168
        %v2309 = vunpack.c.0.s8 %v2308
        %v2310 = vlaneseq
        %v2311 = vshrl.u32 %v2310, 7
        %v2312 = vsub.s32 %v2309, %v2311
        %v2313 = vrot.slane %v906, %v2312
        %v2315 = vunpack.c.l.s4 1966171168
        %v2316 = vunpack.c.0.s8 %v2315
        %v2317 = vlaneseq
        %v2318 = vshrl.u32 %v2317, 7
        %v2319 = vsub.s32 %v2316, %v2318
        %v2320 = vrot.slane %v2306, %v2319
        %v2321 = vcombine.high %v2313, %v2313
        %v2323 = vunpack.c.l.s4 1966171168
        %v2324 = vunpack.c.0.s8 %v2323
        %v2325 = vlaneseq
        %v2326 = vshrl.u32 %v2325, 7
        %v2327 = vsub.s32 %v2324, %v2326
        %v2328 = vrot.slane %v2313, %v2327
        %v2330 = vunpack.c.l.s4 1966171168
        %v2331 = vunpack.c.0.s8 %v2330
        %v2332 = vlaneseq
        %v2333 = vshrl.u32 %v2332, 7
        %v2334 = vsub.s32 %v2331, %v2333
        %v2335 = vrot.slane %v2320, %v2334
        %v2337 = vunpack.c.l.s4 1966171168
        %v2338 = vunpack.c.0.s8 %v2337
        %v2339 = vlaneseq
        %v2340 = vshrl.u32 %v2339, 7
        %v2341 = vsub.s32 %v2338, %v2340
        %v2342 = vrot.slane %v2321, %v2341
        %v2343 = vcombine.high %v2328, %v2328
        %v2344 = vcombine.high %v2342, %v2342
        %v3557 = vunpack.c.l.b16 %v907
        %v3558 = vunpack.c.h.b16 %v907
        %v3559 = vunpack.c.l.b16 %v908
        %v3560 = vunpack.c.h.b16 %v908
        %v3561 = vunpack.c.l.b16 %v909
        %v3562 = vunpack.c.h.b16 %v909
        %v3563 = vunpack.c.l.b16 %v910
        %v3564 = vunpack.c.h.b16 %v910
        %v3565 = vunpack.c.l.b16 %v911
        %v3566 = vunpack.c.h.b16 %v911
        %v3567 = vunpack.c.l.b16 %v912
        %v3568 = vunpack.c.h.b16 %v912
        %v3569 = vunpack.c.l.b16 %v913
        %v3570 = vunpack.c.h.b16 %v913
        %v3571 = vunpack.c.l.b16 %v914
        %v3572 = vunpack.c.h.b16 %v914
        %v3573 = vunpack.c.l.b16 %v915
        %v3574 = vunpack.c.h.b16 %v915
        %v3575 = vunpack.c.l.b16 %v916
        %v3576 = vunpack.c.h.b16 %v916
        %v3577 = vunpack.c.l.b16 %v917
        %v3578 = vunpack.c.h.b16 %v917
        %v3579 = vunpack.c.l.b16 %v918
        %v3580 = vunpack.c.h.b16 %v918
        %v3581 = vunpack.c.l.b16 %v919
        %v3582 = vunpack.c.h.b16 %v919
        %v3583 = vunpack.c.l.b16 %v920
        %v3584 = vunpack.c.h.b16 %v920
        %v3585 = vunpack.c.l.b16 %v921
        %v3586 = vunpack.c.h.b16 %v921
        %v3587 = vunpack.c.l.b16 %v922
        %v3588 = vunpack.c.h.b16 %v922
        %v3589 = vunpack.c.l.b16 %v923
        %v3590 = vunpack.c.h.b16 %v923
        %v3591 = vunpack.c.l.b16 %v924
        %v3592 = vunpack.c.h.b16 %v924
        %v3593 = vunpack.c.l.b16 %v925
        %v3594 = vunpack.c.h.b16 %v925
        %v3595 = vunpack.c.l.b16 %v926
        %v3596 = vunpack.c.h.b16 %v926
        %v3597 = vunpack.c.l.b16 %v927
        %v3598 = vunpack.c.h.b16 %v927
        %v3599 = vunpack.c.l.b16 %v928
        %v3600 = vunpack.c.h.b16 %v928
        %v3601 = vunpack.c.l.b16 %v929
        %v3602 = vunpack.c.h.b16 %v929
        %v3603 = vunpack.c.l.b16 %v930
        %v3604 = vunpack.c.h.b16 %v930
        %v3605 = vunpack.c.l.b16 %v931
        %v3606 = vunpack.c.h.b16 %v931
        %v3607 = vunpack.c.l.b16 %v932
        %v3608 = vunpack.c.h.b16 %v932
        %v3609 = vunpack.c.l.b16 %v933
        %v3610 = vunpack.c.h.b16 %v933
        %v3611 = vunpack.c.l.b16 %v934
        %v3612 = vunpack.c.h.b16 %v934
        %v3613 = vunpack.c.l.b16 %v935
        %v3614 = vunpack.c.h.b16 %v935
        %v3615 = vunpack.c.l.b16 %v936
        %v3616 = vunpack.c.h.b16 %v936
        %v3617 = vunpack.c.l.b16 %v937
        %v3618 = vunpack.c.h.b16 %v937
        %v3619 = vunpack.c.l.b16 %v938
        %v3620 = vunpack.c.h.b16 %v938
        %v3621 = vunpack.c.l.b16 %v939
        %v3622 = vunpack.c.h.b16 %v939
        %v3623 = vunpack.c.l.b16 %v940
        %v3624 = vunpack.c.h.b16 %v940
        %v3625 = vunpack.c.l.b16 %v941
        %v3626 = vunpack.c.h.b16 %v941
        %v3627 = vunpack.c.l.b16 %v942
        %v3628 = vunpack.c.h.b16 %v942
        %v3629 = vunpack.c.l.b16 %v943
        %v3630 = vunpack.c.h.b16 %v943
        %v3631 = vunpack.c.l.b16 %v944
        %v3632 = vunpack.c.h.b16 %v944
        %v3633 = vunpack.c.l.b16 %v945
        %v3634 = vunpack.c.h.b16 %v945
        %v3635 = vunpack.c.l.b16 %v946
        %v3636 = vunpack.c.h.b16 %v946
        %v3637 = vunpack.c.l.b16 %v947
        %v3638 = vunpack.c.h.b16 %v947
        %v3639 = vunpack.c.l.b16 %v948
        %v3640 = vunpack.c.h.b16 %v948
        %v3641 = vunpack.c.l.b16 %v949
        %v3642 = vunpack.c.h.b16 %v949
        %v3643 = vunpack.c.l.b16 %v950
        %v3644 = vunpack.c.h.b16 %v950
        %v3645 = vunpack.c.l.b16 %v951
        %v3646 = vunpack.c.h.b16 %v951
        %v3647 = vunpack.c.l.b16 %v952
        %v3648 = vunpack.c.h.b16 %v952
        %v3649 = vunpack.c.l.b16 %v953
        %v3650 = vunpack.c.h.b16 %v953
        %v3651 = vunpack.c.l.b16 %v954
        %v3652 = vunpack.c.h.b16 %v954
        %v3653 = vunpack.c.l.b16 %v955
        %v3654 = vunpack.c.h.b16 %v955
        %v3655 = vunpack.c.l.b16 %v956
        %v3656 = vunpack.c.h.b16 %v956
        %v3657 = vunpack.c.l.b16 %v957
        %v3658 = vunpack.c.h.b16 %v957
        %v3659 = vunpack.c.l.b16 %v958
        %v3660 = vunpack.c.h.b16 %v958
        %v3661 = vunpack.c.l.b16 %v959
        %v3662 = vunpack.c.h.b16 %v959
        %v3663 = vunpack.c.l.b16 %v960
        %v3664 = vunpack.c.h.b16 %v960
        %v3665 = vunpack.c.l.b16 %v961
        %v3666 = vunpack.c.h.b16 %v961
        %v3667 = vunpack.c.l.b16 %v962
        %v3668 = vunpack.c.h.b16 %v962
        %v3669 = vunpack.c.l.b16 %v963
        %v3670 = vunpack.c.h.b16 %v963
        %v3671 = vunpack.c.l.b16 %v964
        %v3672 = vunpack.c.h.b16 %v964
        %v3673 = vunpack.c.l.b16 %v965
        %v3674 = vunpack.c.h.b16 %v965
        %v3675 = vunpack.c.l.b16 %v966
        %v3676 = vunpack.c.h.b16 %v966
        %v3677 = vunpack.c.l.b16 %v967
        %v3678 = vunpack.c.h.b16 %v967
        %v3679 = vunpack.c.l.b16 %v968
        %v3680 = vunpack.c.h.b16 %v968
        %v3681 = vunpack.c.l.b16 %v969
        %v3682 = vunpack.c.h.b16 %v969
        %v3683 = vunpack.c.l.b16 %v970
        %v3684 = vunpack.c.h.b16 %v970
        %v3685 = vunpack.c.l.b16 %v971
        %v3686 = vunpack.c.h.b16 %v971
        %v3687 = vunpack.c.l.b16 %v972
        %v3688 = vunpack.c.h.b16 %v972
        %v3689 = vunpack.c.l.b16 %v973
        %v3690 = vunpack.c.h.b16 %v973
        %v3691 = vunpack.c.l.b16 %v974
        %v3692 = vunpack.c.h.b16 %v974
        %v3693 = vunpack.c.l.b16 %v975
        %v3694 = vunpack.c.h.b16 %v975
        %v3695 = vunpack.c.l.b16 %v976
        %v3696 = vunpack.c.h.b16 %v976
        %v3697 = vunpack.c.l.b16 %v977
        %v3698 = vunpack.c.h.b16 %v977
        %v3699 = vunpack.c.l.b16 %v978
        %v3700 = vunpack.c.h.b16 %v978
        %v3701 = vunpack.c.l.b16 %v979
        %v3702 = vunpack.c.h.b16 %v979
        %v3703 = vunpack.c.l.b16 %v980
        %v3704 = vunpack.c.h.b16 %v980
        %v3705 = vunpack.c.l.b16 %v981
        %v3706 = vunpack.c.h.b16 %v981
        %v3707 = vunpack.c.l.b16 %v982
        %v3708 = vunpack.c.h.b16 %v982
        %v3709 = vunpack.c.l.b16 %v983
        %v3710 = vunpack.c.h.b16 %v983
        %v3711 = vunpack.c.l.b16 %v984
        %v3712 = vunpack.c.h.b16 %v984
        %v3713 = vunpack.c.l.b16 %v985
        %v3714 = vunpack.c.h.b16 %v985
        %v3715 = vunpack.c.l.b16 %v986
        %v3716 = vunpack.c.h.b16 %v986
        %v3717 = vunpack.c.l.b16 %v987
        %v3718 = vunpack.c.h.b16 %v987
        %v3719 = vunpack.c.l.b16 %v988
        %v3720 = vunpack.c.h.b16 %v988
        %v3721 = vunpack.c.l.b16 %v989
        %v3722 = vunpack.c.h.b16 %v989
        %v3723 = vunpack.c.l.b16 %v990
        %v3724 = vunpack.c.h.b16 %v990
        %v3725 = vunpack.c.l.b16 %v991
        %v3726 = vunpack.c.h.b16 %v991
        %v3727 = vunpack.c.l.b16 %v992
        %v3728 = vunpack.c.h.b16 %v992
        %v3729 = vunpack.c.l.b16 %v993
        %v3730 = vunpack.c.h.b16 %v993
        %v3731 = vunpack.c.l.b16 %v994
        %v3732 = vunpack.c.h.b16 %v994
        %v3733 = vunpack.c.l.b16 %v995
        %v3734 = vunpack.c.h.b16 %v995
        %v3735 = vunpack.c.l.b16 %v996
        %v3736 = vunpack.c.h.b16 %v996
        %v3737 = vunpack.c.l.b16 %v997
        %v3738 = vunpack.c.h.b16 %v997
        %v3739 = vunpack.c.l.b16 %v998
        %v3740 = vunpack.c.h.b16 %v998
        %v3741 = vunpack.c.l.b16 %v999
        %v3742 = vunpack.c.h.b16 %v999
        %v3743 = vunpack.c.l.b16 %v1000
        %v3744 = vunpack.c.h.b16 %v1000
        %v3745 = vunpack.c.l.b16 %v1001
        %v3746 = vunpack.c.h.b16 %v1001
        %v3747 = vunpack.c.l.b16 %v1002
        %v3748 = vunpack.c.h.b16 %v1002
        %v3749 = vunpack.c.l.b16 %v1003
        %v3750 = vunpack.c.h.b16 %v1003
        %v3751 = vunpack.c.l.b16 %v1004
        %v3752 = vunpack.c.h.b16 %v1004
        %v3753 = vunpack.c.l.b16 %v1005
        %v3754 = vunpack.c.h.b16 %v1005
        %v3755 = vunpack.c.l.b16 %v1006
        %v3756 = vunpack.c.h.b16 %v1006
        %v3757 = vunpack.c.l.b16 %v1007
        %v3758 = vunpack.c.h.b16 %v1007
        %v3759 = vunpack.c.l.b16 %v1008
        %v3760 = vunpack.c.h.b16 %v1008
        %v3761 = vunpack.c.l.b16 %v1009
        %v3762 = vunpack.c.h.b16 %v1009
        %v3763 = vunpack.c.l.b16 %v1010
        %v3764 = vunpack.c.h.b16 %v1010
        %v3765 = vunpack.c.l.b16 %v1011
        %v3766 = vunpack.c.h.b16 %v1011
        %v3767 = vunpack.c.l.b16 %v1012
        %v3768 = vunpack.c.h.b16 %v1012
        %v3769 = vunpack.c.l.b16 %v1013
        %v3770 = vunpack.c.h.b16 %v1013
        %v3771 = vunpack.c.l.b16 %v1014
        %v3772 = vunpack.c.h.b16 %v1014
        %v3773 = vunpack.c.l.b16 %v1015
        %v3774 = vunpack.c.h.b16 %v1015
        %v3775 = vunpack.c.l.b16 %v1016
        %v3776 = vunpack.c.h.b16 %v1016
        %v3777 = vunpack.c.l.b16 %v1017
        %v3778 = vunpack.c.h.b16 %v1017
        %v3779 = vunpack.c.l.b16 %v1018
        %v3780 = vunpack.c.h.b16 %v1018
        %v3781 = vunpack.c.l.b16 %v1019
        %v3782 = vunpack.c.h.b16 %v1019
        %v3783 = vunpack.c.l.b16 %v1020
        %v3784 = vunpack.c.h.b16 %v1020
        %v3785 = vunpack.c.l.b16 %v1021
        %v3786 = vunpack.c.h.b16 %v1021
        %v3787 = vunpack.c.l.b16 %v1022
        %v3788 = vunpack.c.h.b16 %v1022
        %v3789 = vunpack.c.l.b16 %v1023
        %v3790 = vunpack.c.h.b16 %v1023
        %v3791 = vunpack.c.l.b16 %v1024
        %v3792 = vunpack.c.h.b16 %v1024
        %v3793 = vunpack.c.l.b16 %v1025
        %v3794 = vunpack.c.h.b16 %v1025
        %v3795 = vunpack.c.l.b16 %v1026
        %v3796 = vunpack.c.h.b16 %v1026
        %v3797 = vunpack.c.l.b16 %v1027
        %v3798 = vunpack.c.h.b16 %v1027
        %v3799 = vunpack.c.l.b16 %v1028
        %v3800 = vunpack.c.h.b16 %v1028
        %v3801 = vunpack.c.l.b16 %v1029
        %v3802 = vunpack.c.h.b16 %v1029
        %v3803 = vunpack.c.l.b16 %v1030
        %v3804 = vunpack.c.h.b16 %v1030
        %v3805 = vunpack.c.l.b16 %v1031
        %v3806 = vunpack.c.h.b16 %v1031
        %v3807 = vunpack.c.l.b16 %v1032
        %v3808 = vunpack.c.h.b16 %v1032
        %v3809 = vunpack.c.l.b16 %v1033
        %v3810 = vunpack.c.h.b16 %v1033
        %v3811 = vunpack.c.l.b16 %v1034
        %v3812 = vunpack.c.h.b16 %v1034
        %v3813 = vunpack.c.l.b16 %v1035
        %v3814 = vunpack.c.h.b16 %v1035
        %v3815 = vunpack.c.l.b16 %v1036
        %v3816 = vunpack.c.h.b16 %v1036
        %v3817 = vunpack.c.l.b16 %v1037
        %v3818 = vunpack.c.h.b16 %v1037
        %v3819 = vunpack.c.l.b16 %v1038
        %v3820 = vunpack.c.h.b16 %v1038
        %v3821 = vunpack.c.l.b16 %v1039
        %v3822 = vunpack.c.h.b16 %v1039
        %v3823 = vunpack.c.l.b16 %v1040
        %v3824 = vunpack.c.h.b16 %v1040
        %v3825 = vunpack.c.l.b16 %v1041
        %v3826 = vunpack.c.h.b16 %v1041
        %v3827 = vunpack.c.l.b16 %v1042
        %v3828 = vunpack.c.h.b16 %v1042
        %v3829 = vunpack.c.l.b16 %v1043
        %v3830 = vunpack.c.h.b16 %v1043
        %v3831 = vunpack.c.l.b16 %v1044
        %v3832 = vunpack.c.h.b16 %v1044
        %v3833 = vunpack.c.l.b16 %v1045
        %v3834 = vunpack.c.h.b16 %v1045
        %v3835 = vunpack.c.l.b16 %v1046
        %v3836 = vunpack.c.h.b16 %v1046
        %v3837 = vunpack.c.l.b16 %v1047
        %v3838 = vunpack.c.h.b16 %v1047
        %v3839 = vunpack.c.l.b16 %v1048
        %v3840 = vunpack.c.h.b16 %v1048
        %v3841 = vunpack.c.l.b16 %v1049
        %v3842 = vunpack.c.h.b16 %v1049
        %v3843 = vunpack.c.l.b16 %v1050
        %v3844 = vunpack.c.h.b16 %v1050
        %v3845 = vunpack.c.l.b16 %v1051
        %v3846 = vunpack.c.h.b16 %v1051
        %v3847 = vunpack.c.l.b16 %v1052
        %v3848 = vunpack.c.h.b16 %v1052
        %v3849 = vunpack.c.l.b16 %v1053
        %v3850 = vunpack.c.h.b16 %v1053
        %v3851 = vunpack.c.l.b16 %v1054
        %v3852 = vunpack.c.h.b16 %v1054
        %v3853 = vunpack.c.l.b16 %v1055
        %v3854 = vunpack.c.h.b16 %v1055
        %v3855 = vunpack.c.l.b16 %v1056
        %v3856 = vunpack.c.h.b16 %v1056
        %v3857 = vunpack.c.l.b16 %v1057
        %v3858 = vunpack.c.h.b16 %v1057
        %v3859 = vunpack.c.l.b16 %v1058
        %v3860 = vunpack.c.h.b16 %v1058
        %v3861 = vunpack.c.l.b16 %v1059
        %v3862 = vunpack.c.h.b16 %v1059
        %v3863 = vunpack.c.l.b16 %v1060
        %v3864 = vunpack.c.h.b16 %v1060
        %v3865 = vunpack.c.l.b16 %v1061
        %v3866 = vunpack.c.h.b16 %v1061
        %v3867 = vunpack.c.l.b16 %v1062
        %v3868 = vunpack.c.h.b16 %v1062
        %v3869 = vunpack.c.l.b16 %v1063
        %v3870 = vunpack.c.h.b16 %v1063
        %v3871 = vunpack.c.l.b16 %v1064
        %v3872 = vunpack.c.h.b16 %v1064
        %v3873 = vunpack.c.l.b16 %v1065
        %v3874 = vunpack.c.h.b16 %v1065
        %v3875 = vunpack.c.l.b16 %v1066
        %v3876 = vunpack.c.h.b16 %v1066
        %v3877 = vunpack.c.l.b16 %v1067
        %v3878 = vunpack.c.h.b16 %v1067
        %v3879 = vunpack.c.l.b16 %v1068
        %v3880 = vunpack.c.h.b16 %v1068
        %v3881 = vunpack.c.l.b16 %v1069
        %v3882 = vunpack.c.h.b16 %v1069
        %v3883 = vunpack.c.l.b16 %v1070
        %v3884 = vunpack.c.h.b16 %v1070
        %v3885 = vunpack.c.l.b16 %v1071
        %v3886 = vunpack.c.h.b16 %v1071
        %v3887 = vunpack.c.l.b16 %v1072
        %v3888 = vunpack.c.h.b16 %v1072
        %v3889 = vunpack.c.l.b16 %v1073
        %v3890 = vunpack.c.h.b16 %v1073
        %v3891 = vunpack.c.l.b16 %v1074
        %v3892 = vunpack.c.h.b16 %v1074
        %v3893 = vunpack.c.l.b16 %v1075
        %v3894 = vunpack.c.h.b16 %v1075
        %v3895 = vunpack.c.l.b16 %v1076
        %v3896 = vunpack.c.h.b16 %v1076
        %v3897 = vunpack.c.l.b16 %v1077
        %v3898 = vunpack.c.h.b16 %v1077
        %v3899 = vunpack.c.l.b16 %v1078
        %v3900 = vunpack.c.h.b16 %v1078
        %v3901 = vunpack.c.l.b16 %v1079
        %v3902 = vunpack.c.h.b16 %v1079
        %v3903 = vunpack.c.l.b16 %v1080
        %v3904 = vunpack.c.h.b16 %v1080
        %v3905 = vunpack.c.l.b16 %v1081
        %v3906 = vunpack.c.h.b16 %v1081
        %v3907 = vunpack.c.l.b16 %v1082
        %v3908 = vunpack.c.h.b16 %v1082
        %v3909 = vunpack.c.l.b16 %v1083
        %v3910 = vunpack.c.h.b16 %v1083
        %v3911 = vunpack.c.l.b16 %v1084
        %v3912 = vunpack.c.h.b16 %v1084
        %v3913 = vunpack.c.l.b16 %v1085
        %v3914 = vunpack.c.h.b16 %v1085
        %v3915 = vunpack.c.l.b16 %v1086
        %v3916 = vunpack.c.h.b16 %v1086
        %v3917 = vunpack.c.l.b16 %v1087
        %v3918 = vunpack.c.h.b16 %v1087
        %v3919 = vunpack.c.l.b16 %v1088
        %v3920 = vunpack.c.h.b16 %v1088
        %v3921 = vunpack.c.l.b16 %v1089
        %v3922 = vunpack.c.h.b16 %v1089
        %v3923 = vunpack.c.l.b16 %v1090
        %v3924 = vunpack.c.h.b16 %v1090
        %v3925 = vunpack.c.l.b16 %v1091
        %v3926 = vunpack.c.h.b16 %v1091
        %v3927 = vunpack.c.l.b16 %v1092
        %v3928 = vunpack.c.h.b16 %v1092
        %v3929 = vunpack.c.l.b16 %v1093
        %v3930 = vunpack.c.h.b16 %v1093
        %v3931 = vunpack.c.l.b16 %v1094
        %v3932 = vunpack.c.h.b16 %v1094
        %v3933 = vunpack.c.l.b16 %v1095
        %v3934 = vunpack.c.h.b16 %v1095
        %v3935 = vunpack.c.l.b16 %v1096
        %v3936 = vunpack.c.h.b16 %v1096
        %v3937 = vunpack.c.l.b16 %v1097
        %v3938 = vunpack.c.h.b16 %v1097
        %v3939 = vunpack.c.l.b16 %v1098
        %v3940 = vunpack.c.h.b16 %v1098
        %v3941 = vunpack.c.l.b16 %v1099
        %v3942 = vunpack.c.h.b16 %v1099
        %v3943 = vunpack.c.l.b16 %v1100
        %v3944 = vunpack.c.h.b16 %v1100
        %v3945 = vunpack.c.l.b16 %v1101
        %v3946 = vunpack.c.h.b16 %v1101
        %v3947 = vunpack.c.l.b16 %v1102
        %v3948 = vunpack.c.h.b16 %v1102
        %v3949 = vunpack.c.l.b16 %v1103
        %v3950 = vunpack.c.h.b16 %v1103
        %v3951 = vunpack.c.l.b16 %v1104
        %v3952 = vunpack.c.h.b16 %v1104
        %v3953 = vunpack.c.l.b16 %v1105
        %v3954 = vunpack.c.h.b16 %v1105
        %v3955 = vunpack.c.l.b16 %v1106
        %v3956 = vunpack.c.h.b16 %v1106
        %v3957 = vunpack.c.l.b16 %v1107
        %v3958 = vunpack.c.h.b16 %v1107
        %v3959 = vunpack.c.l.b16 %v1108
        %v3960 = vunpack.c.h.b16 %v1108
        %v3961 = vunpack.c.l.b16 %v1109
        %v3962 = vunpack.c.h.b16 %v1109
        %v3963 = vunpack.c.l.b16 %v1110
        %v3964 = vunpack.c.h.b16 %v1110
        %v3965 = vunpack.c.l.b16 %v1111
        %v3966 = vunpack.c.h.b16 %v1111
        %v3967 = vunpack.c.l.b16 %v1112
        %v3968 = vunpack.c.h.b16 %v1112
        %v3969 = vunpack.c.l.b16 %v1113
        %v3970 = vunpack.c.h.b16 %v1113
        %v3971 = vunpack.c.l.b16 %v1114
        %v3972 = vunpack.c.h.b16 %v1114
        %v3973 = vunpack.c.l.b16 %v1115
        %v3974 = vunpack.c.h.b16 %v1115
        %v3975 = vunpack.c.l.b16 %v1116
        %v3976 = vunpack.c.h.b16 %v1116
        %v3977 = vunpack.c.l.b16 %v1117
        %v3978 = vunpack.c.h.b16 %v1117
        %v3979 = vunpack.c.l.b16 %v1118
        %v3980 = vunpack.c.h.b16 %v1118
        %v3981 = vunpack.c.l.b16 %v1119
        %v3982 = vunpack.c.h.b16 %v1119
        %v3983 = vunpack.c.l.b16 %v1120
        %v3984 = vunpack.c.h.b16 %v1120
        %v3985 = vunpack.c.l.b16 %v1121
        %v3986 = vunpack.c.h.b16 %v1121
        %v3987 = vunpack.c.l.b16 %v1122
        %v3988 = vunpack.c.h.b16 %v1122
        %v3989 = vunpack.c.l.b16 %v1123
        %v3990 = vunpack.c.h.b16 %v1123
        %v3991 = vunpack.c.l.b16 %v1124
        %v3992 = vunpack.c.h.b16 %v1124
        %v3993 = vunpack.c.l.b16 %v1125
        %v3994 = vunpack.c.h.b16 %v1125
        %v3995 = vunpack.c.l.b16 %v1126
        %v3996 = vunpack.c.h.b16 %v1126
        %v3997 = vunpack.c.l.b16 %v1127
        %v3998 = vunpack.c.h.b16 %v1127
        %v3999 = vunpack.c.l.b16 %v1128
        %v4000 = vunpack.c.h.b16 %v1128
        %v4001 = vunpack.c.l.b16 %v1129
        %v4002 = vunpack.c.h.b16 %v1129
        %v4003 = vunpack.c.l.b16 %v1130
        %v4004 = vunpack.c.h.b16 %v1130
        %v4005 = vunpack.c.l.b16 %v1131
        %v4006 = vunpack.c.h.b16 %v1131
        %v4007 = vunpack.c.l.b16 %v1132
        %v4008 = vunpack.c.h.b16 %v1132
        %v4009 = vunpack.c.l.b16 %v1133
        %v4010 = vunpack.c.h.b16 %v1133
        %v4011 = vunpack.c.l.b16 %v1134
        %v4012 = vunpack.c.h.b16 %v1134
        %v4013 = vunpack.c.l.b16 %v1135
        %v4014 = vunpack.c.h.b16 %v1135
        %v4015 = vunpack.c.l.b16 %v1136
        %v4016 = vunpack.c.h.b16 %v1136
        %v4017 = vunpack.c.l.b16 %v1137
        %v4018 = vunpack.c.h.b16 %v1137
        %v4019 = vunpack.c.l.b16 %v1138
        %v4020 = vunpack.c.h.b16 %v1138
        %v4021 = vunpack.c.l.b16 %v1139
        %v4022 = vunpack.c.h.b16 %v1139
        %v4023 = vunpack.c.l.b16 %v1140
        %v4024 = vunpack.c.h.b16 %v1140
        %v4025 = vunpack.c.l.b16 %v1141
        %v4026 = vunpack.c.h.b16 %v1141
        %v4027 = vunpack.c.l.b16 %v1142
        %v4028 = vunpack.c.h.b16 %v1142
        %v4029 = vunpack.c.l.b16 %v1143
        %v4030 = vunpack.c.h.b16 %v1143
        %v4031 = vunpack.c.l.b16 %v1144
        %v4032 = vunpack.c.h.b16 %v1144
        %v4033 = vunpack.c.l.b16 %v1145
        %v4034 = vunpack.c.h.b16 %v1145
        %v4035 = vunpack.c.l.b16 %v1146
        %v4036 = vunpack.c.h.b16 %v1146
        %v4037 = vunpack.c.l.b16 %v1147
        %v4038 = vunpack.c.h.b16 %v1147
        %v4039 = vunpack.c.l.b16 %v1148
        %v4040 = vunpack.c.h.b16 %v1148
        %v4041 = vunpack.c.l.b16 %v1149
        %v4042 = vunpack.c.h.b16 %v1149
        %v4043 = vunpack.c.l.b16 %v1150
        %v4044 = vunpack.c.h.b16 %v1150
        %v4045 = vunpack.c.l.b16 %v1151
        %v4046 = vunpack.c.h.b16 %v1151
        %v4047 = vunpack.c.l.b16 %v1152
        %v4048 = vunpack.c.h.b16 %v1152
        %v4049 = vunpack.c.l.b16 %v1153
        %v4050 = vunpack.c.h.b16 %v1153
        %v4051 = vunpack.c.l.b16 %v1154
        %v4052 = vunpack.c.h.b16 %v1154
        %v4053 = vunpack.c.l.b16 %v1155
        %v4054 = vunpack.c.h.b16 %v1155
        %v4055 = vunpack.c.l.b16 %v1156
        %v4056 = vunpack.c.h.b16 %v1156
        %v4057 = vunpack.c.l.b16 %v1157
        %v4058 = vunpack.c.h.b16 %v1157
        %v4059 = vunpack.c.l.b16 %v1158
        %v4060 = vunpack.c.h.b16 %v1158
        %v4061 = vunpack.c.l.b16 %v1159
        %v4062 = vunpack.c.h.b16 %v1159
        %v4063 = vunpack.c.l.b16 %v1160
        %v4064 = vunpack.c.h.b16 %v1160
        %v4065 = vunpack.c.l.b16 %v1161
        %v4066 = vunpack.c.h.b16 %v1161
        %v4067 = vunpack.c.l.b16 %v1162
        %v4068 = vunpack.c.h.b16 %v1162
        %v4069 = vunpack.c.l.b16 %v1163
        %v4070 = vunpack.c.h.b16 %v1163
        %v4071 = vunpack.c.l.b16 %v1164
        %v4072 = vunpack.c.h.b16 %v1164
        %v4073 = vunpack.c.l.b16 %v1165
        %v4074 = vunpack.c.h.b16 %v1165
        %v4075 = vunpack.c.l.b16 %v1166
        %v4076 = vunpack.c.h.b16 %v1166
        %v4077 = vunpack.c.l.b16 %v1167
        %v4078 = vunpack.c.h.b16 %v1167
        %v4079 = vunpack.c.l.b16 %v1168
        %v4080 = vunpack.c.h.b16 %v1168
        %v4081 = vunpack.c.l.b16 %v1169
        %v4082 = vunpack.c.h.b16 %v1169
        %v4083 = vunpack.c.l.b16 %v1170
        %v4084 = vunpack.c.h.b16 %v1170
        %v4085 = vunpack.c.l.b16 %v1171
        %v4086 = vunpack.c.h.b16 %v1171
        %v4087 = vunpack.c.l.b16 %v1172
        %v4088 = vunpack.c.h.b16 %v1172
        %v4089 = vunpack.c.l.b16 %v1173
        %v4090 = vunpack.c.h.b16 %v1173
        %v4091 = vunpack.c.l.b16 %v1174
        %v4092 = vunpack.c.h.b16 %v1174
        %v4093 = vunpack.c.l.b16 %v1175
        %v4094 = vunpack.c.h.b16 %v1175
        %v4095 = vunpack.c.l.b16 %v1176
        %v4096 = vunpack.c.h.b16 %v1176
        %v4097 = vunpack.c.l.b16 %v1177
        %v4098 = vunpack.c.h.b16 %v1177
        %v4099 = vunpack.c.l.b16 %v1178
        %v4100 = vunpack.c.h.b16 %v1178
        %v4101 = vunpack.c.l.b16 %v1179
        %v4102 = vunpack.c.h.b16 %v1179
        %v4103 = vunpack.c.l.b16 %v1180
        %v4104 = vunpack.c.h.b16 %v1180
        %v4105 = vunpack.c.l.b16 %v1181
        %v4106 = vunpack.c.h.b16 %v1181
        %v4107 = vunpack.c.l.b16 %v1182
        %v4108 = vunpack.c.h.b16 %v1182
        %v4109 = vunpack.c.l.b16 %v1183
        %v4110 = vunpack.c.h.b16 %v1183
        %v4111 = vunpack.c.l.b16 %v1184
        %v4112 = vunpack.c.h.b16 %v1184
        %v4113 = vunpack.c.l.b16 %v1185
        %v4114 = vunpack.c.h.b16 %v1185
        %v4115 = vunpack.c.l.b16 %v1186
        %v4116 = vunpack.c.h.b16 %v1186
        %v4117 = vunpack.c.l.b16 %v1187
        %v4118 = vunpack.c.h.b16 %v1187
        %v4119 = vunpack.c.l.b16 %v1188
        %v4120 = vunpack.c.h.b16 %v1188
        %v4121 = vunpack.c.l.b16 %v1189
        %v4122 = vunpack.c.h.b16 %v1189
        %v4123 = vunpack.c.l.b16 %v1190
        %v4124 = vunpack.c.h.b16 %v1190
        %v4125 = vunpack.c.l.b16 %v1191
        %v4126 = vunpack.c.h.b16 %v1191
        %v4127 = vunpack.c.l.b16 %v1192
        %v4128 = vunpack.c.h.b16 %v1192
        %v4129 = vunpack.c.l.b16 %v1193
        %v4130 = vunpack.c.h.b16 %v1193
        %v4131 = vunpack.c.l.b16 %v1194
        %v4132 = vunpack.c.h.b16 %v1194
        %v4133 = vunpack.c.l.b16 %v1195
        %v4134 = vunpack.c.h.b16 %v1195
        %v4135 = vunpack.c.l.b16 %v1196
        %v4136 = vunpack.c.h.b16 %v1196
        %v4137 = vunpack.c.l.b16 %v1197
        %v4138 = vunpack.c.h.b16 %v1197
        %v4139 = vunpack.c.l.b16 %v1198
        %v4140 = vunpack.c.h.b16 %v1198
        %v4141 = vunpack.c.l.b16 %v1199
        %v4142 = vunpack.c.h.b16 %v1199
        %v4143 = vunpack.c.l.b16 %v1200
        %v4144 = vunpack.c.h.b16 %v1200
        %v4145 = vunpack.c.l.b16 %v1201
        %v4146 = vunpack.c.h.b16 %v1201
        %v4147 = vunpack.c.l.b16 %v1202
        %v4148 = vunpack.c.h.b16 %v1202
        %v4149 = vunpack.c.l.b16 %v1203
        %v4150 = vunpack.c.h.b16 %v1203
        %v4151 = vunpack.c.l.b16 %v1204
        %v4152 = vunpack.c.h.b16 %v1204
        %v4153 = vunpack.c.l.b16 %v1205
        %v4154 = vunpack.c.h.b16 %v1205
        %v4155 = vunpack.c.l.b16 %v1206
        %v4156 = vunpack.c.h.b16 %v1206
        %v4157 = vunpack.c.l.b16 %v1207
        %v4158 = vunpack.c.h.b16 %v1207
        %v4159 = vunpack.c.l.b16 %v1208
        %v4160 = vunpack.c.h.b16 %v1208
        %v4161 = vunpack.c.l.b16 %v1209
        %v4162 = vunpack.c.h.b16 %v1209
        %v4163 = vunpack.c.l.b16 %v1210
        %v4164 = vunpack.c.h.b16 %v1210
        %v4165 = vunpack.c.l.b16 %v1211
        %v4166 = vunpack.c.h.b16 %v1211
        %v4167 = vunpack.c.l.b16 %v1212
        %v4168 = vunpack.c.h.b16 %v1212
        %v4169 = vunpack.c.l.b16 %v1213
        %v4170 = vunpack.c.h.b16 %v1213
        %v4171 = vunpack.c.l.b16 %v1214
        %v4172 = vunpack.c.h.b16 %v1214
        %v4173 = vunpack.c.l.b16 %v1215
        %v4174 = vunpack.c.h.b16 %v1215
        %v4175 = vunpack.c.l.b16 %v1216
        %v4176 = vunpack.c.h.b16 %v1216
        %v4177 = vunpack.c.l.b16 %v1217
        %v4178 = vunpack.c.h.b16 %v1217
        %v4179 = vunpack.c.l.b16 %v1218
        %v4180 = vunpack.c.h.b16 %v1218
        %v4181 = vunpack.c.l.b16 %v1219
        %v4182 = vunpack.c.h.b16 %v1219
        %v4183 = vunpack.c.l.b16 %v1220
        %v4184 = vunpack.c.h.b16 %v1220
        %v4185 = vunpack.c.l.b16 %v1221
        %v4186 = vunpack.c.h.b16 %v1221
        %v4187 = vunpack.c.l.b16 %v1222
        %v4188 = vunpack.c.h.b16 %v1222
        %v4189 = vunpack.c.l.b16 %v1223
        %v4190 = vunpack.c.h.b16 %v1223
        %v4191 = vunpack.c.l.b16 %v1224
        %v4192 = vunpack.c.h.b16 %v1224
        %v4193 = vunpack.c.l.b16 %v1225
        %v4194 = vunpack.c.h.b16 %v1225
        %v4195 = vunpack.c.l.b16 %v1226
        %v4196 = vunpack.c.h.b16 %v1226
        %v4197 = vunpack.c.l.b16 %v1227
        %v4198 = vunpack.c.h.b16 %v1227
        %v4199 = vunpack.c.l.b16 %v1228
        %v4200 = vunpack.c.h.b16 %v1228
        %v4201 = vunpack.c.l.b16 %v1229
        %v4202 = vunpack.c.h.b16 %v1229
        %v4203 = vunpack.c.l.b16 %v1230
        %v4204 = vunpack.c.h.b16 %v1230
        %v4205 = vunpack.c.l.b16 %v1231
        %v4206 = vunpack.c.h.b16 %v1231
        %v4207 = vunpack.c.l.b16 %v1232
        %v4208 = vunpack.c.h.b16 %v1232
        %v4209 = vunpack.c.l.b16 %v1233
        %v4210 = vunpack.c.h.b16 %v1233
        %v4211 = vunpack.c.l.b16 %v1234
        %v4212 = vunpack.c.h.b16 %v1234
        %v4213 = vunpack.c.l.b16 %v1235
        %v4214 = vunpack.c.h.b16 %v1235
        %v4215 = vunpack.c.l.b16 %v1236
        %v4216 = vunpack.c.h.b16 %v1236
        %v4217 = vunpack.c.l.b16 %v1237
        %v4218 = vunpack.c.h.b16 %v1237
        %v4219 = vunpack.c.l.b16 %v1238
        %v4220 = vunpack.c.h.b16 %v1238
        %v4221 = vunpack.c.l.b16 %v1239
        %v4222 = vunpack.c.h.b16 %v1239
        %v4223 = vunpack.c.l.b16 %v1240
        %v4224 = vunpack.c.h.b16 %v1240
        %v4225 = vunpack.c.l.b16 %v1241
        %v4226 = vunpack.c.h.b16 %v1241
        %v4227 = vunpack.c.l.b16 %v1242
        %v4228 = vunpack.c.h.b16 %v1242
        %v4229 = vunpack.c.l.b16 %v1243
        %v4230 = vunpack.c.h.b16 %v1243
        %v4231 = vunpack.c.l.b16 %v1244
        %v4232 = vunpack.c.h.b16 %v1244
        %v4233 = vunpack.c.l.b16 %v1245
        %v4234 = vunpack.c.h.b16 %v1245
        %v4235 = vunpack.c.l.b16 %v1246
        %v4236 = vunpack.c.h.b16 %v1246
        %v4237 = vunpack.c.l.b16 %v1247
        %v4238 = vunpack.c.h.b16 %v1247
        %v4239 = vunpack.c.l.b16 %v1248
        %v4240 = vunpack.c.h.b16 %v1248
        %v4241 = vunpack.c.l.b16 %v1249
        %v4242 = vunpack.c.h.b16 %v1249
        %v4243 = vunpack.c.l.b16 %v1250
        %v4244 = vunpack.c.h.b16 %v1250
        %v4245 = vunpack.c.l.b16 %v1251
        %v4246 = vunpack.c.h.b16 %v1251
        %v4247 = vunpack.c.l.b16 %v1252
        %v4248 = vunpack.c.h.b16 %v1252
        %v4249 = vunpack.c.l.b16 %v1253
        %v4250 = vunpack.c.h.b16 %v1253
        %v4251 = vunpack.c.l.b16 %v1254
        %v4252 = vunpack.c.h.b16 %v1254
        %v4253 = vunpack.c.l.b16 %v1255
        %v4254 = vunpack.c.h.b16 %v1255
        %v4255 = vunpack.c.l.b16 %v1256
        %v4256 = vunpack.c.h.b16 %v1256
        %v4257 = vunpack.c.l.b16 %v1257
        %v4258 = vunpack.c.h.b16 %v1257
        %v4259 = vunpack.c.l.b16 %v1258
        %v4260 = vunpack.c.h.b16 %v1258
        %v4261 = vunpack.c.l.b16 %v1259
        %v4262 = vunpack.c.h.b16 %v1259
        %v4263 = vunpack.c.l.b16 %v1260
        %v4264 = vunpack.c.h.b16 %v1260
        %v4265 = vunpack.c.l.b16 %v1261
        %v4266 = vunpack.c.h.b16 %v1261
        %v4267 = vunpack.c.l.b16 %v1262
        %v4268 = vunpack.c.h.b16 %v1262
        %v4269 = vunpack.c.l.b16 %v1263
        %v4270 = vunpack.c.h.b16 %v1263
        %v4271 = vunpack.c.l.b16 %v1264
        %v4272 = vunpack.c.h.b16 %v1264
        %v4273 = vunpack.c.l.b16 %v1265
        %v4274 = vunpack.c.h.b16 %v1265
        %v4275 = vunpack.c.l.b16 %v1266
        %v4276 = vunpack.c.h.b16 %v1266
        %v4277 = vunpack.c.l.b16 %v1267
        %v4278 = vunpack.c.h.b16 %v1267
        %v4279 = vunpack.c.l.b16 %v1268
        %v4280 = vunpack.c.h.b16 %v1268
        %v4281 = vunpack.c.l.b16 %v1269
        %v4282 = vunpack.c.h.b16 %v1269
        %v4283 = vunpack.c.l.b16 %v1270
        %v4284 = vunpack.c.h.b16 %v1270
        %v4285 = vunpack.c.l.b16 %v1271
        %v4286 = vunpack.c.h.b16 %v1271
        %v4287 = vunpack.c.l.b16 %v1272
        %v4288 = vunpack.c.h.b16 %v1272
        %v4289 = vunpack.c.l.b16 %v1273
        %v4290 = vunpack.c.h.b16 %v1273
        %v4291 = vunpack.c.l.b16 %v1274
        %v4292 = vunpack.c.h.b16 %v1274
        %v4293 = vunpack.c.l.b16 %v1275
        %v4294 = vunpack.c.h.b16 %v1275
        %v4295 = vunpack.c.l.b16 %v1276
        %v4296 = vunpack.c.h.b16 %v1276
        %v4297 = vunpack.c.l.b16 %v1277
        %v4298 = vunpack.c.h.b16 %v1277
        %v4299 = vunpack.c.l.b16 %v1278
        %v4300 = vunpack.c.h.b16 %v1278
        %v4301 = vunpack.c.l.b16 %v1279
        %v4302 = vunpack.c.h.b16 %v1279
        %v4303 = vunpack.c.l.b16 %v1280
        %v4304 = vunpack.c.h.b16 %v1280
        %v4305 = vunpack.c.l.b16 %v1281
        %v4306 = vunpack.c.h.b16 %v1281
        %v4307 = vunpack.c.l.b16 %v1282
        %v4308 = vunpack.c.h.b16 %v1282
        %v4309 = vunpack.c.l.b16 %v1283
        %v4310 = vunpack.c.h.b16 %v1283
        %v4311 = vunpack.c.l.b16 %v1284
        %v4312 = vunpack.c.h.b16 %v1284
        %v4313 = vunpack.c.l.b16 %v1285
        %v4314 = vunpack.c.h.b16 %v1285
        %v4315 = vunpack.c.l.b16 %v1286
        %v4316 = vunpack.c.h.b16 %v1286
        %v4317 = vunpack.c.l.b16 %v1287
        %v4318 = vunpack.c.h.b16 %v1287
        %v4319 = vunpack.c.l.b16 %v1288
        %v4320 = vunpack.c.h.b16 %v1288
        %v4321 = vunpack.c.l.b16 %v1289
        %v4322 = vunpack.c.h.b16 %v1289
        %v4323 = vunpack.c.l.b16 %v1290
        %v4324 = vunpack.c.h.b16 %v1290
        %v4325 = vunpack.c.l.b16 %v1291
        %v4326 = vunpack.c.h.b16 %v1291
        %v4327 = vunpack.c.l.b16 %v1292
        %v4328 = vunpack.c.h.b16 %v1292
        %v4329 = vunpack.c.l.b16 %v1293
        %v4330 = vunpack.c.h.b16 %v1293
        %v4331 = vunpack.c.l.b16 %v1294
        %v4332 = vunpack.c.h.b16 %v1294
        %v4333 = vunpack.c.l.b16 %v1295
        %v4334 = vunpack.c.h.b16 %v1295
        %v4335 = vunpack.c.l.b16 %v1296
        %v4336 = vunpack.c.h.b16 %v1296
        %v4337 = vunpack.c.l.b16 %v1297
        %v4338 = vunpack.c.h.b16 %v1297
        %v4339 = vunpack.c.l.b16 %v1298
        %v4340 = vunpack.c.h.b16 %v1298
        %v4341 = vunpack.c.l.b16 %v1299
        %v4342 = vunpack.c.h.b16 %v1299
        %v4343 = vunpack.c.l.b16 %v1300
        %v4344 = vunpack.c.h.b16 %v1300
        %v4345 = vunpack.c.l.b16 %v1301
        %v4346 = vunpack.c.h.b16 %v1301
        %v4347 = vunpack.c.l.b16 %v1302
        %v4348 = vunpack.c.h.b16 %v1302
        %v4349 = vunpack.c.l.b16 %v1303
        %v4350 = vunpack.c.h.b16 %v1303
        %v4351 = vunpack.c.l.b16 %v1304
        %v4352 = vunpack.c.h.b16 %v1304
        %v4353 = vunpack.c.l.b16 %v1305
        %v4354 = vunpack.c.h.b16 %v1305
        %v4355 = vunpack.c.l.b16 %v1306
        %v4356 = vunpack.c.h.b16 %v1306
        %v4357 = vunpack.c.l.b16 %v1307
        %v4358 = vunpack.c.h.b16 %v1307
        %v4359 = vunpack.c.l.b16 %v1308
        %v4360 = vunpack.c.h.b16 %v1308
        %v4361 = vunpack.c.l.b16 %v1309
        %v4362 = vunpack.c.h.b16 %v1309
        %v4363 = vunpack.c.l.b16 %v1310
        %v4364 = vunpack.c.h.b16 %v1310
        %v4365 = vunpack.c.l.b16 %v1311
        %v4366 = vunpack.c.h.b16 %v1311
        %v4367 = vunpack.c.l.b16 %v1312
        %v4368 = vunpack.c.h.b16 %v1312
        %v4369 = vunpack.c.l.b16 %v1313
        %v4370 = vunpack.c.h.b16 %v1313
        %v4371 = vunpack.c.l.b16 %v1314
        %v4372 = vunpack.c.h.b16 %v1314
        %v4373 = vunpack.c.l.b16 %v1315
        %v4374 = vunpack.c.h.b16 %v1315
        %v4375 = vunpack.c.l.b16 %v1316
        %v4376 = vunpack.c.h.b16 %v1316
        %v4377 = vunpack.c.l.b16 %v1317
        %v4378 = vunpack.c.h.b16 %v1317
        %v4379 = vunpack.c.l.b16 %v1318
        %v4380 = vunpack.c.h.b16 %v1318
        %v4381 = vunpack.c.l.b16 %v1319
        %v4382 = vunpack.c.h.b16 %v1319
        %v4383 = vunpack.c.l.b16 %v1320
        %v4384 = vunpack.c.h.b16 %v1320
        %v4385 = vunpack.c.l.b16 %v1321
        %v4386 = vunpack.c.h.b16 %v1321
        %v4387 = vunpack.c.l.b16 %v1322
        %v4388 = vunpack.c.h.b16 %v1322
        %v4389 = vunpack.c.l.b16 %v1323
        %v4390 = vunpack.c.h.b16 %v1323
        %v4391 = vunpack.c.l.b16 %v1324
        %v4392 = vunpack.c.h.b16 %v1324
        %v4393 = vunpack.c.l.b16 %v1325
        %v4394 = vunpack.c.h.b16 %v1325
        %v4395 = vunpack.c.l.b16 %v1326
        %v4396 = vunpack.c.h.b16 %v1326
        %v4397 = vunpack.c.l.b16 %v1327
        %v4398 = vunpack.c.h.b16 %v1327
        %v4399 = vunpack.c.l.b16 %v1328
        %v4400 = vunpack.c.h.b16 %v1328
        %v4401 = vunpack.c.l.b16 %v1329
        %v4402 = vunpack.c.h.b16 %v1329
        %v4403 = vunpack.c.l.b16 %v1330
        %v4404 = vunpack.c.h.b16 %v1330
        %v4405 = vunpack.c.l.b16 %v1331
        %v4406 = vunpack.c.h.b16 %v1331
        %v4407 = vunpack.c.l.b16 %v1332
        %v4408 = vunpack.c.h.b16 %v1332
        %v4409 = vunpack.c.l.b16 %v1333
        %v4410 = vunpack.c.h.b16 %v1333
        %v4411 = vunpack.c.l.b16 %v1334
        %v4412 = vunpack.c.h.b16 %v1334
        %v4413 = vunpack.c.l.b16 %v1335
        %v4414 = vunpack.c.h.b16 %v1335
        %v4415 = vunpack.c.l.b16 %v1336
        %v4416 = vunpack.c.h.b16 %v1336
        %v4417 = vunpack.c.l.b16 %v1337
        %v4418 = vunpack.c.h.b16 %v1337
        %v4419 = vunpack.c.l.b16 %v1338
        %v4420 = vunpack.c.h.b16 %v1338
        %v4421 = vunpack.c.l.b16 %v1339
        %v4422 = vunpack.c.h.b16 %v1339
        %v4423 = vunpack.c.l.b16 %v1340
        %v4424 = vunpack.c.h.b16 %v1340
        %v4425 = vunpack.c.l.b16 %v1341
        %v4426 = vunpack.c.h.b16 %v1341
        %v4427 = vunpack.c.l.b16 %v1342
        %v4428 = vunpack.c.h.b16 %v1342
        %v4429 = vunpack.c.l.b16 %v1343
        %v4430 = vunpack.c.h.b16 %v1343
        %v4431 = vunpack.c.l.b16 %v1344
        %v4432 = vunpack.c.h.b16 %v1344
        %v4433 = vunpack.c.l.b16 %v1345
        %v4434 = vunpack.c.h.b16 %v1345
        %v4435 = vunpack.c.l.b16 %v1346
        %v4436 = vunpack.c.h.b16 %v1346
        %v4437 = vunpack.c.l.b16 %v1347
        %v4438 = vunpack.c.h.b16 %v1347
        %v4439 = vunpack.c.l.b16 %v1348
        %v4440 = vunpack.c.h.b16 %v1348
        %v4441 = vunpack.c.l.b16 %v1349
        %v4442 = vunpack.c.h.b16 %v1349
        %v4443 = vunpack.c.l.b16 %v1350
        %v4444 = vunpack.c.h.b16 %v1350
        %v4445 = vunpack.c.l.b16 %v1351
        %v4446 = vunpack.c.h.b16 %v1351
        %v4447 = vunpack.c.l.b16 %v1352
        %v4448 = vunpack.c.h.b16 %v1352
        %v4449 = vunpack.c.l.b16 %v1353
        %v4450 = vunpack.c.h.b16 %v1353
        %v4451 = vunpack.c.l.b16 %v1354
        %v4452 = vunpack.c.h.b16 %v1354
        %v4453 = vunpack.c.l.b16 %v1355
        %v4454 = vunpack.c.h.b16 %v1355
        %v4455 = vunpack.c.l.b16 %v1356
        %v4456 = vunpack.c.h.b16 %v1356
        %v4457 = vunpack.c.l.b16 %v1357
        %v4458 = vunpack.c.h.b16 %v1357
        %v4459 = vunpack.c.l.b16 %v1358
        %v4460 = vunpack.c.h.b16 %v1358
        %v4461 = vunpack.c.l.b16 %v1359
        %v4462 = vunpack.c.h.b16 %v1359
        %v4463 = vunpack.c.l.b16 %v1360
        %v4464 = vunpack.c.h.b16 %v1360
        %v4465 = vunpack.c.l.b16 %v1361
        %v4466 = vunpack.c.h.b16 %v1361
        %v4467 = vunpack.c.l.b16 %v1362
        %v4468 = vunpack.c.h.b16 %v1362
        %v4469 = vunpack.c.l.b16 %v1363
        %v4470 = vunpack.c.h.b16 %v1363
        %v4471 = vunpack.c.l.b16 %v1364
        %v4472 = vunpack.c.h.b16 %v1364
        %v4473 = vunpack.c.l.b16 %v1365
        %v4474 = vunpack.c.h.b16 %v1365
        %v4475 = vunpack.c.l.b16 %v1366
        %v4476 = vunpack.c.h.b16 %v1366
        %v4477 = vunpack.c.l.b16 %v1367
        %v4478 = vunpack.c.h.b16 %v1367
        %v4479 = vunpack.c.l.b16 %v1368
        %v4480 = vunpack.c.h.b16 %v1368
        %v4481 = vunpack.c.l.b16 %v1369
        %v4482 = vunpack.c.h.b16 %v1369
        %v4483 = vunpack.c.l.b16 %v1370
        %v4484 = vunpack.c.h.b16 %v1370
        %v4485 = vunpack.c.l.b16 %v1371
        %v4486 = vunpack.c.h.b16 %v1371
        %v4487 = vunpack.c.l.b16 %v1372
        %v4488 = vunpack.c.h.b16 %v1372
        %v4489 = vunpack.c.l.b16 %v1373
        %v4490 = vunpack.c.h.b16 %v1373
        %v4491 = vunpack.c.l.b16 %v1374
        %v4492 = vunpack.c.h.b16 %v1374
        %v4493 = vunpack.c.l.b16 %v1375
        %v4494 = vunpack.c.h.b16 %v1375
        %v4495 = vunpack.c.l.b16 %v1376
        %v4496 = vunpack.c.h.b16 %v1376
        %v4497 = vunpack.c.l.b16 %v1377
        %v4498 = vunpack.c.h.b16 %v1377
        %v4499 = vunpack.c.l.b16 %v1378
        %v4500 = vunpack.c.h.b16 %v1378
        %v4501 = vunpack.c.l.b16 %v1379
        %v4502 = vunpack.c.h.b16 %v1379
        %v4503 = vunpack.c.l.b16 %v1380
        %v4504 = vunpack.c.h.b16 %v1380
        %v4505 = vunpack.c.l.b16 %v1381
        %v4506 = vunpack.c.h.b16 %v1381
        %v4507 = vunpack.c.l.b16 %v1382
        %v4508 = vunpack.c.h.b16 %v1382
        %v4509 = vunpack.c.l.b16 %v1383
        %v4510 = vunpack.c.h.b16 %v1383
        %v4511 = vunpack.c.l.b16 %v1384
        %v4512 = vunpack.c.h.b16 %v1384
        %v4513 = vunpack.c.l.b16 %v1385
        %v4514 = vunpack.c.h.b16 %v1385
        %v4515 = vunpack.c.l.b16 %v1386
        %v4516 = vunpack.c.h.b16 %v1386
        %v4517 = vunpack.c.l.b16 %v1387
        %v4518 = vunpack.c.h.b16 %v1387
        %v4519 = vunpack.c.l.b16 %v1388
        %v4520 = vunpack.c.h.b16 %v1388
        %v4521 = vunpack.c.l.b16 %v1389
        %v4522 = vunpack.c.h.b16 %v1389
        %v4523 = vunpack.c.l.b16 %v1390
        %v4524 = vunpack.c.h.b16 %v1390
        %v4525 = vunpack.c.l.b16 %v1391
        %v4526 = vunpack.c.h.b16 %v1391
        %v4527 = vunpack.c.l.b16 %v1392
        %v4528 = vunpack.c.h.b16 %v1392
        %v4529 = vunpack.c.l.b16 %v1393
        %v4530 = vunpack.c.h.b16 %v1393
        %v4531 = vunpack.c.l.b16 %v1394
        %v4532 = vunpack.c.h.b16 %v1394
        %v4533 = vunpack.c.l.b16 %v1395
        %v4534 = vunpack.c.h.b16 %v1395
        %v4535 = vunpack.c.l.b16 %v1396
        %v4536 = vunpack.c.h.b16 %v1396
        %v4537 = vunpack.c.l.b16 %v1397
        %v4538 = vunpack.c.h.b16 %v1397
        %v4539 = vunpack.c.l.b16 %v1398
        %v4540 = vunpack.c.h.b16 %v1398
        %v4541 = vunpack.c.l.b16 %v1399
        %v4542 = vunpack.c.h.b16 %v1399
        %v4543 = vunpack.c.l.b16 %v1400
        %v4544 = vunpack.c.h.b16 %v1400
        %v4545 = vunpack.c.l.b16 %v1401
        %v4546 = vunpack.c.h.b16 %v1401
        %v4547 = vunpack.c.l.b16 %v1402
        %v4548 = vunpack.c.h.b16 %v1402
        %v4549 = vunpack.c.l.b16 %v1403
        %v4550 = vunpack.c.h.b16 %v1403
        %v4551 = vunpack.c.l.b16 %v1404
        %v4552 = vunpack.c.h.b16 %v1404
        %v4553 = vunpack.c.l.b16 %v1405
        %v4554 = vunpack.c.h.b16 %v1405
        %v4555 = vunpack.c.l.b16 %v1406
        %v4556 = vunpack.c.h.b16 %v1406
        %v4557 = vunpack.c.l.b16 %v1407
        %v4558 = vunpack.c.h.b16 %v1407
        %v4559 = vunpack.c.l.b16 %v1408
        %v4560 = vunpack.c.h.b16 %v1408
        %v4561 = vunpack.c.l.b16 %v1409
        %v4562 = vunpack.c.h.b16 %v1409
        %v4563 = vunpack.c.l.b16 %v1410
        %v4564 = vunpack.c.h.b16 %v1410
        %v4565 = vunpack.c.l.b16 %v1411
        %v4566 = vunpack.c.h.b16 %v1411
        %v4567 = vunpack.c.l.b16 %v1412
        %v4568 = vunpack.c.h.b16 %v1412
        %v4569 = vunpack.c.l.b16 %v1413
        %v4570 = vunpack.c.h.b16 %v1413
        %v4571 = vunpack.c.l.b16 %v1414
        %v4572 = vunpack.c.h.b16 %v1414
        %v4573 = vunpack.c.l.b16 %v1415
        %v4574 = vunpack.c.h.b16 %v1415
        %v4575 = vunpack.c.l.b16 %v1416
        %v4576 = vunpack.c.h.b16 %v1416
        %v4577 = vunpack.c.l.b16 %v1417
        %v4578 = vunpack.c.h.b16 %v1417
        %v4579 = vunpack.c.l.b16 %v1418
        %v4580 = vunpack.c.h.b16 %v1418
        %v4581 = vunpack.c.l.b16 %v1419
        %v4582 = vunpack.c.h.b16 %v1419
        %v4583 = vunpack.c.l.b16 %v1420
        %v4584 = vunpack.c.h.b16 %v1420
        %v4585 = vunpack.c.l.b16 %v1421
        %v4586 = vunpack.c.h.b16 %v1421
        %v4587 = vunpack.c.l.b16 %v1422
        %v4588 = vunpack.c.h.b16 %v1422
        %v4589 = vunpack.c.l.b16 %v1423
        %v4590 = vunpack.c.h.b16 %v1423
        %v4591 = vunpack.c.l.b16 %v1424
        %v4592 = vunpack.c.h.b16 %v1424
        %v4593 = vunpack.c.l.b16 %v1425
        %v4594 = vunpack.c.h.b16 %v1425
        %v4595 = vunpack.c.l.b16 %v1426
        %v4596 = vunpack.c.h.b16 %v1426
        %v4597 = vunpack.c.l.b16 %v1427
        %v4598 = vunpack.c.h.b16 %v1427
        %v4599 = vunpack.c.l.b16 %v1428
        %v4600 = vunpack.c.h.b16 %v1428
        %v4601 = vunpack.c.l.b16 %v1429
        %v4602 = vunpack.c.h.b16 %v1429
        %v4603 = vunpack.c.l.b16 %v1430
        %v4604 = vunpack.c.h.b16 %v1430
        %v4605 = vunpack.c.l.b16 %v1431
        %v4606 = vunpack.c.h.b16 %v1431
        %v4607 = vunpack.c.l.b16 %v1432
        %v4608 = vunpack.c.h.b16 %v1432
        %v4609 = vunpack.c.l.b16 %v1433
        %v4610 = vunpack.c.h.b16 %v1433
        %v4611 = vunpack.c.l.b16 %v1434
        %v4612 = vunpack.c.h.b16 %v1434
        %v4613 = vunpack.c.l.b16 %v1435
        %v4614 = vunpack.c.h.b16 %v1435
        %v4615 = vunpack.c.l.b16 %v1436
        %v4616 = vunpack.c.h.b16 %v1436
        %v4617 = vunpack.c.l.b16 %v1437
        %v4618 = vunpack.c.h.b16 %v1437
        %v4619 = vunpack.c.l.b16 %v1438
        %v4620 = vunpack.c.h.b16 %v1438
        %v4621 = vunpack.c.l.b16 %v1439
        %v4622 = vunpack.c.h.b16 %v1439
        %v4623 = vunpack.c.l.b16 %v1440
        %v4624 = vunpack.c.h.b16 %v1440
        %v4625 = vunpack.c.l.b16 %v1441
        %v4626 = vunpack.c.h.b16 %v1441
        %v4627 = vunpack.c.l.b16 %v1442
        %v4628 = vunpack.c.h.b16 %v1442
        %v4629 = vunpack.c.l.b16 %v1443
        %v4630 = vunpack.c.h.b16 %v1443
        %v4631 = vunpack.c.l.b16 %v1444
        %v4632 = vunpack.c.h.b16 %v1444
        %v4633 = vunpack.c.l.b16 %v1445
        %v4634 = vunpack.c.h.b16 %v1445
        %v4635 = vunpack.c.l.b16 %v1446
        %v4636 = vunpack.c.h.b16 %v1446
        %v4637 = vunpack.c.l.b16 %v1447
        %v4638 = vunpack.c.h.b16 %v1447
        %v4639 = vunpack.c.l.b16 %v1448
        %v4640 = vunpack.c.h.b16 %v1448
        %v4641 = vunpack.c.l.b16 %v1449
        %v4642 = vunpack.c.h.b16 %v1449
        %v4643 = vunpack.c.l.b16 %v1450
        %v4644 = vunpack.c.h.b16 %v1450
        %v4645 = vunpack.c.l.b16 %v1451
        %v4646 = vunpack.c.h.b16 %v1451
        %v4647 = vunpack.c.l.b16 %v1452
        %v4648 = vunpack.c.h.b16 %v1452
        %v4649 = vunpack.c.l.b16 %v1453
        %v4650 = vunpack.c.h.b16 %v1453
        %v4651 = vunpack.c.l.b16 %v1454
        %v4652 = vunpack.c.h.b16 %v1454
        %v4653 = vunpack.c.l.b16 %v1455
        %v4654 = vunpack.c.h.b16 %v1455
        %v4655 = vunpack.c.l.b16 %v1456
        %v4656 = vunpack.c.h.b16 %v1456
        %v4657 = vunpack.c.l.b16 %v1457
        %v4658 = vunpack.c.h.b16 %v1457
        %v4659 = vunpack.c.l.b16 %v1458
        %v4660 = vunpack.c.h.b16 %v1458
        %v4661 = vunpack.c.l.b16 %v1459
        %v4662 = vunpack.c.h.b16 %v1459
        %v4663 = vunpack.c.l.b16 %v1460
        %v4664 = vunpack.c.h.b16 %v1460
        %v4665 = vunpack.c.l.b16 %v1461
        %v4666 = vunpack.c.h.b16 %v1461
        %v4667 = vunpack.c.l.b16 %v1462
        %v4668 = vunpack.c.h.b16 %v1462
        %v4669 = vunpack.c.l.b16 %v1463
        %v4670 = vunpack.c.h.b16 %v1463
        %v4671 = vunpack.c.l.b16 %v1464
        %v4672 = vunpack.c.h.b16 %v1464
        %v4673 = vunpack.c.l.b16 %v1465
        %v4674 = vunpack.c.h.b16 %v1465
        %v4675 = vunpack.c.l.b16 %v1466
        %v4676 = vunpack.c.h.b16 %v1466
        %v4677 = vunpack.c.l.b16 %v1467
        %v4678 = vunpack.c.h.b16 %v1467
        %v4679 = vunpack.c.l.b16 %v1468
        %v4680 = vunpack.c.h.b16 %v1468
        %v4681 = vunpack.c.l.b16 %v1469
        %v4682 = vunpack.c.h.b16 %v1469
        %v4683 = vunpack.c.l.b16 %v1470
        %v4684 = vunpack.c.h.b16 %v1470
        %v4685 = vunpack.c.l.b16 %v1471
        %v4686 = vunpack.c.h.b16 %v1471
        %v4687 = vunpack.c.l.b16 %v1472
        %v4688 = vunpack.c.h.b16 %v1472
        %v4689 = vunpack.c.l.b16 %v1473
        %v4690 = vunpack.c.h.b16 %v1473
        %v4691 = vunpack.c.l.b16 %v1474
        %v4692 = vunpack.c.h.b16 %v1474
        %v4693 = vunpack.c.l.b16 %v1475
        %v4694 = vunpack.c.h.b16 %v1475
        %v4695 = vunpack.c.l.b16 %v1476
        %v4696 = vunpack.c.h.b16 %v1476
        %v4697 = vunpack.c.l.b16 %v1477
        %v4698 = vunpack.c.h.b16 %v1477
        %v4699 = vunpack.c.l.b16 %v1478
        %v4700 = vunpack.c.h.b16 %v1478
        %v4701 = vunpack.c.l.b16 %v1479
        %v4702 = vunpack.c.h.b16 %v1479
        %v4703 = vunpack.c.l.b16 %v1480
        %v4704 = vunpack.c.h.b16 %v1480
        %v4705 = vunpack.c.l.b16 %v1481
        %v4706 = vunpack.c.h.b16 %v1481
        %v4707 = vunpack.c.l.b16 %v1482
        %v4708 = vunpack.c.h.b16 %v1482
        %v4709 = vunpack.c.l.b16 %v1483
        %v4710 = vunpack.c.h.b16 %v1483
        %v4711 = vunpack.c.l.b16 %v1484
        %v4712 = vunpack.c.h.b16 %v1484
        %v4713 = vunpack.c.l.b16 %v1485
        %v4714 = vunpack.c.h.b16 %v1485
        %v4715 = vunpack.c.l.b16 %v1486
        %v4716 = vunpack.c.h.b16 %v1486
        %v4717 = vunpack.c.l.b16 %v1487
        %v4718 = vunpack.c.h.b16 %v1487
        %v4719 = vunpack.c.l.b16 %v1488
        %v4720 = vunpack.c.h.b16 %v1488
        %v4721 = vunpack.c.l.b16 %v1489
        %v4722 = vunpack.c.h.b16 %v1489
        %v4723 = vunpack.c.l.b16 %v1490
        %v4724 = vunpack.c.h.b16 %v1490
        %v4725 = vunpack.c.l.b16 %v1491
        %v4726 = vunpack.c.h.b16 %v1491
        %v4727 = vunpack.c.l.b16 %v1492
        %v4728 = vunpack.c.h.b16 %v1492
        %v4729 = vunpack.c.l.b16 %v1493
        %v4730 = vunpack.c.h.b16 %v1493
        %v4731 = vunpack.c.l.b16 %v1494
        %v4732 = vunpack.c.h.b16 %v1494
        %v4733 = vunpack.c.l.b16 %v1495
        %v4734 = vunpack.c.h.b16 %v1495
        %v4735 = vunpack.c.l.b16 %v1496
        %v4736 = vunpack.c.h.b16 %v1496
        %v4737 = vunpack.c.l.b16 %v1497
        %v4738 = vunpack.c.h.b16 %v1497
        %v4739 = vunpack.c.l.b16 %v1498
        %v4740 = vunpack.c.h.b16 %v1498
        %v4741 = vunpack.c.l.b16 %v1499
        %v4742 = vunpack.c.h.b16 %v1499
        %v4743 = vunpack.c.l.b16 %v1500
        %v4744 = vunpack.c.h.b16 %v1500
        %v4745 = vunpack.c.l.b16 %v1501
        %v4746 = vunpack.c.h.b16 %v1501
        %v4747 = vunpack.c.l.b16 %v1502
        %v4748 = vunpack.c.h.b16 %v1502
        %v4749 = vunpack.c.l.b16 %v1503
        %v4750 = vunpack.c.h.b16 %v1503
        %v4751 = vunpack.c.l.b16 %v1504
        %v4752 = vunpack.c.h.b16 %v1504
        %v4753 = vunpack.c.l.b16 %v1505
        %v4754 = vunpack.c.h.b16 %v1505
        %v4755 = vunpack.c.l.b16 %v1506
        %v4756 = vunpack.c.h.b16 %v1506
        %v4757 = vunpack.c.l.b16 %v1507
        %v4758 = vunpack.c.h.b16 %v1507
        %v4759 = vunpack.c.l.b16 %v1508
        %v4760 = vunpack.c.h.b16 %v1508
        %v4761 = vunpack.c.l.b16 %v1509
        %v4762 = vunpack.c.h.b16 %v1509
        %v4763 = vunpack.c.l.b16 %v1510
        %v4764 = vunpack.c.h.b16 %v1510
        %v4765 = vunpack.c.l.b16 %v1511
        %v4766 = vunpack.c.h.b16 %v1511
        %v4767 = vunpack.c.l.b16 %v1512
        %v4768 = vunpack.c.h.b16 %v1512
        %v4769 = vunpack.c.l.b16 %v1513
        %v4770 = vunpack.c.h.b16 %v1513
        %v4771 = vunpack.c.l.b16 %v1514
        %v4772 = vunpack.c.h.b16 %v1514
        %v4773 = vunpack.c.l.b16 %v1515
        %v4774 = vunpack.c.h.b16 %v1515
        %v4775 = vunpack.c.l.b16 %v1516
        %v4776 = vunpack.c.h.b16 %v1516
        %v4777 = vunpack.c.l.b16 %v1517
        %v4778 = vunpack.c.h.b16 %v1517
        %v4779 = vunpack.c.l.b16 %v1518
        %v4780 = vunpack.c.h.b16 %v1518
        %v4781 = vunpack.c.l.b16 %v1519
        %v4782 = vunpack.c.h.b16 %v1519
        %v4783 = vunpack.c.l.b16 %v1520
        %v4784 = vunpack.c.h.b16 %v1520
        %v4785 = vunpack.c.l.b16 %v1521
        %v4786 = vunpack.c.h.b16 %v1521
        %v4787 = vunpack.c.l.b16 %v1522
        %v4788 = vunpack.c.h.b16 %v1522
        %v4789 = vunpack.c.l.b16 %v1523
        %v4790 = vunpack.c.h.b16 %v1523
        %v4791 = vunpack.c.l.b16 %v1524
        %v4792 = vunpack.c.h.b16 %v1524
        %v4793 = vunpack.c.l.b16 %v1525
        %v4794 = vunpack.c.h.b16 %v1525
        %v4795 = vunpack.c.l.b16 %v1526
        %v4796 = vunpack.c.h.b16 %v1526
        %v4797 = vunpack.c.l.b16 %v1527
        %v4798 = vunpack.c.h.b16 %v1527
        %v4799 = vunpack.c.l.b16 %v1528
        %v4800 = vunpack.c.h.b16 %v1528
        %v4801 = vunpack.c.l.b16 %v1529
        %v4802 = vunpack.c.h.b16 %v1529
        %v4803 = vunpack.c.l.b16 %v1530
        %v4804 = vunpack.c.h.b16 %v1530
        %v4805 = vunpack.c.l.b16 %v1531
        %v4806 = vunpack.c.h.b16 %v1531
        %v4807 = vunpack.c.l.b16 %v1532
        %v4808 = vunpack.c.h.b16 %v1532
        %v4809 = vunpack.c.l.b16 %v1533
        %v4810 = vunpack.c.h.b16 %v1533
        %v4811 = vunpack.c.l.b16 %v1534
        %v4812 = vunpack.c.h.b16 %v1534
        %v4813 = vunpack.c.l.b16 %v1535
        %v4814 = vunpack.c.h.b16 %v1535
        %v4815 = vunpack.c.l.b16 %v1536
        %v4816 = vunpack.c.h.b16 %v1536
        %v4817 = vunpack.c.l.b16 %v1537
        %v4818 = vunpack.c.h.b16 %v1537
        %v4819 = vunpack.c.l.b16 %v1538
        %v4820 = vunpack.c.h.b16 %v1538
        %v4821 = vunpack.c.l.b16 %v1539
        %v4822 = vunpack.c.h.b16 %v1539
        %v4823 = vunpack.c.l.b16 %v1540
        %v4824 = vunpack.c.h.b16 %v1540
        %v4825 = vunpack.c.l.b16 %v1541
        %v4826 = vunpack.c.h.b16 %v1541
        %v4827 = vunpack.c.l.b16 %v1542
        %v4828 = vunpack.c.h.b16 %v1542
        %v4829 = vunpack.c.l.b16 %v1543
        %v4830 = vunpack.c.h.b16 %v1543
        %v4831 = vunpack.c.l.b16 %v1544
        %v4832 = vunpack.c.h.b16 %v1544
        %v4833 = vunpack.c.l.b16 %v1545
        %v4834 = vunpack.c.h.b16 %v1545
        %v4835 = vunpack.c.l.b16 %v1546
        %v4836 = vunpack.c.h.b16 %v1546
        %v4837 = vunpack.c.l.b16 %v1547
        %v4838 = vunpack.c.h.b16 %v1547
        %v4839 = vunpack.c.l.b16 %v1548
        %v4840 = vunpack.c.h.b16 %v1548
        %v4841 = vunpack.c.l.b16 %v1549
        %v4842 = vunpack.c.h.b16 %v1549
        %v4843 = vunpack.c.l.b16 %v1550
        %v4844 = vunpack.c.h.b16 %v1550
        %v4845 = vunpack.c.l.b16 %v1551
        %v4846 = vunpack.c.h.b16 %v1551
        %v4847 = vunpack.c.l.b16 %v1552
        %v4848 = vunpack.c.h.b16 %v1552
        %v4849 = vunpack.c.l.b16 %v1553
        %v4850 = vunpack.c.h.b16 %v1553
        %v4851 = vunpack.c.l.b16 %v1554
        %v4852 = vunpack.c.h.b16 %v1554
        %v4853 = vunpack.c.l.b16 %v1555
        %v4854 = vunpack.c.h.b16 %v1555
        %v4855 = vunpack.c.l.b16 %v1556
        %v4856 = vunpack.c.h.b16 %v1556
        %v4857 = vunpack.c.l.b16 %v1557
        %v4858 = vunpack.c.h.b16 %v1557
        %v4859 = vunpack.c.l.b16 %v1558
        %v4860 = vunpack.c.h.b16 %v1558
        %v4861 = vunpack.c.l.b16 %v1559
        %v4862 = vunpack.c.h.b16 %v1559
        %v4863 = vunpack.c.l.b16 %v1560
        %v4864 = vunpack.c.h.b16 %v1560
        %v4865 = vunpack.c.l.b16 %v1561
        %v4866 = vunpack.c.h.b16 %v1561
        %v4867 = vunpack.c.l.b16 %v1562
        %v4868 = vunpack.c.h.b16 %v1562
        %v4869 = vunpack.c.l.b16 %v1563
        %v4870 = vunpack.c.h.b16 %v1563
        %v4871 = vunpack.c.l.b16 %v1564
        %v4872 = vunpack.c.h.b16 %v1564
        %v4873 = vunpack.c.l.b16 %v1565
        %v4874 = vunpack.c.h.b16 %v1565
        %v4875 = vunpack.c.l.b16 %v1566
        %v4876 = vunpack.c.h.b16 %v1566
        %v4877 = vunpack.c.l.b16 %v1567
        %v4878 = vunpack.c.h.b16 %v1567
        %v4879 = vunpack.c.l.b16 %v1568
        %v4880 = vunpack.c.h.b16 %v1568
        %v4881 = vunpack.c.l.b16 %v1569
        %v4882 = vunpack.c.h.b16 %v1569
        %v4883 = vunpack.c.l.b16 %v1570
        %v4884 = vunpack.c.h.b16 %v1570
        %v4885 = vunpack.c.l.b16 %v1571
        %v4886 = vunpack.c.h.b16 %v1571
        %v4887 = vunpack.c.l.b16 %v1572
        %v4888 = vunpack.c.h.b16 %v1572
        %v4889 = vunpack.c.l.b16 %v1573
        %v4890 = vunpack.c.h.b16 %v1573
        %v4891 = vunpack.c.l.b16 %v1574
        %v4892 = vunpack.c.h.b16 %v1574
        %v4893 = vunpack.c.l.b16 %v1575
        %v4894 = vunpack.c.h.b16 %v1575
        %v4895 = vunpack.c.l.b16 %v1576
        %v4896 = vunpack.c.h.b16 %v1576
        %v4897 = vunpack.c.l.b16 %v1577
        %v4898 = vunpack.c.h.b16 %v1577
        %v4899 = vunpack.c.l.b16 %v1578
        %v4900 = vunpack.c.h.b16 %v1578
        %v4901 = vunpack.c.l.b16 %v1579
        %v4902 = vunpack.c.h.b16 %v1579
        %v4903 = vunpack.c.l.b16 %v1580
        %v4904 = vunpack.c.h.b16 %v1580
        %v4905 = vunpack.c.l.b16 %v1581
        %v4906 = vunpack.c.h.b16 %v1581
        %v4907 = vunpack.c.l.b16 %v1582
        %v4908 = vunpack.c.h.b16 %v1582
        %v4909 = vunpack.c.l.b16 %v1583
        %v4910 = vunpack.c.h.b16 %v1583
        %v4911 = vunpack.c.l.b16 %v1584
        %v4912 = vunpack.c.h.b16 %v1584
        %v4913 = vunpack.c.l.b16 %v1585
        %v4914 = vunpack.c.h.b16 %v1585
        %v4915 = vunpack.c.l.b16 %v1586
        %v4916 = vunpack.c.h.b16 %v1586
        %v4917 = vunpack.c.l.b16 %v1587
        %v4918 = vunpack.c.h.b16 %v1587
        %v4919 = vunpack.c.l.b16 %v1588
        %v4920 = vunpack.c.h.b16 %v1588
        %v4921 = vunpack.c.l.b16 %v1589
        %v4922 = vunpack.c.h.b16 %v1589
        %v4923 = vunpack.c.l.b16 %v1590
        %v4924 = vunpack.c.h.b16 %v1590
        %v4925 = vunpack.c.l.b16 %v1591
        %v4926 = vunpack.c.h.b16 %v1591
        %v4927 = vunpack.c.l.b16 %v1592
        %v4928 = vunpack.c.h.b16 %v1592
        %v4929 = vunpack.c.l.b16 %v1593
        %v4930 = vunpack.c.h.b16 %v1593
        %v4931 = vunpack.c.l.b16 %v1594
        %v4932 = vunpack.c.h.b16 %v1594
        %v4933 = vunpack.c.l.b16 %v1595
        %v4934 = vunpack.c.h.b16 %v1595
        %v4935 = vunpack.c.l.b16 %v1596
        %v4936 = vunpack.c.h.b16 %v1596
        %v4937 = vunpack.c.l.b16 %v1597
        %v4938 = vunpack.c.h.b16 %v1597
        %v4939 = vunpack.c.l.b16 %v1598
        %v4940 = vunpack.c.h.b16 %v1598
        %v4941 = vunpack.c.l.b16 %v1599
        %v4942 = vunpack.c.h.b16 %v1599
        %v4943 = vunpack.c.l.b16 %v1600
        %v4944 = vunpack.c.h.b16 %v1600
        %v4945 = vunpack.c.l.b16 %v1601
        %v4946 = vunpack.c.h.b16 %v1601
        %v4947 = vunpack.c.l.b16 %v1602
        %v4948 = vunpack.c.h.b16 %v1602
        %v4949 = vunpack.c.l.b16 %v1603
        %v4950 = vunpack.c.h.b16 %v1603
        %v4951 = vunpack.c.l.b16 %v1604
        %v4952 = vunpack.c.h.b16 %v1604
        %v4953 = vunpack.c.l.b16 %v1605
        %v4954 = vunpack.c.h.b16 %v1605
        %v4955 = vunpack.c.l.b16 %v1606
        %v4956 = vunpack.c.h.b16 %v1606
        %v4957 = vunpack.c.l.b16 %v1607
        %v4958 = vunpack.c.h.b16 %v1607
        %v4959 = vunpack.c.l.b16 %v1608
        %v4960 = vunpack.c.h.b16 %v1608
        %v4961 = vunpack.c.l.b16 %v1609
        %v4962 = vunpack.c.h.b16 %v1609
        %v4963 = vunpack.c.l.b16 %v1610
        %v4964 = vunpack.c.h.b16 %v1610
        %v4965 = vunpack.c.l.b16 %v1611
        %v4966 = vunpack.c.h.b16 %v1611
        %v4967 = vunpack.c.l.b16 %v1612
        %v4968 = vunpack.c.h.b16 %v1612
        %v4969 = vunpack.c.l.b16 %v1613
        %v4970 = vunpack.c.h.b16 %v1613
        %v4971 = vunpack.c.l.b16 %v1614
        %v4972 = vunpack.c.h.b16 %v1614
        %v4973 = vunpack.c.l.b16 %v1615
        %v4974 = vunpack.c.h.b16 %v1615
        %v4975 = vunpack.c.l.b16 %v1616
        %v4976 = vunpack.c.h.b16 %v1616
        %v4977 = vunpack.c.l.b16 %v1617
        %v4978 = vunpack.c.h.b16 %v1617
        %v4979 = vunpack.c.l.b16 %v1618
        %v4980 = vunpack.c.h.b16 %v1618
        %v4981 = vunpack.c.l.b16 %v1619
        %v4982 = vunpack.c.h.b16 %v1619
        %v4983 = vunpack.c.l.b16 %v1620
        %v4984 = vunpack.c.h.b16 %v1620
        %v4985 = vunpack.c.l.b16 %v1621
        %v4986 = vunpack.c.h.b16 %v1621
        %v4987 = vunpack.c.l.b16 %v1622
        %v4988 = vunpack.c.h.b16 %v1622
        %v4989 = vunpack.c.l.b16 %v1623
        %v4990 = vunpack.c.h.b16 %v1623
        %v4991 = vunpack.c.l.b16 %v1624
        %v4992 = vunpack.c.h.b16 %v1624
        %v4993 = vunpack.c.l.b16 %v1625
        %v4994 = vunpack.c.h.b16 %v1625
        %v4995 = vunpack.c.l.b16 %v1626
        %v4996 = vunpack.c.h.b16 %v1626
        %v4997 = vunpack.c.l.b16 %v1627
        %v4998 = vunpack.c.h.b16 %v1627
        %v4999 = vunpack.c.l.b16 %v1628
        %v5000 = vunpack.c.h.b16 %v1628
        %v5001 = vunpack.c.l.b16 %v1629
        %v5002 = vunpack.c.h.b16 %v1629
        %v5003 = vunpack.c.l.b16 %v1630
        %v5004 = vunpack.c.h.b16 %v1630
        %v5005 = vunpack.c.l.b16 %v1631
        %v5006 = vunpack.c.h.b16 %v1631
        %v5007 = vunpack.c.l.b16 %v1632
        %v5008 = vunpack.c.h.b16 %v1632
        %v5009 = vunpack.c.l.b16 %v1633
        %v5010 = vunpack.c.h.b16 %v1633
        %v5011 = vunpack.c.l.b16 %v1634
        %v5012 = vunpack.c.h.b16 %v1634
        %v5013 = vunpack.c.l.b16 %v1635
        %v5014 = vunpack.c.h.b16 %v1635
        %v5015 = vunpack.c.l.b16 %v1636
        %v5016 = vunpack.c.h.b16 %v1636
        %v5017 = vunpack.c.l.b16 %v1637
        %v5018 = vunpack.c.h.b16 %v1637
        %v5019 = vunpack.c.l.b16 %v1638
        %v5020 = vunpack.c.h.b16 %v1638
        %v5021 = vunpack.c.l.b16 %v1639
        %v5022 = vunpack.c.h.b16 %v1639
        %v5023 = vunpack.c.l.b16 %v1640
        %v5024 = vunpack.c.h.b16 %v1640
        %v5025 = vunpack.c.l.b16 %v1641
        %v5026 = vunpack.c.h.b16 %v1641
        %v5027 = vunpack.c.l.b16 %v1642
        %v5028 = vunpack.c.h.b16 %v1642
        %v5029 = vunpack.c.l.b16 %v1643
        %v5030 = vunpack.c.h.b16 %v1643
        %v5031 = vunpack.c.l.b16 %v1644
        %v5032 = vunpack.c.h.b16 %v1644
        %v5033 = vunpack.c.l.b16 %v1645
        %v5034 = vunpack.c.h.b16 %v1645
        %v5035 = vunpack.c.l.b16 %v1646
        %v5036 = vunpack.c.h.b16 %v1646
        %v5037 = vunpack.c.l.b16 %v1647
        %v5038 = vunpack.c.h.b16 %v1647
        %v5039 = vunpack.c.l.b16 %v1648
        %v5040 = vunpack.c.h.b16 %v1648
        %v5041 = vunpack.c.l.b16 %v1649
        %v5042 = vunpack.c.h.b16 %v1649
        %v5043 = vunpack.c.l.b16 %v1650
        %v5044 = vunpack.c.h.b16 %v1650
        %v5045 = vunpack.c.l.b16 %v1651
        %v5046 = vunpack.c.h.b16 %v1651
        %v5047 = vunpack.c.l.b16 %v1652
        %v5048 = vunpack.c.h.b16 %v1652
        %v5049 = vunpack.c.l.b16 %v1653
        %v5050 = vunpack.c.h.b16 %v1653
        %v5051 = vunpack.c.l.b16 %v1654
        %v5052 = vunpack.c.h.b16 %v1654
        %v5053 = vunpack.c.l.b16 %v1655
        %v5054 = vunpack.c.h.b16 %v1655
        %v5055 = vunpack.c.l.b16 %v1656
        %v5056 = vunpack.c.h.b16 %v1656
        %v5057 = vunpack.c.l.b16 %v1657
        %v5058 = vunpack.c.h.b16 %v1657
        %v5059 = vunpack.c.l.b16 %v1658
        %v5060 = vunpack.c.h.b16 %v1658
        %v5061 = vunpack.c.l.b16 %v1659
        %v5062 = vunpack.c.h.b16 %v1659
        %v5063 = vunpack.c.l.b16 %v1660
        %v5064 = vunpack.c.h.b16 %v1660
        %v5065 = vunpack.c.l.b16 %v1661
        %v5066 = vunpack.c.h.b16 %v1661
        %v5067 = vunpack.c.l.b16 %v1662
        %v5068 = vunpack.c.h.b16 %v1662
        %v5069 = vunpack.c.l.b16 %v1663
        %v5070 = vunpack.c.h.b16 %v1663
        %v5071 = vunpack.c.l.b16 %v1664
        %v5072 = vunpack.c.h.b16 %v1664
        %v5073 = vunpack.c.l.b16 %v1665
        %v5074 = vunpack.c.h.b16 %v1665
        %v5075 = vunpack.c.l.b16 %v1666
        %v5076 = vunpack.c.h.b16 %v1666
        %v5077 = vunpack.c.l.b16 %v1667
        %v5078 = vunpack.c.h.b16 %v1667
        %v5079 = vunpack.c.l.b16 %v1668
        %v5080 = vunpack.c.h.b16 %v1668
        %v5081 = vunpack.c.l.b16 %v1669
        %v5082 = vunpack.c.h.b16 %v1669
        %v5083 = vunpack.c.l.b16 %v1670
        %v5084 = vunpack.c.h.b16 %v1670
        %v5085 = vunpack.c.l.b16 %v1671
        %v5086 = vunpack.c.h.b16 %v1671
        %v5087 = vunpack.c.l.b16 %v1672
        %v5088 = vunpack.c.h.b16 %v1672
        %v5089 = vunpack.c.l.b16 %v1673
        %v5090 = vunpack.c.h.b16 %v1673
        %v5091 = vunpack.c.l.b16 %v1674
        %v5092 = vunpack.c.h.b16 %v1674
        %v5093 = vunpack.c.l.b16 %v1675
        %v5094 = vunpack.c.h.b16 %v1675
        %v5095 = vunpack.c.l.b16 %v1676
        %v5096 = vunpack.c.h.b16 %v1676
        %v5097 = vunpack.c.l.b16 %v1677
        %v5098 = vunpack.c.h.b16 %v1677
        %v5099 = vunpack.c.l.b16 %v1678
        %v5100 = vunpack.c.h.b16 %v1678
        %v5101 = vunpack.c.l.b16 %v1679
        %v5102 = vunpack.c.h.b16 %v1679
        %v5103 = vunpack.c.l.b16 %v1680
        %v5104 = vunpack.c.h.b16 %v1680
        %v5105 = vunpack.c.l.b16 %v1681
        %v5106 = vunpack.c.h.b16 %v1681
        %v5107 = vunpack.c.l.b16 %v1682
        %v5108 = vunpack.c.h.b16 %v1682
        %v5109 = vunpack.c.l.b16 %v1683
        %v5110 = vunpack.c.h.b16 %v1683
        %v5111 = vunpack.c.l.b16 %v1684
        %v5112 = vunpack.c.h.b16 %v1684
        %v5113 = vunpack.c.l.b16 %v1685
        %v5114 = vunpack.c.h.b16 %v1685
        %v5115 = vunpack.c.l.b16 %v1686
        %v5116 = vunpack.c.h.b16 %v1686
        %v5117 = vunpack.c.l.b16 %v1687
        %v5118 = vunpack.c.h.b16 %v1687
        %v5119 = vunpack.c.l.b16 %v1688
        %v5120 = vunpack.c.h.b16 %v1688
        %v5121 = vunpack.c.l.b16 %v1689
        %v5122 = vunpack.c.h.b16 %v1689
        %v5123 = vunpack.c.l.b16 %v1690
        %v5124 = vunpack.c.h.b16 %v1690
        %v5125 = vunpack.c.l.b16 %v1691
        %v5126 = vunpack.c.h.b16 %v1691
        %v5127 = vunpack.c.l.b16 %v1692
        %v5128 = vunpack.c.h.b16 %v1692
        %v5129 = vunpack.c.l.b16 %v1693
        %v5130 = vunpack.c.h.b16 %v1693
        %v5131 = vunpack.c.l.b16 %v1694
        %v5132 = vunpack.c.h.b16 %v1694
        %v5133 = vunpack.c.l.b16 %v1695
        %v5134 = vunpack.c.h.b16 %v1695
        %v5135 = vunpack.c.l.b16 %v1696
        %v5136 = vunpack.c.h.b16 %v1696
        %v5137 = vunpack.c.l.b16 %v1697
        %v5138 = vunpack.c.h.b16 %v1697
        %v5139 = vunpack.c.l.b16 %v1698
        %v5140 = vunpack.c.h.b16 %v1698
        %v5141 = vunpack.c.l.b16 %v1699
        %v5142 = vunpack.c.h.b16 %v1699
        %v5143 = vunpack.c.l.b16 %v1700
        %v5144 = vunpack.c.h.b16 %v1700
        %v5145 = vunpack.c.l.b16 %v1701
        %v5146 = vunpack.c.h.b16 %v1701
        %v5147 = vunpack.c.l.b16 %v1702
        %v5148 = vunpack.c.h.b16 %v1702
        %v5149 = vunpack.c.l.b16 %v1703
        %v5150 = vunpack.c.h.b16 %v1703
        %v5151 = vunpack.c.l.b16 %v1704
        %v5152 = vunpack.c.h.b16 %v1704
        %v5153 = vunpack.c.l.b16 %v1705
        %v5154 = vunpack.c.h.b16 %v1705
        %v5155 = vunpack.c.l.b16 %v1706
        %v5156 = vunpack.c.h.b16 %v1706
        %v5157 = vunpack.c.l.b16 %v1707
        %v5158 = vunpack.c.h.b16 %v1707
        %v5159 = vunpack.c.l.b16 %v1708
        %v5160 = vunpack.c.h.b16 %v1708
        %v5161 = vunpack.c.l.b16 %v1709
        %v5162 = vunpack.c.h.b16 %v1709
        %v5163 = vunpack.c.l.b16 %v1710
        %v5164 = vunpack.c.h.b16 %v1710
        %v5165 = vunpack.c.l.b16 %v1711
        %v5166 = vunpack.c.h.b16 %v1711
        %v5167 = vunpack.c.l.b16 %v1712
        %v5168 = vunpack.c.h.b16 %v1712
        %v5169 = vunpack.c.l.b16 %v1713
        %v5170 = vunpack.c.h.b16 %v1713
        %v5171 = vunpack.c.l.b16 %v1714
        %v5172 = vunpack.c.h.b16 %v1714
        %v5173 = vunpack.c.l.b16 %v1715
        %v5174 = vunpack.c.h.b16 %v1715
        %v5175 = vunpack.c.l.b16 %v1716
        %v5176 = vunpack.c.h.b16 %v1716
        %v5177 = vunpack.c.l.b16 %v1717
        %v5178 = vunpack.c.h.b16 %v1717
        %v5179 = vunpack.c.l.b16 %v1718
        %v5180 = vunpack.c.h.b16 %v1718
        %v5181 = vunpack.c.l.b16 %v1719
        %v5182 = vunpack.c.h.b16 %v1719
        %v5183 = vunpack.c.l.b16 %v1720
        %v5184 = vunpack.c.h.b16 %v1720
        %v5185 = vunpack.c.l.b16 %v1721
        %v5186 = vunpack.c.h.b16 %v1721
        %v5187 = vunpack.c.l.b16 %v1722
        %v5188 = vunpack.c.h.b16 %v1722
        %v5189 = vunpack.c.l.b16 %v1723
        %v5190 = vunpack.c.h.b16 %v1723
        %v5191 = vunpack.c.l.b16 %v1724
        %v5192 = vunpack.c.h.b16 %v1724
        %v5193 = vunpack.c.l.b16 %v1725
        %v5194 = vunpack.c.h.b16 %v1725
        %v5195 = vunpack.c.l.b16 %v1726
        %v5196 = vunpack.c.h.b16 %v1726
        %v5197 = vunpack.c.l.b16 %v1727
        %v5198 = vunpack.c.h.b16 %v1727
        %v5199 = vunpack.c.l.b16 %v1728
        %v5200 = vunpack.c.h.b16 %v1728
        %v5201 = vunpack.c.l.b16 %v1729
        %v5202 = vunpack.c.h.b16 %v1729
        %v5203 = vunpack.c.l.b16 %v1730
        %v5204 = vunpack.c.h.b16 %v1730
        %v5205 = vunpack.c.l.b16 %v1731
        %v5206 = vunpack.c.h.b16 %v1731
        %v5207 = vunpack.c.l.b16 %v1732
        %v5208 = vunpack.c.h.b16 %v1732
        %v5209 = vunpack.c.l.b16 %v1733
        %v5210 = vunpack.c.h.b16 %v1733
        %v5211 = vunpack.c.l.b16 %v1734
        %v5212 = vunpack.c.h.b16 %v1734
        %v5213 = vunpack.c.l.b16 %v1735
        %v5214 = vunpack.c.h.b16 %v1735
        %v5215 = vunpack.c.l.b16 %v1736
        %v5216 = vunpack.c.h.b16 %v1736
        %v5217 = vunpack.c.l.b16 %v1737
        %v5218 = vunpack.c.h.b16 %v1737
        %v5219 = vunpack.c.l.b16 %v1738
        %v5220 = vunpack.c.h.b16 %v1738
        %v5221 = vunpack.c.l.b16 %v1739
        %v5222 = vunpack.c.h.b16 %v1739
        %v5223 = vunpack.c.l.b16 %v1740
        %v5224 = vunpack.c.h.b16 %v1740
        %v5225 = vunpack.c.l.b16 %v1741
        %v5226 = vunpack.c.h.b16 %v1741
        %v5227 = vunpack.c.l.b16 %v1742
        %v5228 = vunpack.c.h.b16 %v1742
        %v5229 = vunpack.c.l.b16 %v1743
        %v5230 = vunpack.c.h.b16 %v1743
        %v5231 = vunpack.c.l.b16 %v1744
        %v5232 = vunpack.c.h.b16 %v1744
        %v5233 = vunpack.c.l.b16 %v1745
        %v5234 = vunpack.c.h.b16 %v1745
        %v5235 = vunpack.c.l.b16 %v1746
        %v5236 = vunpack.c.h.b16 %v1746
        %v5237 = vunpack.c.l.b16 %v1747
        %v5238 = vunpack.c.h.b16 %v1747
        %v5239 = vunpack.c.l.b16 %v1748
        %v5240 = vunpack.c.h.b16 %v1748
        %v5241 = vunpack.c.l.b16 %v1749
        %v5242 = vunpack.c.h.b16 %v1749
        %v5243 = vunpack.c.l.b16 %v1750
        %v5244 = vunpack.c.h.b16 %v1750
        %v5245 = vunpack.c.l.b16 %v1751
        %v5246 = vunpack.c.h.b16 %v1751
        %v5247 = vunpack.c.l.b16 %v1752
        %v5248 = vunpack.c.h.b16 %v1752
        %v5249 = vunpack.c.l.b16 %v1753
        %v5250 = vunpack.c.h.b16 %v1753
        %v5251 = vunpack.c.l.b16 %v1754
        %v5252 = vunpack.c.h.b16 %v1754
        %v5253 = vunpack.c.l.b16 %v1755
        %v5254 = vunpack.c.h.b16 %v1755
        %v5255 = vunpack.c.l.b16 %v1756
        %v5256 = vunpack.c.h.b16 %v1756
        %v5257 = vunpack.c.l.b16 %v1757
        %v5258 = vunpack.c.h.b16 %v1757
        %v5259 = vunpack.c.l.b16 %v1758
        %v5260 = vunpack.c.h.b16 %v1758
        %v5261 = vunpack.c.l.b16 %v1759
        %v5262 = vunpack.c.h.b16 %v1759
        %v5263 = vunpack.c.l.b16 %v1760
        %v5264 = vunpack.c.h.b16 %v1760
        %v5265 = vunpack.c.l.b16 %v1761
        %v5266 = vunpack.c.h.b16 %v1761
        %v5267 = vunpack.c.l.b16 %v1762
        %v5268 = vunpack.c.h.b16 %v1762
        %v5269 = vunpack.c.l.b16 %v1763
        %v5270 = vunpack.c.h.b16 %v1763
        %v5271 = vunpack.c.l.b16 %v1764
        %v5272 = vunpack.c.h.b16 %v1764
        %v5273 = vunpack.c.l.b16 %v1765
        %v5274 = vunpack.c.h.b16 %v1765
        %v5275 = vunpack.c.l.b16 %v1766
        %v5276 = vunpack.c.h.b16 %v1766
        %v5277 = vunpack.c.l.b16 %v1767
        %v5278 = vunpack.c.h.b16 %v1767
        %v5279 = vunpack.c.l.b16 %v1768
        %v5280 = vunpack.c.h.b16 %v1768
        %v5281 = vunpack.c.l.b16 %v1769
        %v5282 = vunpack.c.h.b16 %v1769
        %v5283 = vunpack.c.l.b16 %v1770
        %v5284 = vunpack.c.h.b16 %v1770
        %v5285 = vunpack.c.l.b16 %v1771
        %v5286 = vunpack.c.h.b16 %v1771
        %v5287 = vunpack.c.l.b16 %v1772
        %v5288 = vunpack.c.h.b16 %v1772
        %v5289 = vunpack.c.l.b16 %v1773
        %v5290 = vunpack.c.h.b16 %v1773
        %v5291 = vunpack.c.l.b16 %v1774
        %v5292 = vunpack.c.h.b16 %v1774
        %v5293 = vunpack.c.l.b16 %v1775
        %v5294 = vunpack.c.h.b16 %v1775
        %v5295 = vunpack.c.l.b16 %v1776
        %v5296 = vunpack.c.h.b16 %v1776
        %v5297 = vunpack.c.l.b16 %v1777
        %v5298 = vunpack.c.h.b16 %v1777
        %v5299 = vunpack.c.l.b16 %v1778
        %v5300 = vunpack.c.h.b16 %v1778
        %v5301 = vunpack.c.l.b16 %v1779
        %v5302 = vunpack.c.h.b16 %v1779
        %v5303 = vunpack.c.l.b16 %v1780
        %v5304 = vunpack.c.h.b16 %v1780
        %v5305 = vunpack.c.l.b16 %v1781
        %v5306 = vunpack.c.h.b16 %v1781
        %v5307 = vunpack.c.l.b16 %v1782
        %v5308 = vunpack.c.h.b16 %v1782
        %v5309 = vunpack.c.l.b16 %v1783
        %v5310 = vunpack.c.h.b16 %v1783
        %v5311 = vunpack.c.l.b16 %v1784
        %v5312 = vunpack.c.h.b16 %v1784
        %v5313 = vunpack.c.l.b16 %v1785
        %v5314 = vunpack.c.h.b16 %v1785
        %v5315 = vunpack.c.l.b16 %v1786
        %v5316 = vunpack.c.h.b16 %v1786
        %v5317 = vunpack.c.l.b16 %v1787
        %v5318 = vunpack.c.h.b16 %v1787
        %v5319 = vunpack.c.l.b16 %v1788
        %v5320 = vunpack.c.h.b16 %v1788
        %v5321 = vunpack.c.l.b16 %v1789
        %v5322 = vunpack.c.h.b16 %v1789
        %v5323 = vunpack.c.l.b16 %v1790
        %v5324 = vunpack.c.h.b16 %v1790
        %v5325 = vunpack.c.l.b16 %v1791
        %v5326 = vunpack.c.h.b16 %v1791
        %v5327 = vunpack.c.l.b16 %v1792
        %v5328 = vunpack.c.h.b16 %v1792
        %v5329 = vunpack.c.l.b16 %v1793
        %v5330 = vunpack.c.h.b16 %v1793
        %v5331 = vunpack.c.l.b16 %v1794
        %v5332 = vunpack.c.h.b16 %v1794
        %v5333 = vunpack.c.l.b16 %v1795
        %v5334 = vunpack.c.h.b16 %v1795
        %v5335 = vunpack.c.l.b16 %v1796
        %v5336 = vunpack.c.h.b16 %v1796
        %v5337 = vunpack.c.l.b16 %v1797
        %v5338 = vunpack.c.h.b16 %v1797
        %v5339 = vunpack.c.l.b16 %v1798
        %v5340 = vunpack.c.h.b16 %v1798
        %v5341 = vunpack.c.l.b16 %v1799
        %v5342 = vunpack.c.h.b16 %v1799
        %v5343 = vunpack.c.l.b16 %v1800
        %v5344 = vunpack.c.h.b16 %v1800
        %v5345 = vunpack.c.l.b16 %v1801
        %v5346 = vunpack.c.h.b16 %v1801
        %v5347 = vunpack.c.l.b16 %v1802
        %v5348 = vunpack.c.h.b16 %v1802
        %v5349 = vunpack.c.l.b16 %v1803
        %v5350 = vunpack.c.h.b16 %v1803
        %v5351 = vunpack.c.l.b16 %v1804
        %v5352 = vunpack.c.h.b16 %v1804
        %v5353 = vunpack.c.l.b16 %v1805
        %v5354 = vunpack.c.h.b16 %v1805
        %v5355 = vunpack.c.l.b16 %v1806
        %v5356 = vunpack.c.h.b16 %v1806
        %v5357 = vunpack.c.l.b16 %v1807
        %v5358 = vunpack.c.h.b16 %v1807
        %v5359 = vunpack.c.l.b16 %v1808
        %v5360 = vunpack.c.h.b16 %v1808
        %v5361 = vunpack.c.l.b16 %v1809
        %v5362 = vunpack.c.h.b16 %v1809
        %v5363 = vunpack.c.l.b16 %v1810
        %v5364 = vunpack.c.h.b16 %v1810
        %v5365 = vunpack.c.l.b16 %v1811
        %v5366 = vunpack.c.h.b16 %v1811
        %v5367 = vunpack.c.l.b16 %v1812
        %v5368 = vunpack.c.h.b16 %v1812
        %v5369 = vunpack.c.l.b16 %v1813
        %v5370 = vunpack.c.h.b16 %v1813
        %v5371 = vunpack.c.l.b16 %v1814
        %v5372 = vunpack.c.h.b16 %v1814
        %v5373 = vunpack.c.l.b16 %v1815
        %v5374 = vunpack.c.h.b16 %v1815
        %v5375 = vunpack.c.l.b16 %v1816
        %v5376 = vunpack.c.h.b16 %v1816
        %v5377 = vunpack.c.l.b16 %v1817
        %v5378 = vunpack.c.h.b16 %v1817
        %v5379 = vunpack.c.l.b16 %v1818
        %v5380 = vunpack.c.h.b16 %v1818
        %v5381 = vunpack.c.l.b16 %v1819
        %v5382 = vunpack.c.h.b16 %v1819
        %v5383 = vunpack.c.l.b16 %v1820
        %v5384 = vunpack.c.h.b16 %v1820
        %v5385 = vunpack.c.l.b16 %v1821
        %v5386 = vunpack.c.h.b16 %v1821
        %v5387 = vunpack.c.l.b16 %v1822
        %v5388 = vunpack.c.h.b16 %v1822
        %v5389 = vunpack.c.l.b16 %v1823
        %v5390 = vunpack.c.h.b16 %v1823
        %v5391 = vunpack.c.l.b16 %v1824
        %v5392 = vunpack.c.h.b16 %v1824
        %v5393 = vunpack.c.l.b16 %v1825
        %v5394 = vunpack.c.h.b16 %v1825
        %v5395 = vunpack.c.l.b16 %v1826
        %v5396 = vunpack.c.h.b16 %v1826
        %v5397 = vunpack.c.l.b16 %v1827
        %v5398 = vunpack.c.h.b16 %v1827
        %v5399 = vunpack.c.l.b16 %v1828
        %v5400 = vunpack.c.h.b16 %v1828
        %v5401 = vunpack.c.l.b16 %v1829
        %v5402 = vunpack.c.h.b16 %v1829
        %v5403 = vunpack.c.l.b16 %v1830
        %v5404 = vunpack.c.h.b16 %v1830
        %v5405 = vunpack.c.l.b16 %v1831
        %v5406 = vunpack.c.h.b16 %v1831
        %v5407 = vunpack.c.l.b16 %v1832
        %v5408 = vunpack.c.h.b16 %v1832
        %v5409 = vunpack.c.l.b16 %v1833
        %v5410 = vunpack.c.h.b16 %v1833
        %v5411 = vunpack.c.l.b16 %v1834
        %v5412 = vunpack.c.h.b16 %v1834
        %v5413 = vunpack.c.l.b16 %v1835
        %v5414 = vunpack.c.h.b16 %v1835
        %v5415 = vunpack.c.l.b16 %v1836
        %v5416 = vunpack.c.h.b16 %v1836
        %v5417 = vunpack.c.l.b16 %v1837
        %v5418 = vunpack.c.h.b16 %v1837
        %v5419 = vunpack.c.l.b16 %v1838
        %v5420 = vunpack.c.h.b16 %v1838
        %v5421 = vunpack.c.l.b16 %v1839
        %v5422 = vunpack.c.h.b16 %v1839
        %v5423 = vunpack.c.l.b16 %v1840
        %v5424 = vunpack.c.h.b16 %v1840
        %v5425 = vunpack.c.l.b16 %v1841
        %v5426 = vunpack.c.h.b16 %v1841
        %v5427 = vunpack.c.l.b16 %v1842
        %v5428 = vunpack.c.h.b16 %v1842
        %v5429 = vunpack.c.l.b16 %v1843
        %v5430 = vunpack.c.h.b16 %v1843
        %v5431 = vunpack.c.l.b16 %v1844
        %v5432 = vunpack.c.h.b16 %v1844
        %v5433 = vunpack.c.l.b16 %v1845
        %v5434 = vunpack.c.h.b16 %v1845
        %v5435 = vunpack.c.l.b16 %v1846
        %v5436 = vunpack.c.h.b16 %v1846
        %v5437 = vunpack.c.l.b16 %v1847
        %v5438 = vunpack.c.h.b16 %v1847
        %v5439 = vunpack.c.l.b16 %v1848
        %v5440 = vunpack.c.h.b16 %v1848
        %v5441 = vunpack.c.l.b16 %v1849
        %v5442 = vunpack.c.h.b16 %v1849
        %v5443 = vunpack.c.l.b16 %v1850
        %v5444 = vunpack.c.h.b16 %v1850
        %v5445 = vunpack.c.l.b16 %v1851
        %v5446 = vunpack.c.h.b16 %v1851
        %v5447 = vunpack.c.l.b16 %v1852
        %v5448 = vunpack.c.h.b16 %v1852
        %v5449 = vunpack.c.l.b16 %v1853
        %v5450 = vunpack.c.h.b16 %v1853
        %v5451 = vunpack.c.l.b16 %v1854
        %v5452 = vunpack.c.h.b16 %v1854
        %v5453 = vunpack.c.l.b16 %v1855
        %v5454 = vunpack.c.h.b16 %v1855
        %v5455 = vunpack.c.l.b16 %v1856
        %v5456 = vunpack.c.h.b16 %v1856
        %v5457 = vunpack.c.l.b16 %v1857
        %v5458 = vunpack.c.h.b16 %v1857
        %v5459 = vunpack.c.l.b16 %v1858
        %v5460 = vunpack.c.h.b16 %v1858
        %v5461 = vunpack.c.l.b16 %v1859
        %v5462 = vunpack.c.h.b16 %v1859
        %v5463 = vunpack.c.l.b16 %v1860
        %v5464 = vunpack.c.h.b16 %v1860
        %v5465 = vunpack.c.l.b16 %v1861
        %v5466 = vunpack.c.h.b16 %v1861
        %v5467 = vunpack.c.l.b16 %v1862
        %v5468 = vunpack.c.h.b16 %v1862
        %v5469 = vunpack.c.l.b16 %v1863
        %v5470 = vunpack.c.h.b16 %v1863
        %v5471 = vunpack.c.l.b16 %v1864
        %v5472 = vunpack.c.h.b16 %v1864
        %v5473 = vunpack.c.l.b16 %v1865
        %v5474 = vunpack.c.h.b16 %v1865
        %v5475 = vunpack.c.l.b16 %v1866
        %v5476 = vunpack.c.h.b16 %v1866
        %v5477 = vunpack.c.l.b16 %v1867
        %v5478 = vunpack.c.h.b16 %v1867
        %v5479 = vunpack.c.l.b16 %v1868
        %v5480 = vunpack.c.h.b16 %v1868
        %v5481 = vunpack.c.l.b16 %v1869
        %v5482 = vunpack.c.h.b16 %v1869
        %v5483 = vunpack.c.l.b16 %v1870
        %v5484 = vunpack.c.h.b16 %v1870
        %v5485 = vunpack.c.l.b16 %v1871
        %v5486 = vunpack.c.h.b16 %v1871
        %v5487 = vunpack.c.l.b16 %v1872
        %v5488 = vunpack.c.h.b16 %v1872
        %v5489 = vunpack.c.l.b16 %v1873
        %v5490 = vunpack.c.h.b16 %v1873
        %v5491 = vunpack.c.l.b16 %v1874
        %v5492 = vunpack.c.h.b16 %v1874
        %v5493 = vunpack.c.l.b16 %v1875
        %v5494 = vunpack.c.h.b16 %v1875
        %v5495 = vunpack.c.l.b16 %v1876
        %v5496 = vunpack.c.h.b16 %v1876
        %v5497 = vunpack.c.l.b16 %v1877
        %v5498 = vunpack.c.h.b16 %v1877
        %v5499 = vunpack.c.l.b16 %v1878
        %v5500 = vunpack.c.h.b16 %v1878
        %v5501 = vunpack.c.l.b16 %v1879
        %v5502 = vunpack.c.h.b16 %v1879
        %v5503 = vunpack.c.l.b16 %v1880
        %v5504 = vunpack.c.h.b16 %v1880
        %v5505 = vunpack.c.l.b16 %v1881
        %v5506 = vunpack.c.h.b16 %v1881
        %v5507 = vunpack.c.l.b16 %v1882
        %v5508 = vunpack.c.h.b16 %v1882
        %v5509 = vunpack.c.l.b16 %v1883
        %v5510 = vunpack.c.h.b16 %v1883
        %v5511 = vunpack.c.l.b16 %v1884
        %v5512 = vunpack.c.h.b16 %v1884
        %v5513 = vunpack.c.l.b16 %v1885
        %v5514 = vunpack.c.h.b16 %v1885
        %v5515 = vunpack.c.l.b16 %v1886
        %v5516 = vunpack.c.h.b16 %v1886
        %v5517 = vunpack.c.l.b16 %v1887
        %v5518 = vunpack.c.h.b16 %v1887
        %v5519 = vunpack.c.l.b16 %v1888
        %v5520 = vunpack.c.h.b16 %v1888
        %v5521 = vunpack.c.l.b16 %v1889
        %v5522 = vunpack.c.h.b16 %v1889
        %v5523 = vunpack.c.l.b16 %v1890
        %v5524 = vunpack.c.h.b16 %v1890
        %v5525 = vunpack.c.l.b16 %v1891
        %v5526 = vunpack.c.h.b16 %v1891
        %v5527 = vunpack.c.l.b16 %v1892
        %v5528 = vunpack.c.h.b16 %v1892
        %v5529 = vunpack.c.l.b16 %v1893
        %v5530 = vunpack.c.h.b16 %v1893
        %v5531 = vunpack.c.l.b16 %v1894
        %v5532 = vunpack.c.h.b16 %v1894
        %v5533 = vunpack.c.l.b16 %v1895
        %v5534 = vunpack.c.h.b16 %v1895
        %v5535 = vunpack.c.l.b16 %v1896
        %v5536 = vunpack.c.h.b16 %v1896
        %v5537 = vunpack.c.l.b16 %v1897
        %v5538 = vunpack.c.h.b16 %v1897
        %v5539 = vunpack.c.l.b16 %v1898
        %v5540 = vunpack.c.h.b16 %v1898
        %v5541 = vunpack.c.l.b16 %v1899
        %v5542 = vunpack.c.h.b16 %v1899
        %v5543 = vunpack.c.l.b16 %v1900
        %v5544 = vunpack.c.h.b16 %v1900
        %v5545 = vunpack.c.l.b16 %v1901
        %v5546 = vunpack.c.h.b16 %v1901
        %v5547 = vunpack.c.l.b16 %v1902
        %v5548 = vunpack.c.h.b16 %v1902
        %v5549 = vunpack.c.l.b16 %v1903
        %v5550 = vunpack.c.h.b16 %v1903
        %v5551 = vunpack.c.l.b16 %v1904
        %v5552 = vunpack.c.h.b16 %v1904
        %v5553 = vunpack.c.l.b16 %v1905
        %v5554 = vunpack.c.h.b16 %v1905
        %v5555 = vunpack.c.l.b16 %v1906
        %v5556 = vunpack.c.h.b16 %v1906
        %v5557 = vunpack.c.l.b16 %v1907
        %v5558 = vunpack.c.h.b16 %v1907
        %v5559 = vunpack.c.l.b16 %v1908
        %v5560 = vunpack.c.h.b16 %v1908
        %v5561 = vunpack.c.l.b16 %v1909
        %v5562 = vunpack.c.h.b16 %v1909
        %v5563 = vunpack.c.l.b16 %v1910
        %v5564 = vunpack.c.h.b16 %v1910
        %v5565 = vunpack.c.l.b16 %v1911
        %v5566 = vunpack.c.h.b16 %v1911
        %v5567 = vunpack.c.l.b16 %v1912
        %v5568 = vunpack.c.h.b16 %v1912
        %v5569 = vunpack.c.l.b16 %v1913
        %v5570 = vunpack.c.h.b16 %v1913
        %v5571 = vunpack.c.l.b16 %v1914
        %v5572 = vunpack.c.h.b16 %v1914
        %v5573 = vunpack.c.l.b16 %v1915
        %v5574 = vunpack.c.h.b16 %v1915
        %v5575 = vunpack.c.l.b16 %v1916
        %v5576 = vunpack.c.h.b16 %v1916
        %v5577 = vunpack.c.l.b16 %v1917
        %v5578 = vunpack.c.h.b16 %v1917
        %v5579 = vunpack.c.l.b16 %v1918
        %v5580 = vunpack.c.h.b16 %v1918
        %v5581 = vunpack.c.l.b16 %v1919
        %v5582 = vunpack.c.h.b16 %v1919
        %v5583 = vunpack.c.l.b16 %v1920
        %v5584 = vunpack.c.h.b16 %v1920
        %v5585 = vunpack.c.l.b16 %v1921
        %v5586 = vunpack.c.h.b16 %v1921
        %v5587 = vunpack.c.l.b16 %v1922
        %v5588 = vunpack.c.h.b16 %v1922
        %v5589 = vunpack.c.l.b16 %v1923
        %v5590 = vunpack.c.h.b16 %v1923
        %v5591 = vunpack.c.l.b16 %v1924
        %v5592 = vunpack.c.h.b16 %v1924
        %v5593 = vunpack.c.l.b16 %v1925
        %v5594 = vunpack.c.h.b16 %v1925
        %v5595 = vunpack.c.l.b16 %v1926
        %v5596 = vunpack.c.h.b16 %v1926
        %v5597 = vunpack.c.l.b16 %v1927
        %v5598 = vunpack.c.h.b16 %v1927
        %v5599 = vunpack.c.l.b16 %v1928
        %v5600 = vunpack.c.h.b16 %v1928
        %v5601 = vunpack.c.l.b16 %v1929
        %v5602 = vunpack.c.h.b16 %v1929
        %v5603 = vunpack.c.l.b16 %v1930
        %v5604 = vunpack.c.h.b16 %v1930
        %v5605 = vunpack.c.l.b16 %v1931
        %v5606 = vunpack.c.h.b16 %v1931
        %v5607 = vunpack.c.l.b16 %v1932
        %v5608 = vunpack.c.h.b16 %v1932
        %v5609 = vunpack.c.l.b16 %v1933
        %v5610 = vunpack.c.h.b16 %v1933
        %v5611 = vunpack.c.l.b16 %v1934
        %v5612 = vunpack.c.h.b16 %v1934
        %v5613 = vunpack.c.l.b16 %v1935
        %v5614 = vunpack.c.h.b16 %v1935
        %v5615 = vunpack.c.l.b16 %v1936
        %v5616 = vunpack.c.h.b16 %v1936
        %v5617 = vunpack.c.l.b16 %v1937
        %v5618 = vunpack.c.h.b16 %v1937
        %v5619 = vunpack.c.l.b16 %v1938
        %v5620 = vunpack.c.h.b16 %v1938
        %v5621 = vunpack.c.l.b16 %v1939
        %v5622 = vunpack.c.h.b16 %v1939
        %v5623 = vunpack.c.l.b16 %v1940
        %v5624 = vunpack.c.h.b16 %v1940
        %v5625 = vunpack.c.l.b16 %v1941
        %v5626 = vunpack.c.h.b16 %v1941
        %v5627 = vunpack.c.l.b16 %v1942
        %v5628 = vunpack.c.h.b16 %v1942
        %v5629 = vunpack.c.l.b16 %v1943
        %v5630 = vunpack.c.h.b16 %v1943
        %v5631 = vunpack.c.l.b16 %v1944
        %v5632 = vunpack.c.h.b16 %v1944
        %v5633 = vunpack.c.l.b16 %v1945
        %v5634 = vunpack.c.h.b16 %v1945
        %v5635 = vunpack.c.l.b16 %v1946
        %v5636 = vunpack.c.h.b16 %v1946
        %v5637 = vunpack.c.l.b16 %v1947
        %v5638 = vunpack.c.h.b16 %v1947
        %v5639 = vunpack.c.l.b16 %v1948
        %v5640 = vunpack.c.h.b16 %v1948
        %v5641 = vunpack.c.l.b16 %v1949
        %v5642 = vunpack.c.h.b16 %v1949
        %v5643 = vunpack.c.l.b16 %v1950
        %v5644 = vunpack.c.h.b16 %v1950
        %v5645 = vunpack.c.l.b16 %v1951
        %v5646 = vunpack.c.h.b16 %v1951
        %v5647 = vunpack.c.l.b16 %v1952
        %v5648 = vunpack.c.h.b16 %v1952
        %v5649 = vunpack.c.l.b16 %v1953
        %v5650 = vunpack.c.h.b16 %v1953
        %v5651 = vunpack.c.l.b16 %v1954
        %v5652 = vunpack.c.h.b16 %v1954
        %v5653 = vunpack.c.l.b16 %v1955
        %v5654 = vunpack.c.h.b16 %v1955
        %v5655 = vunpack.c.l.b16 %v1956
        %v5656 = vunpack.c.h.b16 %v1956
        %v5657 = vunpack.c.l.b16 %v1957
        %v5658 = vunpack.c.h.b16 %v1957
        %v5659 = vunpack.c.l.b16 %v1958
        %v5660 = vunpack.c.h.b16 %v1958
        %v5661 = vunpack.c.l.b16 %v1959
        %v5662 = vunpack.c.h.b16 %v1959
        %v5663 = vunpack.c.l.b16 %v1960
        %v5664 = vunpack.c.h.b16 %v1960
        %v5665 = vunpack.c.l.b16 %v1961
        %v5666 = vunpack.c.h.b16 %v1961
        %v5667 = vunpack.c.l.b16 %v1962
        %v5668 = vunpack.c.h.b16 %v1962
        %v5669 = vunpack.c.l.b16 %v1963
        %v5670 = vunpack.c.h.b16 %v1963
        %v5671 = vunpack.c.l.b16 %v1964
        %v5672 = vunpack.c.h.b16 %v1964
        %v5673 = vunpack.c.l.b16 %v1965
        %v5674 = vunpack.c.h.b16 %v1965
        %v5675 = vunpack.c.l.b16 %v1966
        %v5676 = vunpack.c.h.b16 %v1966
        %v5677 = vunpack.c.l.b16 %v1967
        %v5678 = vunpack.c.h.b16 %v1967
        %v5679 = vunpack.c.l.b16 %v1968
        %v5680 = vunpack.c.h.b16 %v1968
        %v5681 = vunpack.c.l.b16 %v1969
        %v5682 = vunpack.c.h.b16 %v1969
        %v5683 = vunpack.c.l.b16 %v1970
        %v5684 = vunpack.c.h.b16 %v1970
        %v5685 = vunpack.c.l.b16 %v1971
        %v5686 = vunpack.c.h.b16 %v1971
        %v5687 = vunpack.c.l.b16 %v1972
        %v5688 = vunpack.c.h.b16 %v1972
        %v5689 = vunpack.c.l.b16 %v1973
        %v5690 = vunpack.c.h.b16 %v1973
        %v5691 = vunpack.c.l.b16 %v1974
        %v5692 = vunpack.c.h.b16 %v1974
        %v5693 = vunpack.c.l.b16 %v1975
        %v5694 = vunpack.c.h.b16 %v1975
        %v5695 = vunpack.c.l.b16 %v1976
        %v5696 = vunpack.c.h.b16 %v1976
        %v5697 = vunpack.c.l.b16 %v1977
        %v5698 = vunpack.c.h.b16 %v1977
        %v5699 = vunpack.c.l.b16 %v1978
        %v5700 = vunpack.c.h.b16 %v1978
        %v5701 = vunpack.c.l.b16 %v1979
        %v5702 = vunpack.c.h.b16 %v1979
        %v5703 = vunpack.c.l.b16 %v1980
        %v5704 = vunpack.c.h.b16 %v1980
        %v5705 = vunpack.c.l.b16 %v1981
        %v5706 = vunpack.c.h.b16 %v1981
        %v5707 = vunpack.c.l.b16 %v1982
        %v5708 = vunpack.c.h.b16 %v1982
        %v5709 = vunpack.c.l.b16 %v1983
        %v5710 = vunpack.c.h.b16 %v1983
        %v5711 = vunpack.c.l.b16 %v1984
        %v5712 = vunpack.c.h.b16 %v1984
        %v5713 = vunpack.c.l.b16 %v1985
        %v5714 = vunpack.c.h.b16 %v1985
        %v5715 = vunpack.c.l.b16 %v1986
        %v5716 = vunpack.c.h.b16 %v1986
        %v5717 = vunpack.c.l.b16 %v1987
        %v5718 = vunpack.c.h.b16 %v1987
        %v5719 = vunpack.c.l.b16 %v1988
        %v5720 = vunpack.c.h.b16 %v1988
        %v5721 = vunpack.c.l.b16 %v1989
        %v5722 = vunpack.c.h.b16 %v1989
        %v5723 = vunpack.c.l.b16 %v1990
        %v5724 = vunpack.c.h.b16 %v1990
        %v5725 = vunpack.c.l.b16 %v1991
        %v5726 = vunpack.c.h.b16 %v1991
        %v5727 = vunpack.c.l.b16 %v1992
        %v5728 = vunpack.c.h.b16 %v1992
        %v5729 = vunpack.c.l.b16 %v1993
        %v5730 = vunpack.c.h.b16 %v1993
        %v5731 = vunpack.c.l.b16 %v1994
        %v5732 = vunpack.c.h.b16 %v1994
        %v5733 = vunpack.c.l.b16 %v1995
        %v5734 = vunpack.c.h.b16 %v1995
        %v5735 = vunpack.c.l.b16 %v1996
        %v5736 = vunpack.c.h.b16 %v1996
        %v5737 = vunpack.c.l.b16 %v1997
        %v5738 = vunpack.c.h.b16 %v1997
        %v5739 = vunpack.c.l.b16 %v1998
        %v5740 = vunpack.c.h.b16 %v1998
        %v5741 = vunpack.c.l.b16 %v1999
        %v5742 = vunpack.c.h.b16 %v1999
        %v5743 = vunpack.c.l.b16 %v2000
        %v5744 = vunpack.c.h.b16 %v2000
        %v5745 = vunpack.c.l.b16 %v2001
        %v5746 = vunpack.c.h.b16 %v2001
        %v5747 = vunpack.c.l.b16 %v2002
        %v5748 = vunpack.c.h.b16 %v2002
        %v5749 = vunpack.c.l.b16 %v2003
        %v5750 = vunpack.c.h.b16 %v2003
        %v5751 = vunpack.c.l.b16 %v2004
        %v5752 = vunpack.c.h.b16 %v2004
        %v5753 = vunpack.c.l.b16 %v2005
        %v5754 = vunpack.c.h.b16 %v2005
        %v5755 = vunpack.c.l.b16 %v2006
        %v5756 = vunpack.c.h.b16 %v2006
        %v5757 = vunpack.c.l.b16 %v2007
        %v5758 = vunpack.c.h.b16 %v2007
        %v5759 = vunpack.c.l.b16 %v2008
        %v5760 = vunpack.c.h.b16 %v2008
        %v5761 = vunpack.c.l.b16 %v2009
        %v5762 = vunpack.c.h.b16 %v2009
        %v5763 = vunpack.c.l.b16 %v2010
        %v5764 = vunpack.c.h.b16 %v2010
        %v5765 = vunpack.c.l.b16 %v2011
        %v5766 = vunpack.c.h.b16 %v2011
        %v5767 = vunpack.c.l.b16 %v2012
        %v5768 = vunpack.c.h.b16 %v2012
        %v5769 = vunpack.c.l.b16 %v2013
        %v5770 = vunpack.c.h.b16 %v2013
        %v5771 = vunpack.c.l.b16 %v2014
        %v5772 = vunpack.c.h.b16 %v2014
        %v5773 = vunpack.c.l.b16 %v2015
        %v5774 = vunpack.c.h.b16 %v2015
        %v5775 = vunpack.c.l.b16 %v2016
        %v5776 = vunpack.c.h.b16 %v2016
        %v5777 = vunpack.c.l.b16 %v2017
        %v5778 = vunpack.c.h.b16 %v2017
        %v5779 = vunpack.c.l.b16 %v2018
        %v5780 = vunpack.c.h.b16 %v2018
        %v5781 = vunpack.c.l.b16 %v2019
        %v5782 = vunpack.c.h.b16 %v2019
        %v5783 = vunpack.c.l.b16 %v2020
        %v5784 = vunpack.c.h.b16 %v2020
        %v5785 = vunpack.c.l.b16 %v2021
        %v5786 = vunpack.c.h.b16 %v2021
        %v5787 = vunpack.c.l.b16 %v2022
        %v5788 = vunpack.c.h.b16 %v2022
        %v5789 = vunpack.c.l.b16 %v2023
        %v5790 = vunpack.c.h.b16 %v2023
        %v5791 = vunpack.c.l.b16 %v2024
        %v5792 = vunpack.c.h.b16 %v2024
        %v5793 = vunpack.c.l.b16 %v2025
        %v5794 = vunpack.c.h.b16 %v2025
        %v5795 = vunpack.c.l.b16 %v2026
        %v5796 = vunpack.c.h.b16 %v2026
        %v5797 = vunpack.c.l.b16 %v2027
        %v5798 = vunpack.c.h.b16 %v2027
        %v5799 = vunpack.c.l.b16 %v2028
        %v5800 = vunpack.c.h.b16 %v2028
        %v5801 = vunpack.c.l.b16 %v2029
        %v5802 = vunpack.c.h.b16 %v2029
        %v5803 = vunpack.c.l.b16 %v2030
        %v5804 = vunpack.c.h.b16 %v2030
        %v5805 = vunpack.c.l.b16 %v2031
        %v5806 = vunpack.c.h.b16 %v2031
        %v5807 = vunpack.c.l.b16 %v2032
        %v5808 = vunpack.c.h.b16 %v2032
        %v5809 = vunpack.c.l.b16 %v2033
        %v5810 = vunpack.c.h.b16 %v2033
        %v5811 = vunpack.c.l.b16 %v2034
        %v5812 = vunpack.c.h.b16 %v2034
        %v5813 = vunpack.c.l.b16 %v2035
        %v5814 = vunpack.c.h.b16 %v2035
        %v5815 = vunpack.c.l.b16 %v2036
        %v5816 = vunpack.c.h.b16 %v2036
        %v5817 = vunpack.c.l.b16 %v2037
        %v5818 = vunpack.c.h.b16 %v2037
        %v5819 = vunpack.c.l.b16 %v2038
        %v5820 = vunpack.c.h.b16 %v2038
        %v5821 = vunpack.c.l.b16 %v2039
        %v5822 = vunpack.c.h.b16 %v2039
        %v5823 = vunpack.c.l.b16 %v2040
        %v5824 = vunpack.c.h.b16 %v2040
        %v5825 = vunpack.c.l.b16 %v2041
        %v5826 = vunpack.c.h.b16 %v2041
        %v5827 = vunpack.c.l.b16 %v2042
        %v5828 = vunpack.c.h.b16 %v2042
        %v5829 = vunpack.c.l.b16 %v2043
        %v5830 = vunpack.c.h.b16 %v2043
        %v5831 = vunpack.c.l.b16 %v2044
        %v5832 = vunpack.c.h.b16 %v2044
        %v5833 = vunpack.c.l.b16 %v2045
        %v5834 = vunpack.c.h.b16 %v2045
        %v5835 = vunpack.c.l.b16 %v2046
        %v5836 = vunpack.c.h.b16 %v2046
        %v5837 = vunpack.c.l.b16 %v2047
        %v5838 = vunpack.c.h.b16 %v2047
        %v5839 = vunpack.c.l.b16 %v2048
        %v5840 = vunpack.c.h.b16 %v2048
        %v5841 = vunpack.c.l.b16 %v2049
        %v5842 = vunpack.c.h.b16 %v2049
        %v5843 = vunpack.c.l.b16 %v2050
        %v5844 = vunpack.c.h.b16 %v2050
        %v5845 = vunpack.c.l.b16 %v2051
        %v5846 = vunpack.c.h.b16 %v2051
        %v5847 = vunpack.c.l.b16 %v2052
        %v5848 = vunpack.c.h.b16 %v2052
        %v5849 = vunpack.c.l.b16 %v2053
        %v5850 = vunpack.c.h.b16 %v2053
        %v5851 = vunpack.c.l.b16 %v2054
        %v5852 = vunpack.c.h.b16 %v2054
        %v5853 = vunpack.c.l.b16 %v2055
        %v5854 = vunpack.c.h.b16 %v2055
        %v5855 = vunpack.c.l.b16 %v2056
        %v5856 = vunpack.c.h.b16 %v2056
        %v5857 = vunpack.c.l.b16 %v2057
        %v5858 = vunpack.c.h.b16 %v2057
        %v5859 = vunpack.c.l.b16 %v2058
        %v5860 = vunpack.c.h.b16 %v2058
        %v5861 = vunpack.c.l.b16 %v2059
        %v5862 = vunpack.c.h.b16 %v2059
        %v5863 = vunpack.c.l.b16 %v2060
        %v5864 = vunpack.c.h.b16 %v2060
        %v5865 = vunpack.c.l.b16 %v2061
        %v5866 = vunpack.c.h.b16 %v2061
        %v5867 = vunpack.c.l.b16 %v2062
        %v5868 = vunpack.c.h.b16 %v2062
        %v5869 = vunpack.c.l.b16 %v2063
        %v5870 = vunpack.c.h.b16 %v2063
        %v5871 = vunpack.c.l.b16 %v2064
        %v5872 = vunpack.c.h.b16 %v2064
        %v5873 = vunpack.c.l.b16 %v2065
        %v5874 = vunpack.c.h.b16 %v2065
        %v5875 = vunpack.c.l.b16 %v2066
        %v5876 = vunpack.c.h.b16 %v2066
        %v5877 = vunpack.c.l.b16 %v2067
        %v5878 = vunpack.c.h.b16 %v2067
        %v5879 = vunpack.c.l.b16 %v2068
        %v5880 = vunpack.c.h.b16 %v2068
        %v5881 = vunpack.c.l.b16 %v2069
        %v5882 = vunpack.c.h.b16 %v2069
        %v5883 = vunpack.c.l.b16 %v2070
        %v5884 = vunpack.c.h.b16 %v2070
        %v5885 = vunpack.c.l.b16 %v2071
        %v5886 = vunpack.c.h.b16 %v2071
        %v5887 = vunpack.c.l.b16 %v2072
        %v5888 = vunpack.c.h.b16 %v2072
        %v5889 = vunpack.c.l.b16 %v2073
        %v5890 = vunpack.c.h.b16 %v2073
        %v5891 = vunpack.c.l.b16 %v2074
        %v5892 = vunpack.c.h.b16 %v2074
        %v5893 = vunpack.c.l.b16 %v2075
        %v5894 = vunpack.c.h.b16 %v2075
        %v5895 = vunpack.c.l.b16 %v2076
        %v5896 = vunpack.c.h.b16 %v2076
        %v5897 = vunpack.c.l.b16 %v2077
        %v5898 = vunpack.c.h.b16 %v2077
        %v5899 = vunpack.c.l.b16 %v2078
        %v5900 = vunpack.c.h.b16 %v2078
        %v5901 = vunpack.c.l.b16 %v2079
        %v5902 = vunpack.c.h.b16 %v2079
        %v5903 = vunpack.c.l.b16 %v2080
        %v5904 = vunpack.c.h.b16 %v2080
        %v5905 = vunpack.c.l.b16 %v2081
        %v5906 = vunpack.c.h.b16 %v2081
        %v5907 = vunpack.c.l.b16 %v2082
        %v5908 = vunpack.c.h.b16 %v2082
        %v5909 = vpack.c.b16 %v3561, %v3557
        %v5910 = vpack.c.b16 %v3562, %v3558
        %v5911 = vpack.c.b16 %v3563, %v3559
        %v5912 = vpack.c.b16 %v3564, %v3560
        %v5913 = vpack.c.b16 %v3569, %v3565
        %v5914 = vpack.c.b16 %v3570, %v3566
        %v5915 = vpack.c.b16 %v3571, %v3567
        %v5916 = vpack.c.b16 %v3572, %v3568
        %v5917 = vpack.c.b16 %v3577, %v3573
        %v5918 = vpack.c.b16 %v3578, %v3574
        %v5919 = vpack.c.b16 %v3579, %v3575
        %v5920 = vpack.c.b16 %v3580, %v3576
        %v5921 = vpack.c.b16 %v3585, %v3581
        %v5922 = vpack.c.b16 %v3586, %v3582
        %v5923 = vpack.c.b16 %v3587, %v3583
        %v5924 = vpack.c.b16 %v3588, %v3584
        %v5925 = vpack.c.b16 %v3593, %v3589
        %v5926 = vpack.c.b16 %v3594, %v3590
        %v5927 = vpack.c.b16 %v3595, %v3591
        %v5928 = vpack.c.b16 %v3596, %v3592
        %v5929 = vpack.c.b16 %v3601, %v3597
        %v5930 = vpack.c.b16 %v3602, %v3598
        %v5931 = vpack.c.b16 %v3603, %v3599
        %v5932 = vpack.c.b16 %v3604, %v3600
        %v5933 = vpack.c.b16 %v3609, %v3605
        %v5934 = vpack.c.b16 %v3610, %v3606
        %v5935 = vpack.c.b16 %v3611, %v3607
        %v5936 = vpack.c.b16 %v3612, %v3608
        %v5937 = vpack.c.b16 %v3617, %v3613
        %v5938 = vpack.c.b16 %v3618, %v3614
        %v5939 = vpack.c.b16 %v3619, %v3615
        %v5940 = vpack.c.b16 %v3620, %v3616
        %v5941 = vpack.c.b16 %v3625, %v3621
        %v5942 = vpack.c.b16 %v3626, %v3622
        %v5943 = vpack.c.b16 %v3627, %v3623
        %v5944 = vpack.c.b16 %v3628, %v3624
        %v5945 = vpack.c.b16 %v3633, %v3629
        %v5946 = vpack.c.b16 %v3634, %v3630
        %v5947 = vpack.c.b16 %v3635, %v3631
        %v5948 = vpack.c.b16 %v3636, %v3632
        %v5949 = vpack.c.b16 %v3641, %v3637
        %v5950 = vpack.c.b16 %v3642, %v3638
        %v5951 = vpack.c.b16 %v3643, %v3639
        %v5952 = vpack.c.b16 %v3644, %v3640
        %v5953 = vpack.c.b16 %v3649, %v3645
        %v5954 = vpack.c.b16 %v3650, %v3646
        %v5955 = vpack.c.b16 %v3651, %v3647
        %v5956 = vpack.c.b16 %v3652, %v3648
        %v5957 = vpack.c.b16 %v3657, %v3653
        %v5958 = vpack.c.b16 %v3658, %v3654
        %v5959 = vpack.c.b16 %v3659, %v3655
        %v5960 = vpack.c.b16 %v3660, %v3656
        %v5961 = vpack.c.b16 %v3665, %v3661
        %v5962 = vpack.c.b16 %v3666, %v3662
        %v5963 = vpack.c.b16 %v3667, %v3663
        %v5964 = vpack.c.b16 %v3668, %v3664
        %v5965 = vpack.c.b16 %v3673, %v3669
        %v5966 = vpack.c.b16 %v3674, %v3670
        %v5967 = vpack.c.b16 %v3675, %v3671
        %v5968 = vpack.c.b16 %v3676, %v3672
        %v5969 = vpack.c.b16 %v3681, %v3677
        %v5970 = vpack.c.b16 %v3682, %v3678
        %v5971 = vpack.c.b16 %v3683, %v3679
        %v5972 = vpack.c.b16 %v3684, %v3680
        %v5973 = vpack.c.b16 %v3689, %v3685
        %v5974 = vpack.c.b16 %v3690, %v3686
        %v5975 = vpack.c.b16 %v3691, %v3687
        %v5976 = vpack.c.b16 %v3692, %v3688
        %v5977 = vpack.c.b16 %v3697, %v3693
        %v5978 = vpack.c.b16 %v3698, %v3694
        %v5979 = vpack.c.b16 %v3699, %v3695
        %v5980 = vpack.c.b16 %v3700, %v3696
        %v5981 = vpack.c.b16 %v3705, %v3701
        %v5982 = vpack.c.b16 %v3706, %v3702
        %v5983 = vpack.c.b16 %v3707, %v3703
        %v5984 = vpack.c.b16 %v3708, %v3704
        %v5985 = vpack.c.b16 %v3713, %v3709
        %v5986 = vpack.c.b16 %v3714, %v3710
        %v5987 = vpack.c.b16 %v3715, %v3711
        %v5988 = vpack.c.b16 %v3716, %v3712
        %v5989 = vpack.c.b16 %v3721, %v3717
        %v5990 = vpack.c.b16 %v3722, %v3718
        %v5991 = vpack.c.b16 %v3723, %v3719
        %v5992 = vpack.c.b16 %v3724, %v3720
        %v5993 = vpack.c.b16 %v3729, %v3725
        %v5994 = vpack.c.b16 %v3730, %v3726
        %v5995 = vpack.c.b16 %v3731, %v3727
        %v5996 = vpack.c.b16 %v3732, %v3728
        %v5997 = vpack.c.b16 %v3737, %v3733
        %v5998 = vpack.c.b16 %v3738, %v3734
        %v5999 = vpack.c.b16 %v3739, %v3735
        %v6000 = vpack.c.b16 %v3740, %v3736
        %v6001 = vpack.c.b16 %v3745, %v3741
        %v6002 = vpack.c.b16 %v3746, %v3742
        %v6003 = vpack.c.b16 %v3747, %v3743
        %v6004 = vpack.c.b16 %v3748, %v3744
        %v6005 = vpack.c.b16 %v3753, %v3749
        %v6006 = vpack.c.b16 %v3754, %v3750
        %v6007 = vpack.c.b16 %v3755, %v3751
        %v6008 = vpack.c.b16 %v3756, %v3752
        %v6009 = vpack.c.b16 %v3761, %v3757
        %v6010 = vpack.c.b16 %v3762, %v3758
        %v6011 = vpack.c.b16 %v3763, %v3759
        %v6012 = vpack.c.b16 %v3764, %v3760
        %v6013 = vpack.c.b16 %v3769, %v3765
        %v6014 = vpack.c.b16 %v3770, %v3766
        %v6015 = vpack.c.b16 %v3771, %v3767
        %v6016 = vpack.c.b16 %v3772, %v3768
        %v6017 = vpack.c.b16 %v3777, %v3773
        %v6018 = vpack.c.b16 %v3778, %v3774
        %v6019 = vpack.c.b16 %v3779, %v3775
        %v6020 = vpack.c.b16 %v3780, %v3776
        %v6021 = vpack.c.b16 %v3785, %v3781
        %v6022 = vpack.c.b16 %v3786, %v3782
        %v6023 = vpack.c.b16 %v3787, %v3783
        %v6024 = vpack.c.b16 %v3788, %v3784
        %v6025 = vpack.c.b16 %v3793, %v3789
        %v6026 = vpack.c.b16 %v3794, %v3790
        %v6027 = vpack.c.b16 %v3795, %v3791
        %v6028 = vpack.c.b16 %v3796, %v3792
        %v6029 = vpack.c.b16 %v3801, %v3797
        %v6030 = vpack.c.b16 %v3802, %v3798
        %v6031 = vpack.c.b16 %v3803, %v3799
        %v6032 = vpack.c.b16 %v3804, %v3800
        %v6033 = vpack.c.b16 %v3809, %v3805
        %v6034 = vpack.c.b16 %v3810, %v3806
        %v6035 = vpack.c.b16 %v3811, %v3807
        %v6036 = vpack.c.b16 %v3812, %v3808
        %v6037 = vpack.c.b16 %v3817, %v3813
        %v6038 = vpack.c.b16 %v3818, %v3814
        %v6039 = vpack.c.b16 %v3819, %v3815
        %v6040 = vpack.c.b16 %v3820, %v3816
        %v6041 = vpack.c.b16 %v3825, %v3821
        %v6042 = vpack.c.b16 %v3826, %v3822
        %v6043 = vpack.c.b16 %v3827, %v3823
        %v6044 = vpack.c.b16 %v3828, %v3824
        %v6045 = vpack.c.b16 %v3833, %v3829
        %v6046 = vpack.c.b16 %v3834, %v3830
        %v6047 = vpack.c.b16 %v3835, %v3831
        %v6048 = vpack.c.b16 %v3836, %v3832
        %v6049 = vpack.c.b16 %v3841, %v3837
        %v6050 = vpack.c.b16 %v3842, %v3838
        %v6051 = vpack.c.b16 %v3843, %v3839
        %v6052 = vpack.c.b16 %v3844, %v3840
        %v6053 = vpack.c.b16 %v3849, %v3845
        %v6054 = vpack.c.b16 %v3850, %v3846
        %v6055 = vpack.c.b16 %v3851, %v3847
        %v6056 = vpack.c.b16 %v3852, %v3848
        %v6057 = vpack.c.b16 %v3857, %v3853
        %v6058 = vpack.c.b16 %v3858, %v3854
        %v6059 = vpack.c.b16 %v3859, %v3855
        %v6060 = vpack.c.b16 %v3860, %v3856
        %v6061 = vpack.c.b16 %v3865, %v3861
        %v6062 = vpack.c.b16 %v3866, %v3862
        %v6063 = vpack.c.b16 %v3867, %v3863
        %v6064 = vpack.c.b16 %v3868, %v3864
        %v6065 = vpack.c.b16 %v3873, %v3869
        %v6066 = vpack.c.b16 %v3874, %v3870
        %v6067 = vpack.c.b16 %v3875, %v3871
        %v6068 = vpack.c.b16 %v3876, %v3872
        %v6069 = vpack.c.b16 %v3881, %v3877
        %v6070 = vpack.c.b16 %v3882, %v3878
        %v6071 = vpack.c.b16 %v3883, %v3879
        %v6072 = vpack.c.b16 %v3884, %v3880
        %v6073 = vpack.c.b16 %v3889, %v3885
        %v6074 = vpack.c.b16 %v3890, %v3886
        %v6075 = vpack.c.b16 %v3891, %v3887
        %v6076 = vpack.c.b16 %v3892, %v3888
        %v6077 = vpack.c.b16 %v3897, %v3893
        %v6078 = vpack.c.b16 %v3898, %v3894
        %v6079 = vpack.c.b16 %v3899, %v3895
        %v6080 = vpack.c.b16 %v3900, %v3896
        %v6081 = vpack.c.b16 %v3905, %v3901
        %v6082 = vpack.c.b16 %v3906, %v3902
        %v6083 = vpack.c.b16 %v3907, %v3903
        %v6084 = vpack.c.b16 %v3908, %v3904
        %v6085 = vpack.c.b16 %v3913, %v3909
        %v6086 = vpack.c.b16 %v3914, %v3910
        %v6087 = vpack.c.b16 %v3915, %v3911
        %v6088 = vpack.c.b16 %v3916, %v3912
        %v6089 = vpack.c.b16 %v3921, %v3917
        %v6090 = vpack.c.b16 %v3922, %v3918
        %v6091 = vpack.c.b16 %v3923, %v3919
        %v6092 = vpack.c.b16 %v3924, %v3920
        %v6093 = vpack.c.b16 %v3929, %v3925
        %v6094 = vpack.c.b16 %v3930, %v3926
        %v6095 = vpack.c.b16 %v3931, %v3927
        %v6096 = vpack.c.b16 %v3932, %v3928
        %v6097 = vpack.c.b16 %v3937, %v3933
        %v6098 = vpack.c.b16 %v3938, %v3934
        %v6099 = vpack.c.b16 %v3939, %v3935
        %v6100 = vpack.c.b16 %v3940, %v3936
        %v6101 = vpack.c.b16 %v3945, %v3941
        %v6102 = vpack.c.b16 %v3946, %v3942
        %v6103 = vpack.c.b16 %v3947, %v3943
        %v6104 = vpack.c.b16 %v3948, %v3944
        %v6105 = vpack.c.b16 %v3953, %v3949
        %v6106 = vpack.c.b16 %v3954, %v3950
        %v6107 = vpack.c.b16 %v3955, %v3951
        %v6108 = vpack.c.b16 %v3956, %v3952
        %v6109 = vpack.c.b16 %v3961, %v3957
        %v6110 = vpack.c.b16 %v3962, %v3958
        %v6111 = vpack.c.b16 %v3963, %v3959
        %v6112 = vpack.c.b16 %v3964, %v3960
        %v6113 = vpack.c.b16 %v3969, %v3965
        %v6114 = vpack.c.b16 %v3970, %v3966
        %v6115 = vpack.c.b16 %v3971, %v3967
        %v6116 = vpack.c.b16 %v3972, %v3968
        %v6117 = vpack.c.b16 %v3977, %v3973
        %v6118 = vpack.c.b16 %v3978, %v3974
        %v6119 = vpack.c.b16 %v3979, %v3975
        %v6120 = vpack.c.b16 %v3980, %v3976
        %v6121 = vpack.c.b16 %v3985, %v3981
        %v6122 = vpack.c.b16 %v3986, %v3982
        %v6123 = vpack.c.b16 %v3987, %v3983
        %v6124 = vpack.c.b16 %v3988, %v3984
        %v6125 = vpack.c.b16 %v3993, %v3989
        %v6126 = vpack.c.b16 %v3994, %v3990
        %v6127 = vpack.c.b16 %v3995, %v3991
        %v6128 = vpack.c.b16 %v3996, %v3992
        %v6129 = vpack.c.b16 %v4001, %v3997
        %v6130 = vpack.c.b16 %v4002, %v3998
        %v6131 = vpack.c.b16 %v4003, %v3999
        %v6132 = vpack.c.b16 %v4004, %v4000
        %v6133 = vpack.c.b16 %v4009, %v4005
        %v6134 = vpack.c.b16 %v4010, %v4006
        %v6135 = vpack.c.b16 %v4011, %v4007
        %v6136 = vpack.c.b16 %v4012, %v4008
        %v6137 = vpack.c.b16 %v4017, %v4013
        %v6138 = vpack.c.b16 %v4018, %v4014
        %v6139 = vpack.c.b16 %v4019, %v4015
        %v6140 = vpack.c.b16 %v4020, %v4016
        %v6141 = vpack.c.b16 %v4025, %v4021
        %v6142 = vpack.c.b16 %v4026, %v4022
        %v6143 = vpack.c.b16 %v4027, %v4023
        %v6144 = vpack.c.b16 %v4028, %v4024
        %v6145 = vpack.c.b16 %v4033, %v4029
        %v6146 = vpack.c.b16 %v4034, %v4030
        %v6147 = vpack.c.b16 %v4035, %v4031
        %v6148 = vpack.c.b16 %v4036, %v4032
        %v6149 = vpack.c.b16 %v4041, %v4037
        %v6150 = vpack.c.b16 %v4042, %v4038
        %v6151 = vpack.c.b16 %v4043, %v4039
        %v6152 = vpack.c.b16 %v4044, %v4040
        %v6153 = vpack.c.b16 %v4049, %v4045
        %v6154 = vpack.c.b16 %v4050, %v4046
        %v6155 = vpack.c.b16 %v4051, %v4047
        %v6156 = vpack.c.b16 %v4052, %v4048
        %v6157 = vpack.c.b16 %v4057, %v4053
        %v6158 = vpack.c.b16 %v4058, %v4054
        %v6159 = vpack.c.b16 %v4059, %v4055
        %v6160 = vpack.c.b16 %v4060, %v4056
        %v6161 = vpack.c.b16 %v4065, %v4061
        %v6162 = vpack.c.b16 %v4066, %v4062
        %v6163 = vpack.c.b16 %v4067, %v4063
        %v6164 = vpack.c.b16 %v4068, %v4064
        %v6165 = vpack.c.b16 %v4073, %v4069
        %v6166 = vpack.c.b16 %v4074, %v4070
        %v6167 = vpack.c.b16 %v4075, %v4071
        %v6168 = vpack.c.b16 %v4076, %v4072
        %v6169 = vpack.c.b16 %v4081, %v4077
        %v6170 = vpack.c.b16 %v4082, %v4078
        %v6171 = vpack.c.b16 %v4083, %v4079
        %v6172 = vpack.c.b16 %v4084, %v4080
        %v6173 = vpack.c.b16 %v4089, %v4085
        %v6174 = vpack.c.b16 %v4090, %v4086
        %v6175 = vpack.c.b16 %v4091, %v4087
        %v6176 = vpack.c.b16 %v4092, %v4088
        %v6177 = vpack.c.b16 %v4097, %v4093
        %v6178 = vpack.c.b16 %v4098, %v4094
        %v6179 = vpack.c.b16 %v4099, %v4095
        %v6180 = vpack.c.b16 %v4100, %v4096
        %v6181 = vpack.c.b16 %v4105, %v4101
        %v6182 = vpack.c.b16 %v4106, %v4102
        %v6183 = vpack.c.b16 %v4107, %v4103
        %v6184 = vpack.c.b16 %v4108, %v4104
        %v6185 = vpack.c.b16 %v4113, %v4109
        %v6186 = vpack.c.b16 %v4114, %v4110
        %v6187 = vpack.c.b16 %v4115, %v4111
        %v6188 = vpack.c.b16 %v4116, %v4112
        %v6189 = vpack.c.b16 %v4121, %v4117
        %v6190 = vpack.c.b16 %v4122, %v4118
        %v6191 = vpack.c.b16 %v4123, %v4119
        %v6192 = vpack.c.b16 %v4124, %v4120
        %v6193 = vpack.c.b16 %v4129, %v4125
        %v6194 = vpack.c.b16 %v4130, %v4126
        %v6195 = vpack.c.b16 %v4131, %v4127
        %v6196 = vpack.c.b16 %v4132, %v4128
        %v6197 = vpack.c.b16 %v4137, %v4133
        %v6198 = vpack.c.b16 %v4138, %v4134
        %v6199 = vpack.c.b16 %v4139, %v4135
        %v6200 = vpack.c.b16 %v4140, %v4136
        %v6201 = vpack.c.b16 %v4145, %v4141
        %v6202 = vpack.c.b16 %v4146, %v4142
        %v6203 = vpack.c.b16 %v4147, %v4143
        %v6204 = vpack.c.b16 %v4148, %v4144
        %v6205 = vpack.c.b16 %v4153, %v4149
        %v6206 = vpack.c.b16 %v4154, %v4150
        %v6207 = vpack.c.b16 %v4155, %v4151
        %v6208 = vpack.c.b16 %v4156, %v4152
        %v6209 = vpack.c.b16 %v4161, %v4157
        %v6210 = vpack.c.b16 %v4162, %v4158
        %v6211 = vpack.c.b16 %v4163, %v4159
        %v6212 = vpack.c.b16 %v4164, %v4160
        %v6213 = vpack.c.b16 %v4169, %v4165
        %v6214 = vpack.c.b16 %v4170, %v4166
        %v6215 = vpack.c.b16 %v4171, %v4167
        %v6216 = vpack.c.b16 %v4172, %v4168
        %v6217 = vpack.c.b16 %v4177, %v4173
        %v6218 = vpack.c.b16 %v4178, %v4174
        %v6219 = vpack.c.b16 %v4179, %v4175
        %v6220 = vpack.c.b16 %v4180, %v4176
        %v6221 = vpack.c.b16 %v4185, %v4181
        %v6222 = vpack.c.b16 %v4186, %v4182
        %v6223 = vpack.c.b16 %v4187, %v4183
        %v6224 = vpack.c.b16 %v4188, %v4184
        %v6225 = vpack.c.b16 %v4193, %v4189
        %v6226 = vpack.c.b16 %v4194, %v4190
        %v6227 = vpack.c.b16 %v4195, %v4191
        %v6228 = vpack.c.b16 %v4196, %v4192
        %v6229 = vpack.c.b16 %v4201, %v4197
        %v6230 = vpack.c.b16 %v4202, %v4198
        %v6231 = vpack.c.b16 %v4203, %v4199
        %v6232 = vpack.c.b16 %v4204, %v4200
        %v6233 = vpack.c.b16 %v4209, %v4205
        %v6234 = vpack.c.b16 %v4210, %v4206
        %v6235 = vpack.c.b16 %v4211, %v4207
        %v6236 = vpack.c.b16 %v4212, %v4208
        %v6237 = vpack.c.b16 %v4217, %v4213
        %v6238 = vpack.c.b16 %v4218, %v4214
        %v6239 = vpack.c.b16 %v4219, %v4215
        %v6240 = vpack.c.b16 %v4220, %v4216
        %v6241 = vpack.c.b16 %v4225, %v4221
        %v6242 = vpack.c.b16 %v4226, %v4222
        %v6243 = vpack.c.b16 %v4227, %v4223
        %v6244 = vpack.c.b16 %v4228, %v4224
        %v6245 = vpack.c.b16 %v4233, %v4229
        %v6246 = vpack.c.b16 %v4234, %v4230
        %v6247 = vpack.c.b16 %v4235, %v4231
        %v6248 = vpack.c.b16 %v4236, %v4232
        %v6249 = vpack.c.b16 %v4241, %v4237
        %v6250 = vpack.c.b16 %v4242, %v4238
        %v6251 = vpack.c.b16 %v4243, %v4239
        %v6252 = vpack.c.b16 %v4244, %v4240
        %v6253 = vpack.c.b16 %v4249, %v4245
        %v6254 = vpack.c.b16 %v4250, %v4246
        %v6255 = vpack.c.b16 %v4251, %v4247
        %v6256 = vpack.c.b16 %v4252, %v4248
        %v6257 = vpack.c.b16 %v4257, %v4253
        %v6258 = vpack.c.b16 %v4258, %v4254
        %v6259 = vpack.c.b16 %v4259, %v4255
        %v6260 = vpack.c.b16 %v4260, %v4256
        %v6261 = vpack.c.b16 %v4265, %v4261
        %v6262 = vpack.c.b16 %v4266, %v4262
        %v6263 = vpack.c.b16 %v4267, %v4263
        %v6264 = vpack.c.b16 %v4268, %v4264
        %v6265 = vpack.c.b16 %v4273, %v4269
        %v6266 = vpack.c.b16 %v4274, %v4270
        %v6267 = vpack.c.b16 %v4275, %v4271
        %v6268 = vpack.c.b16 %v4276, %v4272
        %v6269 = vpack.c.b16 %v4281, %v4277
        %v6270 = vpack.c.b16 %v4282, %v4278
        %v6271 = vpack.c.b16 %v4283, %v4279
        %v6272 = vpack.c.b16 %v4284, %v4280
        %v6273 = vpack.c.b16 %v4289, %v4285
        %v6274 = vpack.c.b16 %v4290, %v4286
        %v6275 = vpack.c.b16 %v4291, %v4287
        %v6276 = vpack.c.b16 %v4292, %v4288
        %v6277 = vpack.c.b16 %v4297, %v4293
        %v6278 = vpack.c.b16 %v4298, %v4294
        %v6279 = vpack.c.b16 %v4299, %v4295
        %v6280 = vpack.c.b16 %v4300, %v4296
        %v6281 = vpack.c.b16 %v4305, %v4301
        %v6282 = vpack.c.b16 %v4306, %v4302
        %v6283 = vpack.c.b16 %v4307, %v4303
        %v6284 = vpack.c.b16 %v4308, %v4304
        %v6285 = vpack.c.b16 %v4313, %v4309
        %v6286 = vpack.c.b16 %v4314, %v4310
        %v6287 = vpack.c.b16 %v4315, %v4311
        %v6288 = vpack.c.b16 %v4316, %v4312
        %v6289 = vpack.c.b16 %v4321, %v4317
        %v6290 = vpack.c.b16 %v4322, %v4318
        %v6291 = vpack.c.b16 %v4323, %v4319
        %v6292 = vpack.c.b16 %v4324, %v4320
        %v6293 = vpack.c.b16 %v4329, %v4325
        %v6294 = vpack.c.b16 %v4330, %v4326
        %v6295 = vpack.c.b16 %v4331, %v4327
        %v6296 = vpack.c.b16 %v4332, %v4328
        %v6297 = vpack.c.b16 %v4337, %v4333
        %v6298 = vpack.c.b16 %v4338, %v4334
        %v6299 = vpack.c.b16 %v4339, %v4335
        %v6300 = vpack.c.b16 %v4340, %v4336
        %v6301 = vpack.c.b16 %v4345, %v4341
        %v6302 = vpack.c.b16 %v4346, %v4342
        %v6303 = vpack.c.b16 %v4347, %v4343
        %v6304 = vpack.c.b16 %v4348, %v4344
        %v6305 = vpack.c.b16 %v4353, %v4349
        %v6306 = vpack.c.b16 %v4354, %v4350
        %v6307 = vpack.c.b16 %v4355, %v4351
        %v6308 = vpack.c.b16 %v4356, %v4352
        %v6309 = vpack.c.b16 %v4361, %v4357
        %v6310 = vpack.c.b16 %v4362, %v4358
        %v6311 = vpack.c.b16 %v4363, %v4359
        %v6312 = vpack.c.b16 %v4364, %v4360
        %v6313 = vpack.c.b16 %v4369, %v4365
        %v6314 = vpack.c.b16 %v4370, %v4366
        %v6315 = vpack.c.b16 %v4371, %v4367
        %v6316 = vpack.c.b16 %v4372, %v4368
        %v6317 = vpack.c.b16 %v4377, %v4373
        %v6318 = vpack.c.b16 %v4378, %v4374
        %v6319 = vpack.c.b16 %v4379, %v4375
        %v6320 = vpack.c.b16 %v4380, %v4376
        %v6321 = vpack.c.b16 %v4385, %v4381
        %v6322 = vpack.c.b16 %v4386, %v4382
        %v6323 = vpack.c.b16 %v4387, %v4383
        %v6324 = vpack.c.b16 %v4388, %v4384
        %v6325 = vpack.c.b16 %v4393, %v4389
        %v6326 = vpack.c.b16 %v4394, %v4390
        %v6327 = vpack.c.b16 %v4395, %v4391
        %v6328 = vpack.c.b16 %v4396, %v4392
        %v6329 = vpack.c.b16 %v4401, %v4397
        %v6330 = vpack.c.b16 %v4402, %v4398
        %v6331 = vpack.c.b16 %v4403, %v4399
        %v6332 = vpack.c.b16 %v4404, %v4400
        %v6333 = vpack.c.b16 %v4409, %v4405
        %v6334 = vpack.c.b16 %v4410, %v4406
        %v6335 = vpack.c.b16 %v4411, %v4407
        %v6336 = vpack.c.b16 %v4412, %v4408
        %v6337 = vpack.c.b16 %v4417, %v4413
        %v6338 = vpack.c.b16 %v4418, %v4414
        %v6339 = vpack.c.b16 %v4419, %v4415
        %v6340 = vpack.c.b16 %v4420, %v4416
        %v6341 = vpack.c.b16 %v4425, %v4421
        %v6342 = vpack.c.b16 %v4426, %v4422
        %v6343 = vpack.c.b16 %v4427, %v4423
        %v6344 = vpack.c.b16 %v4428, %v4424
        %v6345 = vpack.c.b16 %v4433, %v4429
        %v6346 = vpack.c.b16 %v4434, %v4430
        %v6347 = vpack.c.b16 %v4435, %v4431
        %v6348 = vpack.c.b16 %v4436, %v4432
        %v6349 = vpack.c.b16 %v4441, %v4437
        %v6350 = vpack.c.b16 %v4442, %v4438
        %v6351 = vpack.c.b16 %v4443, %v4439
        %v6352 = vpack.c.b16 %v4444, %v4440
        %v6353 = vpack.c.b16 %v4449, %v4445
        %v6354 = vpack.c.b16 %v4450, %v4446
        %v6355 = vpack.c.b16 %v4451, %v4447
        %v6356 = vpack.c.b16 %v4452, %v4448
        %v6357 = vpack.c.b16 %v4457, %v4453
        %v6358 = vpack.c.b16 %v4458, %v4454
        %v6359 = vpack.c.b16 %v4459, %v4455
        %v6360 = vpack.c.b16 %v4460, %v4456
        %v6361 = vpack.c.b16 %v4465, %v4461
        %v6362 = vpack.c.b16 %v4466, %v4462
        %v6363 = vpack.c.b16 %v4467, %v4463
        %v6364 = vpack.c.b16 %v4468, %v4464
        %v6365 = vpack.c.b16 %v4473, %v4469
        %v6366 = vpack.c.b16 %v4474, %v4470
        %v6367 = vpack.c.b16 %v4475, %v4471
        %v6368 = vpack.c.b16 %v4476, %v4472
        %v6369 = vpack.c.b16 %v4481, %v4477
        %v6370 = vpack.c.b16 %v4482, %v4478
        %v6371 = vpack.c.b16 %v4483, %v4479
        %v6372 = vpack.c.b16 %v4484, %v4480
        %v6373 = vpack.c.b16 %v4489, %v4485
        %v6374 = vpack.c.b16 %v4490, %v4486
        %v6375 = vpack.c.b16 %v4491, %v4487
        %v6376 = vpack.c.b16 %v4492, %v4488
        %v6377 = vpack.c.b16 %v4497, %v4493
        %v6378 = vpack.c.b16 %v4498, %v4494
        %v6379 = vpack.c.b16 %v4499, %v4495
        %v6380 = vpack.c.b16 %v4500, %v4496
        %v6381 = vpack.c.b16 %v4505, %v4501
        %v6382 = vpack.c.b16 %v4506, %v4502
        %v6383 = vpack.c.b16 %v4507, %v4503
        %v6384 = vpack.c.b16 %v4508, %v4504
        %v6385 = vpack.c.b16 %v4513, %v4509
        %v6386 = vpack.c.b16 %v4514, %v4510
        %v6387 = vpack.c.b16 %v4515, %v4511
        %v6388 = vpack.c.b16 %v4516, %v4512
        %v6389 = vpack.c.b16 %v4521, %v4517
        %v6390 = vpack.c.b16 %v4522, %v4518
        %v6391 = vpack.c.b16 %v4523, %v4519
        %v6392 = vpack.c.b16 %v4524, %v4520
        %v6393 = vpack.c.b16 %v4529, %v4525
        %v6394 = vpack.c.b16 %v4530, %v4526
        %v6395 = vpack.c.b16 %v4531, %v4527
        %v6396 = vpack.c.b16 %v4532, %v4528
        %v6397 = vpack.c.b16 %v4537, %v4533
        %v6398 = vpack.c.b16 %v4538, %v4534
        %v6399 = vpack.c.b16 %v4539, %v4535
        %v6400 = vpack.c.b16 %v4540, %v4536
        %v6401 = vpack.c.b16 %v4545, %v4541
        %v6402 = vpack.c.b16 %v4546, %v4542
        %v6403 = vpack.c.b16 %v4547, %v4543
        %v6404 = vpack.c.b16 %v4548, %v4544
        %v6405 = vpack.c.b16 %v4553, %v4549
        %v6406 = vpack.c.b16 %v4554, %v4550
        %v6407 = vpack.c.b16 %v4555, %v4551
        %v6408 = vpack.c.b16 %v4556, %v4552
        %v6409 = vpack.c.b16 %v4561, %v4557
        %v6410 = vpack.c.b16 %v4562, %v4558
        %v6411 = vpack.c.b16 %v4563, %v4559
        %v6412 = vpack.c.b16 %v4564, %v4560
        %v6413 = vpack.c.b16 %v4569, %v4565
        %v6414 = vpack.c.b16 %v4570, %v4566
        %v6415 = vpack.c.b16 %v4571, %v4567
        %v6416 = vpack.c.b16 %v4572, %v4568
        %v6417 = vpack.c.b16 %v4577, %v4573
        %v6418 = vpack.c.b16 %v4578, %v4574
        %v6419 = vpack.c.b16 %v4579, %v4575
        %v6420 = vpack.c.b16 %v4580, %v4576
        %v6421 = vpack.c.b16 %v4585, %v4581
        %v6422 = vpack.c.b16 %v4586, %v4582
        %v6423 = vpack.c.b16 %v4587, %v4583
        %v6424 = vpack.c.b16 %v4588, %v4584
        %v6425 = vpack.c.b16 %v4593, %v4589
        %v6426 = vpack.c.b16 %v4594, %v4590
        %v6427 = vpack.c.b16 %v4595, %v4591
        %v6428 = vpack.c.b16 %v4596, %v4592
        %v6429 = vpack.c.b16 %v4601, %v4597
        %v6430 = vpack.c.b16 %v4602, %v4598
        %v6431 = vpack.c.b16 %v4603, %v4599
        %v6432 = vpack.c.b16 %v4604, %v4600
        %v6433 = vpack.c.b16 %v4609, %v4605
        %v6434 = vpack.c.b16 %v4610, %v4606
        %v6435 = vpack.c.b16 %v4611, %v4607
        %v6436 = vpack.c.b16 %v4612, %v4608
        %v6437 = vpack.c.b16 %v4617, %v4613
        %v6438 = vpack.c.b16 %v4618, %v4614
        %v6439 = vpack.c.b16 %v4619, %v4615
        %v6440 = vpack.c.b16 %v4620, %v4616
        %v6441 = vpack.c.b16 %v4625, %v4621
        %v6442 = vpack.c.b16 %v4626, %v4622
        %v6443 = vpack.c.b16 %v4627, %v4623
        %v6444 = vpack.c.b16 %v4628, %v4624
        %v6445 = vpack.c.b16 %v4633, %v4629
        %v6446 = vpack.c.b16 %v4634, %v4630
        %v6447 = vpack.c.b16 %v4635, %v4631
        %v6448 = vpack.c.b16 %v4636, %v4632
        %v6449 = vpack.c.b16 %v4641, %v4637
        %v6450 = vpack.c.b16 %v4642, %v4638
        %v6451 = vpack.c.b16 %v4643, %v4639
        %v6452 = vpack.c.b16 %v4644, %v4640
        %v6453 = vpack.c.b16 %v4649, %v4645
        %v6454 = vpack.c.b16 %v4650, %v4646
        %v6455 = vpack.c.b16 %v4651, %v4647
        %v6456 = vpack.c.b16 %v4652, %v4648
        %v6457 = vpack.c.b16 %v4657, %v4653
        %v6458 = vpack.c.b16 %v4658, %v4654
        %v6459 = vpack.c.b16 %v4659, %v4655
        %v6460 = vpack.c.b16 %v4660, %v4656
        %v6461 = vpack.c.b16 %v4665, %v4661
        %v6462 = vpack.c.b16 %v4666, %v4662
        %v6463 = vpack.c.b16 %v4667, %v4663
        %v6464 = vpack.c.b16 %v4668, %v4664
        %v6465 = vpack.c.b16 %v4673, %v4669
        %v6466 = vpack.c.b16 %v4674, %v4670
        %v6467 = vpack.c.b16 %v4675, %v4671
        %v6468 = vpack.c.b16 %v4676, %v4672
        %v6469 = vpack.c.b16 %v4681, %v4677
        %v6470 = vpack.c.b16 %v4682, %v4678
        %v6471 = vpack.c.b16 %v4683, %v4679
        %v6472 = vpack.c.b16 %v4684, %v4680
        %v6473 = vpack.c.b16 %v4689, %v4685
        %v6474 = vpack.c.b16 %v4690, %v4686
        %v6475 = vpack.c.b16 %v4691, %v4687
        %v6476 = vpack.c.b16 %v4692, %v4688
        %v6477 = vpack.c.b16 %v4697, %v4693
        %v6478 = vpack.c.b16 %v4698, %v4694
        %v6479 = vpack.c.b16 %v4699, %v4695
        %v6480 = vpack.c.b16 %v4700, %v4696
        %v6481 = vpack.c.b16 %v4705, %v4701
        %v6482 = vpack.c.b16 %v4706, %v4702
        %v6483 = vpack.c.b16 %v4707, %v4703
        %v6484 = vpack.c.b16 %v4708, %v4704
        %v6485 = vpack.c.b16 %v4713, %v4709
        %v6486 = vpack.c.b16 %v4714, %v4710
        %v6487 = vpack.c.b16 %v4715, %v4711
        %v6488 = vpack.c.b16 %v4716, %v4712
        %v6489 = vpack.c.b16 %v4721, %v4717
        %v6490 = vpack.c.b16 %v4722, %v4718
        %v6491 = vpack.c.b16 %v4723, %v4719
        %v6492 = vpack.c.b16 %v4724, %v4720
        %v6493 = vpack.c.b16 %v4729, %v4725
        %v6494 = vpack.c.b16 %v4730, %v4726
        %v6495 = vpack.c.b16 %v4731, %v4727
        %v6496 = vpack.c.b16 %v4732, %v4728
        %v6497 = vpack.c.b16 %v4737, %v4733
        %v6498 = vpack.c.b16 %v4738, %v4734
        %v6499 = vpack.c.b16 %v4739, %v4735
        %v6500 = vpack.c.b16 %v4740, %v4736
        %v6501 = vpack.c.b16 %v4745, %v4741
        %v6502 = vpack.c.b16 %v4746, %v4742
        %v6503 = vpack.c.b16 %v4747, %v4743
        %v6504 = vpack.c.b16 %v4748, %v4744
        %v6505 = vpack.c.b16 %v4753, %v4749
        %v6506 = vpack.c.b16 %v4754, %v4750
        %v6507 = vpack.c.b16 %v4755, %v4751
        %v6508 = vpack.c.b16 %v4756, %v4752
        %v6509 = vpack.c.b16 %v4761, %v4757
        %v6510 = vpack.c.b16 %v4762, %v4758
        %v6511 = vpack.c.b16 %v4763, %v4759
        %v6512 = vpack.c.b16 %v4764, %v4760
        %v6513 = vpack.c.b16 %v4769, %v4765
        %v6514 = vpack.c.b16 %v4770, %v4766
        %v6515 = vpack.c.b16 %v4771, %v4767
        %v6516 = vpack.c.b16 %v4772, %v4768
        %v6517 = vpack.c.b16 %v4777, %v4773
        %v6518 = vpack.c.b16 %v4778, %v4774
        %v6519 = vpack.c.b16 %v4779, %v4775
        %v6520 = vpack.c.b16 %v4780, %v4776
        %v6521 = vpack.c.b16 %v4785, %v4781
        %v6522 = vpack.c.b16 %v4786, %v4782
        %v6523 = vpack.c.b16 %v4787, %v4783
        %v6524 = vpack.c.b16 %v4788, %v4784
        %v6525 = vpack.c.b16 %v4793, %v4789
        %v6526 = vpack.c.b16 %v4794, %v4790
        %v6527 = vpack.c.b16 %v4795, %v4791
        %v6528 = vpack.c.b16 %v4796, %v4792
        %v6529 = vpack.c.b16 %v4801, %v4797
        %v6530 = vpack.c.b16 %v4802, %v4798
        %v6531 = vpack.c.b16 %v4803, %v4799
        %v6532 = vpack.c.b16 %v4804, %v4800
        %v6533 = vpack.c.b16 %v4809, %v4805
        %v6534 = vpack.c.b16 %v4810, %v4806
        %v6535 = vpack.c.b16 %v4811, %v4807
        %v6536 = vpack.c.b16 %v4812, %v4808
        %v6537 = vpack.c.b16 %v4817, %v4813
        %v6538 = vpack.c.b16 %v4818, %v4814
        %v6539 = vpack.c.b16 %v4819, %v4815
        %v6540 = vpack.c.b16 %v4820, %v4816
        %v6541 = vpack.c.b16 %v4825, %v4821
        %v6542 = vpack.c.b16 %v4826, %v4822
        %v6543 = vpack.c.b16 %v4827, %v4823
        %v6544 = vpack.c.b16 %v4828, %v4824
        %v6545 = vpack.c.b16 %v4833, %v4829
        %v6546 = vpack.c.b16 %v4834, %v4830
        %v6547 = vpack.c.b16 %v4835, %v4831
        %v6548 = vpack.c.b16 %v4836, %v4832
        %v6549 = vpack.c.b16 %v4841, %v4837
        %v6550 = vpack.c.b16 %v4842, %v4838
        %v6551 = vpack.c.b16 %v4843, %v4839
        %v6552 = vpack.c.b16 %v4844, %v4840
        %v6553 = vpack.c.b16 %v4849, %v4845
        %v6554 = vpack.c.b16 %v4850, %v4846
        %v6555 = vpack.c.b16 %v4851, %v4847
        %v6556 = vpack.c.b16 %v4852, %v4848
        %v6557 = vpack.c.b16 %v4857, %v4853
        %v6558 = vpack.c.b16 %v4858, %v4854
        %v6559 = vpack.c.b16 %v4859, %v4855
        %v6560 = vpack.c.b16 %v4860, %v4856
        %v6561 = vpack.c.b16 %v4865, %v4861
        %v6562 = vpack.c.b16 %v4866, %v4862
        %v6563 = vpack.c.b16 %v4867, %v4863
        %v6564 = vpack.c.b16 %v4868, %v4864
        %v6565 = vpack.c.b16 %v4873, %v4869
        %v6566 = vpack.c.b16 %v4874, %v4870
        %v6567 = vpack.c.b16 %v4875, %v4871
        %v6568 = vpack.c.b16 %v4876, %v4872
        %v6569 = vpack.c.b16 %v4881, %v4877
        %v6570 = vpack.c.b16 %v4882, %v4878
        %v6571 = vpack.c.b16 %v4883, %v4879
        %v6572 = vpack.c.b16 %v4884, %v4880
        %v6573 = vpack.c.b16 %v4889, %v4885
        %v6574 = vpack.c.b16 %v4890, %v4886
        %v6575 = vpack.c.b16 %v4891, %v4887
        %v6576 = vpack.c.b16 %v4892, %v4888
        %v6577 = vpack.c.b16 %v4897, %v4893
        %v6578 = vpack.c.b16 %v4898, %v4894
        %v6579 = vpack.c.b16 %v4899, %v4895
        %v6580 = vpack.c.b16 %v4900, %v4896
        %v6581 = vpack.c.b16 %v4905, %v4901
        %v6582 = vpack.c.b16 %v4906, %v4902
        %v6583 = vpack.c.b16 %v4907, %v4903
        %v6584 = vpack.c.b16 %v4908, %v4904
        %v6585 = vpack.c.b16 %v4913, %v4909
        %v6586 = vpack.c.b16 %v4914, %v4910
        %v6587 = vpack.c.b16 %v4915, %v4911
        %v6588 = vpack.c.b16 %v4916, %v4912
        %v6589 = vpack.c.b16 %v4921, %v4917
        %v6590 = vpack.c.b16 %v4922, %v4918
        %v6591 = vpack.c.b16 %v4923, %v4919
        %v6592 = vpack.c.b16 %v4924, %v4920
        %v6593 = vpack.c.b16 %v4929, %v4925
        %v6594 = vpack.c.b16 %v4930, %v4926
        %v6595 = vpack.c.b16 %v4931, %v4927
        %v6596 = vpack.c.b16 %v4932, %v4928
        %v6597 = vpack.c.b16 %v4937, %v4933
        %v6598 = vpack.c.b16 %v4938, %v4934
        %v6599 = vpack.c.b16 %v4939, %v4935
        %v6600 = vpack.c.b16 %v4940, %v4936
        %v6601 = vpack.c.b16 %v4945, %v4941
        %v6602 = vpack.c.b16 %v4946, %v4942
        %v6603 = vpack.c.b16 %v4947, %v4943
        %v6604 = vpack.c.b16 %v4948, %v4944
        %v6605 = vpack.c.b16 %v4953, %v4949
        %v6606 = vpack.c.b16 %v4954, %v4950
        %v6607 = vpack.c.b16 %v4955, %v4951
        %v6608 = vpack.c.b16 %v4956, %v4952
        %v6609 = vpack.c.b16 %v4961, %v4957
        %v6610 = vpack.c.b16 %v4962, %v4958
        %v6611 = vpack.c.b16 %v4963, %v4959
        %v6612 = vpack.c.b16 %v4964, %v4960
        %v6613 = vpack.c.b16 %v4969, %v4965
        %v6614 = vpack.c.b16 %v4970, %v4966
        %v6615 = vpack.c.b16 %v4971, %v4967
        %v6616 = vpack.c.b16 %v4972, %v4968
        %v6617 = vpack.c.b16 %v4977, %v4973
        %v6618 = vpack.c.b16 %v4978, %v4974
        %v6619 = vpack.c.b16 %v4979, %v4975
        %v6620 = vpack.c.b16 %v4980, %v4976
        %v6621 = vpack.c.b16 %v4985, %v4981
        %v6622 = vpack.c.b16 %v4986, %v4982
        %v6623 = vpack.c.b16 %v4987, %v4983
        %v6624 = vpack.c.b16 %v4988, %v4984
        %v6625 = vpack.c.b16 %v4993, %v4989
        %v6626 = vpack.c.b16 %v4994, %v4990
        %v6627 = vpack.c.b16 %v4995, %v4991
        %v6628 = vpack.c.b16 %v4996, %v4992
        %v6629 = vpack.c.b16 %v5001, %v4997
        %v6630 = vpack.c.b16 %v5002, %v4998
        %v6631 = vpack.c.b16 %v5003, %v4999
        %v6632 = vpack.c.b16 %v5004, %v5000
        %v6633 = vpack.c.b16 %v5009, %v5005
        %v6634 = vpack.c.b16 %v5010, %v5006
        %v6635 = vpack.c.b16 %v5011, %v5007
        %v6636 = vpack.c.b16 %v5012, %v5008
        %v6637 = vpack.c.b16 %v5017, %v5013
        %v6638 = vpack.c.b16 %v5018, %v5014
        %v6639 = vpack.c.b16 %v5019, %v5015
        %v6640 = vpack.c.b16 %v5020, %v5016
        %v6641 = vpack.c.b16 %v5025, %v5021
        %v6642 = vpack.c.b16 %v5026, %v5022
        %v6643 = vpack.c.b16 %v5027, %v5023
        %v6644 = vpack.c.b16 %v5028, %v5024
        %v6645 = vpack.c.b16 %v5033, %v5029
        %v6646 = vpack.c.b16 %v5034, %v5030
        %v6647 = vpack.c.b16 %v5035, %v5031
        %v6648 = vpack.c.b16 %v5036, %v5032
        %v6649 = vpack.c.b16 %v5041, %v5037
        %v6650 = vpack.c.b16 %v5042, %v5038
        %v6651 = vpack.c.b16 %v5043, %v5039
        %v6652 = vpack.c.b16 %v5044, %v5040
        %v6653 = vpack.c.b16 %v5049, %v5045
        %v6654 = vpack.c.b16 %v5050, %v5046
        %v6655 = vpack.c.b16 %v5051, %v5047
        %v6656 = vpack.c.b16 %v5052, %v5048
        %v6657 = vpack.c.b16 %v5057, %v5053
        %v6658 = vpack.c.b16 %v5058, %v5054
        %v6659 = vpack.c.b16 %v5059, %v5055
        %v6660 = vpack.c.b16 %v5060, %v5056
        %v6661 = vpack.c.b16 %v5065, %v5061
        %v6662 = vpack.c.b16 %v5066, %v5062
        %v6663 = vpack.c.b16 %v5067, %v5063
        %v6664 = vpack.c.b16 %v5068, %v5064
        %v6665 = vpack.c.b16 %v5073, %v5069
        %v6666 = vpack.c.b16 %v5074, %v5070
        %v6667 = vpack.c.b16 %v5075, %v5071
        %v6668 = vpack.c.b16 %v5076, %v5072
        %v6669 = vpack.c.b16 %v5081, %v5077
        %v6670 = vpack.c.b16 %v5082, %v5078
        %v6671 = vpack.c.b16 %v5083, %v5079
        %v6672 = vpack.c.b16 %v5084, %v5080
        %v6673 = vpack.c.b16 %v5089, %v5085
        %v6674 = vpack.c.b16 %v5090, %v5086
        %v6675 = vpack.c.b16 %v5091, %v5087
        %v6676 = vpack.c.b16 %v5092, %v5088
        %v6677 = vpack.c.b16 %v5097, %v5093
        %v6678 = vpack.c.b16 %v5098, %v5094
        %v6679 = vpack.c.b16 %v5099, %v5095
        %v6680 = vpack.c.b16 %v5100, %v5096
        %v6681 = vpack.c.b16 %v5105, %v5101
        %v6682 = vpack.c.b16 %v5106, %v5102
        %v6683 = vpack.c.b16 %v5107, %v5103
        %v6684 = vpack.c.b16 %v5108, %v5104
        %v6685 = vpack.c.b16 %v5113, %v5109
        %v6686 = vpack.c.b16 %v5114, %v5110
        %v6687 = vpack.c.b16 %v5115, %v5111
        %v6688 = vpack.c.b16 %v5116, %v5112
        %v6689 = vpack.c.b16 %v5121, %v5117
        %v6690 = vpack.c.b16 %v5122, %v5118
        %v6691 = vpack.c.b16 %v5123, %v5119
        %v6692 = vpack.c.b16 %v5124, %v5120
        %v6693 = vpack.c.b16 %v5129, %v5125
        %v6694 = vpack.c.b16 %v5130, %v5126
        %v6695 = vpack.c.b16 %v5131, %v5127
        %v6696 = vpack.c.b16 %v5132, %v5128
        %v6697 = vpack.c.b16 %v5137, %v5133
        %v6698 = vpack.c.b16 %v5138, %v5134
        %v6699 = vpack.c.b16 %v5139, %v5135
        %v6700 = vpack.c.b16 %v5140, %v5136
        %v6701 = vpack.c.b16 %v5145, %v5141
        %v6702 = vpack.c.b16 %v5146, %v5142
        %v6703 = vpack.c.b16 %v5147, %v5143
        %v6704 = vpack.c.b16 %v5148, %v5144
        %v6705 = vpack.c.b16 %v5153, %v5149
        %v6706 = vpack.c.b16 %v5154, %v5150
        %v6707 = vpack.c.b16 %v5155, %v5151
        %v6708 = vpack.c.b16 %v5156, %v5152
        %v6709 = vpack.c.b16 %v5161, %v5157
        %v6710 = vpack.c.b16 %v5162, %v5158
        %v6711 = vpack.c.b16 %v5163, %v5159
        %v6712 = vpack.c.b16 %v5164, %v5160
        %v6713 = vpack.c.b16 %v5169, %v5165
        %v6714 = vpack.c.b16 %v5170, %v5166
        %v6715 = vpack.c.b16 %v5171, %v5167
        %v6716 = vpack.c.b16 %v5172, %v5168
        %v6717 = vpack.c.b16 %v5177, %v5173
        %v6718 = vpack.c.b16 %v5178, %v5174
        %v6719 = vpack.c.b16 %v5179, %v5175
        %v6720 = vpack.c.b16 %v5180, %v5176
        %v6721 = vpack.c.b16 %v5185, %v5181
        %v6722 = vpack.c.b16 %v5186, %v5182
        %v6723 = vpack.c.b16 %v5187, %v5183
        %v6724 = vpack.c.b16 %v5188, %v5184
        %v6725 = vpack.c.b16 %v5193, %v5189
        %v6726 = vpack.c.b16 %v5194, %v5190
        %v6727 = vpack.c.b16 %v5195, %v5191
        %v6728 = vpack.c.b16 %v5196, %v5192
        %v6729 = vpack.c.b16 %v5201, %v5197
        %v6730 = vpack.c.b16 %v5202, %v5198
        %v6731 = vpack.c.b16 %v5203, %v5199
        %v6732 = vpack.c.b16 %v5204, %v5200
        %v6733 = vpack.c.b16 %v5209, %v5205
        %v6734 = vpack.c.b16 %v5210, %v5206
        %v6735 = vpack.c.b16 %v5211, %v5207
        %v6736 = vpack.c.b16 %v5212, %v5208
        %v6737 = vpack.c.b16 %v5217, %v5213
        %v6738 = vpack.c.b16 %v5218, %v5214
        %v6739 = vpack.c.b16 %v5219, %v5215
        %v6740 = vpack.c.b16 %v5220, %v5216
        %v6741 = vpack.c.b16 %v5225, %v5221
        %v6742 = vpack.c.b16 %v5226, %v5222
        %v6743 = vpack.c.b16 %v5227, %v5223
        %v6744 = vpack.c.b16 %v5228, %v5224
        %v6745 = vpack.c.b16 %v5233, %v5229
        %v6746 = vpack.c.b16 %v5234, %v5230
        %v6747 = vpack.c.b16 %v5235, %v5231
        %v6748 = vpack.c.b16 %v5236, %v5232
        %v6749 = vpack.c.b16 %v5241, %v5237
        %v6750 = vpack.c.b16 %v5242, %v5238
        %v6751 = vpack.c.b16 %v5243, %v5239
        %v6752 = vpack.c.b16 %v5244, %v5240
        %v6753 = vpack.c.b16 %v5249, %v5245
        %v6754 = vpack.c.b16 %v5250, %v5246
        %v6755 = vpack.c.b16 %v5251, %v5247
        %v6756 = vpack.c.b16 %v5252, %v5248
        %v6757 = vpack.c.b16 %v5257, %v5253
        %v6758 = vpack.c.b16 %v5258, %v5254
        %v6759 = vpack.c.b16 %v5259, %v5255
        %v6760 = vpack.c.b16 %v5260, %v5256
        %v6761 = vpack.c.b16 %v5265, %v5261
        %v6762 = vpack.c.b16 %v5266, %v5262
        %v6763 = vpack.c.b16 %v5267, %v5263
        %v6764 = vpack.c.b16 %v5268, %v5264
        %v6765 = vpack.c.b16 %v5273, %v5269
        %v6766 = vpack.c.b16 %v5274, %v5270
        %v6767 = vpack.c.b16 %v5275, %v5271
        %v6768 = vpack.c.b16 %v5276, %v5272
        %v6769 = vpack.c.b16 %v5281, %v5277
        %v6770 = vpack.c.b16 %v5282, %v5278
        %v6771 = vpack.c.b16 %v5283, %v5279
        %v6772 = vpack.c.b16 %v5284, %v5280
        %v6773 = vpack.c.b16 %v5289, %v5285
        %v6774 = vpack.c.b16 %v5290, %v5286
        %v6775 = vpack.c.b16 %v5291, %v5287
        %v6776 = vpack.c.b16 %v5292, %v5288
        %v6777 = vpack.c.b16 %v5297, %v5293
        %v6778 = vpack.c.b16 %v5298, %v5294
        %v6779 = vpack.c.b16 %v5299, %v5295
        %v6780 = vpack.c.b16 %v5300, %v5296
        %v6781 = vpack.c.b16 %v5305, %v5301
        %v6782 = vpack.c.b16 %v5306, %v5302
        %v6783 = vpack.c.b16 %v5307, %v5303
        %v6784 = vpack.c.b16 %v5308, %v5304
        %v6785 = vpack.c.b16 %v5313, %v5309
        %v6786 = vpack.c.b16 %v5314, %v5310
        %v6787 = vpack.c.b16 %v5315, %v5311
        %v6788 = vpack.c.b16 %v5316, %v5312
        %v6789 = vpack.c.b16 %v5321, %v5317
        %v6790 = vpack.c.b16 %v5322, %v5318
        %v6791 = vpack.c.b16 %v5323, %v5319
        %v6792 = vpack.c.b16 %v5324, %v5320
        %v6793 = vpack.c.b16 %v5329, %v5325
        %v6794 = vpack.c.b16 %v5330, %v5326
        %v6795 = vpack.c.b16 %v5331, %v5327
        %v6796 = vpack.c.b16 %v5332, %v5328
        %v6797 = vpack.c.b16 %v5337, %v5333
        %v6798 = vpack.c.b16 %v5338, %v5334
        %v6799 = vpack.c.b16 %v5339, %v5335
        %v6800 = vpack.c.b16 %v5340, %v5336
        %v6801 = vpack.c.b16 %v5345, %v5341
        %v6802 = vpack.c.b16 %v5346, %v5342
        %v6803 = vpack.c.b16 %v5347, %v5343
        %v6804 = vpack.c.b16 %v5348, %v5344
        %v6805 = vpack.c.b16 %v5353, %v5349
        %v6806 = vpack.c.b16 %v5354, %v5350
        %v6807 = vpack.c.b16 %v5355, %v5351
        %v6808 = vpack.c.b16 %v5356, %v5352
        %v6809 = vpack.c.b16 %v5361, %v5357
        %v6810 = vpack.c.b16 %v5362, %v5358
        %v6811 = vpack.c.b16 %v5363, %v5359
        %v6812 = vpack.c.b16 %v5364, %v5360
        %v6813 = vpack.c.b16 %v5369, %v5365
        %v6814 = vpack.c.b16 %v5370, %v5366
        %v6815 = vpack.c.b16 %v5371, %v5367
        %v6816 = vpack.c.b16 %v5372, %v5368
        %v6817 = vpack.c.b16 %v5377, %v5373
        %v6818 = vpack.c.b16 %v5378, %v5374
        %v6819 = vpack.c.b16 %v5379, %v5375
        %v6820 = vpack.c.b16 %v5380, %v5376
        %v6821 = vpack.c.b16 %v5385, %v5381
        %v6822 = vpack.c.b16 %v5386, %v5382
        %v6823 = vpack.c.b16 %v5387, %v5383
        %v6824 = vpack.c.b16 %v5388, %v5384
        %v6825 = vpack.c.b16 %v5393, %v5389
        %v6826 = vpack.c.b16 %v5394, %v5390
        %v6827 = vpack.c.b16 %v5395, %v5391
        %v6828 = vpack.c.b16 %v5396, %v5392
        %v6829 = vpack.c.b16 %v5401, %v5397
        %v6830 = vpack.c.b16 %v5402, %v5398
        %v6831 = vpack.c.b16 %v5403, %v5399
        %v6832 = vpack.c.b16 %v5404, %v5400
        %v6833 = vpack.c.b16 %v5409, %v5405
        %v6834 = vpack.c.b16 %v5410, %v5406
        %v6835 = vpack.c.b16 %v5411, %v5407
        %v6836 = vpack.c.b16 %v5412, %v5408
        %v6837 = vpack.c.b16 %v5417, %v5413
        %v6838 = vpack.c.b16 %v5418, %v5414
        %v6839 = vpack.c.b16 %v5419, %v5415
        %v6840 = vpack.c.b16 %v5420, %v5416
        %v6841 = vpack.c.b16 %v5425, %v5421
        %v6842 = vpack.c.b16 %v5426, %v5422
        %v6843 = vpack.c.b16 %v5427, %v5423
        %v6844 = vpack.c.b16 %v5428, %v5424
        %v6845 = vpack.c.b16 %v5433, %v5429
        %v6846 = vpack.c.b16 %v5434, %v5430
        %v6847 = vpack.c.b16 %v5435, %v5431
        %v6848 = vpack.c.b16 %v5436, %v5432
        %v6849 = vpack.c.b16 %v5441, %v5437
        %v6850 = vpack.c.b16 %v5442, %v5438
        %v6851 = vpack.c.b16 %v5443, %v5439
        %v6852 = vpack.c.b16 %v5444, %v5440
        %v6853 = vpack.c.b16 %v5449, %v5445
        %v6854 = vpack.c.b16 %v5450, %v5446
        %v6855 = vpack.c.b16 %v5451, %v5447
        %v6856 = vpack.c.b16 %v5452, %v5448
        %v6857 = vpack.c.b16 %v5457, %v5453
        %v6858 = vpack.c.b16 %v5458, %v5454
        %v6859 = vpack.c.b16 %v5459, %v5455
        %v6860 = vpack.c.b16 %v5460, %v5456
        %v6861 = vpack.c.b16 %v5465, %v5461
        %v6862 = vpack.c.b16 %v5466, %v5462
        %v6863 = vpack.c.b16 %v5467, %v5463
        %v6864 = vpack.c.b16 %v5468, %v5464
        %v6865 = vpack.c.b16 %v5473, %v5469
        %v6866 = vpack.c.b16 %v5474, %v5470
        %v6867 = vpack.c.b16 %v5475, %v5471
        %v6868 = vpack.c.b16 %v5476, %v5472
        %v6869 = vpack.c.b16 %v5481, %v5477
        %v6870 = vpack.c.b16 %v5482, %v5478
        %v6871 = vpack.c.b16 %v5483, %v5479
        %v6872 = vpack.c.b16 %v5484, %v5480
        %v6873 = vpack.c.b16 %v5489, %v5485
        %v6874 = vpack.c.b16 %v5490, %v5486
        %v6875 = vpack.c.b16 %v5491, %v5487
        %v6876 = vpack.c.b16 %v5492, %v5488
        %v6877 = vpack.c.b16 %v5497, %v5493
        %v6878 = vpack.c.b16 %v5498, %v5494
        %v6879 = vpack.c.b16 %v5499, %v5495
        %v6880 = vpack.c.b16 %v5500, %v5496
        %v6881 = vpack.c.b16 %v5505, %v5501
        %v6882 = vpack.c.b16 %v5506, %v5502
        %v6883 = vpack.c.b16 %v5507, %v5503
        %v6884 = vpack.c.b16 %v5508, %v5504
        %v6885 = vpack.c.b16 %v5513, %v5509
        %v6886 = vpack.c.b16 %v5514, %v5510
        %v6887 = vpack.c.b16 %v5515, %v5511
        %v6888 = vpack.c.b16 %v5516, %v5512
        %v6889 = vpack.c.b16 %v5521, %v5517
        %v6890 = vpack.c.b16 %v5522, %v5518
        %v6891 = vpack.c.b16 %v5523, %v5519
        %v6892 = vpack.c.b16 %v5524, %v5520
        %v6893 = vpack.c.b16 %v5529, %v5525
        %v6894 = vpack.c.b16 %v5530, %v5526
        %v6895 = vpack.c.b16 %v5531, %v5527
        %v6896 = vpack.c.b16 %v5532, %v5528
        %v6897 = vpack.c.b16 %v5537, %v5533
        %v6898 = vpack.c.b16 %v5538, %v5534
        %v6899 = vpack.c.b16 %v5539, %v5535
        %v6900 = vpack.c.b16 %v5540, %v5536
        %v6901 = vpack.c.b16 %v5545, %v5541
        %v6902 = vpack.c.b16 %v5546, %v5542
        %v6903 = vpack.c.b16 %v5547, %v5543
        %v6904 = vpack.c.b16 %v5548, %v5544
        %v6905 = vpack.c.b16 %v5553, %v5549
        %v6906 = vpack.c.b16 %v5554, %v5550
        %v6907 = vpack.c.b16 %v5555, %v5551
        %v6908 = vpack.c.b16 %v5556, %v5552
        %v6909 = vpack.c.b16 %v5561, %v5557
        %v6910 = vpack.c.b16 %v5562, %v5558
        %v6911 = vpack.c.b16 %v5563, %v5559
        %v6912 = vpack.c.b16 %v5564, %v5560
        %v6913 = vpack.c.b16 %v5569, %v5565
        %v6914 = vpack.c.b16 %v5570, %v5566
        %v6915 = vpack.c.b16 %v5571, %v5567
        %v6916 = vpack.c.b16 %v5572, %v5568
        %v6917 = vpack.c.b16 %v5577, %v5573
        %v6918 = vpack.c.b16 %v5578, %v5574
        %v6919 = vpack.c.b16 %v5579, %v5575
        %v6920 = vpack.c.b16 %v5580, %v5576
        %v6921 = vpack.c.b16 %v5585, %v5581
        %v6922 = vpack.c.b16 %v5586, %v5582
        %v6923 = vpack.c.b16 %v5587, %v5583
        %v6924 = vpack.c.b16 %v5588, %v5584
        %v6925 = vpack.c.b16 %v5593, %v5589
        %v6926 = vpack.c.b16 %v5594, %v5590
        %v6927 = vpack.c.b16 %v5595, %v5591
        %v6928 = vpack.c.b16 %v5596, %v5592
        %v6929 = vpack.c.b16 %v5601, %v5597
        %v6930 = vpack.c.b16 %v5602, %v5598
        %v6931 = vpack.c.b16 %v5603, %v5599
        %v6932 = vpack.c.b16 %v5604, %v5600
        %v6933 = vpack.c.b16 %v5609, %v5605
        %v6934 = vpack.c.b16 %v5610, %v5606
        %v6935 = vpack.c.b16 %v5611, %v5607
        %v6936 = vpack.c.b16 %v5612, %v5608
        %v6937 = vpack.c.b16 %v5617, %v5613
        %v6938 = vpack.c.b16 %v5618, %v5614
        %v6939 = vpack.c.b16 %v5619, %v5615
        %v6940 = vpack.c.b16 %v5620, %v5616
        %v6941 = vpack.c.b16 %v5625, %v5621
        %v6942 = vpack.c.b16 %v5626, %v5622
        %v6943 = vpack.c.b16 %v5627, %v5623
        %v6944 = vpack.c.b16 %v5628, %v5624
        %v6945 = vpack.c.b16 %v5633, %v5629
        %v6946 = vpack.c.b16 %v5634, %v5630
        %v6947 = vpack.c.b16 %v5635, %v5631
        %v6948 = vpack.c.b16 %v5636, %v5632
        %v6949 = vpack.c.b16 %v5641, %v5637
        %v6950 = vpack.c.b16 %v5642, %v5638
        %v6951 = vpack.c.b16 %v5643, %v5639
        %v6952 = vpack.c.b16 %v5644, %v5640
        %v6953 = vpack.c.b16 %v5649, %v5645
        %v6954 = vpack.c.b16 %v5650, %v5646
        %v6955 = vpack.c.b16 %v5651, %v5647
        %v6956 = vpack.c.b16 %v5652, %v5648
        %v6957 = vpack.c.b16 %v5657, %v5653
        %v6958 = vpack.c.b16 %v5658, %v5654
        %v6959 = vpack.c.b16 %v5659, %v5655
        %v6960 = vpack.c.b16 %v5660, %v5656
        %v6961 = vpack.c.b16 %v5665, %v5661
        %v6962 = vpack.c.b16 %v5666, %v5662
        %v6963 = vpack.c.b16 %v5667, %v5663
        %v6964 = vpack.c.b16 %v5668, %v5664
        %v6965 = vpack.c.b16 %v5673, %v5669
        %v6966 = vpack.c.b16 %v5674, %v5670
        %v6967 = vpack.c.b16 %v5675, %v5671
        %v6968 = vpack.c.b16 %v5676, %v5672
        %v6969 = vpack.c.b16 %v5681, %v5677
        %v6970 = vpack.c.b16 %v5682, %v5678
        %v6971 = vpack.c.b16 %v5683, %v5679
        %v6972 = vpack.c.b16 %v5684, %v5680
        %v6973 = vpack.c.b16 %v5689, %v5685
        %v6974 = vpack.c.b16 %v5690, %v5686
        %v6975 = vpack.c.b16 %v5691, %v5687
        %v6976 = vpack.c.b16 %v5692, %v5688
        %v6977 = vpack.c.b16 %v5697, %v5693
        %v6978 = vpack.c.b16 %v5698, %v5694
        %v6979 = vpack.c.b16 %v5699, %v5695
        %v6980 = vpack.c.b16 %v5700, %v5696
        %v6981 = vpack.c.b16 %v5705, %v5701
        %v6982 = vpack.c.b16 %v5706, %v5702
        %v6983 = vpack.c.b16 %v5707, %v5703
        %v6984 = vpack.c.b16 %v5708, %v5704
        %v6985 = vpack.c.b16 %v5713, %v5709
        %v6986 = vpack.c.b16 %v5714, %v5710
        %v6987 = vpack.c.b16 %v5715, %v5711
        %v6988 = vpack.c.b16 %v5716, %v5712
        %v6989 = vpack.c.b16 %v5721, %v5717
        %v6990 = vpack.c.b16 %v5722, %v5718
        %v6991 = vpack.c.b16 %v5723, %v5719
        %v6992 = vpack.c.b16 %v5724, %v5720
        %v6993 = vpack.c.b16 %v5729, %v5725
        %v6994 = vpack.c.b16 %v5730, %v5726
        %v6995 = vpack.c.b16 %v5731, %v5727
        %v6996 = vpack.c.b16 %v5732, %v5728
        %v6997 = vpack.c.b16 %v5737, %v5733
        %v6998 = vpack.c.b16 %v5738, %v5734
        %v6999 = vpack.c.b16 %v5739, %v5735
        %v7000 = vpack.c.b16 %v5740, %v5736
        %v7001 = vpack.c.b16 %v5745, %v5741
        %v7002 = vpack.c.b16 %v5746, %v5742
        %v7003 = vpack.c.b16 %v5747, %v5743
        %v7004 = vpack.c.b16 %v5748, %v5744
        %v7005 = vpack.c.b16 %v5753, %v5749
        %v7006 = vpack.c.b16 %v5754, %v5750
        %v7007 = vpack.c.b16 %v5755, %v5751
        %v7008 = vpack.c.b16 %v5756, %v5752
        %v7009 = vpack.c.b16 %v5761, %v5757
        %v7010 = vpack.c.b16 %v5762, %v5758
        %v7011 = vpack.c.b16 %v5763, %v5759
        %v7012 = vpack.c.b16 %v5764, %v5760
        %v7013 = vpack.c.b16 %v5769, %v5765
        %v7014 = vpack.c.b16 %v5770, %v5766
        %v7015 = vpack.c.b16 %v5771, %v5767
        %v7016 = vpack.c.b16 %v5772, %v5768
        %v7017 = vpack.c.b16 %v5777, %v5773
        %v7018 = vpack.c.b16 %v5778, %v5774
        %v7019 = vpack.c.b16 %v5779, %v5775
        %v7020 = vpack.c.b16 %v5780, %v5776
        %v7021 = vpack.c.b16 %v5785, %v5781
        %v7022 = vpack.c.b16 %v5786, %v5782
        %v7023 = vpack.c.b16 %v5787, %v5783
        %v7024 = vpack.c.b16 %v5788, %v5784
        %v7025 = vpack.c.b16 %v5793, %v5789
        %v7026 = vpack.c.b16 %v5794, %v5790
        %v7027 = vpack.c.b16 %v5795, %v5791
        %v7028 = vpack.c.b16 %v5796, %v5792
        %v7029 = vpack.c.b16 %v5801, %v5797
        %v7030 = vpack.c.b16 %v5802, %v5798
        %v7031 = vpack.c.b16 %v5803, %v5799
        %v7032 = vpack.c.b16 %v5804, %v5800
        %v7033 = vpack.c.b16 %v5809, %v5805
        %v7034 = vpack.c.b16 %v5810, %v5806
        %v7035 = vpack.c.b16 %v5811, %v5807
        %v7036 = vpack.c.b16 %v5812, %v5808
        %v7037 = vpack.c.b16 %v5817, %v5813
        %v7038 = vpack.c.b16 %v5818, %v5814
        %v7039 = vpack.c.b16 %v5819, %v5815
        %v7040 = vpack.c.b16 %v5820, %v5816
        %v7041 = vpack.c.b16 %v5825, %v5821
        %v7042 = vpack.c.b16 %v5826, %v5822
        %v7043 = vpack.c.b16 %v5827, %v5823
        %v7044 = vpack.c.b16 %v5828, %v5824
        %v7045 = vpack.c.b16 %v5833, %v5829
        %v7046 = vpack.c.b16 %v5834, %v5830
        %v7047 = vpack.c.b16 %v5835, %v5831
        %v7048 = vpack.c.b16 %v5836, %v5832
        %v7049 = vpack.c.b16 %v5841, %v5837
        %v7050 = vpack.c.b16 %v5842, %v5838
        %v7051 = vpack.c.b16 %v5843, %v5839
        %v7052 = vpack.c.b16 %v5844, %v5840
        %v7053 = vpack.c.b16 %v5849, %v5845
        %v7054 = vpack.c.b16 %v5850, %v5846
        %v7055 = vpack.c.b16 %v5851, %v5847
        %v7056 = vpack.c.b16 %v5852, %v5848
        %v7057 = vpack.c.b16 %v5857, %v5853
        %v7058 = vpack.c.b16 %v5858, %v5854
        %v7059 = vpack.c.b16 %v5859, %v5855
        %v7060 = vpack.c.b16 %v5860, %v5856
        %v7061 = vpack.c.b16 %v5865, %v5861
        %v7062 = vpack.c.b16 %v5866, %v5862
        %v7063 = vpack.c.b16 %v5867, %v5863
        %v7064 = vpack.c.b16 %v5868, %v5864
        %v7065 = vpack.c.b16 %v5873, %v5869
        %v7066 = vpack.c.b16 %v5874, %v5870
        %v7067 = vpack.c.b16 %v5875, %v5871
        %v7068 = vpack.c.b16 %v5876, %v5872
        %v7069 = vpack.c.b16 %v5881, %v5877
        %v7070 = vpack.c.b16 %v5882, %v5878
        %v7071 = vpack.c.b16 %v5883, %v5879
        %v7072 = vpack.c.b16 %v5884, %v5880
        %v7073 = vpack.c.b16 %v5889, %v5885
        %v7074 = vpack.c.b16 %v5890, %v5886
        %v7075 = vpack.c.b16 %v5891, %v5887
        %v7076 = vpack.c.b16 %v5892, %v5888
        %v7077 = vpack.c.b16 %v5897, %v5893
        %v7078 = vpack.c.b16 %v5898, %v5894
        %v7079 = vpack.c.b16 %v5899, %v5895
        %v7080 = vpack.c.b16 %v5900, %v5896
        %v7081 = vpack.c.b16 %v5905, %v5901
        %v7082 = vpack.c.b16 %v5906, %v5902
        %v7083 = vpack.c.b16 %v5907, %v5903
        %v7084 = vpack.c.b16 %v5908, %v5904
        %vm8261 = vcmask 785408
        %v8263 = vsel %vm8261, %v2335, 0
        %8265 = vmatprep.subr.bf16.mxu0 %v5938
        %8266 = vmatpush1.bf16.msra.mxu0 %v5937
        %8267 = vmatprep.subr.bf16.mxu0 %v5934
        %8268 = vmatpush1.bf16.msra.mxu0 %v5933
        %8269 = vmatprep.subr.bf16.mxu0 %v5930
        %8270 = vmatpush1.bf16.msra.mxu0 %v5929
        %8271 = vmatprep.subr.bf16.mxu0 %v5926
        %8272 = vmatpush1.bf16.msra.mxu0 %v5925
        %8273 = vmatprep.subr.bf16.mxu0 %v5922
        %8274 = vmatpush1.bf16.msra.mxu0 %v5921
        %8275 = vmatprep.subr.bf16.mxu0 %v5918
        %8276 = vmatpush1.bf16.msra.mxu0 %v5917
        %8277 = vmatprep.subr.bf16.mxu0 %v5914
        %8278 = vmatpush1.bf16.msra.mxu0 %v5913
        %8279 = vmatprep.subr.bf16.mxu0 %v5910
        %8280 = vmatpush1.bf16.msra.mxu0 %v5909
        %8281 = vmatprep.subr.bf16.mxu0 %v5970
        %8282 = vmatpush2.bf16.msra.mxu0 %v5969
        %8283 = vmatprep.subr.bf16.mxu0 %v5966
        %8284 = vmatpush2.bf16.msra.mxu0 %v5965
        %8285 = vmatprep.subr.bf16.mxu0 %v5962
        %8286 = vmatpush2.bf16.msra.mxu0 %v5961
        %8287 = vmatprep.subr.bf16.mxu0 %v5958
        %8288 = vmatpush2.bf16.msra.mxu0 %v5957
        %8289 = vmatprep.subr.bf16.mxu0 %v5954
        %8290 = vmatpush2.bf16.msra.mxu0 %v5953
        %8291 = vmatprep.subr.bf16.mxu0 %v5950
        %8292 = vmatpush2.bf16.msra.mxu0 %v5949
        %8293 = vmatprep.subr.bf16.mxu0 %v5946
        %8294 = vmatpush2.bf16.msra.mxu0 %v5945
        %8295 = vmatprep.subr.bf16.mxu0 %v5942
        %8296 = vmatpush2.bf16.msra.mxu0 %v5941
        %8297 = vmatprep.mubr.bf16.mxu0 %v2147
        %8298 = vmatmul.mubr.bf16.gmra.mxu0 %v2133
        %v8299 = vpop.f32.mrf.mxu0
        %v8300 = vadd.f32 %v2088, %v8299
        %v8301 = vpop.f32.mrf.mxu0
        %v8302 = vadd.f32 %v2092, %v8301
        %v8303 = vpop.f32.mrf.mxu0
        %v8304 = vpop.f32.mrf.mxu0
        %8305 = vdwg.mxu0
        %8306 = vmatprep.subr.bf16.mxu0 %v6002
        %8307 = vmatpush1.bf16.msra.mxu0 %v6001
        %8308 = vmatprep.subr.bf16.mxu0 %v5998
        %8309 = vmatpush1.bf16.msra.mxu0 %v5997
        %8310 = vmatprep.subr.bf16.mxu0 %v5994
        %8311 = vmatpush1.bf16.msra.mxu0 %v5993
        %8312 = vmatprep.subr.bf16.mxu0 %v5990
        %8313 = vmatpush1.bf16.msra.mxu0 %v5989
        %8314 = vmatprep.subr.bf16.mxu0 %v5986
        %8315 = vmatpush1.bf16.msra.mxu0 %v5985
        %8316 = vmatprep.subr.bf16.mxu0 %v5982
        %8317 = vmatpush1.bf16.msra.mxu0 %v5981
        %8318 = vmatprep.subr.bf16.mxu0 %v5978
        %8319 = vmatpush1.bf16.msra.mxu0 %v5977
        %8320 = vmatprep.subr.bf16.mxu0 %v5974
        %8321 = vmatpush1.bf16.msra.mxu0 %v5973
        %8322 = vmatprep.subr.bf16.mxu0 %v6034
        %8323 = vmatpush2.bf16.msra.mxu0 %v6033
        %8324 = vmatprep.subr.bf16.mxu0 %v6030
        %8325 = vmatpush2.bf16.msra.mxu0 %v6029
        %8326 = vmatprep.subr.bf16.mxu0 %v6026
        %8327 = vmatpush2.bf16.msra.mxu0 %v6025
        %8328 = vmatprep.subr.bf16.mxu0 %v6022
        %8329 = vmatpush2.bf16.msra.mxu0 %v6021
        %8330 = vmatprep.subr.bf16.mxu0 %v6018
        %8331 = vmatpush2.bf16.msra.mxu0 %v6017
        %8332 = vmatprep.subr.bf16.mxu0 %v6014
        %8333 = vmatpush2.bf16.msra.mxu0 %v6013
        %8334 = vmatprep.subr.bf16.mxu0 %v6010
        %8335 = vmatpush2.bf16.msra.mxu0 %v6009
        %8336 = vmatprep.subr.bf16.mxu0 %v6006
        %8337 = vmatpush2.bf16.msra.mxu0 %v6005
        %8338 = vmatprep.mubr.bf16.mxu0 %v2157
        %8339 = vmatmul.mubr.bf16.gmra.mxu0 %v2155
        %v8340 = vpop.f32.mrf.mxu0
        %v8341 = vadd.f32 %v8300, %v8340
        %v8342 = vpop.f32.mrf.mxu0
        %v8343 = vadd.f32 %v8302, %v8342
        %v8344 = vpop.f32.mrf.mxu0
        %v8345 = vpop.f32.mrf.mxu0
        %8346 = vdwg.mxu0
        %8347 = vmatprep.subr.bf16.mxu0 %v6066
        %8348 = vmatpush1.bf16.msra.mxu0 %v6065
        %8349 = vmatprep.subr.bf16.mxu0 %v6062
        %8350 = vmatpush1.bf16.msra.mxu0 %v6061
        %8351 = vmatprep.subr.bf16.mxu0 %v6058
        %8352 = vmatpush1.bf16.msra.mxu0 %v6057
        %8353 = vmatprep.subr.bf16.mxu0 %v6054
        %8354 = vmatpush1.bf16.msra.mxu0 %v6053
        %8355 = vmatprep.subr.bf16.mxu0 %v6050
        %8356 = vmatpush1.bf16.msra.mxu0 %v6049
        %8357 = vmatprep.subr.bf16.mxu0 %v6046
        %8358 = vmatpush1.bf16.msra.mxu0 %v6045
        %8359 = vmatprep.subr.bf16.mxu0 %v6042
        %8360 = vmatpush1.bf16.msra.mxu0 %v6041
        %8361 = vmatprep.subr.bf16.mxu0 %v6038
        %8362 = vmatpush1.bf16.msra.mxu0 %v6037
        %8363 = vmatprep.subr.bf16.mxu0 %v6098
        %8364 = vmatpush2.bf16.msra.mxu0 %v6097
        %8365 = vmatprep.subr.bf16.mxu0 %v6094
        %8366 = vmatpush2.bf16.msra.mxu0 %v6093
        %8367 = vmatprep.subr.bf16.mxu0 %v6090
        %8368 = vmatpush2.bf16.msra.mxu0 %v6089
        %8369 = vmatprep.subr.bf16.mxu0 %v6086
        %8370 = vmatpush2.bf16.msra.mxu0 %v6085
        %8371 = vmatprep.subr.bf16.mxu0 %v6082
        %8372 = vmatpush2.bf16.msra.mxu0 %v6081
        %8373 = vmatprep.subr.bf16.mxu0 %v6078
        %8374 = vmatpush2.bf16.msra.mxu0 %v6077
        %8375 = vmatprep.subr.bf16.mxu0 %v6074
        %8376 = vmatpush2.bf16.msra.mxu0 %v6073
        %8377 = vmatprep.subr.bf16.mxu0 %v6070
        %8378 = vmatpush2.bf16.msra.mxu0 %v6069
        %8379 = vmatprep.mubr.bf16.mxu0 %v2154
        %8380 = vmatmul.mubr.bf16.gmra.mxu0 %v2140
        %v8381 = vpop.f32.mrf.mxu0
        %v8382 = vadd.f32 %v8341, %v8381
        %v8383 = vpop.f32.mrf.mxu0
        %v8384 = vadd.f32 %v8343, %v8383
        %v8385 = vpop.f32.mrf.mxu0
        %v8386 = vpop.f32.mrf.mxu0
        %8387 = vdwg.mxu0
        %8388 = vmatprep.subr.bf16.mxu0 %v6130
        %8389 = vmatpush1.bf16.msra.mxu0 %v6129
        %8390 = vmatprep.subr.bf16.mxu0 %v6126
        %8391 = vmatpush1.bf16.msra.mxu0 %v6125
        %8392 = vmatprep.subr.bf16.mxu0 %v6122
        %8393 = vmatpush1.bf16.msra.mxu0 %v6121
        %8394 = vmatprep.subr.bf16.mxu0 %v6118
        %8395 = vmatpush1.bf16.msra.mxu0 %v6117
        %8396 = vmatprep.subr.bf16.mxu0 %v6114
        %8397 = vmatpush1.bf16.msra.mxu0 %v6113
        %8398 = vmatprep.subr.bf16.mxu0 %v6110
        %8399 = vmatpush1.bf16.msra.mxu0 %v6109
        %8400 = vmatprep.subr.bf16.mxu0 %v6106
        %8401 = vmatpush1.bf16.msra.mxu0 %v6105
        %8402 = vmatprep.subr.bf16.mxu0 %v6102
        %8403 = vmatpush1.bf16.msra.mxu0 %v6101
        %8404 = vmatprep.subr.bf16.mxu0 %v6162
        %8405 = vmatpush2.bf16.msra.mxu0 %v6161
        %8406 = vmatprep.subr.bf16.mxu0 %v6158
        %8407 = vmatpush2.bf16.msra.mxu0 %v6157
        %8408 = vmatprep.subr.bf16.mxu0 %v6154
        %8409 = vmatpush2.bf16.msra.mxu0 %v6153
        %8410 = vmatprep.subr.bf16.mxu0 %v6150
        %8411 = vmatpush2.bf16.msra.mxu0 %v6149
        %8412 = vmatprep.subr.bf16.mxu0 %v6146
        %8413 = vmatpush2.bf16.msra.mxu0 %v6145
        %8414 = vmatprep.subr.bf16.mxu0 %v6142
        %8415 = vmatpush2.bf16.msra.mxu0 %v6141
        %8416 = vmatprep.subr.bf16.mxu0 %v6138
        %8417 = vmatpush2.bf16.msra.mxu0 %v6137
        %8418 = vmatprep.subr.bf16.mxu0 %v6134
        %8419 = vmatpush2.bf16.msra.mxu0 %v6133
        %8420 = vmatprep.mubr.bf16.mxu0 %v2158
        %8421 = vmatmul.mubr.bf16.gmra.mxu0 %v2156
        %v8422 = vpop.f32.mrf.mxu0
        %v8423 = vadd.f32 %v8382, %v8422
        %v8424 = vpop.f32.mrf.mxu0
        %v8425 = vadd.f32 %v8384, %v8424
        %v8426 = vpop.f32.mrf.mxu0
        %v8427 = vpop.f32.mrf.mxu0
        %8428 = vdwg.mxu0
        %8429 = vmatprep.subr.bf16.mxu0 %v6194
        %8430 = vmatpush1.bf16.msra.mxu0 %v6193
        %8431 = vmatprep.subr.bf16.mxu0 %v6190
        %8432 = vmatpush1.bf16.msra.mxu0 %v6189
        %8433 = vmatprep.subr.bf16.mxu0 %v6186
        %8434 = vmatpush1.bf16.msra.mxu0 %v6185
        %8435 = vmatprep.subr.bf16.mxu0 %v6182
        %8436 = vmatpush1.bf16.msra.mxu0 %v6181
        %8437 = vmatprep.subr.bf16.mxu0 %v6178
        %8438 = vmatpush1.bf16.msra.mxu0 %v6177
        %8439 = vmatprep.subr.bf16.mxu0 %v6174
        %8440 = vmatpush1.bf16.msra.mxu0 %v6173
        %8441 = vmatprep.subr.bf16.mxu0 %v6170
        %8442 = vmatpush1.bf16.msra.mxu0 %v6169
        %8443 = vmatprep.subr.bf16.mxu0 %v6166
        %8444 = vmatpush1.bf16.msra.mxu0 %v6165
        %8445 = vmatprep.subr.bf16.mxu0 %v6226
        %8446 = vmatpush2.bf16.msra.mxu0 %v6225
        %8447 = vmatprep.subr.bf16.mxu0 %v6222
        %8448 = vmatpush2.bf16.msra.mxu0 %v6221
        %8449 = vmatprep.subr.bf16.mxu0 %v6218
        %8450 = vmatpush2.bf16.msra.mxu0 %v6217
        %8451 = vmatprep.subr.bf16.mxu0 %v6214
        %8452 = vmatpush2.bf16.msra.mxu0 %v6213
        %8453 = vmatprep.subr.bf16.mxu0 %v6210
        %8454 = vmatpush2.bf16.msra.mxu0 %v6209
        %8455 = vmatprep.subr.bf16.mxu0 %v6206
        %8456 = vmatpush2.bf16.msra.mxu0 %v6205
        %8457 = vmatprep.subr.bf16.mxu0 %v6202
        %8458 = vmatpush2.bf16.msra.mxu0 %v6201
        %8459 = vmatprep.subr.bf16.mxu0 %v6198
        %8460 = vmatpush2.bf16.msra.mxu0 %v6197
        %8461 = vmatprep.mubr.bf16.mxu0 %v2196
        %8462 = vmatmul.mubr.bf16.gmra.mxu0 %v2182
        %v8463 = vpop.f32.mrf.mxu0
        %v8464 = vadd.f32 %v8423, %v8463
        %v8465 = vpop.f32.mrf.mxu0
        %v8466 = vadd.f32 %v8425, %v8465
        %v8467 = vpop.f32.mrf.mxu0
        %v8468 = vpop.f32.mrf.mxu0
        %8469 = vdwg.mxu0
        %8470 = vmatprep.subr.bf16.mxu0 %v6258
        %8471 = vmatpush1.bf16.msra.mxu0 %v6257
        %8472 = vmatprep.subr.bf16.mxu0 %v6254
        %8473 = vmatpush1.bf16.msra.mxu0 %v6253
        %8474 = vmatprep.subr.bf16.mxu0 %v6250
        %8475 = vmatpush1.bf16.msra.mxu0 %v6249
        %8476 = vmatprep.subr.bf16.mxu0 %v6246
        %8477 = vmatpush1.bf16.msra.mxu0 %v6245
        %8478 = vmatprep.subr.bf16.mxu0 %v6242
        %8479 = vmatpush1.bf16.msra.mxu0 %v6241
        %8480 = vmatprep.subr.bf16.mxu0 %v6238
        %8481 = vmatpush1.bf16.msra.mxu0 %v6237
        %8482 = vmatprep.subr.bf16.mxu0 %v6234
        %8483 = vmatpush1.bf16.msra.mxu0 %v6233
        %8484 = vmatprep.subr.bf16.mxu0 %v6230
        %8485 = vmatpush1.bf16.msra.mxu0 %v6229
        %8486 = vmatprep.subr.bf16.mxu0 %v6290
        %8487 = vmatpush2.bf16.msra.mxu0 %v6289
        %8488 = vmatprep.subr.bf16.mxu0 %v6286
        %8489 = vmatpush2.bf16.msra.mxu0 %v6285
        %8490 = vmatprep.subr.bf16.mxu0 %v6282
        %8491 = vmatpush2.bf16.msra.mxu0 %v6281
        %8492 = vmatprep.subr.bf16.mxu0 %v6278
        %8493 = vmatpush2.bf16.msra.mxu0 %v6277
        %8494 = vmatprep.subr.bf16.mxu0 %v6274
        %8495 = vmatpush2.bf16.msra.mxu0 %v6273
        %8496 = vmatprep.subr.bf16.mxu0 %v6270
        %8497 = vmatpush2.bf16.msra.mxu0 %v6269
        %8498 = vmatprep.subr.bf16.mxu0 %v6266
        %8499 = vmatpush2.bf16.msra.mxu0 %v6265
        %8500 = vmatprep.subr.bf16.mxu0 %v6262
        %8501 = vmatpush2.bf16.msra.mxu0 %v6261
        %8502 = vmatprep.mubr.bf16.mxu0 %v2206
        %8503 = vmatmul.mubr.bf16.gmra.mxu0 %v2204
        %v8504 = vpop.f32.mrf.mxu0
        %v8505 = vadd.f32 %v8464, %v8504
        %v8506 = vpop.f32.mrf.mxu0
        %v8507 = vadd.f32 %v8466, %v8506
        %v8508 = vpop.f32.mrf.mxu0
        %v8509 = vpop.f32.mrf.mxu0
        %8510 = vdwg.mxu0
        %8511 = vmatprep.subr.bf16.mxu0 %v6322
        %8512 = vmatpush1.bf16.msra.mxu0 %v6321
        %8513 = vmatprep.subr.bf16.mxu0 %v6318
        %8514 = vmatpush1.bf16.msra.mxu0 %v6317
        %8515 = vmatprep.subr.bf16.mxu0 %v6314
        %8516 = vmatpush1.bf16.msra.mxu0 %v6313
        %8517 = vmatprep.subr.bf16.mxu0 %v6310
        %8518 = vmatpush1.bf16.msra.mxu0 %v6309
        %8519 = vmatprep.subr.bf16.mxu0 %v6306
        %8520 = vmatpush1.bf16.msra.mxu0 %v6305
        %8521 = vmatprep.subr.bf16.mxu0 %v6302
        %8522 = vmatpush1.bf16.msra.mxu0 %v6301
        %8523 = vmatprep.subr.bf16.mxu0 %v6298
        %8524 = vmatpush1.bf16.msra.mxu0 %v6297
        %8525 = vmatprep.subr.bf16.mxu0 %v6294
        %8526 = vmatpush1.bf16.msra.mxu0 %v6293
        %8527 = vmatprep.subr.bf16.mxu0 %v6354
        %8528 = vmatpush2.bf16.msra.mxu0 %v6353
        %8529 = vmatprep.subr.bf16.mxu0 %v6350
        %8530 = vmatpush2.bf16.msra.mxu0 %v6349
        %8531 = vmatprep.subr.bf16.mxu0 %v6346
        %8532 = vmatpush2.bf16.msra.mxu0 %v6345
        %8533 = vmatprep.subr.bf16.mxu0 %v6342
        %8534 = vmatpush2.bf16.msra.mxu0 %v6341
        %8535 = vmatprep.subr.bf16.mxu0 %v6338
        %8536 = vmatpush2.bf16.msra.mxu0 %v6337
        %8537 = vmatprep.subr.bf16.mxu0 %v6334
        %8538 = vmatpush2.bf16.msra.mxu0 %v6333
        %8539 = vmatprep.subr.bf16.mxu0 %v6330
        %8540 = vmatpush2.bf16.msra.mxu0 %v6329
        %8541 = vmatprep.subr.bf16.mxu0 %v6326
        %8542 = vmatpush2.bf16.msra.mxu0 %v6325
        %8543 = vmatprep.mubr.bf16.mxu0 %v2203
        %8544 = vmatmul.mubr.bf16.gmra.mxu0 %v2189
        %v8545 = vpop.f32.mrf.mxu0
        %v8546 = vadd.f32 %v8505, %v8545
        %v8547 = vpop.f32.mrf.mxu0
        %v8548 = vadd.f32 %v8507, %v8547
        %v8549 = vpop.f32.mrf.mxu0
        %v8550 = vpop.f32.mrf.mxu0
        %8551 = vdwg.mxu0
        %8552 = vmatprep.subr.bf16.mxu0 %v6386
        %8553 = vmatpush1.bf16.msra.mxu0 %v6385
        %8554 = vmatprep.subr.bf16.mxu0 %v6382
        %8555 = vmatpush1.bf16.msra.mxu0 %v6381
        %8556 = vmatprep.subr.bf16.mxu0 %v6378
        %8557 = vmatpush1.bf16.msra.mxu0 %v6377
        %8558 = vmatprep.subr.bf16.mxu0 %v6374
        %8559 = vmatpush1.bf16.msra.mxu0 %v6373
        %8560 = vmatprep.subr.bf16.mxu0 %v6370
        %8561 = vmatpush1.bf16.msra.mxu0 %v6369
        %8562 = vmatprep.subr.bf16.mxu0 %v6366
        %8563 = vmatpush1.bf16.msra.mxu0 %v6365
        %8564 = vmatprep.subr.bf16.mxu0 %v6362
        %8565 = vmatpush1.bf16.msra.mxu0 %v6361
        %8566 = vmatprep.subr.bf16.mxu0 %v6358
        %8567 = vmatpush1.bf16.msra.mxu0 %v6357
        %8568 = vmatprep.subr.bf16.mxu0 %v6418
        %8569 = vmatpush2.bf16.msra.mxu0 %v6417
        %8570 = vmatprep.subr.bf16.mxu0 %v6414
        %8571 = vmatpush2.bf16.msra.mxu0 %v6413
        %8572 = vmatprep.subr.bf16.mxu0 %v6410
        %8573 = vmatpush2.bf16.msra.mxu0 %v6409
        %8574 = vmatprep.subr.bf16.mxu0 %v6406
        %8575 = vmatpush2.bf16.msra.mxu0 %v6405
        %8576 = vmatprep.subr.bf16.mxu0 %v6402
        %8577 = vmatpush2.bf16.msra.mxu0 %v6401
        %8578 = vmatprep.subr.bf16.mxu0 %v6398
        %8579 = vmatpush2.bf16.msra.mxu0 %v6397
        %8580 = vmatprep.subr.bf16.mxu0 %v6394
        %8581 = vmatpush2.bf16.msra.mxu0 %v6393
        %8582 = vmatprep.subr.bf16.mxu0 %v6390
        %8583 = vmatpush2.bf16.msra.mxu0 %v6389
        %8584 = vmatprep.mubr.bf16.mxu0 %v2207
        %8585 = vmatmul.mubr.bf16.gmra.mxu0 %v2205
        %v8586 = vpop.f32.mrf.mxu0
        %v8587 = vadd.f32 %v8546, %v8586
        %v8588 = vpop.f32.mrf.mxu0
        %v8589 = vadd.f32 %v8548, %v8588
        %v8590 = vpop.f32.mrf.mxu0
        %v8591 = vpop.f32.mrf.mxu0
        %8592 = vdwg.mxu0
        %8593 = vmatprep.subr.bf16.mxu0 %v6450
        %8594 = vmatpush1.bf16.msra.mxu0 %v6449
        %8595 = vmatprep.subr.bf16.mxu0 %v6446
        %8596 = vmatpush1.bf16.msra.mxu0 %v6445
        %8597 = vmatprep.subr.bf16.mxu0 %v6442
        %8598 = vmatpush1.bf16.msra.mxu0 %v6441
        %8599 = vmatprep.subr.bf16.mxu0 %v6438
        %8600 = vmatpush1.bf16.msra.mxu0 %v6437
        %8601 = vmatprep.subr.bf16.mxu0 %v6434
        %8602 = vmatpush1.bf16.msra.mxu0 %v6433
        %8603 = vmatprep.subr.bf16.mxu0 %v6430
        %8604 = vmatpush1.bf16.msra.mxu0 %v6429
        %8605 = vmatprep.subr.bf16.mxu0 %v6426
        %8606 = vmatpush1.bf16.msra.mxu0 %v6425
        %8607 = vmatprep.subr.bf16.mxu0 %v6422
        %8608 = vmatpush1.bf16.msra.mxu0 %v6421
        %8609 = vmatprep.subr.bf16.mxu0 %v6482
        %8610 = vmatpush2.bf16.msra.mxu0 %v6481
        %8611 = vmatprep.subr.bf16.mxu0 %v6478
        %8612 = vmatpush2.bf16.msra.mxu0 %v6477
        %8613 = vmatprep.subr.bf16.mxu0 %v6474
        %8614 = vmatpush2.bf16.msra.mxu0 %v6473
        %8615 = vmatprep.subr.bf16.mxu0 %v6470
        %8616 = vmatpush2.bf16.msra.mxu0 %v6469
        %8617 = vmatprep.subr.bf16.mxu0 %v6466
        %8618 = vmatpush2.bf16.msra.mxu0 %v6465
        %8619 = vmatprep.subr.bf16.mxu0 %v6462
        %8620 = vmatpush2.bf16.msra.mxu0 %v6461
        %8621 = vmatprep.subr.bf16.mxu0 %v6458
        %8622 = vmatpush2.bf16.msra.mxu0 %v6457
        %8623 = vmatprep.subr.bf16.mxu0 %v6454
        %8624 = vmatpush2.bf16.msra.mxu0 %v6453
        %8625 = vmatprep.mubr.bf16.mxu0 %v2245
        %8626 = vmatmul.mubr.bf16.gmra.mxu0 %v2231
        %v8627 = vpop.f32.mrf.mxu0
        %v8628 = vadd.f32 %v8587, %v8627
        %v8629 = vpop.f32.mrf.mxu0
        %v8630 = vadd.f32 %v8589, %v8629
        %v8631 = vpop.f32.mrf.mxu0
        %v8632 = vpop.f32.mrf.mxu0
        %8633 = vdwg.mxu0
        %8634 = vmatprep.subr.bf16.mxu0 %v6514
        %8635 = vmatpush1.bf16.msra.mxu0 %v6513
        %8636 = vmatprep.subr.bf16.mxu0 %v6510
        %8637 = vmatpush1.bf16.msra.mxu0 %v6509
        %8638 = vmatprep.subr.bf16.mxu0 %v6506
        %8639 = vmatpush1.bf16.msra.mxu0 %v6505
        %8640 = vmatprep.subr.bf16.mxu0 %v6502
        %8641 = vmatpush1.bf16.msra.mxu0 %v6501
        %8642 = vmatprep.subr.bf16.mxu0 %v6498
        %8643 = vmatpush1.bf16.msra.mxu0 %v6497
        %8644 = vmatprep.subr.bf16.mxu0 %v6494
        %8645 = vmatpush1.bf16.msra.mxu0 %v6493
        %8646 = vmatprep.subr.bf16.mxu0 %v6490
        %8647 = vmatpush1.bf16.msra.mxu0 %v6489
        %8648 = vmatprep.subr.bf16.mxu0 %v6486
        %8649 = vmatpush1.bf16.msra.mxu0 %v6485
        %8650 = vmatprep.subr.bf16.mxu0 %v6546
        %8651 = vmatpush2.bf16.msra.mxu0 %v6545
        %8652 = vmatprep.subr.bf16.mxu0 %v6542
        %8653 = vmatpush2.bf16.msra.mxu0 %v6541
        %8654 = vmatprep.subr.bf16.mxu0 %v6538
        %8655 = vmatpush2.bf16.msra.mxu0 %v6537
        %8656 = vmatprep.subr.bf16.mxu0 %v6534
        %8657 = vmatpush2.bf16.msra.mxu0 %v6533
        %8658 = vmatprep.subr.bf16.mxu0 %v6530
        %8659 = vmatpush2.bf16.msra.mxu0 %v6529
        %8660 = vmatprep.subr.bf16.mxu0 %v6526
        %8661 = vmatpush2.bf16.msra.mxu0 %v6525
        %8662 = vmatprep.subr.bf16.mxu0 %v6522
        %8663 = vmatpush2.bf16.msra.mxu0 %v6521
        %8664 = vmatprep.subr.bf16.mxu0 %v6518
        %8665 = vmatpush2.bf16.msra.mxu0 %v6517
        %8666 = vmatprep.mubr.bf16.mxu0 %v2255
        %8667 = vmatmul.mubr.bf16.gmra.mxu0 %v2253
        %v8668 = vpop.f32.mrf.mxu0
        %v8669 = vadd.f32 %v8628, %v8668
        %v8670 = vpop.f32.mrf.mxu0
        %v8671 = vadd.f32 %v8630, %v8670
        %v8672 = vpop.f32.mrf.mxu0
        %v8673 = vpop.f32.mrf.mxu0
        %8674 = vdwg.mxu0
        %8675 = vmatprep.subr.bf16.mxu0 %v6578
        %8676 = vmatpush1.bf16.msra.mxu0 %v6577
        %8677 = vmatprep.subr.bf16.mxu0 %v6574
        %8678 = vmatpush1.bf16.msra.mxu0 %v6573
        %8679 = vmatprep.subr.bf16.mxu0 %v6570
        %8680 = vmatpush1.bf16.msra.mxu0 %v6569
        %8681 = vmatprep.subr.bf16.mxu0 %v6566
        %8682 = vmatpush1.bf16.msra.mxu0 %v6565
        %8683 = vmatprep.subr.bf16.mxu0 %v6562
        %8684 = vmatpush1.bf16.msra.mxu0 %v6561
        %8685 = vmatprep.subr.bf16.mxu0 %v6558
        %8686 = vmatpush1.bf16.msra.mxu0 %v6557
        %8687 = vmatprep.subr.bf16.mxu0 %v6554
        %8688 = vmatpush1.bf16.msra.mxu0 %v6553
        %8689 = vmatprep.subr.bf16.mxu0 %v6550
        %8690 = vmatpush1.bf16.msra.mxu0 %v6549
        %8691 = vmatprep.subr.bf16.mxu0 %v6610
        %8692 = vmatpush2.bf16.msra.mxu0 %v6609
        %8693 = vmatprep.subr.bf16.mxu0 %v6606
        %8694 = vmatpush2.bf16.msra.mxu0 %v6605
        %8695 = vmatprep.subr.bf16.mxu0 %v6602
        %8696 = vmatpush2.bf16.msra.mxu0 %v6601
        %8697 = vmatprep.subr.bf16.mxu0 %v6598
        %8698 = vmatpush2.bf16.msra.mxu0 %v6597
        %8699 = vmatprep.subr.bf16.mxu0 %v6594
        %8700 = vmatpush2.bf16.msra.mxu0 %v6593
        %8701 = vmatprep.subr.bf16.mxu0 %v6590
        %8702 = vmatpush2.bf16.msra.mxu0 %v6589
        %8703 = vmatprep.subr.bf16.mxu0 %v6586
        %8704 = vmatpush2.bf16.msra.mxu0 %v6585
        %8705 = vmatprep.subr.bf16.mxu0 %v6582
        %8706 = vmatpush2.bf16.msra.mxu0 %v6581
        %8707 = vmatprep.mubr.bf16.mxu0 %v2252
        %8708 = vmatmul.mubr.bf16.gmra.mxu0 %v2238
        %v8709 = vpop.f32.mrf.mxu0
        %v8710 = vadd.f32 %v8669, %v8709
        %v8711 = vpop.f32.mrf.mxu0
        %v8712 = vadd.f32 %v8671, %v8711
        %v8713 = vpop.f32.mrf.mxu0
        %v8714 = vpop.f32.mrf.mxu0
        %8715 = vdwg.mxu0
        %8716 = vmatprep.subr.bf16.mxu0 %v6642
        %8717 = vmatpush1.bf16.msra.mxu0 %v6641
        %8718 = vmatprep.subr.bf16.mxu0 %v6638
        %8719 = vmatpush1.bf16.msra.mxu0 %v6637
        %8720 = vmatprep.subr.bf16.mxu0 %v6634
        %8721 = vmatpush1.bf16.msra.mxu0 %v6633
        %8722 = vmatprep.subr.bf16.mxu0 %v6630
        %8723 = vmatpush1.bf16.msra.mxu0 %v6629
        %8724 = vmatprep.subr.bf16.mxu0 %v6626
        %8725 = vmatpush1.bf16.msra.mxu0 %v6625
        %8726 = vmatprep.subr.bf16.mxu0 %v6622
        %8727 = vmatpush1.bf16.msra.mxu0 %v6621
        %8728 = vmatprep.subr.bf16.mxu0 %v6618
        %8729 = vmatpush1.bf16.msra.mxu0 %v6617
        %8730 = vmatprep.subr.bf16.mxu0 %v6614
        %8731 = vmatpush1.bf16.msra.mxu0 %v6613
        %8732 = vmatprep.subr.bf16.mxu0 %v6674
        %8733 = vmatpush2.bf16.msra.mxu0 %v6673
        %8734 = vmatprep.subr.bf16.mxu0 %v6670
        %8735 = vmatpush2.bf16.msra.mxu0 %v6669
        %8736 = vmatprep.subr.bf16.mxu0 %v6666
        %8737 = vmatpush2.bf16.msra.mxu0 %v6665
        %8738 = vmatprep.subr.bf16.mxu0 %v6662
        %8739 = vmatpush2.bf16.msra.mxu0 %v6661
        %8740 = vmatprep.subr.bf16.mxu0 %v6658
        %8741 = vmatpush2.bf16.msra.mxu0 %v6657
        %8742 = vmatprep.subr.bf16.mxu0 %v6654
        %8743 = vmatpush2.bf16.msra.mxu0 %v6653
        %8744 = vmatprep.subr.bf16.mxu0 %v6650
        %8745 = vmatpush2.bf16.msra.mxu0 %v6649
        %8746 = vmatprep.subr.bf16.mxu0 %v6646
        %8747 = vmatpush2.bf16.msra.mxu0 %v6645
        %8748 = vmatprep.mubr.bf16.mxu0 %v2256
        %8749 = vmatmul.mubr.bf16.gmra.mxu0 %v2254
        %v8750 = vpop.f32.mrf.mxu0
        %v8751 = vadd.f32 %v8710, %v8750
        %v8752 = vpop.f32.mrf.mxu0
        %v8753 = vadd.f32 %v8712, %v8752
        %v8754 = vpop.f32.mrf.mxu0
        %v8755 = vpop.f32.mrf.mxu0
        %8756 = vdwg.mxu0
        %8757 = vmatprep.subr.bf16.mxu0 %v6706
        %8758 = vmatpush1.bf16.msra.mxu0 %v6705
        %8759 = vmatprep.subr.bf16.mxu0 %v6702
        %8760 = vmatpush1.bf16.msra.mxu0 %v6701
        %8761 = vmatprep.subr.bf16.mxu0 %v6698
        %8762 = vmatpush1.bf16.msra.mxu0 %v6697
        %8763 = vmatprep.subr.bf16.mxu0 %v6694
        %8764 = vmatpush1.bf16.msra.mxu0 %v6693
        %8765 = vmatprep.subr.bf16.mxu0 %v6690
        %8766 = vmatpush1.bf16.msra.mxu0 %v6689
        %8767 = vmatprep.subr.bf16.mxu0 %v6686
        %8768 = vmatpush1.bf16.msra.mxu0 %v6685
        %8769 = vmatprep.subr.bf16.mxu0 %v6682
        %8770 = vmatpush1.bf16.msra.mxu0 %v6681
        %8771 = vmatprep.subr.bf16.mxu0 %v6678
        %8772 = vmatpush1.bf16.msra.mxu0 %v6677
        %8773 = vmatprep.subr.bf16.mxu0 %v6738
        %8774 = vmatpush2.bf16.msra.mxu0 %v6737
        %8775 = vmatprep.subr.bf16.mxu0 %v6734
        %8776 = vmatpush2.bf16.msra.mxu0 %v6733
        %8777 = vmatprep.subr.bf16.mxu0 %v6730
        %8778 = vmatpush2.bf16.msra.mxu0 %v6729
        %8779 = vmatprep.subr.bf16.mxu0 %v6726
        %8780 = vmatpush2.bf16.msra.mxu0 %v6725
        %8781 = vmatprep.subr.bf16.mxu0 %v6722
        %8782 = vmatpush2.bf16.msra.mxu0 %v6721
        %8783 = vmatprep.subr.bf16.mxu0 %v6718
        %8784 = vmatpush2.bf16.msra.mxu0 %v6717
        %8785 = vmatprep.subr.bf16.mxu0 %v6714
        %8786 = vmatpush2.bf16.msra.mxu0 %v6713
        %8787 = vmatprep.subr.bf16.mxu0 %v6710
        %8788 = vmatpush2.bf16.msra.mxu0 %v6709
        %8789 = vmatprep.mubr.bf16.mxu0 %v2294
        %8790 = vmatmul.mubr.bf16.gmra.mxu0 %v2280
        %v8791 = vpop.f32.mrf.mxu0
        %v8792 = vadd.f32 %v8751, %v8791
        %v8793 = vpop.f32.mrf.mxu0
        %v8794 = vadd.f32 %v8753, %v8793
        %v8795 = vpop.f32.mrf.mxu0
        %v8796 = vpop.f32.mrf.mxu0
        %8797 = vdwg.mxu0
        %8798 = vmatprep.subr.bf16.mxu0 %v6770
        %8799 = vmatpush1.bf16.msra.mxu0 %v6769
        %8800 = vmatprep.subr.bf16.mxu0 %v6766
        %8801 = vmatpush1.bf16.msra.mxu0 %v6765
        %8802 = vmatprep.subr.bf16.mxu0 %v6762
        %8803 = vmatpush1.bf16.msra.mxu0 %v6761
        %8804 = vmatprep.subr.bf16.mxu0 %v6758
        %8805 = vmatpush1.bf16.msra.mxu0 %v6757
        %8806 = vmatprep.subr.bf16.mxu0 %v6754
        %8807 = vmatpush1.bf16.msra.mxu0 %v6753
        %8808 = vmatprep.subr.bf16.mxu0 %v6750
        %8809 = vmatpush1.bf16.msra.mxu0 %v6749
        %8810 = vmatprep.subr.bf16.mxu0 %v6746
        %8811 = vmatpush1.bf16.msra.mxu0 %v6745
        %8812 = vmatprep.subr.bf16.mxu0 %v6742
        %8813 = vmatpush1.bf16.msra.mxu0 %v6741
        %8814 = vmatprep.subr.bf16.mxu0 %v6802
        %8815 = vmatpush2.bf16.msra.mxu0 %v6801
        %8816 = vmatprep.subr.bf16.mxu0 %v6798
        %8817 = vmatpush2.bf16.msra.mxu0 %v6797
        %8818 = vmatprep.subr.bf16.mxu0 %v6794
        %8819 = vmatpush2.bf16.msra.mxu0 %v6793
        %8820 = vmatprep.subr.bf16.mxu0 %v6790
        %8821 = vmatpush2.bf16.msra.mxu0 %v6789
        %8822 = vmatprep.subr.bf16.mxu0 %v6786
        %8823 = vmatpush2.bf16.msra.mxu0 %v6785
        %8824 = vmatprep.subr.bf16.mxu0 %v6782
        %8825 = vmatpush2.bf16.msra.mxu0 %v6781
        %8826 = vmatprep.subr.bf16.mxu0 %v6778
        %8827 = vmatpush2.bf16.msra.mxu0 %v6777
        %8828 = vmatprep.subr.bf16.mxu0 %v6774
        %8829 = vmatpush2.bf16.msra.mxu0 %v6773
        %8830 = vmatprep.mubr.bf16.mxu0 %v2304
        %8831 = vmatmul.mubr.bf16.gmra.mxu0 %v2302
        %v8832 = vpop.f32.mrf.mxu0
        %v8833 = vadd.f32 %v8792, %v8832
        %v8834 = vpop.f32.mrf.mxu0
        %v8835 = vadd.f32 %v8794, %v8834
        %v8836 = vpop.f32.mrf.mxu0
        %v8837 = vpop.f32.mrf.mxu0
        %8838 = vdwg.mxu0
        %8839 = vmatprep.subr.bf16.mxu0 %v6834
        %8840 = vmatpush1.bf16.msra.mxu0 %v6833
        %8841 = vmatprep.subr.bf16.mxu0 %v6830
        %8842 = vmatpush1.bf16.msra.mxu0 %v6829
        %8843 = vmatprep.subr.bf16.mxu0 %v6826
        %8844 = vmatpush1.bf16.msra.mxu0 %v6825
        %8845 = vmatprep.subr.bf16.mxu0 %v6822
        %8846 = vmatpush1.bf16.msra.mxu0 %v6821
        %8847 = vmatprep.subr.bf16.mxu0 %v6818
        %8848 = vmatpush1.bf16.msra.mxu0 %v6817
        %8849 = vmatprep.subr.bf16.mxu0 %v6814
        %8850 = vmatpush1.bf16.msra.mxu0 %v6813
        %8851 = vmatprep.subr.bf16.mxu0 %v6810
        %8852 = vmatpush1.bf16.msra.mxu0 %v6809
        %8853 = vmatprep.subr.bf16.mxu0 %v6806
        %8854 = vmatpush1.bf16.msra.mxu0 %v6805
        %8855 = vmatprep.subr.bf16.mxu0 %v6866
        %8856 = vmatpush2.bf16.msra.mxu0 %v6865
        %8857 = vmatprep.subr.bf16.mxu0 %v6862
        %8858 = vmatpush2.bf16.msra.mxu0 %v6861
        %8859 = vmatprep.subr.bf16.mxu0 %v6858
        %8860 = vmatpush2.bf16.msra.mxu0 %v6857
        %8861 = vmatprep.subr.bf16.mxu0 %v6854
        %8862 = vmatpush2.bf16.msra.mxu0 %v6853
        %8863 = vmatprep.subr.bf16.mxu0 %v6850
        %8864 = vmatpush2.bf16.msra.mxu0 %v6849
        %8865 = vmatprep.subr.bf16.mxu0 %v6846
        %8866 = vmatpush2.bf16.msra.mxu0 %v6845
        %8867 = vmatprep.subr.bf16.mxu0 %v6842
        %8868 = vmatpush2.bf16.msra.mxu0 %v6841
        %8869 = vmatprep.subr.bf16.mxu0 %v6838
        %8870 = vmatpush2.bf16.msra.mxu0 %v6837
        %8871 = vmatprep.mubr.bf16.mxu0 %v2301
        %8872 = vmatmul.mubr.bf16.gmra.mxu0 %v2287
        %v8873 = vpop.f32.mrf.mxu0
        %v8874 = vadd.f32 %v8833, %v8873
        %v8875 = vpop.f32.mrf.mxu0
        %v8876 = vadd.f32 %v8835, %v8875
        %v8877 = vpop.f32.mrf.mxu0
        %v8878 = vpop.f32.mrf.mxu0
        %8879 = vdwg.mxu0
        %8880 = vmatprep.subr.bf16.mxu0 %v6898
        %8881 = vmatpush1.bf16.msra.mxu0 %v6897
        %8882 = vmatprep.subr.bf16.mxu0 %v6894
        %8883 = vmatpush1.bf16.msra.mxu0 %v6893
        %8884 = vmatprep.subr.bf16.mxu0 %v6890
        %8885 = vmatpush1.bf16.msra.mxu0 %v6889
        %8886 = vmatprep.subr.bf16.mxu0 %v6886
        %8887 = vmatpush1.bf16.msra.mxu0 %v6885
        %8888 = vmatprep.subr.bf16.mxu0 %v6882
        %8889 = vmatpush1.bf16.msra.mxu0 %v6881
        %8890 = vmatprep.subr.bf16.mxu0 %v6878
        %8891 = vmatpush1.bf16.msra.mxu0 %v6877
        %8892 = vmatprep.subr.bf16.mxu0 %v6874
        %8893 = vmatpush1.bf16.msra.mxu0 %v6873
        %8894 = vmatprep.subr.bf16.mxu0 %v6870
        %8895 = vmatpush1.bf16.msra.mxu0 %v6869
        %8896 = vmatprep.subr.bf16.mxu0 %v6930
        %8897 = vmatpush2.bf16.msra.mxu0 %v6929
        %8898 = vmatprep.subr.bf16.mxu0 %v6926
        %8899 = vmatpush2.bf16.msra.mxu0 %v6925
        %8900 = vmatprep.subr.bf16.mxu0 %v6922
        %8901 = vmatpush2.bf16.msra.mxu0 %v6921
        %8902 = vmatprep.subr.bf16.mxu0 %v6918
        %8903 = vmatpush2.bf16.msra.mxu0 %v6917
        %8904 = vmatprep.subr.bf16.mxu0 %v6914
        %8905 = vmatpush2.bf16.msra.mxu0 %v6913
        %8906 = vmatprep.subr.bf16.mxu0 %v6910
        %8907 = vmatpush2.bf16.msra.mxu0 %v6909
        %8908 = vmatprep.subr.bf16.mxu0 %v6906
        %8909 = vmatpush2.bf16.msra.mxu0 %v6905
        %8910 = vmatprep.subr.bf16.mxu0 %v6902
        %8911 = vmatpush2.bf16.msra.mxu0 %v6901
        %8912 = vmatprep.mubr.bf16.mxu0 %v2305
        %8913 = vmatmul.mubr.bf16.gmra.mxu0 %v2303
        %v8914 = vpop.f32.mrf.mxu0
        %v8915 = vadd.f32 %v8874, %v8914
        %v8916 = vpop.f32.mrf.mxu0
        %v8917 = vadd.f32 %v8876, %v8916
        %v8918 = vpop.f32.mrf.mxu0
        %v8919 = vpop.f32.mrf.mxu0
        %8920 = vdwg.mxu0
        %8921 = vmatprep.subr.bf16.mxu0 %v6962
        %8922 = vmatpush1.bf16.msra.mxu0 %v6961
        %8923 = vmatprep.subr.bf16.mxu0 %v6958
        %8924 = vmatpush1.bf16.msra.mxu0 %v6957
        %8925 = vmatprep.subr.bf16.mxu0 %v6954
        %8926 = vmatpush1.bf16.msra.mxu0 %v6953
        %8927 = vmatprep.subr.bf16.mxu0 %v6950
        %8928 = vmatpush1.bf16.msra.mxu0 %v6949
        %8929 = vmatprep.subr.bf16.mxu0 %v6946
        %8930 = vmatpush1.bf16.msra.mxu0 %v6945
        %8931 = vmatprep.subr.bf16.mxu0 %v6942
        %8932 = vmatpush1.bf16.msra.mxu0 %v6941
        %8933 = vmatprep.subr.bf16.mxu0 %v6938
        %8934 = vmatpush1.bf16.msra.mxu0 %v6937
        %8935 = vmatprep.subr.bf16.mxu0 %v6934
        %8936 = vmatpush1.bf16.msra.mxu0 %v6933
        %8937 = vmatprep.subr.bf16.mxu0 %v6994
        %8938 = vmatpush2.bf16.msra.mxu0 %v6993
        %8939 = vmatprep.subr.bf16.mxu0 %v6990
        %8940 = vmatpush2.bf16.msra.mxu0 %v6989
        %8941 = vmatprep.subr.bf16.mxu0 %v6986
        %8942 = vmatpush2.bf16.msra.mxu0 %v6985
        %8943 = vmatprep.subr.bf16.mxu0 %v6982
        %8944 = vmatpush2.bf16.msra.mxu0 %v6981
        %8945 = vmatprep.subr.bf16.mxu0 %v6978
        %8946 = vmatpush2.bf16.msra.mxu0 %v6977
        %8947 = vmatprep.subr.bf16.mxu0 %v6974
        %8948 = vmatpush2.bf16.msra.mxu0 %v6973
        %8949 = vmatprep.subr.bf16.mxu0 %v6970
        %8950 = vmatpush2.bf16.msra.mxu0 %v6969
        %8951 = vmatprep.subr.bf16.mxu0 %v6966
        %8952 = vmatpush2.bf16.msra.mxu0 %v6965
        %8953 = vmatprep.mubr.bf16.mxu0 %v2342
        %8954 = vmatmul.mubr.bf16.gmra.mxu0 %v2328
        %v8955 = vpop.f32.mrf.mxu0
        %v8956 = vadd.f32 %v8915, %v8955
        %v8957 = vpop.f32.mrf.mxu0
        %v8958 = vadd.f32 %v8917, %v8957
        %v8959 = vpop.f32.mrf.mxu0
        %v8960 = vpop.f32.mrf.mxu0
        %8961 = vdwg.mxu0
        %8962 = vmatprep.subr.bf16.mxu0 %v7026
        %8963 = vmatpush1.bf16.msra.mxu0 %v7025
        %8964 = vmatprep.subr.bf16.mxu0 %v7022
        %8965 = vmatpush1.bf16.msra.mxu0 %v7021
        %8966 = vmatprep.subr.bf16.mxu0 %v7018
        %8967 = vmatpush1.bf16.msra.mxu0 %v7017
        %8968 = vmatprep.subr.bf16.mxu0 %v7014
        %8969 = vmatpush1.bf16.msra.mxu0 %v7013
        %8970 = vmatprep.subr.bf16.mxu0 %v7010
        %8971 = vmatpush1.bf16.msra.mxu0 %v7009
        %8972 = vmatprep.subr.bf16.mxu0 %v7006
        %8973 = vmatpush1.bf16.msra.mxu0 %v7005
        %8974 = vmatprep.subr.bf16.mxu0 %v7002
        %8975 = vmatpush1.bf16.msra.mxu0 %v7001
        %8976 = vmatprep.subr.bf16.mxu0 %v6998
        %8977 = vmatpush1.bf16.msra.mxu0 %v6997
        %8978 = vmatprep.subr.bf16.mxu0 %v7058
        %8979 = vmatpush2.bf16.msra.mxu0 %v7057
        %8980 = vmatprep.subr.bf16.mxu0 %v7054
        %8981 = vmatpush2.bf16.msra.mxu0 %v7053
        %8982 = vmatprep.subr.bf16.mxu0 %v7050
        %8983 = vmatpush2.bf16.msra.mxu0 %v7049
        %8984 = vmatprep.subr.bf16.mxu0 %v7046
        %8985 = vmatpush2.bf16.msra.mxu0 %v7045
        %8986 = vmatprep.subr.bf16.mxu0 %v7042
        %8987 = vmatpush2.bf16.msra.mxu0 %v7041
        %8988 = vmatprep.subr.bf16.mxu0 %v7038
        %8989 = vmatpush2.bf16.msra.mxu0 %v7037
        %8990 = vmatprep.subr.bf16.mxu0 %v7034
        %8991 = vmatpush2.bf16.msra.mxu0 %v7033
        %8992 = vmatprep.subr.bf16.mxu0 %v7030
        %8993 = vmatpush2.bf16.msra.mxu0 %v7029
        %8994 = vmatprep.mubr.bf16.mxu0 %v2344
        %8995 = vmatmul.mubr.bf16.gmra.mxu0 %v2343
        %v8996 = vpop.f32.mrf.mxu0
        %v8997 = vadd.f32 %v8956, %v8996
        %v8998 = vpop.f32.mrf.mxu0
        %v8999 = vadd.f32 %v8958, %v8998
        %v9000 = vpop.f32.mrf.mxu0
        %v9001 = vpop.f32.mrf.mxu0
        %9002 = vdwg.mxu0
        %9003 = vmatprep.subr.bf16.mxu0 0
        %9004 = vmatpush1.bf16.msra.mxu0 0
        %9005 = vmatprep.subr.bf16.mxu0 0
        %9006 = vmatpush1.bf16.msra.mxu0 0
        %9007 = vmatprep.subr.bf16.mxu0 %v7082
        %9008 = vmatpush1.bf16.msra.mxu0 %v7081
        %9009 = vmatprep.subr.bf16.mxu0 %v7078
        %9010 = vmatpush1.bf16.msra.mxu0 %v7077
        %9011 = vmatprep.subr.bf16.mxu0 %v7074
        %9012 = vmatpush1.bf16.msra.mxu0 %v7073
        %9013 = vmatprep.subr.bf16.mxu0 %v7070
        %9014 = vmatpush1.bf16.msra.mxu0 %v7069
        %9015 = vmatprep.subr.bf16.mxu0 %v7066
        %9016 = vmatpush1.bf16.msra.mxu0 %v7065
        %9017 = vmatprep.subr.bf16.mxu0 %v7062
        %9018 = vmatpush1.bf16.msra.mxu0 %v7061
        %9019 = vmatprep.subr.bf16.mxu0 0
        %9020 = vmatpush2.bf16.msra.mxu0 0
        %9021 = vmatprep.subr.bf16.mxu0 0
        %9022 = vmatpush2.bf16.msra.mxu0 0
        %9023 = vmatprep.subr.bf16.mxu0 0
        %9024 = vmatpush2.bf16.msra.mxu0 0
        %9025 = vmatprep.subr.bf16.mxu0 0
        %9026 = vmatpush2.bf16.msra.mxu0 0
        %9027 = vmatprep.subr.bf16.mxu0 0
        %9028 = vmatpush2.bf16.msra.mxu0 0
        %9029 = vmatprep.subr.bf16.mxu0 0
        %9030 = vmatpush2.bf16.msra.mxu0 0
        %9031 = vmatprep.subr.bf16.mxu0 0
        %9032 = vmatpush2.bf16.msra.mxu0 0
        %9033 = vmatprep.subr.bf16.mxu0 0
        %9034 = vmatpush2.bf16.msra.mxu0 0
        %9035 = vmatprep.mubr.bf16.mxu0 0
        %9036 = vmatmul.mubr.bf16.gmra.mxu0 %v8263
        %v9037 = vpop.f32.mrf.mxu0
        %v9038 = vadd.f32 %v8997, %v9037
        %v9039 = vpop.f32.mrf.mxu0
        %v9040 = vadd.f32 %v8999, %v9039
        %v9041 = vpop.f32.mrf.mxu0
        %v9042 = vpop.f32.mrf.mxu0
        %9043 = vdwg.mxu0
        %9044 = vmatprep.subr.bf16.mxu0 %v5940
        %9045 = vmatpush1.bf16.msra.mxu0 %v5939
        %9046 = vmatprep.subr.bf16.mxu0 %v5936
        %9047 = vmatpush1.bf16.msra.mxu0 %v5935
        %9048 = vmatprep.subr.bf16.mxu0 %v5932
        %9049 = vmatpush1.bf16.msra.mxu0 %v5931
        %9050 = vmatprep.subr.bf16.mxu0 %v5928
        %9051 = vmatpush1.bf16.msra.mxu0 %v5927
        %9052 = vmatprep.subr.bf16.mxu0 %v5924
        %9053 = vmatpush1.bf16.msra.mxu0 %v5923
        %9054 = vmatprep.subr.bf16.mxu0 %v5920
        %9055 = vmatpush1.bf16.msra.mxu0 %v5919
        %9056 = vmatprep.subr.bf16.mxu0 %v5916
        %9057 = vmatpush1.bf16.msra.mxu0 %v5915
        %9058 = vmatprep.subr.bf16.mxu0 %v5912
        %9059 = vmatpush1.bf16.msra.mxu0 %v5911
        %9060 = vmatprep.subr.bf16.mxu0 %v5972
        %9061 = vmatpush2.bf16.msra.mxu0 %v5971
        %9062 = vmatprep.subr.bf16.mxu0 %v5968
        %9063 = vmatpush2.bf16.msra.mxu0 %v5967
        %9064 = vmatprep.subr.bf16.mxu0 %v5964
        %9065 = vmatpush2.bf16.msra.mxu0 %v5963
        %9066 = vmatprep.subr.bf16.mxu0 %v5960
        %9067 = vmatpush2.bf16.msra.mxu0 %v5959
        %9068 = vmatprep.subr.bf16.mxu0 %v5956
        %9069 = vmatpush2.bf16.msra.mxu0 %v5955
        %9070 = vmatprep.subr.bf16.mxu0 %v5952
        %9071 = vmatpush2.bf16.msra.mxu0 %v5951
        %9072 = vmatprep.subr.bf16.mxu0 %v5948
        %9073 = vmatpush2.bf16.msra.mxu0 %v5947
        %9074 = vmatprep.subr.bf16.mxu0 %v5944
        %9075 = vmatpush2.bf16.msra.mxu0 %v5943
        %9076 = vmatprep.mubr.bf16.mxu0 %v2147
        %9077 = vmatmul.mubr.bf16.gmra.mxu0 %v2133
        %v9078 = vpop.f32.mrf.mxu0
        %v9079 = vadd.f32 %v2096, %v9078
        %v9080 = vpop.f32.mrf.mxu0
        %v9081 = vadd.f32 %v2100, %v9080
        %v9082 = vpop.f32.mrf.mxu0
        %v9083 = vpop.f32.mrf.mxu0
        %9084 = vdwg.mxu0
        %9085 = vmatprep.subr.bf16.mxu0 %v6004
        %9086 = vmatpush1.bf16.msra.mxu0 %v6003
        %9087 = vmatprep.subr.bf16.mxu0 %v6000
        %9088 = vmatpush1.bf16.msra.mxu0 %v5999
        %9089 = vmatprep.subr.bf16.mxu0 %v5996
        %9090 = vmatpush1.bf16.msra.mxu0 %v5995
        %9091 = vmatprep.subr.bf16.mxu0 %v5992
        %9092 = vmatpush1.bf16.msra.mxu0 %v5991
        %9093 = vmatprep.subr.bf16.mxu0 %v5988
        %9094 = vmatpush1.bf16.msra.mxu0 %v5987
        %9095 = vmatprep.subr.bf16.mxu0 %v5984
        %9096 = vmatpush1.bf16.msra.mxu0 %v5983
        %9097 = vmatprep.subr.bf16.mxu0 %v5980
        %9098 = vmatpush1.bf16.msra.mxu0 %v5979
        %9099 = vmatprep.subr.bf16.mxu0 %v5976
        %9100 = vmatpush1.bf16.msra.mxu0 %v5975
        %9101 = vmatprep.subr.bf16.mxu0 %v6036
        %9102 = vmatpush2.bf16.msra.mxu0 %v6035
        %9103 = vmatprep.subr.bf16.mxu0 %v6032
        %9104 = vmatpush2.bf16.msra.mxu0 %v6031
        %9105 = vmatprep.subr.bf16.mxu0 %v6028
        %9106 = vmatpush2.bf16.msra.mxu0 %v6027
        %9107 = vmatprep.subr.bf16.mxu0 %v6024
        %9108 = vmatpush2.bf16.msra.mxu0 %v6023
        %9109 = vmatprep.subr.bf16.mxu0 %v6020
        %9110 = vmatpush2.bf16.msra.mxu0 %v6019
        %9111 = vmatprep.subr.bf16.mxu0 %v6016
        %9112 = vmatpush2.bf16.msra.mxu0 %v6015
        %9113 = vmatprep.subr.bf16.mxu0 %v6012
        %9114 = vmatpush2.bf16.msra.mxu0 %v6011
        %9115 = vmatprep.subr.bf16.mxu0 %v6008
        %9116 = vmatpush2.bf16.msra.mxu0 %v6007
        %9117 = vmatprep.mubr.bf16.mxu0 %v2157
        %9118 = vmatmul.mubr.bf16.gmra.mxu0 %v2155
        %v9119 = vpop.f32.mrf.mxu0
        %v9120 = vadd.f32 %v9079, %v9119
        %v9121 = vpop.f32.mrf.mxu0
        %v9122 = vadd.f32 %v9081, %v9121
        %v9123 = vpop.f32.mrf.mxu0
        %v9124 = vpop.f32.mrf.mxu0
        %9125 = vdwg.mxu0
        %9126 = vmatprep.subr.bf16.mxu0 %v6068
        %9127 = vmatpush1.bf16.msra.mxu0 %v6067
        %9128 = vmatprep.subr.bf16.mxu0 %v6064
        %9129 = vmatpush1.bf16.msra.mxu0 %v6063
        %9130 = vmatprep.subr.bf16.mxu0 %v6060
        %9131 = vmatpush1.bf16.msra.mxu0 %v6059
        %9132 = vmatprep.subr.bf16.mxu0 %v6056
        %9133 = vmatpush1.bf16.msra.mxu0 %v6055
        %9134 = vmatprep.subr.bf16.mxu0 %v6052
        %9135 = vmatpush1.bf16.msra.mxu0 %v6051
        %9136 = vmatprep.subr.bf16.mxu0 %v6048
        %9137 = vmatpush1.bf16.msra.mxu0 %v6047
        %9138 = vmatprep.subr.bf16.mxu0 %v6044
        %9139 = vmatpush1.bf16.msra.mxu0 %v6043
        %9140 = vmatprep.subr.bf16.mxu0 %v6040
        %9141 = vmatpush1.bf16.msra.mxu0 %v6039
        %9142 = vmatprep.subr.bf16.mxu0 %v6100
        %9143 = vmatpush2.bf16.msra.mxu0 %v6099
        %9144 = vmatprep.subr.bf16.mxu0 %v6096
        %9145 = vmatpush2.bf16.msra.mxu0 %v6095
        %9146 = vmatprep.subr.bf16.mxu0 %v6092
        %9147 = vmatpush2.bf16.msra.mxu0 %v6091
        %9148 = vmatprep.subr.bf16.mxu0 %v6088
        %9149 = vmatpush2.bf16.msra.mxu0 %v6087
        %9150 = vmatprep.subr.bf16.mxu0 %v6084
        %9151 = vmatpush2.bf16.msra.mxu0 %v6083
        %9152 = vmatprep.subr.bf16.mxu0 %v6080
        %9153 = vmatpush2.bf16.msra.mxu0 %v6079
        %9154 = vmatprep.subr.bf16.mxu0 %v6076
        %9155 = vmatpush2.bf16.msra.mxu0 %v6075
        %9156 = vmatprep.subr.bf16.mxu0 %v6072
        %9157 = vmatpush2.bf16.msra.mxu0 %v6071
        %9158 = vmatprep.mubr.bf16.mxu0 %v2154
        %9159 = vmatmul.mubr.bf16.gmra.mxu0 %v2140
        %v9160 = vpop.f32.mrf.mxu0
        %v9161 = vadd.f32 %v9120, %v9160
        %v9162 = vpop.f32.mrf.mxu0
        %v9163 = vadd.f32 %v9122, %v9162
        %v9164 = vpop.f32.mrf.mxu0
        %v9165 = vpop.f32.mrf.mxu0
        %9166 = vdwg.mxu0
        %9167 = vmatprep.subr.bf16.mxu0 %v6132
        %9168 = vmatpush1.bf16.msra.mxu0 %v6131
        %9169 = vmatprep.subr.bf16.mxu0 %v6128
        %9170 = vmatpush1.bf16.msra.mxu0 %v6127
        %9171 = vmatprep.subr.bf16.mxu0 %v6124
        %9172 = vmatpush1.bf16.msra.mxu0 %v6123
        %9173 = vmatprep.subr.bf16.mxu0 %v6120
        %9174 = vmatpush1.bf16.msra.mxu0 %v6119
        %9175 = vmatprep.subr.bf16.mxu0 %v6116
        %9176 = vmatpush1.bf16.msra.mxu0 %v6115
        %9177 = vmatprep.subr.bf16.mxu0 %v6112
        %9178 = vmatpush1.bf16.msra.mxu0 %v6111
        %9179 = vmatprep.subr.bf16.mxu0 %v6108
        %9180 = vmatpush1.bf16.msra.mxu0 %v6107
        %9181 = vmatprep.subr.bf16.mxu0 %v6104
        %9182 = vmatpush1.bf16.msra.mxu0 %v6103
        %9183 = vmatprep.subr.bf16.mxu0 %v6164
        %9184 = vmatpush2.bf16.msra.mxu0 %v6163
        %9185 = vmatprep.subr.bf16.mxu0 %v6160
        %9186 = vmatpush2.bf16.msra.mxu0 %v6159
        %9187 = vmatprep.subr.bf16.mxu0 %v6156
        %9188 = vmatpush2.bf16.msra.mxu0 %v6155
        %9189 = vmatprep.subr.bf16.mxu0 %v6152
        %9190 = vmatpush2.bf16.msra.mxu0 %v6151
        %9191 = vmatprep.subr.bf16.mxu0 %v6148
        %9192 = vmatpush2.bf16.msra.mxu0 %v6147
        %9193 = vmatprep.subr.bf16.mxu0 %v6144
        %9194 = vmatpush2.bf16.msra.mxu0 %v6143
        %9195 = vmatprep.subr.bf16.mxu0 %v6140
        %9196 = vmatpush2.bf16.msra.mxu0 %v6139
        %9197 = vmatprep.subr.bf16.mxu0 %v6136
        %9198 = vmatpush2.bf16.msra.mxu0 %v6135
        %9199 = vmatprep.mubr.bf16.mxu0 %v2158
        %9200 = vmatmul.mubr.bf16.gmra.mxu0 %v2156
        %v9201 = vpop.f32.mrf.mxu0
        %v9202 = vadd.f32 %v9161, %v9201
        %v9203 = vpop.f32.mrf.mxu0
        %v9204 = vadd.f32 %v9163, %v9203
        %v9205 = vpop.f32.mrf.mxu0
        %v9206 = vpop.f32.mrf.mxu0
        %9207 = vdwg.mxu0
        %9208 = vmatprep.subr.bf16.mxu0 %v6196
        %9209 = vmatpush1.bf16.msra.mxu0 %v6195
        %9210 = vmatprep.subr.bf16.mxu0 %v6192
        %9211 = vmatpush1.bf16.msra.mxu0 %v6191
        %9212 = vmatprep.subr.bf16.mxu0 %v6188
        %9213 = vmatpush1.bf16.msra.mxu0 %v6187
        %9214 = vmatprep.subr.bf16.mxu0 %v6184
        %9215 = vmatpush1.bf16.msra.mxu0 %v6183
        %9216 = vmatprep.subr.bf16.mxu0 %v6180
        %9217 = vmatpush1.bf16.msra.mxu0 %v6179
        %9218 = vmatprep.subr.bf16.mxu0 %v6176
        %9219 = vmatpush1.bf16.msra.mxu0 %v6175
        %9220 = vmatprep.subr.bf16.mxu0 %v6172
        %9221 = vmatpush1.bf16.msra.mxu0 %v6171
        %9222 = vmatprep.subr.bf16.mxu0 %v6168
        %9223 = vmatpush1.bf16.msra.mxu0 %v6167
        %9224 = vmatprep.subr.bf16.mxu0 %v6228
        %9225 = vmatpush2.bf16.msra.mxu0 %v6227
        %9226 = vmatprep.subr.bf16.mxu0 %v6224
        %9227 = vmatpush2.bf16.msra.mxu0 %v6223
        %9228 = vmatprep.subr.bf16.mxu0 %v6220
        %9229 = vmatpush2.bf16.msra.mxu0 %v6219
        %9230 = vmatprep.subr.bf16.mxu0 %v6216
        %9231 = vmatpush2.bf16.msra.mxu0 %v6215
        %9232 = vmatprep.subr.bf16.mxu0 %v6212
        %9233 = vmatpush2.bf16.msra.mxu0 %v6211
        %9234 = vmatprep.subr.bf16.mxu0 %v6208
        %9235 = vmatpush2.bf16.msra.mxu0 %v6207
        %9236 = vmatprep.subr.bf16.mxu0 %v6204
        %9237 = vmatpush2.bf16.msra.mxu0 %v6203
        %9238 = vmatprep.subr.bf16.mxu0 %v6200
        %9239 = vmatpush2.bf16.msra.mxu0 %v6199
        %9240 = vmatprep.mubr.bf16.mxu0 %v2196
        %9241 = vmatmul.mubr.bf16.gmra.mxu0 %v2182
        %v9242 = vpop.f32.mrf.mxu0
        %v9243 = vadd.f32 %v9202, %v9242
        %v9244 = vpop.f32.mrf.mxu0
        %v9245 = vadd.f32 %v9204, %v9244
        %v9246 = vpop.f32.mrf.mxu0
        %v9247 = vpop.f32.mrf.mxu0
        %9248 = vdwg.mxu0
        %9249 = vmatprep.subr.bf16.mxu0 %v6260
        %9250 = vmatpush1.bf16.msra.mxu0 %v6259
        %9251 = vmatprep.subr.bf16.mxu0 %v6256
        %9252 = vmatpush1.bf16.msra.mxu0 %v6255
        %9253 = vmatprep.subr.bf16.mxu0 %v6252
        %9254 = vmatpush1.bf16.msra.mxu0 %v6251
        %9255 = vmatprep.subr.bf16.mxu0 %v6248
        %9256 = vmatpush1.bf16.msra.mxu0 %v6247
        %9257 = vmatprep.subr.bf16.mxu0 %v6244
        %9258 = vmatpush1.bf16.msra.mxu0 %v6243
        %9259 = vmatprep.subr.bf16.mxu0 %v6240
        %9260 = vmatpush1.bf16.msra.mxu0 %v6239
        %9261 = vmatprep.subr.bf16.mxu0 %v6236
        %9262 = vmatpush1.bf16.msra.mxu0 %v6235
        %9263 = vmatprep.subr.bf16.mxu0 %v6232
        %9264 = vmatpush1.bf16.msra.mxu0 %v6231
        %9265 = vmatprep.subr.bf16.mxu0 %v6292
        %9266 = vmatpush2.bf16.msra.mxu0 %v6291
        %9267 = vmatprep.subr.bf16.mxu0 %v6288
        %9268 = vmatpush2.bf16.msra.mxu0 %v6287
        %9269 = vmatprep.subr.bf16.mxu0 %v6284
        %9270 = vmatpush2.bf16.msra.mxu0 %v6283
        %9271 = vmatprep.subr.bf16.mxu0 %v6280
        %9272 = vmatpush2.bf16.msra.mxu0 %v6279
        %9273 = vmatprep.subr.bf16.mxu0 %v6276
        %9274 = vmatpush2.bf16.msra.mxu0 %v6275
        %9275 = vmatprep.subr.bf16.mxu0 %v6272
        %9276 = vmatpush2.bf16.msra.mxu0 %v6271
        %9277 = vmatprep.subr.bf16.mxu0 %v6268
        %9278 = vmatpush2.bf16.msra.mxu0 %v6267
        %9279 = vmatprep.subr.bf16.mxu0 %v6264
        %9280 = vmatpush2.bf16.msra.mxu0 %v6263
        %9281 = vmatprep.mubr.bf16.mxu0 %v2206
        %9282 = vmatmul.mubr.bf16.gmra.mxu0 %v2204
        %v9283 = vpop.f32.mrf.mxu0
        %v9284 = vadd.f32 %v9243, %v9283
        %v9285 = vpop.f32.mrf.mxu0
        %v9286 = vadd.f32 %v9245, %v9285
        %v9287 = vpop.f32.mrf.mxu0
        %v9288 = vpop.f32.mrf.mxu0
        %9289 = vdwg.mxu0
        %9290 = vmatprep.subr.bf16.mxu0 %v6324
        %9291 = vmatpush1.bf16.msra.mxu0 %v6323
        %9292 = vmatprep.subr.bf16.mxu0 %v6320
        %9293 = vmatpush1.bf16.msra.mxu0 %v6319
        %9294 = vmatprep.subr.bf16.mxu0 %v6316
        %9295 = vmatpush1.bf16.msra.mxu0 %v6315
        %9296 = vmatprep.subr.bf16.mxu0 %v6312
        %9297 = vmatpush1.bf16.msra.mxu0 %v6311
        %9298 = vmatprep.subr.bf16.mxu0 %v6308
        %9299 = vmatpush1.bf16.msra.mxu0 %v6307
        %9300 = vmatprep.subr.bf16.mxu0 %v6304
        %9301 = vmatpush1.bf16.msra.mxu0 %v6303
        %9302 = vmatprep.subr.bf16.mxu0 %v6300
        %9303 = vmatpush1.bf16.msra.mxu0 %v6299
        %9304 = vmatprep.subr.bf16.mxu0 %v6296
        %9305 = vmatpush1.bf16.msra.mxu0 %v6295
        %9306 = vmatprep.subr.bf16.mxu0 %v6356
        %9307 = vmatpush2.bf16.msra.mxu0 %v6355
        %9308 = vmatprep.subr.bf16.mxu0 %v6352
        %9309 = vmatpush2.bf16.msra.mxu0 %v6351
        %9310 = vmatprep.subr.bf16.mxu0 %v6348
        %9311 = vmatpush2.bf16.msra.mxu0 %v6347
        %9312 = vmatprep.subr.bf16.mxu0 %v6344
        %9313 = vmatpush2.bf16.msra.mxu0 %v6343
        %9314 = vmatprep.subr.bf16.mxu0 %v6340
        %9315 = vmatpush2.bf16.msra.mxu0 %v6339
        %9316 = vmatprep.subr.bf16.mxu0 %v6336
        %9317 = vmatpush2.bf16.msra.mxu0 %v6335
        %9318 = vmatprep.subr.bf16.mxu0 %v6332
        %9319 = vmatpush2.bf16.msra.mxu0 %v6331
        %9320 = vmatprep.subr.bf16.mxu0 %v6328
        %9321 = vmatpush2.bf16.msra.mxu0 %v6327
        %9322 = vmatprep.mubr.bf16.mxu0 %v2203
        %9323 = vmatmul.mubr.bf16.gmra.mxu0 %v2189
        %v9324 = vpop.f32.mrf.mxu0
        %v9325 = vadd.f32 %v9284, %v9324
        %v9326 = vpop.f32.mrf.mxu0
        %v9327 = vadd.f32 %v9286, %v9326
        %v9328 = vpop.f32.mrf.mxu0
        %v9329 = vpop.f32.mrf.mxu0
        %9330 = vdwg.mxu0
        %9331 = vmatprep.subr.bf16.mxu0 %v6388
        %9332 = vmatpush1.bf16.msra.mxu0 %v6387
        %9333 = vmatprep.subr.bf16.mxu0 %v6384
        %9334 = vmatpush1.bf16.msra.mxu0 %v6383
        %9335 = vmatprep.subr.bf16.mxu0 %v6380
        %9336 = vmatpush1.bf16.msra.mxu0 %v6379
        %9337 = vmatprep.subr.bf16.mxu0 %v6376
        %9338 = vmatpush1.bf16.msra.mxu0 %v6375
        %9339 = vmatprep.subr.bf16.mxu0 %v6372
        %9340 = vmatpush1.bf16.msra.mxu0 %v6371
        %9341 = vmatprep.subr.bf16.mxu0 %v6368
        %9342 = vmatpush1.bf16.msra.mxu0 %v6367
        %9343 = vmatprep.subr.bf16.mxu0 %v6364
        %9344 = vmatpush1.bf16.msra.mxu0 %v6363
        %9345 = vmatprep.subr.bf16.mxu0 %v6360
        %9346 = vmatpush1.bf16.msra.mxu0 %v6359
        %9347 = vmatprep.subr.bf16.mxu0 %v6420
        %9348 = vmatpush2.bf16.msra.mxu0 %v6419
        %9349 = vmatprep.subr.bf16.mxu0 %v6416
        %9350 = vmatpush2.bf16.msra.mxu0 %v6415
        %9351 = vmatprep.subr.bf16.mxu0 %v6412
        %9352 = vmatpush2.bf16.msra.mxu0 %v6411
        %9353 = vmatprep.subr.bf16.mxu0 %v6408
        %9354 = vmatpush2.bf16.msra.mxu0 %v6407
        %9355 = vmatprep.subr.bf16.mxu0 %v6404
        %9356 = vmatpush2.bf16.msra.mxu0 %v6403
        %9357 = vmatprep.subr.bf16.mxu0 %v6400
        %9358 = vmatpush2.bf16.msra.mxu0 %v6399
        %9359 = vmatprep.subr.bf16.mxu0 %v6396
        %9360 = vmatpush2.bf16.msra.mxu0 %v6395
        %9361 = vmatprep.subr.bf16.mxu0 %v6392
        %9362 = vmatpush2.bf16.msra.mxu0 %v6391
        %9363 = vmatprep.mubr.bf16.mxu0 %v2207
        %9364 = vmatmul.mubr.bf16.gmra.mxu0 %v2205
        %v9365 = vpop.f32.mrf.mxu0
        %v9366 = vadd.f32 %v9325, %v9365
        %v9367 = vpop.f32.mrf.mxu0
        %v9368 = vadd.f32 %v9327, %v9367
        %v9369 = vpop.f32.mrf.mxu0
        %v9370 = vpop.f32.mrf.mxu0
        %9371 = vdwg.mxu0
        %9372 = vmatprep.subr.bf16.mxu0 %v6452
        %9373 = vmatpush1.bf16.msra.mxu0 %v6451
        %9374 = vmatprep.subr.bf16.mxu0 %v6448
        %9375 = vmatpush1.bf16.msra.mxu0 %v6447
        %9376 = vmatprep.subr.bf16.mxu0 %v6444
        %9377 = vmatpush1.bf16.msra.mxu0 %v6443
        %9378 = vmatprep.subr.bf16.mxu0 %v6440
        %9379 = vmatpush1.bf16.msra.mxu0 %v6439
        %9380 = vmatprep.subr.bf16.mxu0 %v6436
        %9381 = vmatpush1.bf16.msra.mxu0 %v6435
        %9382 = vmatprep.subr.bf16.mxu0 %v6432
        %9383 = vmatpush1.bf16.msra.mxu0 %v6431
        %9384 = vmatprep.subr.bf16.mxu0 %v6428
        %9385 = vmatpush1.bf16.msra.mxu0 %v6427
        %9386 = vmatprep.subr.bf16.mxu0 %v6424
        %9387 = vmatpush1.bf16.msra.mxu0 %v6423
        %9388 = vmatprep.subr.bf16.mxu0 %v6484
        %9389 = vmatpush2.bf16.msra.mxu0 %v6483
        %9390 = vmatprep.subr.bf16.mxu0 %v6480
        %9391 = vmatpush2.bf16.msra.mxu0 %v6479
        %9392 = vmatprep.subr.bf16.mxu0 %v6476
        %9393 = vmatpush2.bf16.msra.mxu0 %v6475
        %9394 = vmatprep.subr.bf16.mxu0 %v6472
        %9395 = vmatpush2.bf16.msra.mxu0 %v6471
        %9396 = vmatprep.subr.bf16.mxu0 %v6468
        %9397 = vmatpush2.bf16.msra.mxu0 %v6467
        %9398 = vmatprep.subr.bf16.mxu0 %v6464
        %9399 = vmatpush2.bf16.msra.mxu0 %v6463
        %9400 = vmatprep.subr.bf16.mxu0 %v6460
        %9401 = vmatpush2.bf16.msra.mxu0 %v6459
        %9402 = vmatprep.subr.bf16.mxu0 %v6456
        %9403 = vmatpush2.bf16.msra.mxu0 %v6455
        %9404 = vmatprep.mubr.bf16.mxu0 %v2245
        %9405 = vmatmul.mubr.bf16.gmra.mxu0 %v2231
        %v9406 = vpop.f32.mrf.mxu0
        %v9407 = vadd.f32 %v9366, %v9406
        %v9408 = vpop.f32.mrf.mxu0
        %v9409 = vadd.f32 %v9368, %v9408
        %v9410 = vpop.f32.mrf.mxu0
        %v9411 = vpop.f32.mrf.mxu0
        %9412 = vdwg.mxu0
        %9413 = vmatprep.subr.bf16.mxu0 %v6516
        %9414 = vmatpush1.bf16.msra.mxu0 %v6515
        %9415 = vmatprep.subr.bf16.mxu0 %v6512
        %9416 = vmatpush1.bf16.msra.mxu0 %v6511
        %9417 = vmatprep.subr.bf16.mxu0 %v6508
        %9418 = vmatpush1.bf16.msra.mxu0 %v6507
        %9419 = vmatprep.subr.bf16.mxu0 %v6504
        %9420 = vmatpush1.bf16.msra.mxu0 %v6503
        %9421 = vmatprep.subr.bf16.mxu0 %v6500
        %9422 = vmatpush1.bf16.msra.mxu0 %v6499
        %9423 = vmatprep.subr.bf16.mxu0 %v6496
        %9424 = vmatpush1.bf16.msra.mxu0 %v6495
        %9425 = vmatprep.subr.bf16.mxu0 %v6492
        %9426 = vmatpush1.bf16.msra.mxu0 %v6491
        %9427 = vmatprep.subr.bf16.mxu0 %v6488
        %9428 = vmatpush1.bf16.msra.mxu0 %v6487
        %9429 = vmatprep.subr.bf16.mxu0 %v6548
        %9430 = vmatpush2.bf16.msra.mxu0 %v6547
        %9431 = vmatprep.subr.bf16.mxu0 %v6544
        %9432 = vmatpush2.bf16.msra.mxu0 %v6543
        %9433 = vmatprep.subr.bf16.mxu0 %v6540
        %9434 = vmatpush2.bf16.msra.mxu0 %v6539
        %9435 = vmatprep.subr.bf16.mxu0 %v6536
        %9436 = vmatpush2.bf16.msra.mxu0 %v6535
        %9437 = vmatprep.subr.bf16.mxu0 %v6532
        %9438 = vmatpush2.bf16.msra.mxu0 %v6531
        %9439 = vmatprep.subr.bf16.mxu0 %v6528
        %9440 = vmatpush2.bf16.msra.mxu0 %v6527
        %9441 = vmatprep.subr.bf16.mxu0 %v6524
        %9442 = vmatpush2.bf16.msra.mxu0 %v6523
        %9443 = vmatprep.subr.bf16.mxu0 %v6520
        %9444 = vmatpush2.bf16.msra.mxu0 %v6519
        %9445 = vmatprep.mubr.bf16.mxu0 %v2255
        %9446 = vmatmul.mubr.bf16.gmra.mxu0 %v2253
        %v9447 = vpop.f32.mrf.mxu0
        %v9448 = vadd.f32 %v9407, %v9447
        %v9449 = vpop.f32.mrf.mxu0
        %v9450 = vadd.f32 %v9409, %v9449
        %v9451 = vpop.f32.mrf.mxu0
        %v9452 = vpop.f32.mrf.mxu0
        %9453 = vdwg.mxu0
        %9454 = vmatprep.subr.bf16.mxu0 %v6580
        %9455 = vmatpush1.bf16.msra.mxu0 %v6579
        %9456 = vmatprep.subr.bf16.mxu0 %v6576
        %9457 = vmatpush1.bf16.msra.mxu0 %v6575
        %9458 = vmatprep.subr.bf16.mxu0 %v6572
        %9459 = vmatpush1.bf16.msra.mxu0 %v6571
        %9460 = vmatprep.subr.bf16.mxu0 %v6568
        %9461 = vmatpush1.bf16.msra.mxu0 %v6567
        %9462 = vmatprep.subr.bf16.mxu0 %v6564
        %9463 = vmatpush1.bf16.msra.mxu0 %v6563
        %9464 = vmatprep.subr.bf16.mxu0 %v6560
        %9465 = vmatpush1.bf16.msra.mxu0 %v6559
        %9466 = vmatprep.subr.bf16.mxu0 %v6556
        %9467 = vmatpush1.bf16.msra.mxu0 %v6555
        %9468 = vmatprep.subr.bf16.mxu0 %v6552
        %9469 = vmatpush1.bf16.msra.mxu0 %v6551
        %9470 = vmatprep.subr.bf16.mxu0 %v6612
        %9471 = vmatpush2.bf16.msra.mxu0 %v6611
        %9472 = vmatprep.subr.bf16.mxu0 %v6608
        %9473 = vmatpush2.bf16.msra.mxu0 %v6607
        %9474 = vmatprep.subr.bf16.mxu0 %v6604
        %9475 = vmatpush2.bf16.msra.mxu0 %v6603
        %9476 = vmatprep.subr.bf16.mxu0 %v6600
        %9477 = vmatpush2.bf16.msra.mxu0 %v6599
        %9478 = vmatprep.subr.bf16.mxu0 %v6596
        %9479 = vmatpush2.bf16.msra.mxu0 %v6595
        %9480 = vmatprep.subr.bf16.mxu0 %v6592
        %9481 = vmatpush2.bf16.msra.mxu0 %v6591
        %9482 = vmatprep.subr.bf16.mxu0 %v6588
        %9483 = vmatpush2.bf16.msra.mxu0 %v6587
        %9484 = vmatprep.subr.bf16.mxu0 %v6584
        %9485 = vmatpush2.bf16.msra.mxu0 %v6583
        %9486 = vmatprep.mubr.bf16.mxu0 %v2252
        %9487 = vmatmul.mubr.bf16.gmra.mxu0 %v2238
        %v9488 = vpop.f32.mrf.mxu0
        %v9489 = vadd.f32 %v9448, %v9488
        %v9490 = vpop.f32.mrf.mxu0
        %v9491 = vadd.f32 %v9450, %v9490
        %v9492 = vpop.f32.mrf.mxu0
        %v9493 = vpop.f32.mrf.mxu0
        %9494 = vdwg.mxu0
        %9495 = vmatprep.subr.bf16.mxu0 %v6644
        %9496 = vmatpush1.bf16.msra.mxu0 %v6643
        %9497 = vmatprep.subr.bf16.mxu0 %v6640
        %9498 = vmatpush1.bf16.msra.mxu0 %v6639
        %9499 = vmatprep.subr.bf16.mxu0 %v6636
        %9500 = vmatpush1.bf16.msra.mxu0 %v6635
        %9501 = vmatprep.subr.bf16.mxu0 %v6632
        %9502 = vmatpush1.bf16.msra.mxu0 %v6631
        %9503 = vmatprep.subr.bf16.mxu0 %v6628
        %9504 = vmatpush1.bf16.msra.mxu0 %v6627
        %9505 = vmatprep.subr.bf16.mxu0 %v6624
        %9506 = vmatpush1.bf16.msra.mxu0 %v6623
        %9507 = vmatprep.subr.bf16.mxu0 %v6620
        %9508 = vmatpush1.bf16.msra.mxu0 %v6619
        %9509 = vmatprep.subr.bf16.mxu0 %v6616
        %9510 = vmatpush1.bf16.msra.mxu0 %v6615
        %9511 = vmatprep.subr.bf16.mxu0 %v6676
        %9512 = vmatpush2.bf16.msra.mxu0 %v6675
        %9513 = vmatprep.subr.bf16.mxu0 %v6672
        %9514 = vmatpush2.bf16.msra.mxu0 %v6671
        %9515 = vmatprep.subr.bf16.mxu0 %v6668
        %9516 = vmatpush2.bf16.msra.mxu0 %v6667
        %9517 = vmatprep.subr.bf16.mxu0 %v6664
        %9518 = vmatpush2.bf16.msra.mxu0 %v6663
        %9519 = vmatprep.subr.bf16.mxu0 %v6660
        %9520 = vmatpush2.bf16.msra.mxu0 %v6659
        %9521 = vmatprep.subr.bf16.mxu0 %v6656
        %9522 = vmatpush2.bf16.msra.mxu0 %v6655
        %9523 = vmatprep.subr.bf16.mxu0 %v6652
        %9524 = vmatpush2.bf16.msra.mxu0 %v6651
        %9525 = vmatprep.subr.bf16.mxu0 %v6648
        %9526 = vmatpush2.bf16.msra.mxu0 %v6647
        %9527 = vmatprep.mubr.bf16.mxu0 %v2256
        %9528 = vmatmul.mubr.bf16.gmra.mxu0 %v2254
        %v9529 = vpop.f32.mrf.mxu0
        %v9530 = vadd.f32 %v9489, %v9529
        %v9531 = vpop.f32.mrf.mxu0
        %v9532 = vadd.f32 %v9491, %v9531
        %v9533 = vpop.f32.mrf.mxu0
        %v9534 = vpop.f32.mrf.mxu0
        %9535 = vdwg.mxu0
        %9536 = vmatprep.subr.bf16.mxu0 %v6708
        %9537 = vmatpush1.bf16.msra.mxu0 %v6707
        %9538 = vmatprep.subr.bf16.mxu0 %v6704
        %9539 = vmatpush1.bf16.msra.mxu0 %v6703
        %9540 = vmatprep.subr.bf16.mxu0 %v6700
        %9541 = vmatpush1.bf16.msra.mxu0 %v6699
        %9542 = vmatprep.subr.bf16.mxu0 %v6696
        %9543 = vmatpush1.bf16.msra.mxu0 %v6695
        %9544 = vmatprep.subr.bf16.mxu0 %v6692
        %9545 = vmatpush1.bf16.msra.mxu0 %v6691
        %9546 = vmatprep.subr.bf16.mxu0 %v6688
        %9547 = vmatpush1.bf16.msra.mxu0 %v6687
        %9548 = vmatprep.subr.bf16.mxu0 %v6684
        %9549 = vmatpush1.bf16.msra.mxu0 %v6683
        %9550 = vmatprep.subr.bf16.mxu0 %v6680
        %9551 = vmatpush1.bf16.msra.mxu0 %v6679
        %9552 = vmatprep.subr.bf16.mxu0 %v6740
        %9553 = vmatpush2.bf16.msra.mxu0 %v6739
        %9554 = vmatprep.subr.bf16.mxu0 %v6736
        %9555 = vmatpush2.bf16.msra.mxu0 %v6735
        %9556 = vmatprep.subr.bf16.mxu0 %v6732
        %9557 = vmatpush2.bf16.msra.mxu0 %v6731
        %9558 = vmatprep.subr.bf16.mxu0 %v6728
        %9559 = vmatpush2.bf16.msra.mxu0 %v6727
        %9560 = vmatprep.subr.bf16.mxu0 %v6724
        %9561 = vmatpush2.bf16.msra.mxu0 %v6723
        %9562 = vmatprep.subr.bf16.mxu0 %v6720
        %9563 = vmatpush2.bf16.msra.mxu0 %v6719
        %9564 = vmatprep.subr.bf16.mxu0 %v6716
        %9565 = vmatpush2.bf16.msra.mxu0 %v6715
        %9566 = vmatprep.subr.bf16.mxu0 %v6712
        %9567 = vmatpush2.bf16.msra.mxu0 %v6711
        %9568 = vmatprep.mubr.bf16.mxu0 %v2294
        %9569 = vmatmul.mubr.bf16.gmra.mxu0 %v2280
        %v9570 = vpop.f32.mrf.mxu0
        %v9571 = vadd.f32 %v9530, %v9570
        %v9572 = vpop.f32.mrf.mxu0
        %v9573 = vadd.f32 %v9532, %v9572
        %v9574 = vpop.f32.mrf.mxu0
        %v9575 = vpop.f32.mrf.mxu0
        %9576 = vdwg.mxu0
        %9577 = vmatprep.subr.bf16.mxu0 %v6772
        %9578 = vmatpush1.bf16.msra.mxu0 %v6771
        %9579 = vmatprep.subr.bf16.mxu0 %v6768
        %9580 = vmatpush1.bf16.msra.mxu0 %v6767
        %9581 = vmatprep.subr.bf16.mxu0 %v6764
        %9582 = vmatpush1.bf16.msra.mxu0 %v6763
        %9583 = vmatprep.subr.bf16.mxu0 %v6760
        %9584 = vmatpush1.bf16.msra.mxu0 %v6759
        %9585 = vmatprep.subr.bf16.mxu0 %v6756
        %9586 = vmatpush1.bf16.msra.mxu0 %v6755
        %9587 = vmatprep.subr.bf16.mxu0 %v6752
        %9588 = vmatpush1.bf16.msra.mxu0 %v6751
        %9589 = vmatprep.subr.bf16.mxu0 %v6748
        %9590 = vmatpush1.bf16.msra.mxu0 %v6747
        %9591 = vmatprep.subr.bf16.mxu0 %v6744
        %9592 = vmatpush1.bf16.msra.mxu0 %v6743
        %9593 = vmatprep.subr.bf16.mxu0 %v6804
        %9594 = vmatpush2.bf16.msra.mxu0 %v6803
        %9595 = vmatprep.subr.bf16.mxu0 %v6800
        %9596 = vmatpush2.bf16.msra.mxu0 %v6799
        %9597 = vmatprep.subr.bf16.mxu0 %v6796
        %9598 = vmatpush2.bf16.msra.mxu0 %v6795
        %9599 = vmatprep.subr.bf16.mxu0 %v6792
        %9600 = vmatpush2.bf16.msra.mxu0 %v6791
        %9601 = vmatprep.subr.bf16.mxu0 %v6788
        %9602 = vmatpush2.bf16.msra.mxu0 %v6787
        %9603 = vmatprep.subr.bf16.mxu0 %v6784
        %9604 = vmatpush2.bf16.msra.mxu0 %v6783
        %9605 = vmatprep.subr.bf16.mxu0 %v6780
        %9606 = vmatpush2.bf16.msra.mxu0 %v6779
        %9607 = vmatprep.subr.bf16.mxu0 %v6776
        %9608 = vmatpush2.bf16.msra.mxu0 %v6775
        %9609 = vmatprep.mubr.bf16.mxu0 %v2304
        %9610 = vmatmul.mubr.bf16.gmra.mxu0 %v2302
        %v9611 = vpop.f32.mrf.mxu0
        %v9612 = vadd.f32 %v9571, %v9611
        %v9613 = vpop.f32.mrf.mxu0
        %v9614 = vadd.f32 %v9573, %v9613
        %v9615 = vpop.f32.mrf.mxu0
        %v9616 = vpop.f32.mrf.mxu0
        %9617 = vdwg.mxu0
        %9618 = vmatprep.subr.bf16.mxu0 %v6836
        %9619 = vmatpush1.bf16.msra.mxu0 %v6835
        %9620 = vmatprep.subr.bf16.mxu0 %v6832
        %9621 = vmatpush1.bf16.msra.mxu0 %v6831
        %9622 = vmatprep.subr.bf16.mxu0 %v6828
        %9623 = vmatpush1.bf16.msra.mxu0 %v6827
        %9624 = vmatprep.subr.bf16.mxu0 %v6824
        %9625 = vmatpush1.bf16.msra.mxu0 %v6823
        %9626 = vmatprep.subr.bf16.mxu0 %v6820
        %9627 = vmatpush1.bf16.msra.mxu0 %v6819
        %9628 = vmatprep.subr.bf16.mxu0 %v6816
        %9629 = vmatpush1.bf16.msra.mxu0 %v6815
        %9630 = vmatprep.subr.bf16.mxu0 %v6812
        %9631 = vmatpush1.bf16.msra.mxu0 %v6811
        %9632 = vmatprep.subr.bf16.mxu0 %v6808
        %9633 = vmatpush1.bf16.msra.mxu0 %v6807
        %9634 = vmatprep.subr.bf16.mxu0 %v6868
        %9635 = vmatpush2.bf16.msra.mxu0 %v6867
        %9636 = vmatprep.subr.bf16.mxu0 %v6864
        %9637 = vmatpush2.bf16.msra.mxu0 %v6863
        %9638 = vmatprep.subr.bf16.mxu0 %v6860
        %9639 = vmatpush2.bf16.msra.mxu0 %v6859
        %9640 = vmatprep.subr.bf16.mxu0 %v6856
        %9641 = vmatpush2.bf16.msra.mxu0 %v6855
        %9642 = vmatprep.subr.bf16.mxu0 %v6852
        %9643 = vmatpush2.bf16.msra.mxu0 %v6851
        %9644 = vmatprep.subr.bf16.mxu0 %v6848
        %9645 = vmatpush2.bf16.msra.mxu0 %v6847
        %9646 = vmatprep.subr.bf16.mxu0 %v6844
        %9647 = vmatpush2.bf16.msra.mxu0 %v6843
        %9648 = vmatprep.subr.bf16.mxu0 %v6840
        %9649 = vmatpush2.bf16.msra.mxu0 %v6839
        %9650 = vmatprep.mubr.bf16.mxu0 %v2301
        %9651 = vmatmul.mubr.bf16.gmra.mxu0 %v2287
        %v9652 = vpop.f32.mrf.mxu0
        %v9653 = vadd.f32 %v9612, %v9652
        %v9654 = vpop.f32.mrf.mxu0
        %v9655 = vadd.f32 %v9614, %v9654
        %v9656 = vpop.f32.mrf.mxu0
        %v9657 = vpop.f32.mrf.mxu0
        %9658 = vdwg.mxu0
        %9659 = vmatprep.subr.bf16.mxu0 %v6900
        %9660 = vmatpush1.bf16.msra.mxu0 %v6899
        %9661 = vmatprep.subr.bf16.mxu0 %v6896
        %9662 = vmatpush1.bf16.msra.mxu0 %v6895
        %9663 = vmatprep.subr.bf16.mxu0 %v6892
        %9664 = vmatpush1.bf16.msra.mxu0 %v6891
        %9665 = vmatprep.subr.bf16.mxu0 %v6888
        %9666 = vmatpush1.bf16.msra.mxu0 %v6887
        %9667 = vmatprep.subr.bf16.mxu0 %v6884
        %9668 = vmatpush1.bf16.msra.mxu0 %v6883
        %9669 = vmatprep.subr.bf16.mxu0 %v6880
        %9670 = vmatpush1.bf16.msra.mxu0 %v6879
        %9671 = vmatprep.subr.bf16.mxu0 %v6876
        %9672 = vmatpush1.bf16.msra.mxu0 %v6875
        %9673 = vmatprep.subr.bf16.mxu0 %v6872
        %9674 = vmatpush1.bf16.msra.mxu0 %v6871
        %9675 = vmatprep.subr.bf16.mxu0 %v6932
        %9676 = vmatpush2.bf16.msra.mxu0 %v6931
        %9677 = vmatprep.subr.bf16.mxu0 %v6928
        %9678 = vmatpush2.bf16.msra.mxu0 %v6927
        %9679 = vmatprep.subr.bf16.mxu0 %v6924
        %9680 = vmatpush2.bf16.msra.mxu0 %v6923
        %9681 = vmatprep.subr.bf16.mxu0 %v6920
        %9682 = vmatpush2.bf16.msra.mxu0 %v6919
        %9683 = vmatprep.subr.bf16.mxu0 %v6916
        %9684 = vmatpush2.bf16.msra.mxu0 %v6915
        %9685 = vmatprep.subr.bf16.mxu0 %v6912
        %9686 = vmatpush2.bf16.msra.mxu0 %v6911
        %9687 = vmatprep.subr.bf16.mxu0 %v6908
        %9688 = vmatpush2.bf16.msra.mxu0 %v6907
        %9689 = vmatprep.subr.bf16.mxu0 %v6904
        %9690 = vmatpush2.bf16.msra.mxu0 %v6903
        %9691 = vmatprep.mubr.bf16.mxu0 %v2305
        %9692 = vmatmul.mubr.bf16.gmra.mxu0 %v2303
        %v9693 = vpop.f32.mrf.mxu0
        %v9694 = vadd.f32 %v9653, %v9693
        %v9695 = vpop.f32.mrf.mxu0
        %v9696 = vadd.f32 %v9655, %v9695
        %v9697 = vpop.f32.mrf.mxu0
        %v9698 = vpop.f32.mrf.mxu0
        %9699 = vdwg.mxu0
        %9700 = vmatprep.subr.bf16.mxu0 %v6964
        %9701 = vmatpush1.bf16.msra.mxu0 %v6963
        %9702 = vmatprep.subr.bf16.mxu0 %v6960
        %9703 = vmatpush1.bf16.msra.mxu0 %v6959
        %9704 = vmatprep.subr.bf16.mxu0 %v6956
        %9705 = vmatpush1.bf16.msra.mxu0 %v6955
        %9706 = vmatprep.subr.bf16.mxu0 %v6952
        %9707 = vmatpush1.bf16.msra.mxu0 %v6951
        %9708 = vmatprep.subr.bf16.mxu0 %v6948
        %9709 = vmatpush1.bf16.msra.mxu0 %v6947
        %9710 = vmatprep.subr.bf16.mxu0 %v6944
        %9711 = vmatpush1.bf16.msra.mxu0 %v6943
        %9712 = vmatprep.subr.bf16.mxu0 %v6940
        %9713 = vmatpush1.bf16.msra.mxu0 %v6939
        %9714 = vmatprep.subr.bf16.mxu0 %v6936
        %9715 = vmatpush1.bf16.msra.mxu0 %v6935
        %9716 = vmatprep.subr.bf16.mxu0 %v6996
        %9717 = vmatpush2.bf16.msra.mxu0 %v6995
        %9718 = vmatprep.subr.bf16.mxu0 %v6992
        %9719 = vmatpush2.bf16.msra.mxu0 %v6991
        %9720 = vmatprep.subr.bf16.mxu0 %v6988
        %9721 = vmatpush2.bf16.msra.mxu0 %v6987
        %9722 = vmatprep.subr.bf16.mxu0 %v6984
        %9723 = vmatpush2.bf16.msra.mxu0 %v6983
        %9724 = vmatprep.subr.bf16.mxu0 %v6980
        %9725 = vmatpush2.bf16.msra.mxu0 %v6979
        %9726 = vmatprep.subr.bf16.mxu0 %v6976
        %9727 = vmatpush2.bf16.msra.mxu0 %v6975
        %9728 = vmatprep.subr.bf16.mxu0 %v6972
        %9729 = vmatpush2.bf16.msra.mxu0 %v6971
        %9730 = vmatprep.subr.bf16.mxu0 %v6968
        %9731 = vmatpush2.bf16.msra.mxu0 %v6967
        %9732 = vmatprep.mubr.bf16.mxu0 %v2342
        %9733 = vmatmul.mubr.bf16.gmra.mxu0 %v2328
        %v9734 = vpop.f32.mrf.mxu0
        %v9735 = vadd.f32 %v9694, %v9734
        %v9736 = vpop.f32.mrf.mxu0
        %v9737 = vadd.f32 %v9696, %v9736
        %v9738 = vpop.f32.mrf.mxu0
        %v9739 = vpop.f32.mrf.mxu0
        %9740 = vdwg.mxu0
        %9741 = vmatprep.subr.bf16.mxu0 %v7028
        %9742 = vmatpush1.bf16.msra.mxu0 %v7027
        %9743 = vmatprep.subr.bf16.mxu0 %v7024
        %9744 = vmatpush1.bf16.msra.mxu0 %v7023
        %9745 = vmatprep.subr.bf16.mxu0 %v7020
        %9746 = vmatpush1.bf16.msra.mxu0 %v7019
        %9747 = vmatprep.subr.bf16.mxu0 %v7016
        %9748 = vmatpush1.bf16.msra.mxu0 %v7015
        %9749 = vmatprep.subr.bf16.mxu0 %v7012
        %9750 = vmatpush1.bf16.msra.mxu0 %v7011
        %9751 = vmatprep.subr.bf16.mxu0 %v7008
        %9752 = vmatpush1.bf16.msra.mxu0 %v7007
        %9753 = vmatprep.subr.bf16.mxu0 %v7004
        %9754 = vmatpush1.bf16.msra.mxu0 %v7003
        %9755 = vmatprep.subr.bf16.mxu0 %v7000
        %9756 = vmatpush1.bf16.msra.mxu0 %v6999
        %9757 = vmatprep.subr.bf16.mxu0 %v7060
        %9758 = vmatpush2.bf16.msra.mxu0 %v7059
        %9759 = vmatprep.subr.bf16.mxu0 %v7056
        %9760 = vmatpush2.bf16.msra.mxu0 %v7055
        %9761 = vmatprep.subr.bf16.mxu0 %v7052
        %9762 = vmatpush2.bf16.msra.mxu0 %v7051
        %9763 = vmatprep.subr.bf16.mxu0 %v7048
        %9764 = vmatpush2.bf16.msra.mxu0 %v7047
        %9765 = vmatprep.subr.bf16.mxu0 %v7044
        %9766 = vmatpush2.bf16.msra.mxu0 %v7043
        %9767 = vmatprep.subr.bf16.mxu0 %v7040
        %9768 = vmatpush2.bf16.msra.mxu0 %v7039
        %9769 = vmatprep.subr.bf16.mxu0 %v7036
        %9770 = vmatpush2.bf16.msra.mxu0 %v7035
        %9771 = vmatprep.subr.bf16.mxu0 %v7032
        %9772 = vmatpush2.bf16.msra.mxu0 %v7031
        %9773 = vmatprep.mubr.bf16.mxu0 %v2344
        %9774 = vmatmul.mubr.bf16.gmra.mxu0 %v2343
        %v9775 = vpop.f32.mrf.mxu0
        %v9776 = vadd.f32 %v9735, %v9775
        %v9777 = vpop.f32.mrf.mxu0
        %v9778 = vadd.f32 %v9737, %v9777
        %v9779 = vpop.f32.mrf.mxu0
        %v9780 = vpop.f32.mrf.mxu0
        %9781 = vdwg.mxu0
        %9782 = vmatprep.subr.bf16.mxu0 0
        %9783 = vmatpush1.bf16.msra.mxu0 0
        %9784 = vmatprep.subr.bf16.mxu0 0
        %9785 = vmatpush1.bf16.msra.mxu0 0
        %9786 = vmatprep.subr.bf16.mxu0 %v7084
        %9787 = vmatpush1.bf16.msra.mxu0 %v7083
        %9788 = vmatprep.subr.bf16.mxu0 %v7080
        %9789 = vmatpush1.bf16.msra.mxu0 %v7079
        %9790 = vmatprep.subr.bf16.mxu0 %v7076
        %9791 = vmatpush1.bf16.msra.mxu0 %v7075
        %9792 = vmatprep.subr.bf16.mxu0 %v7072
        %9793 = vmatpush1.bf16.msra.mxu0 %v7071
        %9794 = vmatprep.subr.bf16.mxu0 %v7068
        %9795 = vmatpush1.bf16.msra.mxu0 %v7067
        %9796 = vmatprep.subr.bf16.mxu0 %v7064
        %9797 = vmatpush1.bf16.msra.mxu0 %v7063
        %9798 = vmatprep.subr.bf16.mxu0 0
        %9799 = vmatpush2.bf16.msra.mxu0 0
        %9800 = vmatprep.subr.bf16.mxu0 0
        %9801 = vmatpush2.bf16.msra.mxu0 0
        %9802 = vmatprep.subr.bf16.mxu0 0
        %9803 = vmatpush2.bf16.msra.mxu0 0
        %9804 = vmatprep.subr.bf16.mxu0 0
        %9805 = vmatpush2.bf16.msra.mxu0 0
        %9806 = vmatprep.subr.bf16.mxu0 0
        %9807 = vmatpush2.bf16.msra.mxu0 0
        %9808 = vmatprep.subr.bf16.mxu0 0
        %9809 = vmatpush2.bf16.msra.mxu0 0
        %9810 = vmatprep.subr.bf16.mxu0 0
        %9811 = vmatpush2.bf16.msra.mxu0 0
        %9812 = vmatprep.subr.bf16.mxu0 0
        %9813 = vmatpush2.bf16.msra.mxu0 0
        %9814 = vmatprep.mubr.bf16.mxu0 0
        %9815 = vmatmul.mubr.bf16.gmra.mxu0 %v8263
        %v9816 = vpop.f32.mrf.mxu0
        %v9817 = vadd.f32 %v9776, %v9816
        %v9818 = vpop.f32.mrf.mxu0
        %v9819 = vadd.f32 %v9778, %v9818
        %v9820 = vpop.f32.mrf.mxu0
        %v9821 = vpop.f32.mrf.mxu0
        %9822 = vdwg.mxu0
        %v9823 = vmax.f32 %v9038, 0.0
        %v9824 = vmax.f32 %v9040, 0.0
        %v9825 = vmax.f32 %v9817, 0.0
        %v9826 = vmax.f32 %v9819, 0.0
        %v9827 = vld [vmem:[#allocation3] sm:$0x3]
        %v9828 = vld [vmem:[%s294] sm:$0xf]
        %v9830 = vlaneseq
        %v9831 = vshrl.u32 %v9830, 7
        %v9832 = vsub.s32 0, %v9831
        %v9833 = vrot.slane %v9828, %v9832
        %v9834 = vlaneseq
        %v9835 = vshrl.u32 %v9834, 7
        %v9836 = vsub.s32 1, %v9835
        %v9837 = vrot.slane %v9828, %v9836
        %v9838 = vlaneseq
        %v9839 = vshrl.u32 %v9838, 7
        %v9840 = vsub.s32 2, %v9839
        %v9841 = vrot.slane %v9828, %v9840
        %v9842 = vlaneseq
        %v9843 = vshrl.u32 %v9842, 7
        %v9844 = vsub.s32 3, %v9843
        %v9845 = vrot.slane %v9828, %v9844
        %v9850 = vmul.f32 %v9823, %v9833
        %v9851 = vmul.f32 %v9824, %v9837
        %v9852 = vmul.f32 %v9825, %v9841
        %v9853 = vmul.f32 %v9826, %v9845
        %vm9854 = vcmask 1041408
        %v9855 = vsel %vm9854, %v9850, 0.0
        %v9856 = vsel %vm9854, %v9851, 0.0
        %v9857 = vadd.f32 %v9855, %v9856
        %v9858 = vsel %vm9854, %v9852, 0.0
        %v9859 = vadd.f32 %v9857, %v9858
        %v9860 = vsel %vm9854, %v9853, 0.0
        %v9861 = vadd.f32 %v9859, %v9860
        %9862 = vadd.xlane.f32.xlu0 %v9861
        %v9863 = vpop.xlane.xlu0 %9862
        %v9864 = vadd.f32 %v9827, %v9863
        %vm9865 = vcmask 1024
        %9866 = vst.msk [vmem:[#allocation3] sm:$0x3] %vm9865, %v9864
        %p9867 = scmp.eq.s32.totalorder %s27, 1
        // Predicated region
        $region57: #{tpu_custom_call.1} parent=35 // pred_check
          %p9868 = pneg %p9867
        $region58: #{tpu_custom_call.1} parent=35 // pred_check_branch
          %9870 = sbr.rel (%p9868) target = $region60
        $region59: #{tpu_custom_call.1} parent=35 // pred_region
          %v9871 = vld [vmem:[#allocation3] sm:$0x3]
          %9872 = vst.msk [vmem:[%s339] sm:$0x3] %vm9865, %v9871
        $region60: #{tpu_custom_call.1} parent=35 // pred_fallthru
          _
        %p9873 = scmp.lt.s32.totalorder %s26, 1
        %s9874 = scalar_select %p9873, %s26, 1
        %s9875 = smul.addr %s9874, 2
        %s9876 = scalar_lea.vmem %s4, %s9875
        // Predicated region
        $region61: #{tpu_custom_call.1} parent=35 // pred_check
          %p9877 = pneg %p163
        $region62: #{tpu_custom_call.1} parent=35 // pred_check_branch
          %9879 = sbr.rel (%p9877) target = $region64
        $region63: #{tpu_custom_call.1} parent=35 // pred_region
          _
        $region64: #{tpu_custom_call.1} parent=35 // pred_fallthru
          _
      $region36: #{tpu_custom_call.1} parent=5 // pred_fallthru
        _
      %p9880 = scmp.le.s32.totalorder 2, %s17
      // Predicated region
      $region65: #{tpu_custom_call.1} parent=5 // pred_check
        %p9881 = pneg %p9880
      $region66: #{tpu_custom_call.1} parent=5 // pred_check_branch
        %9883 = sbr.rel (%p9881) target = $region68
      $region67: #{tpu_custom_call.1} parent=5 // pred_region
        %s9884 = ssub.s32 %s17, 2
        // Predicated region
        $region69: #{tpu_custom_call.1} parent=67 // pred_check
          %p9885 = pneg %p169
        $region70: #{tpu_custom_call.1} parent=67 // pred_check_branch
          %9887 = sbr.rel (%p9885) target = $region72
        $region71: #{tpu_custom_call.1} parent=67 // pred_region
          %p9888 = scmp.lt.s32.totalorder %s28, 1
          %s9889 = scalar_select %p9888, %s28, 1
          %s9890 = smul.addr %s9889, 2
          %s9891 = scalar_lea.vmem %s4, %s9890
        $region72: #{tpu_custom_call.1} parent=67 // pred_fallthru
          _
      $region68: #{tpu_custom_call.1} parent=5 // pred_fallthru
        _
    $region6: #{tpu_custom_call.1} parent=1 // loop_footer
      %s21 = sadd.s32 1, %s17
    $region7: #{tpu_custom_call.1} parent=1 // loop_footer_branch
      %16 = sbr.rel target = $region3
    $region8: #{tpu_custom_call.1} parent=1 // loop_exit
      _
    %9892 = vsyncpa [#allocation5], 1
    %s9893 = scalar_lea.sflag [#allocation5], 1
    %9894 = vsyncpa %s9893, 1
    %9895 = vsyncpa [#allocation7], 1
    %s9896 = scalar_lea.sflag [#allocation7], 1
    %9897 = vsyncpa %s9896, 1
    %9898 = vsyncpa [#allocation10], 1
    %s9899 = scalar_lea.sflag [#allocation10], 1
    %9900 = vsyncpa %s9899, 1

</llo_original>
